<compile_context>
chip_gen: v7x
topology: tpu7x:2x2x1
jax: 0.10.0
libtpu: 0.0.40
codegen_flags: <defaults>
</compile_context>

<pallas_src>
import jax
import jax.numpy as jnp
from jax import lax
from jax.experimental import pallas as pl
from jax.experimental.pallas import tpu as pltpu  # noqa: F401  (TPU backend)


# ---------------------------------------------------------------------------
# In-kernel helpers
# ---------------------------------------------------------------------------
def _bn_relu(x, gamma, beta, eps=1e-5):
    # x: (M, C) f32 -- training-mode batch stats (biased variance), matching
    # nn.BatchNorm2d(...).train(); gamma/beta: (1, C) f32.  ReLU = withReLU=True.
    mean = jnp.mean(x, axis=0, keepdims=True)
    var = jnp.mean((x - mean) ** 2, axis=0, keepdims=True)
    return jnp.maximum((x - mean) * lax.rsqrt(var + eps) * gamma + beta, 0.0)


# ---------------------------------------------------------------------------
# Fused kernel:
#   ConvT2x2(stride 2) + pad-cat + conv3x3 + BN + ReLU + conv3x3 + BN + ReLU
# ---------------------------------------------------------------------------
def _upstep_fused_kernel(xd_ref, x_ref, wt_ref, bt_ref, w1_ref, g1_ref,
                         be1_ref, w2_ref, g2_ref, be2_ref, o_ref):
    # xd_ref : (N, Hp, Wp, Cskip)  bf16   padded skip connection (x_down)
    # x_ref  : (N, H,  W,  Cin)    bf16   upStep input (pre-uppool)
    # wt_ref : (Cin, 4*Cout)       bf16   ConvT weight, cols = (a, b, o)
    # bt_ref : (1, 4*Cout)         f32    ConvT bias tiled over (a, b)
    # w1_ref : (9*Cin,  Cout)      bf16   conv1 weight, rows = (a, b, c)
    # w2_ref : (9*Cout, Cout)      bf16   conv2 weight, rows = (a, b, c)
    # g*/be* : (1, Cout)           f32    BN gamma / beta
    # o_ref  : (N, H2, W2, Cout)   f32
    N, H, W, Cin = x_ref.shape
    Cout = g1_ref.shape[-1]
    Hp, Wp = 2 * H, 2 * W
    H1, W1 = Hp - 2, Wp - 2
    H2, W2 = H1 - 2, W1 - 2

    # ---- uppool: ConvTranspose2d(Cin, Cout, 2, stride=2) -> ONE MXU push ----
    x2d = x_ref[...].reshape(N * H * W, Cin)
    y = jnp.dot(x2d, wt_ref[...], preferred_element_type=jnp.float32)
    y = (y + bt_ref[...]).astype(jnp.bfloat16)           # (N*H*W, 4*Cout)
    # Sub-pixel assembly in VMEM (no HBM round trip).  Column block k = 2*a + b
    # holds output sub-pixel (a, b); only last-dim-preserving reshapes used.
    sub = [y[:, k * Cout:(k + 1) * Cout].reshape(N, H, W, Cout)
           for k in range(4)]
    rows = [jnp.stack([sub[2 * a], sub[2 * a + 1]], axis=3).reshape(N, H, Wp, Cout)
            for a in range(2)]                            # interleave along W
    up = jnp.stack(rows, axis=2).reshape(N, Hp, Wp, Cout)  # interleave along H

    # ---- torch.cat([x_down_padded, up], dim=C) (stays in VMEM) ----
    cat = jnp.concatenate([xd_ref[...], up], axis=-1)     # (N, Hp, Wp, Cin)

    def im2col(t, hh, ww):
        # (N, hh+2, ww+2, C) -> (N*hh*ww, 9*C), tap order (a, b, c).
        c = t.shape[-1]
        cols = jnp.concatenate([t[:, :, b:b + ww, :] for b in range(3)], axis=-1)
        taps = jnp.concatenate([cols[:, a:a + hh, :, :] for a in range(3)], axis=-1)
        return taps.reshape(N * hh * ww, 9 * c)

    # ---- conv1 (3x3 VALID) as ONE im2col matmul, K = 9*Cin ----
    p1 = im2col(cat, H1, W1)                               # (M1, 72) bf16
    acc1 = jnp.dot(p1, w1_ref[...], preferred_element_type=jnp.float32)
    # conv bias folded away: per-channel bias cancels under train-mode BN.
    h1 = _bn_relu(acc1, g1_ref[...], be1_ref[...])
    h1 = h1.reshape(N, H1, W1, Cout).astype(jnp.bfloat16)  # stays in VMEM

    # ---- conv2 (3x3 VALID) as ONE im2col matmul, K = 9*Cout ----
    p2 = im2col(h1, H2, W2)                                # (M2, 36) bf16
    acc2 = jnp.dot(p2, w2_ref[...], preferred_element_type=jnp.float32)
    h2 = _bn_relu(acc2, g2_ref[...], be2_ref[...])

    # NOTE: could store bf16 here to halve writeback if downstream tolerates it.
    o_ref[...] = h2.reshape(N, H2, W2, Cout)


# ---------------------------------------------------------------------------
# Parameters (same shapes / roles as the PyTorch module)
# ---------------------------------------------------------------------------
def init_params(key, inC, outC):
    ks = jax.random.split(key, 6)
    p = {}
    p["wt"] = 0.1 * jax.random.normal(ks[0], (inC, outC, 2, 2), jnp.float32)   # ConvTranspose2d
    p["bt"] = 0.1 * jax.random.normal(ks[1], (outC,), jnp.float32)
    p["w1"] = 0.1 * jax.random.normal(ks[2], (outC, inC, 3, 3), jnp.float32)   # Conv2d(inC,outC,3)
    p["b1"] = 0.1 * jax.random.normal(ks[3], (outC,), jnp.float32)
    p["g1"] = jnp.ones((outC,), jnp.float32)
    p["be1"] = jnp.zeros((outC,), jnp.float32)
    p["w2"] = 0.1 * jax.random.normal(ks[4], (outC, outC, 3, 3), jnp.float32)  # Conv2d(outC,outC,3)
    p["b2"] = 0.1 * jax.random.normal(ks[5], (outC,), jnp.float32)
    p["g2"] = jnp.ones((outC,), jnp.float32)
    p["be2"] = jnp.zeros((outC,), jnp.float32)
    return p


def prepare_params(p):
    """Kernel-ready weight formats (runs once, outside the jitted forward)."""
    inC, outC = p["wt"].shape[0], p["wt"].shape[1]
    kp = {}
    # ConvTranspose2d (Cin, Cout, 2, 2) -> (Cin, (2a+b)*Cout + o), bf16
    kp["wt"] = (jnp.transpose(p["wt"], (0, 2, 3, 1))
                .reshape(inC, 4 * outC).astype(jnp.bfloat16))
    kp["bt"] = jnp.tile(p["bt"], 4).reshape(1, 4 * outC).astype(jnp.float32)
    # Conv weights OIHW -> HWIO -> (9*Cin, Cout); rows ordered (a, b, c) to
    # match the in-kernel im2col tap order.
    kp["w1"] = (jnp.transpose(p["w1"], (2, 3, 1, 0))
                .reshape(9 * inC, outC).astype(jnp.bfloat16))
    kp["w2"] = (jnp.transpose(p["w2"], (2, 3, 1, 0))
                .reshape(9 * outC, outC).astype(jnp.bfloat16))
    for k in ("g1", "be1", "g2", "be2"):
        kp[k] = p[k].reshape(1, outC).astype(jnp.float32)
    # b1 / b2 intentionally dropped: bias before train-mode BN cancels exactly.
    return kp


# ---------------------------------------------------------------------------
# upStep forward (NCHW in / NCHW out, like the PyTorch module)
# ---------------------------------------------------------------------------
def upstep_forward(x_nchw, x_down_nchw, kp):
    x = jnp.transpose(x_nchw, (0, 2, 3, 1)).astype(jnp.bfloat16)       # NHWC
    xd = jnp.transpose(x_down_nchw, (0, 2, 3, 1)).astype(jnp.bfloat16)
    N, H, W, _ = x.shape
    Cout = kp["g1"].shape[-1]
    Hp, Wp = 2 * H, 2 * W
    H2, W2 = Hp - 4, Wp - 4

    # F.pad(x_down) to the uppool output's spatial size (negative amounts crop)
    Ypad, Xpad = Hp - xd.shape[1], Wp - xd.shape[2]
    xd = lax.pad(xd, jnp.zeros((), xd.dtype),
                 ((0, 0, 0), (Ypad // 2, Ypad - Ypad // 2, 0),
                  (Xpad // 2, Xpad - Xpad // 2, 0), (0, 0, 0)))

    out = pl.pallas_call(
        _upstep_fused_kernel,
        out_shape=jax.ShapeDtypeStruct((N, H2, W2, Cout), jnp.float32),
    )(xd, x, kp["wt"], kp["bt"], kp["w1"], kp["g1"], kp["be1"],
      kp["w2"], kp["g2"], kp["be2"])

    return jnp.transpose(out, (0, 3, 1, 2))   # back to NCHW


# ---------------------------------------------------------------------------
# Pure-JAX reference (mirrors bf16 matmul operands / f32 accumulation;
# keeps the module's conv biases, which cancel under train-mode BN)
# ---------------------------------------------------------------------------
def reference_forward(x_nchw, x_down_nchw, p):
    f32 = jnp.float32
    bf = lambda z: z.astype(jnp.bfloat16).astype(f32)   # mirror bf16 operands

    x = jnp.transpose(x_nchw, (0, 2, 3, 1)).astype(f32)
    xd = jnp.transpose(x_down_nchw, (0, 2, 3, 1)).astype(f32)
    N, H, W, _ = x.shape
    outC = p["wt"].shape[1]

    up = jnp.einsum("nhwc,coab->nhawbo", bf(x), bf(p["wt"]),
                    precision=lax.Precision.HIGHEST)
    up = bf(up.reshape(N, 2 * H, 2 * W, outC) + p["bt"])   # kernel keeps bf16

    Ypad = up.shape[1] - xd.shape[1]
    Xpad = up.shape[2] - xd.shape[2]
    xd = lax.pad(xd, jnp.zeros((), f32),
                 ((0, 0, 0), (Ypad // 2, Ypad - Ypad // 2, 0),
                  (Xpad // 2, Xpad - Xpad // 2, 0), (0, 0, 0)))
    h = jnp.concatenate([bf(xd), up], axis=-1)

    def conv_bn_relu(h, w_pt, b, g, beta):
        w = jnp.transpose(w_pt, (2, 3, 1, 0))             # OIHW -> HWIO
        h = lax.conv_general_dilated(
            bf(h), bf(w), (1, 1), "VALID",
            dimension_numbers=("NHWC", "HWIO", "NHWC"),
            precision=lax.Precision.HIGHEST) + b
        m = jnp.mean(h, axis=(0, 1, 2), keepdims=True)
        v = jnp.mean((h - m) ** 2, axis=(0, 1, 2), keepdims=True)
        h = (h - m) * lax.rsqrt(v + 1e-5) * g + beta
        return jnp.maximum(h, 0.0)

    h = conv_bn_relu(h, p["w1"], p["b1"], p["g1"], p["be1"])
    h = conv_bn_relu(h, p["w2"], p["b2"], p["g2"], p["be2"])
    return jnp.transpose(h, (0, 3, 1, 2))


if __name__ == "__main__":
    key = jax.random.PRNGKey(0)
    kx, kd, kparam = jax.random.split(key, 3)

    inC, outC = 8, 4                                   # inC = 2 * outC (U-Net)
    x = jax.random.normal(kx, (2, inC, 8, 8), jnp.float32)              # NCHW
    x_down = jax.random.normal(kd, (2, inC - outC, 14, 14), jnp.float32)

    raw = init_params(kparam, inC, outC)
    kparams = prepare_params(raw)          # hoisted weight prep (runs once)

    fwd = jax.jit(upstep_forward)
    out = jax.block_until_ready(fwd(x, x_down, kparams))
    assert out.shape == (2, outC, 12, 12), out.shape

    ref = reference_forward(x, x_down, raw)
    err = float(jnp.max(jnp.abs(out - ref)))
    if not (bool(jnp.all(jnp.isfinite(out))) and err < 2e-2):
        raise SystemExit(f"mismatch vs reference: max abs err = {err}")
    print("KERNEL_OK")
</pallas_src>

<mosaic_0001>
module attributes {stable_mosaic.version = 11 : i64} {
  func.func @_upstep_fused_kernel(%arg0: memref<2x16x16x4xbf16, #tpu.memory_space<vmem>>, %arg1: memref<2x8x8x8xbf16, #tpu.memory_space<vmem>>, %arg2: memref<8x16xbf16, #tpu.memory_space<vmem>>, %arg3: memref<1x16xf32, #tpu.memory_space<vmem>>, %arg4: memref<72x4xbf16, #tpu.memory_space<vmem>>, %arg5: memref<1x4xf32, #tpu.memory_space<vmem>>, %arg6: memref<1x4xf32, #tpu.memory_space<vmem>>, %arg7: memref<36x4xbf16, #tpu.memory_space<vmem>>, %arg8: memref<1x4xf32, #tpu.memory_space<vmem>>, %arg9: memref<1x4xf32, #tpu.memory_space<vmem>>, %arg10: memref<2x12x12x4xf32, #tpu.memory_space<vmem>>) attributes {dimension_semantics = [], scalar_prefetch = 0 : i64, scratch_operands = 0 : i64, tpu.core_type = #tpu.core_type<tc>} {
    %c0 = arith.constant 0 : index
    %c0_0 = arith.constant 0 : index
    %c0_1 = arith.constant 0 : index
    %c0_2 = arith.constant 0 : index
    %0 = vector.load %arg1[%c0, %c0_0, %c0_1, %c0_2] : memref<2x8x8x8xbf16, #tpu.memory_space<vmem>>, vector<2x8x8x8xbf16>
    %1 = vector.shape_cast %0 : vector<2x8x8x8xbf16> to vector<128x8xbf16>
    %c0_3 = arith.constant 0 : index
    %c0_4 = arith.constant 0 : index
    %2 = vector.load %arg2[%c0_3, %c0_4] : memref<8x16xbf16, #tpu.memory_space<vmem>>, vector<8x16xbf16>
    %cst = arith.constant dense<0.000000e+00> : vector<128x16xf32>
    %3 = tpu.matmul %1, %2, %cst {dimension_numbers = #tpu.dot_dimension_numbers<[1], [0], [0], [1], [0, 0, 1, 1], [], []>} : vector<128x8xbf16>, vector<8x16xbf16>, vector<128x16xf32> -> vector<128x16xf32>
    %c0_5 = arith.constant 0 : index
    %c0_6 = arith.constant 0 : index
    %4 = vector.load %arg3[%c0_5, %c0_6] : memref<1x16xf32, #tpu.memory_space<vmem>>, vector<1x16xf32>
    %5 = vector.broadcast %4 : vector<1x16xf32> to vector<128x16xf32>
    %6 = arith.addf %3, %5 : vector<128x16xf32>
    %7 = arith.truncf %6 : vector<128x16xf32> to vector<128x16xbf16>
    %8 = vector.extract_strided_slice %7 {offsets = [0, 0], sizes = [128, 4], strides = [1, 1]} : vector<128x16xbf16> to vector<128x4xbf16>
    %9 = vector.shape_cast %8 : vector<128x4xbf16> to vector<2x8x8x4xbf16>
    %10 = vector.extract_strided_slice %7 {offsets = [0, 4], sizes = [128, 4], strides = [1, 1]} : vector<128x16xbf16> to vector<128x4xbf16>
    %11 = vector.shape_cast %10 : vector<128x4xbf16> to vector<2x8x8x4xbf16>
    %12 = vector.extract_strided_slice %7 {offsets = [0, 8], sizes = [128, 4], strides = [1, 1]} : vector<128x16xbf16> to vector<128x4xbf16>
    %13 = vector.shape_cast %12 : vector<128x4xbf16> to vector<2x8x8x4xbf16>
    %14 = vector.extract_strided_slice %7 {offsets = [0, 12], sizes = [128, 4], strides = [1, 1]} : vector<128x16xbf16> to vector<128x4xbf16>
    %15 = vector.shape_cast %14 : vector<128x4xbf16> to vector<2x8x8x4xbf16>
    %16 = vector.shape_cast %9 : vector<2x8x8x4xbf16> to vector<2x8x8x1x4xbf16>
    %17 = vector.shape_cast %11 : vector<2x8x8x4xbf16> to vector<2x8x8x1x4xbf16>
    %18 = tpu.concatenate %16, %17 in 3 : vector<2x8x8x1x4xbf16>, vector<2x8x8x1x4xbf16> -> vector<2x8x8x2x4xbf16>
    %19 = vector.shape_cast %18 : vector<2x8x8x2x4xbf16> to vector<2x8x16x4xbf16>
    %20 = vector.shape_cast %13 : vector<2x8x8x4xbf16> to vector<2x8x8x1x4xbf16>
    %21 = vector.shape_cast %15 : vector<2x8x8x4xbf16> to vector<2x8x8x1x4xbf16>
    %22 = tpu.concatenate %20, %21 in 3 : vector<2x8x8x1x4xbf16>, vector<2x8x8x1x4xbf16> -> vector<2x8x8x2x4xbf16>
    %23 = vector.shape_cast %22 : vector<2x8x8x2x4xbf16> to vector<2x8x16x4xbf16>
    %24 = vector.shape_cast %19 : vector<2x8x16x4xbf16> to vector<2x8x1x16x4xbf16>
    %25 = vector.shape_cast %23 : vector<2x8x16x4xbf16> to vector<2x8x1x16x4xbf16>
    %26 = tpu.concatenate %24, %25 in 2 : vector<2x8x1x16x4xbf16>, vector<2x8x1x16x4xbf16> -> vector<2x8x2x16x4xbf16>
    %27 = vector.shape_cast %26 : vector<2x8x2x16x4xbf16> to vector<2x16x16x4xbf16>
    %c0_7 = arith.constant 0 : index
    %c0_8 = arith.constant 0 : index
    %c0_9 = arith.constant 0 : index
    %c0_10 = arith.constant 0 : index
    %28 = vector.load %arg0[%c0_7, %c0_8, %c0_9, %c0_10] : memref<2x16x16x4xbf16, #tpu.memory_space<vmem>>, vector<2x16x16x4xbf16>
    %29 = tpu.concatenate %28, %27 in 3 : vector<2x16x16x4xbf16>, vector<2x16x16x4xbf16> -> vector<2x16x16x8xbf16>
    %30 = vector.extract_strided_slice %29 {offsets = [0, 0, 0, 0], sizes = [2, 16, 14, 8], strides = [1, 1, 1, 1]} : vector<2x16x16x8xbf16> to vector<2x16x14x8xbf16>
    %31 = vector.extract_strided_slice %29 {offsets = [0, 0, 1, 0], sizes = [2, 16, 14, 8], strides = [1, 1, 1, 1]} : vector<2x16x16x8xbf16> to vector<2x16x14x8xbf16>
    %32 = vector.extract_strided_slice %29 {offsets = [0, 0, 2, 0], sizes = [2, 16, 14, 8], strides = [1, 1, 1, 1]} : vector<2x16x16x8xbf16> to vector<2x16x14x8xbf16>
    %33 = tpu.concatenate %30, %31, %32 in 3 : vector<2x16x14x8xbf16>, vector<2x16x14x8xbf16>, vector<2x16x14x8xbf16> -> vector<2x16x14x24xbf16>
    %34 = vector.extract_strided_slice %33 {offsets = [0, 0, 0, 0], sizes = [2, 14, 14, 24], strides = [1, 1, 1, 1]} : vector<2x16x14x24xbf16> to vector<2x14x14x24xbf16>
    %35 = vector.extract_strided_slice %33 {offsets = [0, 1, 0, 0], sizes = [2, 14, 14, 24], strides = [1, 1, 1, 1]} : vector<2x16x14x24xbf16> to vector<2x14x14x24xbf16>
    %36 = vector.extract_strided_slice %33 {offsets = [0, 2, 0, 0], sizes = [2, 14, 14, 24], strides = [1, 1, 1, 1]} : vector<2x16x14x24xbf16> to vector<2x14x14x24xbf16>
    %37 = tpu.concatenate %34, %35, %36 in 3 : vector<2x14x14x24xbf16>, vector<2x14x14x24xbf16>, vector<2x14x14x24xbf16> -> vector<2x14x14x72xbf16>
    %38 = vector.shape_cast %37 : vector<2x14x14x72xbf16> to vector<392x72xbf16>
    %c0_11 = arith.constant 0 : index
    %c0_12 = arith.constant 0 : index
    %39 = vector.load %arg4[%c0_11, %c0_12] : memref<72x4xbf16, #tpu.memory_space<vmem>>, vector<72x4xbf16>
    %cst_13 = arith.constant dense<0.000000e+00> : vector<392x4xf32>
    %40 = tpu.matmul %38, %39, %cst_13 {dimension_numbers = #tpu.dot_dimension_numbers<[1], [0], [0], [1], [0, 0, 1, 1], [], []>} : vector<392x72xbf16>, vector<72x4xbf16>, vector<392x4xf32> -> vector<392x4xf32>
    %c0_14 = arith.constant 0 : index
    %c0_15 = arith.constant 0 : index
    %41 = vector.load %arg5[%c0_14, %c0_15] : memref<1x4xf32, #tpu.memory_space<vmem>>, vector<1x4xf32>
    %c0_16 = arith.constant 0 : index
    %c0_17 = arith.constant 0 : index
    %42 = vector.load %arg6[%c0_16, %c0_17] : memref<1x4xf32, #tpu.memory_space<vmem>>, vector<1x4xf32>
    %cst_18 = arith.constant dense<0.000000e+00> : vector<4xf32>
    %43 = vector.multi_reduction <add>, %40, %cst_18 [0] : vector<392x4xf32> to vector<4xf32>
    %44 = vector.shape_cast %43 : vector<4xf32> to vector<1x4xf32>
    %cst_19 = arith.constant 3.920000e+02 : f32
    %45 = vector.broadcast %cst_19 : f32 to vector<1x4xf32>
    %46 = arith.divf %44, %45 : vector<1x4xf32>
    %47 = vector.broadcast %46 : vector<1x4xf32> to vector<392x4xf32>
    %48 = arith.subf %40, %47 : vector<392x4xf32>
    %49 = arith.mulf %48, %48 : vector<392x4xf32>
    %cst_20 = arith.constant dense<0.000000e+00> : vector<4xf32>
    %50 = vector.multi_reduction <add>, %49, %cst_20 [0] : vector<392x4xf32> to vector<4xf32>
    %51 = vector.shape_cast %50 : vector<4xf32> to vector<1x4xf32>
    %cst_21 = arith.constant 3.920000e+02 : f32
    %52 = vector.broadcast %cst_21 : f32 to vector<1x4xf32>
    %53 = arith.divf %51, %52 : vector<1x4xf32>
    %54 = vector.broadcast %46 : vector<1x4xf32> to vector<392x4xf32>
    %55 = arith.subf %40, %54 : vector<392x4xf32>
    %cst_22 = arith.constant 9.99999974E-6 : f32
    %56 = vector.broadcast %cst_22 : f32 to vector<1x4xf32>
    %57 = arith.addf %53, %56 : vector<1x4xf32>
    %58 = math.rsqrt %57 : vector<1x4xf32>
    %59 = vector.broadcast %58 : vector<1x4xf32> to vector<392x4xf32>
    %60 = arith.mulf %55, %59 : vector<392x4xf32>
    %61 = vector.broadcast %41 : vector<1x4xf32> to vector<392x4xf32>
    %62 = arith.mulf %60, %61 : vector<392x4xf32>
    %63 = vector.broadcast %42 : vector<1x4xf32> to vector<392x4xf32>
    %64 = arith.addf %62, %63 : vector<392x4xf32>
    %cst_23 = arith.constant 0.000000e+00 : f32
    %65 = vector.broadcast %cst_23 : f32 to vector<392x4xf32>
    %66 = arith.maximumf %64, %65 : vector<392x4xf32>
    %67 = vector.shape_cast %66 : vector<392x4xf32> to vector<2x14x14x4xf32>
    %68 = arith.truncf %67 : vector<2x14x14x4xf32> to vector<2x14x14x4xbf16>
    %69 = vector.extract_strided_slice %68 {offsets = [0, 0, 0, 0], sizes = [2, 14, 12, 4], strides = [1, 1, 1, 1]} : vector<2x14x14x4xbf16> to vector<2x14x12x4xbf16>
    %70 = vector.extract_strided_slice %68 {offsets = [0, 0, 1, 0], sizes = [2, 14, 12, 4], strides = [1, 1, 1, 1]} : vector<2x14x14x4xbf16> to vector<2x14x12x4xbf16>
    %71 = vector.extract_strided_slice %68 {offsets = [0, 0, 2, 0], sizes = [2, 14, 12, 4], strides = [1, 1, 1, 1]} : vector<2x14x14x4xbf16> to vector<2x14x12x4xbf16>
    %72 = tpu.concatenate %69, %70, %71 in 3 : vector<2x14x12x4xbf16>, vector<2x14x12x4xbf16>, vector<2x14x12x4xbf16> -> vector<2x14x12x12xbf16>
    %73 = vector.extract_strided_slice %72 {offsets = [0, 0, 0, 0], sizes = [2, 12, 12, 12], strides = [1, 1, 1, 1]} : vector<2x14x12x12xbf16> to vector<2x12x12x12xbf16>
    %74 = vector.extract_strided_slice %72 {offsets = [0, 1, 0, 0], sizes = [2, 12, 12, 12], strides = [1, 1, 1, 1]} : vector<2x14x12x12xbf16> to vector<2x12x12x12xbf16>
    %75 = vector.extract_strided_slice %72 {offsets = [0, 2, 0, 0], sizes = [2, 12, 12, 12], strides = [1, 1, 1, 1]} : vector<2x14x12x12xbf16> to vector<2x12x12x12xbf16>
    %76 = tpu.concatenate %73, %74, %75 in 3 : vector<2x12x12x12xbf16>, vector<2x12x12x12xbf16>, vector<2x12x12x12xbf16> -> vector<2x12x12x36xbf16>
    %77 = vector.shape_cast %76 : vector<2x12x12x36xbf16> to vector<288x36xbf16>
    %c0_24 = arith.constant 0 : index
    %c0_25 = arith.constant 0 : index
    %78 = vector.load %arg7[%c0_24, %c0_25] : memref<36x4xbf16, #tpu.memory_space<vmem>>, vector<36x4xbf16>
    %cst_26 = arith.constant dense<0.000000e+00> : vector<288x4xf32>
    %79 = tpu.matmul %77, %78, %cst_26 {dimension_numbers = #tpu.dot_dimension_numbers<[1], [0], [0], [1], [0, 0, 1, 1], [], []>} : vector<288x36xbf16>, vector<36x4xbf16>, vector<288x4xf32> -> vector<288x4xf32>
    %c0_27 = arith.constant 0 : index
    %c0_28 = arith.constant 0 : index
    %80 = vector.load %arg8[%c0_27, %c0_28] : memref<1x4xf32, #tpu.memory_space<vmem>>, vector<1x4xf32>
    %c0_29 = arith.constant 0 : index
    %c0_30 = arith.constant 0 : index
    %81 = vector.load %arg9[%c0_29, %c0_30] : memref<1x4xf32, #tpu.memory_space<vmem>>, vector<1x4xf32>
    %cst_31 = arith.constant dense<0.000000e+00> : vector<4xf32>
    %82 = vector.multi_reduction <add>, %79, %cst_31 [0] : vector<288x4xf32> to vector<4xf32>
    %83 = vector.shape_cast %82 : vector<4xf32> to vector<1x4xf32>
    %cst_32 = arith.constant 2.880000e+02 : f32
    %84 = vector.broadcast %cst_32 : f32 to vector<1x4xf32>
    %85 = arith.divf %83, %84 : vector<1x4xf32>
    %86 = vector.broadcast %85 : vector<1x4xf32> to vector<288x4xf32>
    %87 = arith.subf %79, %86 : vector<288x4xf32>
    %88 = arith.mulf %87, %87 : vector<288x4xf32>
    %cst_33 = arith.constant dense<0.000000e+00> : vector<4xf32>
    %89 = vector.multi_reduction <add>, %88, %cst_33 [0] : vector<288x4xf32> to vector<4xf32>
    %90 = vector.shape_cast %89 : vector<4xf32> to vector<1x4xf32>
    %cst_34 = arith.constant 2.880000e+02 : f32
    %91 = vector.broadcast %cst_34 : f32 to vector<1x4xf32>
    %92 = arith.divf %90, %91 : vector<1x4xf32>
    %93 = vector.broadcast %85 : vector<1x4xf32> to vector<288x4xf32>
    %94 = arith.subf %79, %93 : vector<288x4xf32>
    %cst_35 = arith.constant 9.99999974E-6 : f32
    %95 = vector.broadcast %cst_35 : f32 to vector<1x4xf32>
    %96 = arith.addf %92, %95 : vector<1x4xf32>
    %97 = math.rsqrt %96 : vector<1x4xf32>
    %98 = vector.broadcast %97 : vector<1x4xf32> to vector<288x4xf32>
    %99 = arith.mulf %94, %98 : vector<288x4xf32>
    %100 = vector.broadcast %80 : vector<1x4xf32> to vector<288x4xf32>
    %101 = arith.mulf %99, %100 : vector<288x4xf32>
    %102 = vector.broadcast %81 : vector<1x4xf32> to vector<288x4xf32>
    %103 = arith.addf %101, %102 : vector<288x4xf32>
    %cst_36 = arith.constant 0.000000e+00 : f32
    %104 = vector.broadcast %cst_36 : f32 to vector<288x4xf32>
    %105 = arith.maximumf %103, %104 : vector<288x4xf32>
    %106 = vector.shape_cast %105 : vector<288x4xf32> to vector<2x12x12x4xf32>
    %c0_37 = arith.constant 0 : index
    %c0_38 = arith.constant 0 : index
    %c0_39 = arith.constant 0 : index
    %c0_40 = arith.constant 0 : index
    %107 = vector.load %arg10[%c0_37, %c0_38, %c0_39, %c0_40] : memref<2x12x12x4xf32, #tpu.memory_space<vmem>>, vector<2x12x12x4xf32>
    tpu.vector_store %arg10[%c0_37, %c0_38, %c0_39, %c0_40], %106 {strides = array<i32>} : memref<2x12x12x4xf32, #tpu.memory_space<vmem>>, vector<2x12x12x4xf32>,
    return
  }
}

</mosaic_0001>

<llo_original>
// kernel: upstep_forward.1
$region0: #{upstep_forward.1}
  #allocation0 [shape = 'u32[]', space=smem, size = 0x4, offset = 0x4, fixed_abs, tag = 'smem constant byte address 0x4 - core index']
  #allocation1 [shape = 'u32[144,128]{1,0:T(1,128)}', space=vmem, size = 0x12000, scoped, tag = 'internal scratch']
  %s0 = inlined_call_operand.vmem [shape: bf16[2,16,16,4], index: 0, kind: input, shape index: {}]
  %s1 = inlined_call_operand.vmem [shape: bf16[2,8,8,8], index: 1, kind: input, shape index: {}]
  %s2 = inlined_call_operand.vmem [shape: bf16[8,16], index: 2, kind: input, shape index: {}]
  %s3 = inlined_call_operand.vmem [shape: f32[1,16], index: 3, kind: input, shape index: {}]
  %s4 = inlined_call_operand.vmem [shape: bf16[72,4], index: 4, kind: input, shape index: {}]
  %s5 = inlined_call_operand.vmem [shape: f32[1,4], index: 5, kind: input, shape index: {}]
  %s6 = inlined_call_operand.vmem [shape: f32[1,4], index: 6, kind: input, shape index: {}]
  %s7 = inlined_call_operand.vmem [shape: bf16[36,4], index: 7, kind: input, shape index: {}]
  %s8 = inlined_call_operand.vmem [shape: f32[1,4], index: 8, kind: input, shape index: {}]
  %s9 = inlined_call_operand.vmem [shape: f32[1,4], index: 9, kind: input, shape index: {}]
  %s10 = inlined_call_operand.vmem [shape: f32[2,12,12,4], index: 10, kind: output, shape index: {}]
  %s11 = sld [smem:[#allocation0]]
  $region50: #{upstep_forward.1} parent=0
    _
  %s13 = ssub.s32 1, %s11
  %s14 = scalar_select 0, %s13, %s11
  // Predicated region
  $region2: #{upstep_forward.1} parent=0 // pred_check
    _
  $region3: #{upstep_forward.1} parent=0 // pred_check_branch
    %16 = sbr.rel (0) target = $region5
  $region4: #{upstep_forward.1} parent=0 // pred_region
    _
  $region5: #{upstep_forward.1} parent=0 // pred_fallthru
    _
  // Predicated region
  $region6: #{upstep_forward.1} parent=0 // pred_check
    _
  $region7: #{upstep_forward.1} parent=0 // pred_check_branch
    %18 = sbr.rel (0) target = $region9
  $region8: #{upstep_forward.1} parent=0 // pred_region
    _
  $region9: #{upstep_forward.1} parent=0 // pred_fallthru
    _
  // Predicated region
  $region10: #{upstep_forward.1} parent=0 // pred_check
    _
  $region11: #{upstep_forward.1} parent=0 // pred_check_branch
    %20 = sbr.rel (0) target = $region13
  $region12: #{upstep_forward.1} parent=0 // pred_region
    _
  $region13: #{upstep_forward.1} parent=0 // pred_fallthru
    _
  // Predicated region
  $region14: #{upstep_forward.1} parent=0 // pred_check
    _
  $region15: #{upstep_forward.1} parent=0 // pred_check_branch
    %22 = sbr.rel (0) target = $region17
  $region16: #{upstep_forward.1} parent=0 // pred_region
    _
  $region17: #{upstep_forward.1} parent=0 // pred_fallthru
    _
  // Predicated region
  $region18: #{upstep_forward.1} parent=0 // pred_check
    _
  $region19: #{upstep_forward.1} parent=0 // pred_check_branch
    %24 = sbr.rel (0) target = $region21
  $region20: #{upstep_forward.1} parent=0 // pred_region
    _
  $region21: #{upstep_forward.1} parent=0 // pred_fallthru
    _
  // Predicated region
  $region22: #{upstep_forward.1} parent=0 // pred_check
    _
  $region23: #{upstep_forward.1} parent=0 // pred_check_branch
    %26 = sbr.rel (0) target = $region25
  $region24: #{upstep_forward.1} parent=0 // pred_region
    _
  $region25: #{upstep_forward.1} parent=0 // pred_fallthru
    _
  // Predicated region
  $region26: #{upstep_forward.1} parent=0 // pred_check
    _
  $region27: #{upstep_forward.1} parent=0 // pred_check_branch
    %28 = sbr.rel (0) target = $region29
  $region28: #{upstep_forward.1} parent=0 // pred_region
    _
  $region29: #{upstep_forward.1} parent=0 // pred_fallthru
    _
  // Predicated region
  $region30: #{upstep_forward.1} parent=0 // pred_check
    _
  $region31: #{upstep_forward.1} parent=0 // pred_check_branch
    %30 = sbr.rel (0) target = $region33
  $region32: #{upstep_forward.1} parent=0 // pred_region
    _
  $region33: #{upstep_forward.1} parent=0 // pred_fallthru
    _
  // Predicated region
  $region34: #{upstep_forward.1} parent=0 // pred_check
    _
  $region35: #{upstep_forward.1} parent=0 // pred_check_branch
    %32 = sbr.rel (0) target = $region37
  $region36: #{upstep_forward.1} parent=0 // pred_region
    _
  $region37: #{upstep_forward.1} parent=0 // pred_fallthru
    _
  // Predicated region
  $region38: #{upstep_forward.1} parent=0 // pred_check
    _
  $region39: #{upstep_forward.1} parent=0 // pred_check_branch
    %34 = sbr.rel (0) target = $region41
  $region40: #{upstep_forward.1} parent=0 // pred_region
    _
  $region41: #{upstep_forward.1} parent=0 // pred_fallthru
    _
  %v36 = vld [vmem:[%s1] sm:$0xf]
  %v37 = vld [vmem:[%s1 + $0x4] sm:$0xf]
  %v38 = vld [vmem:[%s1 + $0x8] sm:$0xf]
  %v39 = vld [vmem:[%s1 + $0xc] sm:$0xf]
  %v40 = vld [vmem:[%s1 + $0x10] sm:$0xf]
  %v41 = vld [vmem:[%s1 + $0x14] sm:$0xf]
  %v42 = vld [vmem:[%s1 + $0x18] sm:$0xf]
  %v43 = vld [vmem:[%s1 + $0x1c] sm:$0xf]
  %v44 = vld [vmem:[%s1 + $0x20] sm:$0xf]
  %v45 = vld [vmem:[%s1 + $0x24] sm:$0xf]
  %v46 = vld [vmem:[%s1 + $0x28] sm:$0xf]
  %v47 = vld [vmem:[%s1 + $0x2c] sm:$0xf]
  %v48 = vld [vmem:[%s1 + $0x30] sm:$0xf]
  %v49 = vld [vmem:[%s1 + $0x34] sm:$0xf]
  %v50 = vld [vmem:[%s1 + $0x38] sm:$0xf]
  %v51 = vld [vmem:[%s1 + $0x3c] sm:$0xf]
  %v52 = vld [vmem:[%s2] sm:$0xf]
  %v53 = vld [vmem:[%s3] sm:$0x1]
  %v55 = vlaneseq
  %v56 = vshrl.u32 %v55, 7
  %v57 = vsub.s32 0, %v56
  %v58 = vrot.slane %v53, %v57
  %v76 = vunpack.c.l.b16 %v36
  %v77 = vunpack.c.l.b16 %v37
  %v78 = vunpack.c.l.b16 %v38
  %v79 = vunpack.c.l.b16 %v39
  %v80 = vunpack.c.l.b16 %v40
  %v81 = vunpack.c.l.b16 %v41
  %v82 = vunpack.c.l.b16 %v42
  %v83 = vunpack.c.l.b16 %v43
  %v84 = vunpack.c.l.b16 %v44
  %v85 = vunpack.c.l.b16 %v45
  %v86 = vunpack.c.l.b16 %v46
  %v87 = vunpack.c.l.b16 %v47
  %v88 = vunpack.c.l.b16 %v48
  %v89 = vunpack.c.l.b16 %v49
  %v90 = vunpack.c.l.b16 %v50
  %v91 = vunpack.c.l.b16 %v51
  %v92 = vpack.c.b16 %v77, %v76
  %v93 = vpack.c.b16 %v79, %v78
  %v94 = vpack.c.b16 %v81, %v80
  %v95 = vpack.c.b16 %v83, %v82
  %v96 = vpack.c.b16 %v85, %v84
  %v97 = vpack.c.b16 %v87, %v86
  %v98 = vpack.c.b16 %v89, %v88
  %v99 = vpack.c.b16 %v91, %v90
  %vm100 = vcmask 64512
  %v102 = vsel %vm100, %v92, 0
  %v105 = vsel %vm100, %v93, 0
  %v108 = vsel %vm100, %v94, 0
  %v111 = vsel %vm100, %v95, 0
  %v114 = vsel %vm100, %v96, 0
  %v117 = vsel %vm100, %v97, 0
  %v120 = vsel %vm100, %v98, 0
  %v123 = vsel %vm100, %v99, 0
  %vm125 = vcmask 1043456
  %v127 = vsel %vm125, %v52, 0
  %129 = vmatprep.subr.bf16.mxu0 0
  %130 = vmatpush1.bf16.msra.mxu0 %v127
  %131 = vmatprep.subr.bf16.mxu0 0
  %132 = vmatpush1.bf16.msra.mxu0 0
  %133 = vmatprep.subr.bf16.mxu0 0
  %134 = vmatpush1.bf16.msra.mxu0 0
  %135 = vmatprep.subr.bf16.mxu0 0
  %136 = vmatpush1.bf16.msra.mxu0 0
  %137 = vmatprep.subr.bf16.mxu0 0
  %138 = vmatpush1.bf16.msra.mxu0 0
  %139 = vmatprep.subr.bf16.mxu0 0
  %140 = vmatpush1.bf16.msra.mxu0 0
  %141 = vmatprep.subr.bf16.mxu0 0
  %142 = vmatpush1.bf16.msra.mxu0 0
  %143 = vmatprep.subr.bf16.mxu0 0
  %144 = vmatpush1.bf16.msra.mxu0 0
  %145 = vmatprep.subr.bf16.mxu0 0
  %146 = vmatpush1.bf16.msra.mxu0 0
  %147 = vmatprep.subr.bf16.mxu0 0
  %148 = vmatpush1.bf16.msra.mxu0 0
  %149 = vmatprep.subr.bf16.mxu0 0
  %150 = vmatpush1.bf16.msra.mxu0 0
  %151 = vmatprep.subr.bf16.mxu0 0
  %152 = vmatpush1.bf16.msra.mxu0 0
  %153 = vmatprep.subr.bf16.mxu0 0
  %154 = vmatpush1.bf16.msra.mxu0 0
  %155 = vmatprep.subr.bf16.mxu0 0
  %156 = vmatpush1.bf16.msra.mxu0 0
  %157 = vmatprep.subr.bf16.mxu0 0
  %158 = vmatpush1.bf16.msra.mxu0 0
  %159 = vmatprep.subr.bf16.mxu0 0
  %160 = vmatpush1.bf16.msra.mxu0 0
  %161 = vmatprep.mubr.bf16.mxu0 0
  %162 = vmatmul.mubr.bf16.gmra.mrb[0].mxu0 %v102
  %v163 = vpop.f32.mrb[0].mxu0
  %v164 = vadd.f32 %v58, %v163
  %v165 = vpop.f32.mrb[0].mxu0
  %v166 = vpop.f32.mrb[0].mxu0
  %v167 = vadd.f32 %v58, %v166
  %v168 = vpop.f32.mrb[0].mxu0
  %169 = vmatprep.mubr.bf16.mxu0 0
  %170 = vmatmul.mubr.bf16.gmra.mrb[0].mxu0 %v105
  %v171 = vpop.f32.mrb[0].mxu0
  %v172 = vadd.f32 %v58, %v171
  %v173 = vpop.f32.mrb[0].mxu0
  %v174 = vpop.f32.mrb[0].mxu0
  %v175 = vadd.f32 %v58, %v174
  %v176 = vpop.f32.mrb[0].mxu0
  %177 = vmatprep.mubr.bf16.mxu0 0
  %178 = vmatmul.mubr.bf16.gmra.mrb[0].mxu0 %v108
  %v179 = vpop.f32.mrb[0].mxu0
  %v180 = vadd.f32 %v58, %v179
  %v181 = vpop.f32.mrb[0].mxu0
  %v182 = vpop.f32.mrb[0].mxu0
  %v183 = vadd.f32 %v58, %v182
  %v184 = vpop.f32.mrb[0].mxu0
  %185 = vmatprep.mubr.bf16.mxu0 0
  %186 = vmatmul.mubr.bf16.gmra.mrb[0].mxu0 %v111
  %v187 = vpop.f32.mrb[0].mxu0
  %v188 = vadd.f32 %v58, %v187
  %v189 = vpop.f32.mrb[0].mxu0
  %v190 = vpop.f32.mrb[0].mxu0
  %v191 = vadd.f32 %v58, %v190
  %v192 = vpop.f32.mrb[0].mxu0
  %193 = vmatprep.mubr.bf16.mxu0 0
  %194 = vmatmul.mubr.bf16.gmra.mrb[0].mxu0 %v114
  %v195 = vpop.f32.mrb[0].mxu0
  %v196 = vadd.f32 %v58, %v195
  %v197 = vpop.f32.mrb[0].mxu0
  %v198 = vpop.f32.mrb[0].mxu0
  %v199 = vadd.f32 %v58, %v198
  %v200 = vpop.f32.mrb[0].mxu0
  %201 = vmatprep.mubr.bf16.mxu0 0
  %202 = vmatmul.mubr.bf16.gmra.mrb[0].mxu0 %v117
  %v203 = vpop.f32.mrb[0].mxu0
  %v204 = vadd.f32 %v58, %v203
  %v205 = vpop.f32.mrb[0].mxu0
  %v206 = vpop.f32.mrb[0].mxu0
  %v207 = vadd.f32 %v58, %v206
  %v208 = vpop.f32.mrb[0].mxu0
  %209 = vmatprep.mubr.bf16.mxu0 0
  %210 = vmatmul.mubr.bf16.gmra.mrb[0].mxu0 %v120
  %v211 = vpop.f32.mrb[0].mxu0
  %v212 = vadd.f32 %v58, %v211
  %v213 = vpop.f32.mrb[0].mxu0
  %v214 = vpop.f32.mrb[0].mxu0
  %v215 = vadd.f32 %v58, %v214
  %v216 = vpop.f32.mrb[0].mxu0
  %217 = vmatprep.mubr.bf16.mxu0 0
  %218 = vmatmul.mubr.bf16.gmra.mrb[0].mxu0 %v123
  %v219 = vpop.f32.mrb[0].mxu0
  %v220 = vadd.f32 %v58, %v219
  %v221 = vpop.f32.mrb[0].mxu0
  %v222 = vpop.f32.mrb[0].mxu0
  %v223 = vadd.f32 %v58, %v222
  %v224 = vpop.f32.mrb[0].mxu0
  %225 = vdwg.mxu0
  %v226 = vpack.c.bf16 %v167, %v164
  %v227 = vpack.c.bf16 %v175, %v172
  %v228 = vpack.c.bf16 %v183, %v180
  %v229 = vpack.c.bf16 %v191, %v188
  %v230 = vpack.c.bf16 %v199, %v196
  %v231 = vpack.c.bf16 %v207, %v204
  %v232 = vpack.c.bf16 %v215, %v212
  %v233 = vpack.c.bf16 %v223, %v220
  %v242 = vcombine.high %v226, %v226
  %v244 = vunpack.c.l.s4 1966171168
  %v245 = vunpack.c.0.s8 %v244
  %v246 = vlaneseq
  %v247 = vshrl.u32 %v246, 7
  %v248 = vsub.s32 %v245, %v247
  %v249 = vrot.slane %v226, %v248
  %v251 = vunpack.c.l.s4 1966171168
  %v252 = vunpack.c.0.s8 %v251
  %v253 = vlaneseq
  %v254 = vshrl.u32 %v253, 7
  %v255 = vsub.s32 %v252, %v254
  %v256 = vrot.slane %v242, %v255
  %v257 = vcombine.high %v249, %v249
  %v258 = vcombine.high %v256, %v256
  %v260 = vunpack.c.l.s4 1966171168
  %v261 = vunpack.c.0.s8 %v260
  %v262 = vlaneseq
  %v263 = vshrl.u32 %v262, 7
  %v264 = vsub.s32 %v261, %v263
  %v265 = vrot.slane %v249, %v264
  %v267 = vunpack.c.l.s4 1966171168
  %v268 = vunpack.c.0.s8 %v267
  %v269 = vlaneseq
  %v270 = vshrl.u32 %v269, 7
  %v271 = vsub.s32 %v268, %v270
  %v272 = vrot.slane %v256, %v271
  %v274 = vunpack.c.l.s4 1966171168
  %v275 = vunpack.c.0.s8 %v274
  %v276 = vlaneseq
  %v277 = vshrl.u32 %v276, 7
  %v278 = vsub.s32 %v275, %v277
  %v279 = vrot.slane %v257, %v278
  %v281 = vunpack.c.l.s4 1966171168
  %v282 = vunpack.c.0.s8 %v281
  %v283 = vlaneseq
  %v284 = vshrl.u32 %v283, 7
  %v285 = vsub.s32 %v282, %v284
  %v286 = vrot.slane %v258, %v285
  %v287 = vcombine.high %v265, %v265
  %v288 = vcombine.high %v272, %v272
  %v289 = vcombine.high %v279, %v279
  %v290 = vcombine.high %v286, %v286
  %v291 = vcombine.high %v227, %v227
  %v293 = vunpack.c.l.s4 1966171168
  %v294 = vunpack.c.0.s8 %v293
  %v295 = vlaneseq
  %v296 = vshrl.u32 %v295, 7
  %v297 = vsub.s32 %v294, %v296
  %v298 = vrot.slane %v227, %v297
  %v300 = vunpack.c.l.s4 1966171168
  %v301 = vunpack.c.0.s8 %v300
  %v302 = vlaneseq
  %v303 = vshrl.u32 %v302, 7
  %v304 = vsub.s32 %v301, %v303
  %v305 = vrot.slane %v291, %v304
  %v306 = vcombine.high %v298, %v298
  %v307 = vcombine.high %v305, %v305
  %v309 = vunpack.c.l.s4 1966171168
  %v310 = vunpack.c.0.s8 %v309
  %v311 = vlaneseq
  %v312 = vshrl.u32 %v311, 7
  %v313 = vsub.s32 %v310, %v312
  %v314 = vrot.slane %v298, %v313
  %v316 = vunpack.c.l.s4 1966171168
  %v317 = vunpack.c.0.s8 %v316
  %v318 = vlaneseq
  %v319 = vshrl.u32 %v318, 7
  %v320 = vsub.s32 %v317, %v319
  %v321 = vrot.slane %v305, %v320
  %v323 = vunpack.c.l.s4 1966171168
  %v324 = vunpack.c.0.s8 %v323
  %v325 = vlaneseq
  %v326 = vshrl.u32 %v325, 7
  %v327 = vsub.s32 %v324, %v326
  %v328 = vrot.slane %v306, %v327
  %v330 = vunpack.c.l.s4 1966171168
  %v331 = vunpack.c.0.s8 %v330
  %v332 = vlaneseq
  %v333 = vshrl.u32 %v332, 7
  %v334 = vsub.s32 %v331, %v333
  %v335 = vrot.slane %v307, %v334
  %v336 = vcombine.high %v314, %v314
  %v337 = vcombine.high %v321, %v321
  %v338 = vcombine.high %v328, %v328
  %v339 = vcombine.high %v335, %v335
  %v340 = vcombine.high %v228, %v228
  %v342 = vunpack.c.l.s4 1966171168
  %v343 = vunpack.c.0.s8 %v342
  %v344 = vlaneseq
  %v345 = vshrl.u32 %v344, 7
  %v346 = vsub.s32 %v343, %v345
  %v347 = vrot.slane %v228, %v346
  %v349 = vunpack.c.l.s4 1966171168
  %v350 = vunpack.c.0.s8 %v349
  %v351 = vlaneseq
  %v352 = vshrl.u32 %v351, 7
  %v353 = vsub.s32 %v350, %v352
  %v354 = vrot.slane %v340, %v353
  %v355 = vcombine.high %v347, %v347
  %v356 = vcombine.high %v354, %v354
  %v358 = vunpack.c.l.s4 1966171168
  %v359 = vunpack.c.0.s8 %v358
  %v360 = vlaneseq
  %v361 = vshrl.u32 %v360, 7
  %v362 = vsub.s32 %v359, %v361
  %v363 = vrot.slane %v347, %v362
  %v365 = vunpack.c.l.s4 1966171168
  %v366 = vunpack.c.0.s8 %v365
  %v367 = vlaneseq
  %v368 = vshrl.u32 %v367, 7
  %v369 = vsub.s32 %v366, %v368
  %v370 = vrot.slane %v354, %v369
  %v372 = vunpack.c.l.s4 1966171168
  %v373 = vunpack.c.0.s8 %v372
  %v374 = vlaneseq
  %v375 = vshrl.u32 %v374, 7
  %v376 = vsub.s32 %v373, %v375
  %v377 = vrot.slane %v355, %v376
  %v379 = vunpack.c.l.s4 1966171168
  %v380 = vunpack.c.0.s8 %v379
  %v381 = vlaneseq
  %v382 = vshrl.u32 %v381, 7
  %v383 = vsub.s32 %v380, %v382
  %v384 = vrot.slane %v356, %v383
  %v385 = vcombine.high %v363, %v363
  %v386 = vcombine.high %v370, %v370
  %v387 = vcombine.high %v377, %v377
  %v388 = vcombine.high %v384, %v384
  %v389 = vcombine.high %v229, %v229
  %v391 = vunpack.c.l.s4 1966171168
  %v392 = vunpack.c.0.s8 %v391
  %v393 = vlaneseq
  %v394 = vshrl.u32 %v393, 7
  %v395 = vsub.s32 %v392, %v394
  %v396 = vrot.slane %v229, %v395
  %v398 = vunpack.c.l.s4 1966171168
  %v399 = vunpack.c.0.s8 %v398
  %v400 = vlaneseq
  %v401 = vshrl.u32 %v400, 7
  %v402 = vsub.s32 %v399, %v401
  %v403 = vrot.slane %v389, %v402
  %v404 = vcombine.high %v396, %v396
  %v405 = vcombine.high %v403, %v403
  %v407 = vunpack.c.l.s4 1966171168
  %v408 = vunpack.c.0.s8 %v407
  %v409 = vlaneseq
  %v410 = vshrl.u32 %v409, 7
  %v411 = vsub.s32 %v408, %v410
  %v412 = vrot.slane %v396, %v411
  %v414 = vunpack.c.l.s4 1966171168
  %v415 = vunpack.c.0.s8 %v414
  %v416 = vlaneseq
  %v417 = vshrl.u32 %v416, 7
  %v418 = vsub.s32 %v415, %v417
  %v419 = vrot.slane %v403, %v418
  %v421 = vunpack.c.l.s4 1966171168
  %v422 = vunpack.c.0.s8 %v421
  %v423 = vlaneseq
  %v424 = vshrl.u32 %v423, 7
  %v425 = vsub.s32 %v422, %v424
  %v426 = vrot.slane %v404, %v425
  %v428 = vunpack.c.l.s4 1966171168
  %v429 = vunpack.c.0.s8 %v428
  %v430 = vlaneseq
  %v431 = vshrl.u32 %v430, 7
  %v432 = vsub.s32 %v429, %v431
  %v433 = vrot.slane %v405, %v432
  %v434 = vcombine.high %v412, %v412
  %v435 = vcombine.high %v419, %v419
  %v436 = vcombine.high %v426, %v426
  %v437 = vcombine.high %v433, %v433
  %v438 = vcombine.high %v230, %v230
  %v440 = vunpack.c.l.s4 1966171168
  %v441 = vunpack.c.0.s8 %v440
  %v442 = vlaneseq
  %v443 = vshrl.u32 %v442, 7
  %v444 = vsub.s32 %v441, %v443
  %v445 = vrot.slane %v230, %v444
  %v447 = vunpack.c.l.s4 1966171168
  %v448 = vunpack.c.0.s8 %v447
  %v449 = vlaneseq
  %v450 = vshrl.u32 %v449, 7
  %v451 = vsub.s32 %v448, %v450
  %v452 = vrot.slane %v438, %v451
  %v453 = vcombine.high %v445, %v445
  %v454 = vcombine.high %v452, %v452
  %v456 = vunpack.c.l.s4 1966171168
  %v457 = vunpack.c.0.s8 %v456
  %v458 = vlaneseq
  %v459 = vshrl.u32 %v458, 7
  %v460 = vsub.s32 %v457, %v459
  %v461 = vrot.slane %v445, %v460
  %v463 = vunpack.c.l.s4 1966171168
  %v464 = vunpack.c.0.s8 %v463
  %v465 = vlaneseq
  %v466 = vshrl.u32 %v465, 7
  %v467 = vsub.s32 %v464, %v466
  %v468 = vrot.slane %v452, %v467
  %v470 = vunpack.c.l.s4 1966171168
  %v471 = vunpack.c.0.s8 %v470
  %v472 = vlaneseq
  %v473 = vshrl.u32 %v472, 7
  %v474 = vsub.s32 %v471, %v473
  %v475 = vrot.slane %v453, %v474
  %v477 = vunpack.c.l.s4 1966171168
  %v478 = vunpack.c.0.s8 %v477
  %v479 = vlaneseq
  %v480 = vshrl.u32 %v479, 7
  %v481 = vsub.s32 %v478, %v480
  %v482 = vrot.slane %v454, %v481
  %v483 = vcombine.high %v461, %v461
  %v484 = vcombine.high %v468, %v468
  %v485 = vcombine.high %v475, %v475
  %v486 = vcombine.high %v482, %v482
  %v487 = vcombine.high %v231, %v231
  %v489 = vunpack.c.l.s4 1966171168
  %v490 = vunpack.c.0.s8 %v489
  %v491 = vlaneseq
  %v492 = vshrl.u32 %v491, 7
  %v493 = vsub.s32 %v490, %v492
  %v494 = vrot.slane %v231, %v493
  %v496 = vunpack.c.l.s4 1966171168
  %v497 = vunpack.c.0.s8 %v496
  %v498 = vlaneseq
  %v499 = vshrl.u32 %v498, 7
  %v500 = vsub.s32 %v497, %v499
  %v501 = vrot.slane %v487, %v500
  %v502 = vcombine.high %v494, %v494
  %v503 = vcombine.high %v501, %v501
  %v505 = vunpack.c.l.s4 1966171168
  %v506 = vunpack.c.0.s8 %v505
  %v507 = vlaneseq
  %v508 = vshrl.u32 %v507, 7
  %v509 = vsub.s32 %v506, %v508
  %v510 = vrot.slane %v494, %v509
  %v512 = vunpack.c.l.s4 1966171168
  %v513 = vunpack.c.0.s8 %v512
  %v514 = vlaneseq
  %v515 = vshrl.u32 %v514, 7
  %v516 = vsub.s32 %v513, %v515
  %v517 = vrot.slane %v501, %v516
  %v519 = vunpack.c.l.s4 1966171168
  %v520 = vunpack.c.0.s8 %v519
  %v521 = vlaneseq
  %v522 = vshrl.u32 %v521, 7
  %v523 = vsub.s32 %v520, %v522
  %v524 = vrot.slane %v502, %v523
  %v526 = vunpack.c.l.s4 1966171168
  %v527 = vunpack.c.0.s8 %v526
  %v528 = vlaneseq
  %v529 = vshrl.u32 %v528, 7
  %v530 = vsub.s32 %v527, %v529
  %v531 = vrot.slane %v503, %v530
  %v532 = vcombine.high %v510, %v510
  %v533 = vcombine.high %v517, %v517
  %v534 = vcombine.high %v524, %v524
  %v535 = vcombine.high %v531, %v531
  %v536 = vcombine.high %v232, %v232
  %v538 = vunpack.c.l.s4 1966171168
  %v539 = vunpack.c.0.s8 %v538
  %v540 = vlaneseq
  %v541 = vshrl.u32 %v540, 7
  %v542 = vsub.s32 %v539, %v541
  %v543 = vrot.slane %v232, %v542
  %v545 = vunpack.c.l.s4 1966171168
  %v546 = vunpack.c.0.s8 %v545
  %v547 = vlaneseq
  %v548 = vshrl.u32 %v547, 7
  %v549 = vsub.s32 %v546, %v548
  %v550 = vrot.slane %v536, %v549
  %v551 = vcombine.high %v543, %v543
  %v552 = vcombine.high %v550, %v550
  %v554 = vunpack.c.l.s4 1966171168
  %v555 = vunpack.c.0.s8 %v554
  %v556 = vlaneseq
  %v557 = vshrl.u32 %v556, 7
  %v558 = vsub.s32 %v555, %v557
  %v559 = vrot.slane %v543, %v558
  %v561 = vunpack.c.l.s4 1966171168
  %v562 = vunpack.c.0.s8 %v561
  %v563 = vlaneseq
  %v564 = vshrl.u32 %v563, 7
  %v565 = vsub.s32 %v562, %v564
  %v566 = vrot.slane %v550, %v565
  %v568 = vunpack.c.l.s4 1966171168
  %v569 = vunpack.c.0.s8 %v568
  %v570 = vlaneseq
  %v571 = vshrl.u32 %v570, 7
  %v572 = vsub.s32 %v569, %v571
  %v573 = vrot.slane %v551, %v572
  %v575 = vunpack.c.l.s4 1966171168
  %v576 = vunpack.c.0.s8 %v575
  %v577 = vlaneseq
  %v578 = vshrl.u32 %v577, 7
  %v579 = vsub.s32 %v576, %v578
  %v580 = vrot.slane %v552, %v579
  %v581 = vcombine.high %v559, %v559
  %v582 = vcombine.high %v566, %v566
  %v583 = vcombine.high %v573, %v573
  %v584 = vcombine.high %v580, %v580
  %v585 = vcombine.high %v233, %v233
  %v587 = vunpack.c.l.s4 1966171168
  %v588 = vunpack.c.0.s8 %v587
  %v589 = vlaneseq
  %v590 = vshrl.u32 %v589, 7
  %v591 = vsub.s32 %v588, %v590
  %v592 = vrot.slane %v233, %v591
  %v594 = vunpack.c.l.s4 1966171168
  %v595 = vunpack.c.0.s8 %v594
  %v596 = vlaneseq
  %v597 = vshrl.u32 %v596, 7
  %v598 = vsub.s32 %v595, %v597
  %v599 = vrot.slane %v585, %v598
  %v600 = vcombine.high %v592, %v592
  %v601 = vcombine.high %v599, %v599
  %v603 = vunpack.c.l.s4 1966171168
  %v604 = vunpack.c.0.s8 %v603
  %v605 = vlaneseq
  %v606 = vshrl.u32 %v605, 7
  %v607 = vsub.s32 %v604, %v606
  %v608 = vrot.slane %v592, %v607
  %v610 = vunpack.c.l.s4 1966171168
  %v611 = vunpack.c.0.s8 %v610
  %v612 = vlaneseq
  %v613 = vshrl.u32 %v612, 7
  %v614 = vsub.s32 %v611, %v613
  %v615 = vrot.slane %v599, %v614
  %v617 = vunpack.c.l.s4 1966171168
  %v618 = vunpack.c.0.s8 %v617
  %v619 = vlaneseq
  %v620 = vshrl.u32 %v619, 7
  %v621 = vsub.s32 %v618, %v620
  %v622 = vrot.slane %v600, %v621
  %v624 = vunpack.c.l.s4 1966171168
  %v625 = vunpack.c.0.s8 %v624
  %v626 = vlaneseq
  %v627 = vshrl.u32 %v626, 7
  %v628 = vsub.s32 %v625, %v627
  %v629 = vrot.slane %v601, %v628
  %v630 = vcombine.high %v608, %v608
  %v631 = vcombine.high %v615, %v615
  %v632 = vcombine.high %v622, %v622
  %v633 = vcombine.high %v629, %v629
  %v634 = vunpack.i.l.s16 %v265
  %v635 = vunpack.i.h.s16 %v265
  %v636 = vunpack.i.l.s16 %v279
  %v637 = vunpack.i.h.s16 %v279
  %v638 = vunpack.i.l.s16 %v287
  %v639 = vunpack.i.h.s16 %v287
  %v640 = vunpack.i.l.s16 %v289
  %v641 = vunpack.i.h.s16 %v289
  %v642 = vunpack.i.l.s16 %v272
  %v643 = vunpack.i.h.s16 %v272
  %v644 = vunpack.i.l.s16 %v286
  %v645 = vunpack.i.h.s16 %v286
  %v646 = vunpack.i.l.s16 %v288
  %v647 = vunpack.i.h.s16 %v288
  %v648 = vunpack.i.l.s16 %v290
  %v649 = vunpack.i.h.s16 %v290
  %v650 = vunpack.i.l.s16 %v314
  %v651 = vunpack.i.h.s16 %v314
  %v652 = vunpack.i.l.s16 %v328
  %v653 = vunpack.i.h.s16 %v328
  %v654 = vunpack.i.l.s16 %v336
  %v655 = vunpack.i.h.s16 %v336
  %v656 = vunpack.i.l.s16 %v338
  %v657 = vunpack.i.h.s16 %v338
  %v658 = vunpack.i.l.s16 %v321
  %v659 = vunpack.i.h.s16 %v321
  %v660 = vunpack.i.l.s16 %v335
  %v661 = vunpack.i.h.s16 %v335
  %v662 = vunpack.i.l.s16 %v337
  %v663 = vunpack.i.h.s16 %v337
  %v664 = vunpack.i.l.s16 %v339
  %v665 = vunpack.i.h.s16 %v339
  %v666 = vunpack.i.l.s16 %v363
  %v667 = vunpack.i.h.s16 %v363
  %v668 = vunpack.i.l.s16 %v377
  %v669 = vunpack.i.h.s16 %v377
  %v670 = vunpack.i.l.s16 %v385
  %v671 = vunpack.i.h.s16 %v385
  %v672 = vunpack.i.l.s16 %v387
  %v673 = vunpack.i.h.s16 %v387
  %v674 = vunpack.i.l.s16 %v370
  %v675 = vunpack.i.h.s16 %v370
  %v676 = vunpack.i.l.s16 %v384
  %v677 = vunpack.i.h.s16 %v384
  %v678 = vunpack.i.l.s16 %v386
  %v679 = vunpack.i.h.s16 %v386
  %v680 = vunpack.i.l.s16 %v388
  %v681 = vunpack.i.h.s16 %v388
  %v682 = vunpack.i.l.s16 %v412
  %v683 = vunpack.i.h.s16 %v412
  %v684 = vunpack.i.l.s16 %v426
  %v685 = vunpack.i.h.s16 %v426
  %v686 = vunpack.i.l.s16 %v434
  %v687 = vunpack.i.h.s16 %v434
  %v688 = vunpack.i.l.s16 %v436
  %v689 = vunpack.i.h.s16 %v436
  %v690 = vunpack.i.l.s16 %v419
  %v691 = vunpack.i.h.s16 %v419
  %v692 = vunpack.i.l.s16 %v433
  %v693 = vunpack.i.h.s16 %v433
  %v694 = vunpack.i.l.s16 %v435
  %v695 = vunpack.i.h.s16 %v435
  %v696 = vunpack.i.l.s16 %v437
  %v697 = vunpack.i.h.s16 %v437
  %v698 = vunpack.i.l.s16 %v461
  %v699 = vunpack.i.h.s16 %v461
  %v700 = vunpack.i.l.s16 %v475
  %v701 = vunpack.i.h.s16 %v475
  %v702 = vunpack.i.l.s16 %v483
  %v703 = vunpack.i.h.s16 %v483
  %v704 = vunpack.i.l.s16 %v485
  %v705 = vunpack.i.h.s16 %v485
  %v706 = vunpack.i.l.s16 %v468
  %v707 = vunpack.i.h.s16 %v468
  %v708 = vunpack.i.l.s16 %v482
  %v709 = vunpack.i.h.s16 %v482
  %v710 = vunpack.i.l.s16 %v484
  %v711 = vunpack.i.h.s16 %v484
  %v712 = vunpack.i.l.s16 %v486
  %v713 = vunpack.i.h.s16 %v486
  %v714 = vunpack.i.l.s16 %v510
  %v715 = vunpack.i.h.s16 %v510
  %v716 = vunpack.i.l.s16 %v524
  %v717 = vunpack.i.h.s16 %v524
  %v718 = vunpack.i.l.s16 %v532
  %v719 = vunpack.i.h.s16 %v532
  %v720 = vunpack.i.l.s16 %v534
  %v721 = vunpack.i.h.s16 %v534
  %v722 = vunpack.i.l.s16 %v517
  %v723 = vunpack.i.h.s16 %v517
  %v724 = vunpack.i.l.s16 %v531
  %v725 = vunpack.i.h.s16 %v531
  %v726 = vunpack.i.l.s16 %v533
  %v727 = vunpack.i.h.s16 %v533
  %v728 = vunpack.i.l.s16 %v535
  %v729 = vunpack.i.h.s16 %v535
  %v730 = vunpack.i.l.s16 %v559
  %v731 = vunpack.i.h.s16 %v559
  %v732 = vunpack.i.l.s16 %v573
  %v733 = vunpack.i.h.s16 %v573
  %v734 = vunpack.i.l.s16 %v581
  %v735 = vunpack.i.h.s16 %v581
  %v736 = vunpack.i.l.s16 %v583
  %v737 = vunpack.i.h.s16 %v583
  %v738 = vunpack.i.l.s16 %v566
  %v739 = vunpack.i.h.s16 %v566
  %v740 = vunpack.i.l.s16 %v580
  %v741 = vunpack.i.h.s16 %v580
  %v742 = vunpack.i.l.s16 %v582
  %v743 = vunpack.i.h.s16 %v582
  %v744 = vunpack.i.l.s16 %v584
  %v745 = vunpack.i.h.s16 %v584
  %v746 = vunpack.i.l.s16 %v608
  %v747 = vunpack.i.h.s16 %v608
  %v748 = vunpack.i.l.s16 %v622
  %v749 = vunpack.i.h.s16 %v622
  %v750 = vunpack.i.l.s16 %v630
  %v751 = vunpack.i.h.s16 %v630
  %v752 = vunpack.i.l.s16 %v632
  %v753 = vunpack.i.h.s16 %v632
  %v754 = vunpack.i.l.s16 %v615
  %v755 = vunpack.i.h.s16 %v615
  %v756 = vunpack.i.l.s16 %v629
  %v757 = vunpack.i.h.s16 %v629
  %v758 = vunpack.i.l.s16 %v631
  %v759 = vunpack.i.h.s16 %v631
  %v760 = vunpack.i.l.s16 %v633
  %v761 = vunpack.i.h.s16 %v633
  %v762 = vpack.i.b16 %v634, %v634
  %v763 = vpack.i.b16 %v635, %v635
  %v764 = vpack.i.b16 %v636, %v636
  %v765 = vpack.i.b16 %v637, %v637
  %v766 = vpack.i.b16 %v638, %v638
  %v767 = vpack.i.b16 %v639, %v639
  %v768 = vpack.i.b16 %v640, %v640
  %v769 = vpack.i.b16 %v641, %v641
  %v770 = vpack.i.b16 %v642, %v642
  %v771 = vpack.i.b16 %v643, %v643
  %v772 = vpack.i.b16 %v644, %v644
  %v773 = vpack.i.b16 %v645, %v645
  %v774 = vpack.i.b16 %v646, %v646
  %v775 = vpack.i.b16 %v647, %v647
  %v776 = vpack.i.b16 %v648, %v648
  %v777 = vpack.i.b16 %v649, %v649
  %v778 = vpack.i.b16 %v650, %v650
  %v779 = vpack.i.b16 %v651, %v651
  %v780 = vpack.i.b16 %v652, %v652
  %v781 = vpack.i.b16 %v653, %v653
  %v782 = vpack.i.b16 %v654, %v654
  %v783 = vpack.i.b16 %v655, %v655
  %v784 = vpack.i.b16 %v656, %v656
  %v785 = vpack.i.b16 %v657, %v657
  %v786 = vpack.i.b16 %v658, %v658
  %v787 = vpack.i.b16 %v659, %v659
  %v788 = vpack.i.b16 %v660, %v660
  %v789 = vpack.i.b16 %v661, %v661
  %v790 = vpack.i.b16 %v662, %v662
  %v791 = vpack.i.b16 %v663, %v663
  %v792 = vpack.i.b16 %v664, %v664
  %v793 = vpack.i.b16 %v665, %v665
  %v794 = vpack.i.b16 %v666, %v666
  %v795 = vpack.i.b16 %v667, %v667
  %v796 = vpack.i.b16 %v668, %v668
  %v797 = vpack.i.b16 %v669, %v669
  %v798 = vpack.i.b16 %v670, %v670
  %v799 = vpack.i.b16 %v671, %v671
  %v800 = vpack.i.b16 %v672, %v672
  %v801 = vpack.i.b16 %v673, %v673
  %v802 = vpack.i.b16 %v674, %v674
  %v803 = vpack.i.b16 %v675, %v675
  %v804 = vpack.i.b16 %v676, %v676
  %v805 = vpack.i.b16 %v677, %v677
  %v806 = vpack.i.b16 %v678, %v678
  %v807 = vpack.i.b16 %v679, %v679
  %v808 = vpack.i.b16 %v680, %v680
  %v809 = vpack.i.b16 %v681, %v681
  %v810 = vpack.i.b16 %v682, %v682
  %v811 = vpack.i.b16 %v683, %v683
  %v812 = vpack.i.b16 %v684, %v684
  %v813 = vpack.i.b16 %v685, %v685
  %v814 = vpack.i.b16 %v686, %v686
  %v815 = vpack.i.b16 %v687, %v687
  %v816 = vpack.i.b16 %v688, %v688
  %v817 = vpack.i.b16 %v689, %v689
  %v818 = vpack.i.b16 %v690, %v690
  %v819 = vpack.i.b16 %v691, %v691
  %v820 = vpack.i.b16 %v692, %v692
  %v821 = vpack.i.b16 %v693, %v693
  %v822 = vpack.i.b16 %v694, %v694
  %v823 = vpack.i.b16 %v695, %v695
  %v824 = vpack.i.b16 %v696, %v696
  %v825 = vpack.i.b16 %v697, %v697
  %v826 = vpack.i.b16 %v698, %v698
  %v827 = vpack.i.b16 %v699, %v699
  %v828 = vpack.i.b16 %v700, %v700
  %v829 = vpack.i.b16 %v701, %v701
  %v830 = vpack.i.b16 %v702, %v702
  %v831 = vpack.i.b16 %v703, %v703
  %v832 = vpack.i.b16 %v704, %v704
  %v833 = vpack.i.b16 %v705, %v705
  %v834 = vpack.i.b16 %v706, %v706
  %v835 = vpack.i.b16 %v707, %v707
  %v836 = vpack.i.b16 %v708, %v708
  %v837 = vpack.i.b16 %v709, %v709
  %v838 = vpack.i.b16 %v710, %v710
  %v839 = vpack.i.b16 %v711, %v711
  %v840 = vpack.i.b16 %v712, %v712
  %v841 = vpack.i.b16 %v713, %v713
  %v842 = vpack.i.b16 %v714, %v714
  %v843 = vpack.i.b16 %v715, %v715
  %v844 = vpack.i.b16 %v716, %v716
  %v845 = vpack.i.b16 %v717, %v717
  %v846 = vpack.i.b16 %v718, %v718
  %v847 = vpack.i.b16 %v719, %v719
  %v848 = vpack.i.b16 %v720, %v720
  %v849 = vpack.i.b16 %v721, %v721
  %v850 = vpack.i.b16 %v722, %v722
  %v851 = vpack.i.b16 %v723, %v723
  %v852 = vpack.i.b16 %v724, %v724
  %v853 = vpack.i.b16 %v725, %v725
  %v854 = vpack.i.b16 %v726, %v726
  %v855 = vpack.i.b16 %v727, %v727
  %v856 = vpack.i.b16 %v728, %v728
  %v857 = vpack.i.b16 %v729, %v729
  %v858 = vpack.i.b16 %v730, %v730
  %v859 = vpack.i.b16 %v731, %v731
  %v860 = vpack.i.b16 %v732, %v732
  %v861 = vpack.i.b16 %v733, %v733
  %v862 = vpack.i.b16 %v734, %v734
  %v863 = vpack.i.b16 %v735, %v735
  %v864 = vpack.i.b16 %v736, %v736
  %v865 = vpack.i.b16 %v737, %v737
  %v866 = vpack.i.b16 %v738, %v738
  %v867 = vpack.i.b16 %v739, %v739
  %v868 = vpack.i.b16 %v740, %v740
  %v869 = vpack.i.b16 %v741, %v741
  %v870 = vpack.i.b16 %v742, %v742
  %v871 = vpack.i.b16 %v743, %v743
  %v872 = vpack.i.b16 %v744, %v744
  %v873 = vpack.i.b16 %v745, %v745
  %v874 = vpack.i.b16 %v746, %v746
  %v875 = vpack.i.b16 %v747, %v747
  %v876 = vpack.i.b16 %v748, %v748
  %v877 = vpack.i.b16 %v749, %v749
  %v878 = vpack.i.b16 %v750, %v750
  %v879 = vpack.i.b16 %v751, %v751
  %v880 = vpack.i.b16 %v752, %v752
  %v881 = vpack.i.b16 %v753, %v753
  %v882 = vpack.i.b16 %v754, %v754
  %v883 = vpack.i.b16 %v755, %v755
  %v884 = vpack.i.b16 %v756, %v756
  %v885 = vpack.i.b16 %v757, %v757
  %v886 = vpack.i.b16 %v758, %v758
  %v887 = vpack.i.b16 %v759, %v759
  %v888 = vpack.i.b16 %v760, %v760
  %v889 = vpack.i.b16 %v761, %v761
  %v890 = vlaneseq
  %v891 = vshrl.u32 %v890, 7
  %v892 = vsub.s32 0, %v891
  %v893 = vrot.slane %v762, %v892
  %v894 = vlaneseq
  %v895 = vshrl.u32 %v894, 7
  %v896 = vsub.s32 0, %v895
  %v897 = vrot.slane %v763, %v896
  %v898 = vlaneseq
  %v899 = vshrl.u32 %v898, 7
  %v900 = vsub.s32 0, %v899
  %v901 = vrot.slane %v764, %v900
  %v902 = vlaneseq
  %v903 = vshrl.u32 %v902, 7
  %v904 = vsub.s32 0, %v903
  %v905 = vrot.slane %v765, %v904
  %v906 = vlaneseq
  %v907 = vshrl.u32 %v906, 7
  %v908 = vsub.s32 0, %v907
  %v909 = vrot.slane %v766, %v908
  %v910 = vlaneseq
  %v911 = vshrl.u32 %v910, 7
  %v912 = vsub.s32 0, %v911
  %v913 = vrot.slane %v767, %v912
  %v914 = vlaneseq
  %v915 = vshrl.u32 %v914, 7
  %v916 = vsub.s32 0, %v915
  %v917 = vrot.slane %v768, %v916
  %v918 = vlaneseq
  %v919 = vshrl.u32 %v918, 7
  %v920 = vsub.s32 0, %v919
  %v921 = vrot.slane %v769, %v920
  %v922 = vlaneseq
  %v923 = vshrl.u32 %v922, 7
  %v924 = vsub.s32 0, %v923
  %v925 = vrot.slane %v770, %v924
  %v926 = vlaneseq
  %v927 = vshrl.u32 %v926, 7
  %v928 = vsub.s32 0, %v927
  %v929 = vrot.slane %v771, %v928
  %v930 = vlaneseq
  %v931 = vshrl.u32 %v930, 7
  %v932 = vsub.s32 0, %v931
  %v933 = vrot.slane %v772, %v932
  %v934 = vlaneseq
  %v935 = vshrl.u32 %v934, 7
  %v936 = vsub.s32 0, %v935
  %v937 = vrot.slane %v773, %v936
  %v938 = vlaneseq
  %v939 = vshrl.u32 %v938, 7
  %v940 = vsub.s32 0, %v939
  %v941 = vrot.slane %v774, %v940
  %v942 = vlaneseq
  %v943 = vshrl.u32 %v942, 7
  %v944 = vsub.s32 0, %v943
  %v945 = vrot.slane %v775, %v944
  %v946 = vlaneseq
  %v947 = vshrl.u32 %v946, 7
  %v948 = vsub.s32 0, %v947
  %v949 = vrot.slane %v776, %v948
  %v950 = vlaneseq
  %v951 = vshrl.u32 %v950, 7
  %v952 = vsub.s32 0, %v951
  %v953 = vrot.slane %v777, %v952
  %v954 = vlaneseq
  %v955 = vshrl.u32 %v954, 7
  %v956 = vsub.s32 0, %v955
  %v957 = vrot.slane %v778, %v956
  %v958 = vlaneseq
  %v959 = vshrl.u32 %v958, 7
  %v960 = vsub.s32 0, %v959
  %v961 = vrot.slane %v779, %v960
  %v962 = vlaneseq
  %v963 = vshrl.u32 %v962, 7
  %v964 = vsub.s32 0, %v963
  %v965 = vrot.slane %v780, %v964
  %v966 = vlaneseq
  %v967 = vshrl.u32 %v966, 7
  %v968 = vsub.s32 0, %v967
  %v969 = vrot.slane %v781, %v968
  %v970 = vlaneseq
  %v971 = vshrl.u32 %v970, 7
  %v972 = vsub.s32 0, %v971
  %v973 = vrot.slane %v782, %v972
  %v974 = vlaneseq
  %v975 = vshrl.u32 %v974, 7
  %v976 = vsub.s32 0, %v975
  %v977 = vrot.slane %v783, %v976
  %v978 = vlaneseq
  %v979 = vshrl.u32 %v978, 7
  %v980 = vsub.s32 0, %v979
  %v981 = vrot.slane %v784, %v980
  %v982 = vlaneseq
  %v983 = vshrl.u32 %v982, 7
  %v984 = vsub.s32 0, %v983
  %v985 = vrot.slane %v785, %v984
  %v986 = vlaneseq
  %v987 = vshrl.u32 %v986, 7
  %v988 = vsub.s32 0, %v987
  %v989 = vrot.slane %v786, %v988
  %v990 = vlaneseq
  %v991 = vshrl.u32 %v990, 7
  %v992 = vsub.s32 0, %v991
  %v993 = vrot.slane %v787, %v992
  %v994 = vlaneseq
  %v995 = vshrl.u32 %v994, 7
  %v996 = vsub.s32 0, %v995
  %v997 = vrot.slane %v788, %v996
  %v998 = vlaneseq
  %v999 = vshrl.u32 %v998, 7
  %v1000 = vsub.s32 0, %v999
  %v1001 = vrot.slane %v789, %v1000
  %v1002 = vlaneseq
  %v1003 = vshrl.u32 %v1002, 7
  %v1004 = vsub.s32 0, %v1003
  %v1005 = vrot.slane %v790, %v1004
  %v1006 = vlaneseq
  %v1007 = vshrl.u32 %v1006, 7
  %v1008 = vsub.s32 0, %v1007
  %v1009 = vrot.slane %v791, %v1008
  %v1010 = vlaneseq
  %v1011 = vshrl.u32 %v1010, 7
  %v1012 = vsub.s32 0, %v1011
  %v1013 = vrot.slane %v792, %v1012
  %v1014 = vlaneseq
  %v1015 = vshrl.u32 %v1014, 7
  %v1016 = vsub.s32 0, %v1015
  %v1017 = vrot.slane %v793, %v1016
  %v1018 = vlaneseq
  %v1019 = vshrl.u32 %v1018, 7
  %v1020 = vsub.s32 0, %v1019
  %v1021 = vrot.slane %v794, %v1020
  %v1022 = vlaneseq
  %v1023 = vshrl.u32 %v1022, 7
  %v1024 = vsub.s32 0, %v1023
  %v1025 = vrot.slane %v795, %v1024
  %v1026 = vlaneseq
  %v1027 = vshrl.u32 %v1026, 7
  %v1028 = vsub.s32 0, %v1027
  %v1029 = vrot.slane %v796, %v1028
  %v1030 = vlaneseq
  %v1031 = vshrl.u32 %v1030, 7
  %v1032 = vsub.s32 0, %v1031
  %v1033 = vrot.slane %v797, %v1032
  %v1034 = vlaneseq
  %v1035 = vshrl.u32 %v1034, 7
  %v1036 = vsub.s32 0, %v1035
  %v1037 = vrot.slane %v798, %v1036
  %v1038 = vlaneseq
  %v1039 = vshrl.u32 %v1038, 7
  %v1040 = vsub.s32 0, %v1039
  %v1041 = vrot.slane %v799, %v1040
  %v1042 = vlaneseq
  %v1043 = vshrl.u32 %v1042, 7
  %v1044 = vsub.s32 0, %v1043
  %v1045 = vrot.slane %v800, %v1044
  %v1046 = vlaneseq
  %v1047 = vshrl.u32 %v1046, 7
  %v1048 = vsub.s32 0, %v1047
  %v1049 = vrot.slane %v801, %v1048
  %v1050 = vlaneseq
  %v1051 = vshrl.u32 %v1050, 7
  %v1052 = vsub.s32 0, %v1051
  %v1053 = vrot.slane %v802, %v1052
  %v1054 = vlaneseq
  %v1055 = vshrl.u32 %v1054, 7
  %v1056 = vsub.s32 0, %v1055
  %v1057 = vrot.slane %v803, %v1056
  %v1058 = vlaneseq
  %v1059 = vshrl.u32 %v1058, 7
  %v1060 = vsub.s32 0, %v1059
  %v1061 = vrot.slane %v804, %v1060
  %v1062 = vlaneseq
  %v1063 = vshrl.u32 %v1062, 7
  %v1064 = vsub.s32 0, %v1063
  %v1065 = vrot.slane %v805, %v1064
  %v1066 = vlaneseq
  %v1067 = vshrl.u32 %v1066, 7
  %v1068 = vsub.s32 0, %v1067
  %v1069 = vrot.slane %v806, %v1068
  %v1070 = vlaneseq
  %v1071 = vshrl.u32 %v1070, 7
  %v1072 = vsub.s32 0, %v1071
  %v1073 = vrot.slane %v807, %v1072
  %v1074 = vlaneseq
  %v1075 = vshrl.u32 %v1074, 7
  %v1076 = vsub.s32 0, %v1075
  %v1077 = vrot.slane %v808, %v1076
  %v1078 = vlaneseq
  %v1079 = vshrl.u32 %v1078, 7
  %v1080 = vsub.s32 0, %v1079
  %v1081 = vrot.slane %v809, %v1080
  %v1082 = vlaneseq
  %v1083 = vshrl.u32 %v1082, 7
  %v1084 = vsub.s32 0, %v1083
  %v1085 = vrot.slane %v810, %v1084
  %v1086 = vlaneseq
  %v1087 = vshrl.u32 %v1086, 7
  %v1088 = vsub.s32 0, %v1087
  %v1089 = vrot.slane %v811, %v1088
  %v1090 = vlaneseq
  %v1091 = vshrl.u32 %v1090, 7
  %v1092 = vsub.s32 0, %v1091
  %v1093 = vrot.slane %v812, %v1092
  %v1094 = vlaneseq
  %v1095 = vshrl.u32 %v1094, 7
  %v1096 = vsub.s32 0, %v1095
  %v1097 = vrot.slane %v813, %v1096
  %v1098 = vlaneseq
  %v1099 = vshrl.u32 %v1098, 7
  %v1100 = vsub.s32 0, %v1099
  %v1101 = vrot.slane %v814, %v1100
  %v1102 = vlaneseq
  %v1103 = vshrl.u32 %v1102, 7
  %v1104 = vsub.s32 0, %v1103
  %v1105 = vrot.slane %v815, %v1104
  %v1106 = vlaneseq
  %v1107 = vshrl.u32 %v1106, 7
  %v1108 = vsub.s32 0, %v1107
  %v1109 = vrot.slane %v816, %v1108
  %v1110 = vlaneseq
  %v1111 = vshrl.u32 %v1110, 7
  %v1112 = vsub.s32 0, %v1111
  %v1113 = vrot.slane %v817, %v1112
  %v1114 = vlaneseq
  %v1115 = vshrl.u32 %v1114, 7
  %v1116 = vsub.s32 0, %v1115
  %v1117 = vrot.slane %v818, %v1116
  %v1118 = vlaneseq
  %v1119 = vshrl.u32 %v1118, 7
  %v1120 = vsub.s32 0, %v1119
  %v1121 = vrot.slane %v819, %v1120
  %v1122 = vlaneseq
  %v1123 = vshrl.u32 %v1122, 7
  %v1124 = vsub.s32 0, %v1123
  %v1125 = vrot.slane %v820, %v1124
  %v1126 = vlaneseq
  %v1127 = vshrl.u32 %v1126, 7
  %v1128 = vsub.s32 0, %v1127
  %v1129 = vrot.slane %v821, %v1128
  %v1130 = vlaneseq
  %v1131 = vshrl.u32 %v1130, 7
  %v1132 = vsub.s32 0, %v1131
  %v1133 = vrot.slane %v822, %v1132
  %v1134 = vlaneseq
  %v1135 = vshrl.u32 %v1134, 7
  %v1136 = vsub.s32 0, %v1135
  %v1137 = vrot.slane %v823, %v1136
  %v1138 = vlaneseq
  %v1139 = vshrl.u32 %v1138, 7
  %v1140 = vsub.s32 0, %v1139
  %v1141 = vrot.slane %v824, %v1140
  %v1142 = vlaneseq
  %v1143 = vshrl.u32 %v1142, 7
  %v1144 = vsub.s32 0, %v1143
  %v1145 = vrot.slane %v825, %v1144
  %v1146 = vlaneseq
  %v1147 = vshrl.u32 %v1146, 7
  %v1148 = vsub.s32 0, %v1147
  %v1149 = vrot.slane %v826, %v1148
  %v1150 = vlaneseq
  %v1151 = vshrl.u32 %v1150, 7
  %v1152 = vsub.s32 0, %v1151
  %v1153 = vrot.slane %v827, %v1152
  %v1154 = vlaneseq
  %v1155 = vshrl.u32 %v1154, 7
  %v1156 = vsub.s32 0, %v1155
  %v1157 = vrot.slane %v828, %v1156
  %v1158 = vlaneseq
  %v1159 = vshrl.u32 %v1158, 7
  %v1160 = vsub.s32 0, %v1159
  %v1161 = vrot.slane %v829, %v1160
  %v1162 = vlaneseq
  %v1163 = vshrl.u32 %v1162, 7
  %v1164 = vsub.s32 0, %v1163
  %v1165 = vrot.slane %v830, %v1164
  %v1166 = vlaneseq
  %v1167 = vshrl.u32 %v1166, 7
  %v1168 = vsub.s32 0, %v1167
  %v1169 = vrot.slane %v831, %v1168
  %v1170 = vlaneseq
  %v1171 = vshrl.u32 %v1170, 7
  %v1172 = vsub.s32 0, %v1171
  %v1173 = vrot.slane %v832, %v1172
  %v1174 = vlaneseq
  %v1175 = vshrl.u32 %v1174, 7
  %v1176 = vsub.s32 0, %v1175
  %v1177 = vrot.slane %v833, %v1176
  %v1178 = vlaneseq
  %v1179 = vshrl.u32 %v1178, 7
  %v1180 = vsub.s32 0, %v1179
  %v1181 = vrot.slane %v834, %v1180
  %v1182 = vlaneseq
  %v1183 = vshrl.u32 %v1182, 7
  %v1184 = vsub.s32 0, %v1183
  %v1185 = vrot.slane %v835, %v1184
  %v1186 = vlaneseq
  %v1187 = vshrl.u32 %v1186, 7
  %v1188 = vsub.s32 0, %v1187
  %v1189 = vrot.slane %v836, %v1188
  %v1190 = vlaneseq
  %v1191 = vshrl.u32 %v1190, 7
  %v1192 = vsub.s32 0, %v1191
  %v1193 = vrot.slane %v837, %v1192
  %v1194 = vlaneseq
  %v1195 = vshrl.u32 %v1194, 7
  %v1196 = vsub.s32 0, %v1195
  %v1197 = vrot.slane %v838, %v1196
  %v1198 = vlaneseq
  %v1199 = vshrl.u32 %v1198, 7
  %v1200 = vsub.s32 0, %v1199
  %v1201 = vrot.slane %v839, %v1200
  %v1202 = vlaneseq
  %v1203 = vshrl.u32 %v1202, 7
  %v1204 = vsub.s32 0, %v1203
  %v1205 = vrot.slane %v840, %v1204
  %v1206 = vlaneseq
  %v1207 = vshrl.u32 %v1206, 7
  %v1208 = vsub.s32 0, %v1207
  %v1209 = vrot.slane %v841, %v1208
  %v1210 = vlaneseq
  %v1211 = vshrl.u32 %v1210, 7
  %v1212 = vsub.s32 0, %v1211
  %v1213 = vrot.slane %v842, %v1212
  %v1214 = vlaneseq
  %v1215 = vshrl.u32 %v1214, 7
  %v1216 = vsub.s32 0, %v1215
  %v1217 = vrot.slane %v843, %v1216
  %v1218 = vlaneseq
  %v1219 = vshrl.u32 %v1218, 7
  %v1220 = vsub.s32 0, %v1219
  %v1221 = vrot.slane %v844, %v1220
  %v1222 = vlaneseq
  %v1223 = vshrl.u32 %v1222, 7
  %v1224 = vsub.s32 0, %v1223
  %v1225 = vrot.slane %v845, %v1224
  %v1226 = vlaneseq
  %v1227 = vshrl.u32 %v1226, 7
  %v1228 = vsub.s32 0, %v1227
  %v1229 = vrot.slane %v846, %v1228
  %v1230 = vlaneseq
  %v1231 = vshrl.u32 %v1230, 7
  %v1232 = vsub.s32 0, %v1231
  %v1233 = vrot.slane %v847, %v1232
  %v1234 = vlaneseq
  %v1235 = vshrl.u32 %v1234, 7
  %v1236 = vsub.s32 0, %v1235
  %v1237 = vrot.slane %v848, %v1236
  %v1238 = vlaneseq
  %v1239 = vshrl.u32 %v1238, 7
  %v1240 = vsub.s32 0, %v1239
  %v1241 = vrot.slane %v849, %v1240
  %v1242 = vlaneseq
  %v1243 = vshrl.u32 %v1242, 7
  %v1244 = vsub.s32 0, %v1243
  %v1245 = vrot.slane %v850, %v1244
  %v1246 = vlaneseq
  %v1247 = vshrl.u32 %v1246, 7
  %v1248 = vsub.s32 0, %v1247
  %v1249 = vrot.slane %v851, %v1248
  %v1250 = vlaneseq
  %v1251 = vshrl.u32 %v1250, 7
  %v1252 = vsub.s32 0, %v1251
  %v1253 = vrot.slane %v852, %v1252
  %v1254 = vlaneseq
  %v1255 = vshrl.u32 %v1254, 7
  %v1256 = vsub.s32 0, %v1255
  %v1257 = vrot.slane %v853, %v1256
  %v1258 = vlaneseq
  %v1259 = vshrl.u32 %v1258, 7
  %v1260 = vsub.s32 0, %v1259
  %v1261 = vrot.slane %v854, %v1260
  %v1262 = vlaneseq
  %v1263 = vshrl.u32 %v1262, 7
  %v1264 = vsub.s32 0, %v1263
  %v1265 = vrot.slane %v855, %v1264
  %v1266 = vlaneseq
  %v1267 = vshrl.u32 %v1266, 7
  %v1268 = vsub.s32 0, %v1267
  %v1269 = vrot.slane %v856, %v1268
  %v1270 = vlaneseq
  %v1271 = vshrl.u32 %v1270, 7
  %v1272 = vsub.s32 0, %v1271
  %v1273 = vrot.slane %v857, %v1272
  %v1274 = vlaneseq
  %v1275 = vshrl.u32 %v1274, 7
  %v1276 = vsub.s32 0, %v1275
  %v1277 = vrot.slane %v858, %v1276
  %v1278 = vlaneseq
  %v1279 = vshrl.u32 %v1278, 7
  %v1280 = vsub.s32 0, %v1279
  %v1281 = vrot.slane %v859, %v1280
  %v1282 = vlaneseq
  %v1283 = vshrl.u32 %v1282, 7
  %v1284 = vsub.s32 0, %v1283
  %v1285 = vrot.slane %v860, %v1284
  %v1286 = vlaneseq
  %v1287 = vshrl.u32 %v1286, 7
  %v1288 = vsub.s32 0, %v1287
  %v1289 = vrot.slane %v861, %v1288
  %v1290 = vlaneseq
  %v1291 = vshrl.u32 %v1290, 7
  %v1292 = vsub.s32 0, %v1291
  %v1293 = vrot.slane %v862, %v1292
  %v1294 = vlaneseq
  %v1295 = vshrl.u32 %v1294, 7
  %v1296 = vsub.s32 0, %v1295
  %v1297 = vrot.slane %v863, %v1296
  %v1298 = vlaneseq
  %v1299 = vshrl.u32 %v1298, 7
  %v1300 = vsub.s32 0, %v1299
  %v1301 = vrot.slane %v864, %v1300
  %v1302 = vlaneseq
  %v1303 = vshrl.u32 %v1302, 7
  %v1304 = vsub.s32 0, %v1303
  %v1305 = vrot.slane %v865, %v1304
  %v1306 = vlaneseq
  %v1307 = vshrl.u32 %v1306, 7
  %v1308 = vsub.s32 0, %v1307
  %v1309 = vrot.slane %v866, %v1308
  %v1310 = vlaneseq
  %v1311 = vshrl.u32 %v1310, 7
  %v1312 = vsub.s32 0, %v1311
  %v1313 = vrot.slane %v867, %v1312
  %v1314 = vlaneseq
  %v1315 = vshrl.u32 %v1314, 7
  %v1316 = vsub.s32 0, %v1315
  %v1317 = vrot.slane %v868, %v1316
  %v1318 = vlaneseq
  %v1319 = vshrl.u32 %v1318, 7
  %v1320 = vsub.s32 0, %v1319
  %v1321 = vrot.slane %v869, %v1320
  %v1322 = vlaneseq
  %v1323 = vshrl.u32 %v1322, 7
  %v1324 = vsub.s32 0, %v1323
  %v1325 = vrot.slane %v870, %v1324
  %v1326 = vlaneseq
  %v1327 = vshrl.u32 %v1326, 7
  %v1328 = vsub.s32 0, %v1327
  %v1329 = vrot.slane %v871, %v1328
  %v1330 = vlaneseq
  %v1331 = vshrl.u32 %v1330, 7
  %v1332 = vsub.s32 0, %v1331
  %v1333 = vrot.slane %v872, %v1332
  %v1334 = vlaneseq
  %v1335 = vshrl.u32 %v1334, 7
  %v1336 = vsub.s32 0, %v1335
  %v1337 = vrot.slane %v873, %v1336
  %v1338 = vlaneseq
  %v1339 = vshrl.u32 %v1338, 7
  %v1340 = vsub.s32 0, %v1339
  %v1341 = vrot.slane %v874, %v1340
  %v1342 = vlaneseq
  %v1343 = vshrl.u32 %v1342, 7
  %v1344 = vsub.s32 0, %v1343
  %v1345 = vrot.slane %v875, %v1344
  %v1346 = vlaneseq
  %v1347 = vshrl.u32 %v1346, 7
  %v1348 = vsub.s32 0, %v1347
  %v1349 = vrot.slane %v876, %v1348
  %v1350 = vlaneseq
  %v1351 = vshrl.u32 %v1350, 7
  %v1352 = vsub.s32 0, %v1351
  %v1353 = vrot.slane %v877, %v1352
  %v1354 = vlaneseq
  %v1355 = vshrl.u32 %v1354, 7
  %v1356 = vsub.s32 0, %v1355
  %v1357 = vrot.slane %v878, %v1356
  %v1358 = vlaneseq
  %v1359 = vshrl.u32 %v1358, 7
  %v1360 = vsub.s32 0, %v1359
  %v1361 = vrot.slane %v879, %v1360
  %v1362 = vlaneseq
  %v1363 = vshrl.u32 %v1362, 7
  %v1364 = vsub.s32 0, %v1363
  %v1365 = vrot.slane %v880, %v1364
  %v1366 = vlaneseq
  %v1367 = vshrl.u32 %v1366, 7
  %v1368 = vsub.s32 0, %v1367
  %v1369 = vrot.slane %v881, %v1368
  %v1370 = vlaneseq
  %v1371 = vshrl.u32 %v1370, 7
  %v1372 = vsub.s32 0, %v1371
  %v1373 = vrot.slane %v882, %v1372
  %v1374 = vlaneseq
  %v1375 = vshrl.u32 %v1374, 7
  %v1376 = vsub.s32 0, %v1375
  %v1377 = vrot.slane %v883, %v1376
  %v1378 = vlaneseq
  %v1379 = vshrl.u32 %v1378, 7
  %v1380 = vsub.s32 0, %v1379
  %v1381 = vrot.slane %v884, %v1380
  %v1382 = vlaneseq
  %v1383 = vshrl.u32 %v1382, 7
  %v1384 = vsub.s32 0, %v1383
  %v1385 = vrot.slane %v885, %v1384
  %v1386 = vlaneseq
  %v1387 = vshrl.u32 %v1386, 7
  %v1388 = vsub.s32 0, %v1387
  %v1389 = vrot.slane %v886, %v1388
  %v1390 = vlaneseq
  %v1391 = vshrl.u32 %v1390, 7
  %v1392 = vsub.s32 0, %v1391
  %v1393 = vrot.slane %v887, %v1392
  %v1394 = vlaneseq
  %v1395 = vshrl.u32 %v1394, 7
  %v1396 = vsub.s32 0, %v1395
  %v1397 = vrot.slane %v888, %v1396
  %v1398 = vlaneseq
  %v1399 = vshrl.u32 %v1398, 7
  %v1400 = vsub.s32 0, %v1399
  %v1401 = vrot.slane %v889, %v1400
  %1530 = vrot.lane.b32.xlu0 %v893, 124
  %v1531 = vpop.permute.xlu0 %1530
  %1532 = vrot.lane.b32.xlu0 %v897, 124
  %v1533 = vpop.permute.xlu0 %1532
  %1534 = vrot.lane.b32.xlu0 %v901, 124
  %v1535 = vpop.permute.xlu0 %1534
  %1536 = vrot.lane.b32.xlu0 %v905, 124
  %v1537 = vpop.permute.xlu0 %1536
  %1538 = vrot.lane.b32.xlu0 %v909, 124
  %v1539 = vpop.permute.xlu0 %1538
  %1540 = vrot.lane.b32.xlu0 %v913, 124
  %v1541 = vpop.permute.xlu0 %1540
  %1542 = vrot.lane.b32.xlu0 %v917, 124
  %v1543 = vpop.permute.xlu0 %1542
  %1544 = vrot.lane.b32.xlu0 %v921, 124
  %v1545 = vpop.permute.xlu0 %1544
  %1546 = vrot.lane.b32.xlu0 %v925, 124
  %v1547 = vpop.permute.xlu0 %1546
  %1548 = vrot.lane.b32.xlu0 %v929, 124
  %v1549 = vpop.permute.xlu0 %1548
  %1550 = vrot.lane.b32.xlu0 %v933, 124
  %v1551 = vpop.permute.xlu0 %1550
  %1552 = vrot.lane.b32.xlu0 %v937, 124
  %v1553 = vpop.permute.xlu0 %1552
  %1554 = vrot.lane.b32.xlu0 %v941, 124
  %v1555 = vpop.permute.xlu0 %1554
  %1556 = vrot.lane.b32.xlu0 %v945, 124
  %v1557 = vpop.permute.xlu0 %1556
  %1558 = vrot.lane.b32.xlu0 %v949, 124
  %v1559 = vpop.permute.xlu0 %1558
  %1560 = vrot.lane.b32.xlu0 %v953, 124
  %v1561 = vpop.permute.xlu0 %1560
  %1562 = vrot.lane.b32.xlu0 %v957, 124
  %v1563 = vpop.permute.xlu0 %1562
  %1564 = vrot.lane.b32.xlu0 %v961, 124
  %v1565 = vpop.permute.xlu0 %1564
  %1566 = vrot.lane.b32.xlu0 %v965, 124
  %v1567 = vpop.permute.xlu0 %1566
  %1568 = vrot.lane.b32.xlu0 %v969, 124
  %v1569 = vpop.permute.xlu0 %1568
  %1570 = vrot.lane.b32.xlu0 %v973, 124
  %v1571 = vpop.permute.xlu0 %1570
  %1572 = vrot.lane.b32.xlu0 %v977, 124
  %v1573 = vpop.permute.xlu0 %1572
  %1574 = vrot.lane.b32.xlu0 %v981, 124
  %v1575 = vpop.permute.xlu0 %1574
  %1576 = vrot.lane.b32.xlu0 %v985, 124
  %v1577 = vpop.permute.xlu0 %1576
  %1578 = vrot.lane.b32.xlu0 %v989, 124
  %v1579 = vpop.permute.xlu0 %1578
  %1580 = vrot.lane.b32.xlu0 %v993, 124
  %v1581 = vpop.permute.xlu0 %1580
  %1582 = vrot.lane.b32.xlu0 %v997, 124
  %v1583 = vpop.permute.xlu0 %1582
  %1584 = vrot.lane.b32.xlu0 %v1001, 124
  %v1585 = vpop.permute.xlu0 %1584
  %1586 = vrot.lane.b32.xlu0 %v1005, 124
  %v1587 = vpop.permute.xlu0 %1586
  %1588 = vrot.lane.b32.xlu0 %v1009, 124
  %v1589 = vpop.permute.xlu0 %1588
  %1590 = vrot.lane.b32.xlu0 %v1013, 124
  %v1591 = vpop.permute.xlu0 %1590
  %1592 = vrot.lane.b32.xlu0 %v1017, 124
  %v1593 = vpop.permute.xlu0 %1592
  %1594 = vrot.lane.b32.xlu0 %v1021, 124
  %v1595 = vpop.permute.xlu0 %1594
  %1596 = vrot.lane.b32.xlu0 %v1025, 124
  %v1597 = vpop.permute.xlu0 %1596
  %1598 = vrot.lane.b32.xlu0 %v1029, 124
  %v1599 = vpop.permute.xlu0 %1598
  %1600 = vrot.lane.b32.xlu0 %v1033, 124
  %v1601 = vpop.permute.xlu0 %1600
  %1602 = vrot.lane.b32.xlu0 %v1037, 124
  %v1603 = vpop.permute.xlu0 %1602
  %1604 = vrot.lane.b32.xlu0 %v1041, 124
  %v1605 = vpop.permute.xlu0 %1604
  %1606 = vrot.lane.b32.xlu0 %v1045, 124
  %v1607 = vpop.permute.xlu0 %1606
  %1608 = vrot.lane.b32.xlu0 %v1049, 124
  %v1609 = vpop.permute.xlu0 %1608
  %1610 = vrot.lane.b32.xlu0 %v1053, 124
  %v1611 = vpop.permute.xlu0 %1610
  %1612 = vrot.lane.b32.xlu0 %v1057, 124
  %v1613 = vpop.permute.xlu0 %1612
  %1614 = vrot.lane.b32.xlu0 %v1061, 124
  %v1615 = vpop.permute.xlu0 %1614
  %1616 = vrot.lane.b32.xlu0 %v1065, 124
  %v1617 = vpop.permute.xlu0 %1616
  %1618 = vrot.lane.b32.xlu0 %v1069, 124
  %v1619 = vpop.permute.xlu0 %1618
  %1620 = vrot.lane.b32.xlu0 %v1073, 124
  %v1621 = vpop.permute.xlu0 %1620
  %1622 = vrot.lane.b32.xlu0 %v1077, 124
  %v1623 = vpop.permute.xlu0 %1622
  %1624 = vrot.lane.b32.xlu0 %v1081, 124
  %v1625 = vpop.permute.xlu0 %1624
  %1626 = vrot.lane.b32.xlu0 %v1085, 124
  %v1627 = vpop.permute.xlu0 %1626
  %1628 = vrot.lane.b32.xlu0 %v1089, 124
  %v1629 = vpop.permute.xlu0 %1628
  %1630 = vrot.lane.b32.xlu0 %v1093, 124
  %v1631 = vpop.permute.xlu0 %1630
  %1632 = vrot.lane.b32.xlu0 %v1097, 124
  %v1633 = vpop.permute.xlu0 %1632
  %1634 = vrot.lane.b32.xlu0 %v1101, 124
  %v1635 = vpop.permute.xlu0 %1634
  %1636 = vrot.lane.b32.xlu0 %v1105, 124
  %v1637 = vpop.permute.xlu0 %1636
  %1638 = vrot.lane.b32.xlu0 %v1109, 124
  %v1639 = vpop.permute.xlu0 %1638
  %1640 = vrot.lane.b32.xlu0 %v1113, 124
  %v1641 = vpop.permute.xlu0 %1640
  %1642 = vrot.lane.b32.xlu0 %v1117, 124
  %v1643 = vpop.permute.xlu0 %1642
  %1644 = vrot.lane.b32.xlu0 %v1121, 124
  %v1645 = vpop.permute.xlu0 %1644
  %1646 = vrot.lane.b32.xlu0 %v1125, 124
  %v1647 = vpop.permute.xlu0 %1646
  %1648 = vrot.lane.b32.xlu0 %v1129, 124
  %v1649 = vpop.permute.xlu0 %1648
  %1650 = vrot.lane.b32.xlu0 %v1133, 124
  %v1651 = vpop.permute.xlu0 %1650
  %1652 = vrot.lane.b32.xlu0 %v1137, 124
  %v1653 = vpop.permute.xlu0 %1652
  %1654 = vrot.lane.b32.xlu0 %v1141, 124
  %v1655 = vpop.permute.xlu0 %1654
  %1656 = vrot.lane.b32.xlu0 %v1145, 124
  %v1657 = vpop.permute.xlu0 %1656
  %1658 = vrot.lane.b32.xlu0 %v1149, 124
  %v1659 = vpop.permute.xlu0 %1658
  %1660 = vrot.lane.b32.xlu0 %v1153, 124
  %v1661 = vpop.permute.xlu0 %1660
  %1662 = vrot.lane.b32.xlu0 %v1157, 124
  %v1663 = vpop.permute.xlu0 %1662
  %1664 = vrot.lane.b32.xlu0 %v1161, 124
  %v1665 = vpop.permute.xlu0 %1664
  %1666 = vrot.lane.b32.xlu0 %v1165, 124
  %v1667 = vpop.permute.xlu0 %1666
  %1668 = vrot.lane.b32.xlu0 %v1169, 124
  %v1669 = vpop.permute.xlu0 %1668
  %1670 = vrot.lane.b32.xlu0 %v1173, 124
  %v1671 = vpop.permute.xlu0 %1670
  %1672 = vrot.lane.b32.xlu0 %v1177, 124
  %v1673 = vpop.permute.xlu0 %1672
  %1674 = vrot.lane.b32.xlu0 %v1181, 124
  %v1675 = vpop.permute.xlu0 %1674
  %1676 = vrot.lane.b32.xlu0 %v1185, 124
  %v1677 = vpop.permute.xlu0 %1676
  %1678 = vrot.lane.b32.xlu0 %v1189, 124
  %v1679 = vpop.permute.xlu0 %1678
  %1680 = vrot.lane.b32.xlu0 %v1193, 124
  %v1681 = vpop.permute.xlu0 %1680
  %1682 = vrot.lane.b32.xlu0 %v1197, 124
  %v1683 = vpop.permute.xlu0 %1682
  %1684 = vrot.lane.b32.xlu0 %v1201, 124
  %v1685 = vpop.permute.xlu0 %1684
  %1686 = vrot.lane.b32.xlu0 %v1205, 124
  %v1687 = vpop.permute.xlu0 %1686
  %1688 = vrot.lane.b32.xlu0 %v1209, 124
  %v1689 = vpop.permute.xlu0 %1688
  %1690 = vrot.lane.b32.xlu0 %v1213, 124
  %v1691 = vpop.permute.xlu0 %1690
  %1692 = vrot.lane.b32.xlu0 %v1217, 124
  %v1693 = vpop.permute.xlu0 %1692
  %1694 = vrot.lane.b32.xlu0 %v1221, 124
  %v1695 = vpop.permute.xlu0 %1694
  %1696 = vrot.lane.b32.xlu0 %v1225, 124
  %v1697 = vpop.permute.xlu0 %1696
  %1698 = vrot.lane.b32.xlu0 %v1229, 124
  %v1699 = vpop.permute.xlu0 %1698
  %1700 = vrot.lane.b32.xlu0 %v1233, 124
  %v1701 = vpop.permute.xlu0 %1700
  %1702 = vrot.lane.b32.xlu0 %v1237, 124
  %v1703 = vpop.permute.xlu0 %1702
  %1704 = vrot.lane.b32.xlu0 %v1241, 124
  %v1705 = vpop.permute.xlu0 %1704
  %1706 = vrot.lane.b32.xlu0 %v1245, 124
  %v1707 = vpop.permute.xlu0 %1706
  %1708 = vrot.lane.b32.xlu0 %v1249, 124
  %v1709 = vpop.permute.xlu0 %1708
  %1710 = vrot.lane.b32.xlu0 %v1253, 124
  %v1711 = vpop.permute.xlu0 %1710
  %1712 = vrot.lane.b32.xlu0 %v1257, 124
  %v1713 = vpop.permute.xlu0 %1712
  %1714 = vrot.lane.b32.xlu0 %v1261, 124
  %v1715 = vpop.permute.xlu0 %1714
  %1716 = vrot.lane.b32.xlu0 %v1265, 124
  %v1717 = vpop.permute.xlu0 %1716
  %1718 = vrot.lane.b32.xlu0 %v1269, 124
  %v1719 = vpop.permute.xlu0 %1718
  %1720 = vrot.lane.b32.xlu0 %v1273, 124
  %v1721 = vpop.permute.xlu0 %1720
  %1722 = vrot.lane.b32.xlu0 %v1277, 124
  %v1723 = vpop.permute.xlu0 %1722
  %1724 = vrot.lane.b32.xlu0 %v1281, 124
  %v1725 = vpop.permute.xlu0 %1724
  %1726 = vrot.lane.b32.xlu0 %v1285, 124
  %v1727 = vpop.permute.xlu0 %1726
  %1728 = vrot.lane.b32.xlu0 %v1289, 124
  %v1729 = vpop.permute.xlu0 %1728
  %1730 = vrot.lane.b32.xlu0 %v1293, 124
  %v1731 = vpop.permute.xlu0 %1730
  %1732 = vrot.lane.b32.xlu0 %v1297, 124
  %v1733 = vpop.permute.xlu0 %1732
  %1734 = vrot.lane.b32.xlu0 %v1301, 124
  %v1735 = vpop.permute.xlu0 %1734
  %1736 = vrot.lane.b32.xlu0 %v1305, 124
  %v1737 = vpop.permute.xlu0 %1736
  %1738 = vrot.lane.b32.xlu0 %v1309, 124
  %v1739 = vpop.permute.xlu0 %1738
  %1740 = vrot.lane.b32.xlu0 %v1313, 124
  %v1741 = vpop.permute.xlu0 %1740
  %1742 = vrot.lane.b32.xlu0 %v1317, 124
  %v1743 = vpop.permute.xlu0 %1742
  %1744 = vrot.lane.b32.xlu0 %v1321, 124
  %v1745 = vpop.permute.xlu0 %1744
  %1746 = vrot.lane.b32.xlu0 %v1325, 124
  %v1747 = vpop.permute.xlu0 %1746
  %1748 = vrot.lane.b32.xlu0 %v1329, 124
  %v1749 = vpop.permute.xlu0 %1748
  %1750 = vrot.lane.b32.xlu0 %v1333, 124
  %v1751 = vpop.permute.xlu0 %1750
  %1752 = vrot.lane.b32.xlu0 %v1337, 124
  %v1753 = vpop.permute.xlu0 %1752
  %1754 = vrot.lane.b32.xlu0 %v1341, 124
  %v1755 = vpop.permute.xlu0 %1754
  %1756 = vrot.lane.b32.xlu0 %v1345, 124
  %v1757 = vpop.permute.xlu0 %1756
  %1758 = vrot.lane.b32.xlu0 %v1349, 124
  %v1759 = vpop.permute.xlu0 %1758
  %1760 = vrot.lane.b32.xlu0 %v1353, 124
  %v1761 = vpop.permute.xlu0 %1760
  %1762 = vrot.lane.b32.xlu0 %v1357, 124
  %v1763 = vpop.permute.xlu0 %1762
  %1764 = vrot.lane.b32.xlu0 %v1361, 124
  %v1765 = vpop.permute.xlu0 %1764
  %1766 = vrot.lane.b32.xlu0 %v1365, 124
  %v1767 = vpop.permute.xlu0 %1766
  %1768 = vrot.lane.b32.xlu0 %v1369, 124
  %v1769 = vpop.permute.xlu0 %1768
  %1770 = vrot.lane.b32.xlu0 %v1373, 124
  %v1771 = vpop.permute.xlu0 %1770
  %1772 = vrot.lane.b32.xlu0 %v1377, 124
  %v1773 = vpop.permute.xlu0 %1772
  %1774 = vrot.lane.b32.xlu0 %v1381, 124
  %v1775 = vpop.permute.xlu0 %1774
  %1776 = vrot.lane.b32.xlu0 %v1385, 124
  %v1777 = vpop.permute.xlu0 %1776
  %1778 = vrot.lane.b32.xlu0 %v1389, 124
  %v1779 = vpop.permute.xlu0 %1778
  %1780 = vrot.lane.b32.xlu0 %v1393, 124
  %v1781 = vpop.permute.xlu0 %1780
  %1782 = vrot.lane.b32.xlu0 %v1397, 124
  %v1783 = vpop.permute.xlu0 %1782
  %1784 = vrot.lane.b32.xlu0 %v1401, 124
  %v1785 = vpop.permute.xlu0 %1784
  %vm1914 = vcmask 1040384
  %vm1915 = vsmask.f32 256
  %vm1916 = vmand %vm1914, %vm1915
  %v1917 = vsel %vm1916, %v893, %v1531
  %v1918 = vsel %vm1916, %v897, %v1533
  %v1919 = vsel %vm1916, %v901, %v1535
  %v1920 = vsel %vm1916, %v905, %v1537
  %v1921 = vsel %vm1916, %v909, %v1539
  %v1922 = vsel %vm1916, %v913, %v1541
  %v1923 = vsel %vm1916, %v917, %v1543
  %v1924 = vsel %vm1916, %v921, %v1545
  %v1925 = vsel %vm1916, %v925, %v1547
  %v1926 = vsel %vm1916, %v929, %v1549
  %v1927 = vsel %vm1916, %v933, %v1551
  %v1928 = vsel %vm1916, %v937, %v1553
  %v1929 = vsel %vm1916, %v941, %v1555
  %v1930 = vsel %vm1916, %v945, %v1557
  %v1931 = vsel %vm1916, %v949, %v1559
  %v1932 = vsel %vm1916, %v953, %v1561
  %v1933 = vsel %vm1916, %v957, %v1563
  %v1934 = vsel %vm1916, %v961, %v1565
  %v1935 = vsel %vm1916, %v965, %v1567
  %v1936 = vsel %vm1916, %v969, %v1569
  %v1937 = vsel %vm1916, %v973, %v1571
  %v1938 = vsel %vm1916, %v977, %v1573
  %v1939 = vsel %vm1916, %v981, %v1575
  %v1940 = vsel %vm1916, %v985, %v1577
  %v1941 = vsel %vm1916, %v989, %v1579
  %v1942 = vsel %vm1916, %v993, %v1581
  %v1943 = vsel %vm1916, %v997, %v1583
  %v1944 = vsel %vm1916, %v1001, %v1585
  %v1945 = vsel %vm1916, %v1005, %v1587
  %v1946 = vsel %vm1916, %v1009, %v1589
  %v1947 = vsel %vm1916, %v1013, %v1591
  %v1948 = vsel %vm1916, %v1017, %v1593
  %v1949 = vsel %vm1916, %v1021, %v1595
  %v1950 = vsel %vm1916, %v1025, %v1597
  %v1951 = vsel %vm1916, %v1029, %v1599
  %v1952 = vsel %vm1916, %v1033, %v1601
  %v1953 = vsel %vm1916, %v1037, %v1603
  %v1954 = vsel %vm1916, %v1041, %v1605
  %v1955 = vsel %vm1916, %v1045, %v1607
  %v1956 = vsel %vm1916, %v1049, %v1609
  %v1957 = vsel %vm1916, %v1053, %v1611
  %v1958 = vsel %vm1916, %v1057, %v1613
  %v1959 = vsel %vm1916, %v1061, %v1615
  %v1960 = vsel %vm1916, %v1065, %v1617
  %v1961 = vsel %vm1916, %v1069, %v1619
  %v1962 = vsel %vm1916, %v1073, %v1621
  %v1963 = vsel %vm1916, %v1077, %v1623
  %v1964 = vsel %vm1916, %v1081, %v1625
  %v1965 = vsel %vm1916, %v1085, %v1627
  %v1966 = vsel %vm1916, %v1089, %v1629
  %v1967 = vsel %vm1916, %v1093, %v1631
  %v1968 = vsel %vm1916, %v1097, %v1633
  %v1969 = vsel %vm1916, %v1101, %v1635
  %v1970 = vsel %vm1916, %v1105, %v1637
  %v1971 = vsel %vm1916, %v1109, %v1639
  %v1972 = vsel %vm1916, %v1113, %v1641
  %v1973 = vsel %vm1916, %v1117, %v1643
  %v1974 = vsel %vm1916, %v1121, %v1645
  %v1975 = vsel %vm1916, %v1125, %v1647
  %v1976 = vsel %vm1916, %v1129, %v1649
  %v1977 = vsel %vm1916, %v1133, %v1651
  %v1978 = vsel %vm1916, %v1137, %v1653
  %v1979 = vsel %vm1916, %v1141, %v1655
  %v1980 = vsel %vm1916, %v1145, %v1657
  %v1981 = vsel %vm1916, %v1149, %v1659
  %v1982 = vsel %vm1916, %v1153, %v1661
  %v1983 = vsel %vm1916, %v1157, %v1663
  %v1984 = vsel %vm1916, %v1161, %v1665
  %v1985 = vsel %vm1916, %v1165, %v1667
  %v1986 = vsel %vm1916, %v1169, %v1669
  %v1987 = vsel %vm1916, %v1173, %v1671
  %v1988 = vsel %vm1916, %v1177, %v1673
  %v1989 = vsel %vm1916, %v1181, %v1675
  %v1990 = vsel %vm1916, %v1185, %v1677
  %v1991 = vsel %vm1916, %v1189, %v1679
  %v1992 = vsel %vm1916, %v1193, %v1681
  %v1993 = vsel %vm1916, %v1197, %v1683
  %v1994 = vsel %vm1916, %v1201, %v1685
  %v1995 = vsel %vm1916, %v1205, %v1687
  %v1996 = vsel %vm1916, %v1209, %v1689
  %v1997 = vsel %vm1916, %v1213, %v1691
  %v1998 = vsel %vm1916, %v1217, %v1693
  %v1999 = vsel %vm1916, %v1221, %v1695
  %v2000 = vsel %vm1916, %v1225, %v1697
  %v2001 = vsel %vm1916, %v1229, %v1699
  %v2002 = vsel %vm1916, %v1233, %v1701
  %v2003 = vsel %vm1916, %v1237, %v1703
  %v2004 = vsel %vm1916, %v1241, %v1705
  %v2005 = vsel %vm1916, %v1245, %v1707
  %v2006 = vsel %vm1916, %v1249, %v1709
  %v2007 = vsel %vm1916, %v1253, %v1711
  %v2008 = vsel %vm1916, %v1257, %v1713
  %v2009 = vsel %vm1916, %v1261, %v1715
  %v2010 = vsel %vm1916, %v1265, %v1717
  %v2011 = vsel %vm1916, %v1269, %v1719
  %v2012 = vsel %vm1916, %v1273, %v1721
  %v2013 = vsel %vm1916, %v1277, %v1723
  %v2014 = vsel %vm1916, %v1281, %v1725
  %v2015 = vsel %vm1916, %v1285, %v1727
  %v2016 = vsel %vm1916, %v1289, %v1729
  %v2017 = vsel %vm1916, %v1293, %v1731
  %v2018 = vsel %vm1916, %v1297, %v1733
  %v2019 = vsel %vm1916, %v1301, %v1735
  %v2020 = vsel %vm1916, %v1305, %v1737
  %v2021 = vsel %vm1916, %v1309, %v1739
  %v2022 = vsel %vm1916, %v1313, %v1741
  %v2023 = vsel %vm1916, %v1317, %v1743
  %v2024 = vsel %vm1916, %v1321, %v1745
  %v2025 = vsel %vm1916, %v1325, %v1747
  %v2026 = vsel %vm1916, %v1329, %v1749
  %v2027 = vsel %vm1916, %v1333, %v1751
  %v2028 = vsel %vm1916, %v1337, %v1753
  %v2029 = vsel %vm1916, %v1341, %v1755
  %v2030 = vsel %vm1916, %v1345, %v1757
  %v2031 = vsel %vm1916, %v1349, %v1759
  %v2032 = vsel %vm1916, %v1353, %v1761
  %v2033 = vsel %vm1916, %v1357, %v1763
  %v2034 = vsel %vm1916, %v1361, %v1765
  %v2035 = vsel %vm1916, %v1365, %v1767
  %v2036 = vsel %vm1916, %v1369, %v1769
  %v2037 = vsel %vm1916, %v1373, %v1771
  %v2038 = vsel %vm1916, %v1377, %v1773
  %v2039 = vsel %vm1916, %v1381, %v1775
  %v2040 = vsel %vm1916, %v1385, %v1777
  %v2041 = vsel %vm1916, %v1389, %v1779
  %v2042 = vsel %vm1916, %v1393, %v1781
  %v2043 = vsel %vm1916, %v1397, %v1783
  %v2044 = vsel %vm1916, %v1401, %v1785
  %2173 = vrot.lane.b32.xlu0 %v1917, 120
  %v2174 = vpop.permute.xlu0 %2173
  %2175 = vrot.lane.b32.xlu0 %v1918, 120
  %v2176 = vpop.permute.xlu0 %2175
  %2177 = vrot.lane.b32.xlu0 %v1919, 120
  %v2178 = vpop.permute.xlu0 %2177
  %2179 = vrot.lane.b32.xlu0 %v1920, 120
  %v2180 = vpop.permute.xlu0 %2179
  %2181 = vrot.lane.b32.xlu0 %v1921, 120
  %v2182 = vpop.permute.xlu0 %2181
  %2183 = vrot.lane.b32.xlu0 %v1922, 120
  %v2184 = vpop.permute.xlu0 %2183
  %2185 = vrot.lane.b32.xlu0 %v1923, 120
  %v2186 = vpop.permute.xlu0 %2185
  %2187 = vrot.lane.b32.xlu0 %v1924, 120
  %v2188 = vpop.permute.xlu0 %2187
  %2189 = vrot.lane.b32.xlu0 %v1925, 120
  %v2190 = vpop.permute.xlu0 %2189
  %2191 = vrot.lane.b32.xlu0 %v1926, 120
  %v2192 = vpop.permute.xlu0 %2191
  %2193 = vrot.lane.b32.xlu0 %v1927, 120
  %v2194 = vpop.permute.xlu0 %2193
  %2195 = vrot.lane.b32.xlu0 %v1928, 120
  %v2196 = vpop.permute.xlu0 %2195
  %2197 = vrot.lane.b32.xlu0 %v1929, 120
  %v2198 = vpop.permute.xlu0 %2197
  %2199 = vrot.lane.b32.xlu0 %v1930, 120
  %v2200 = vpop.permute.xlu0 %2199
  %2201 = vrot.lane.b32.xlu0 %v1931, 120
  %v2202 = vpop.permute.xlu0 %2201
  %2203 = vrot.lane.b32.xlu0 %v1932, 120
  %v2204 = vpop.permute.xlu0 %2203
  %2205 = vrot.lane.b32.xlu0 %v1933, 120
  %v2206 = vpop.permute.xlu0 %2205
  %2207 = vrot.lane.b32.xlu0 %v1934, 120
  %v2208 = vpop.permute.xlu0 %2207
  %2209 = vrot.lane.b32.xlu0 %v1935, 120
  %v2210 = vpop.permute.xlu0 %2209
  %2211 = vrot.lane.b32.xlu0 %v1936, 120
  %v2212 = vpop.permute.xlu0 %2211
  %2213 = vrot.lane.b32.xlu0 %v1937, 120
  %v2214 = vpop.permute.xlu0 %2213
  %2215 = vrot.lane.b32.xlu0 %v1938, 120
  %v2216 = vpop.permute.xlu0 %2215
  %2217 = vrot.lane.b32.xlu0 %v1939, 120
  %v2218 = vpop.permute.xlu0 %2217
  %2219 = vrot.lane.b32.xlu0 %v1940, 120
  %v2220 = vpop.permute.xlu0 %2219
  %2221 = vrot.lane.b32.xlu0 %v1941, 120
  %v2222 = vpop.permute.xlu0 %2221
  %2223 = vrot.lane.b32.xlu0 %v1942, 120
  %v2224 = vpop.permute.xlu0 %2223
  %2225 = vrot.lane.b32.xlu0 %v1943, 120
  %v2226 = vpop.permute.xlu0 %2225
  %2227 = vrot.lane.b32.xlu0 %v1944, 120
  %v2228 = vpop.permute.xlu0 %2227
  %2229 = vrot.lane.b32.xlu0 %v1945, 120
  %v2230 = vpop.permute.xlu0 %2229
  %2231 = vrot.lane.b32.xlu0 %v1946, 120
  %v2232 = vpop.permute.xlu0 %2231
  %2233 = vrot.lane.b32.xlu0 %v1947, 120
  %v2234 = vpop.permute.xlu0 %2233
  %2235 = vrot.lane.b32.xlu0 %v1948, 120
  %v2236 = vpop.permute.xlu0 %2235
  %2237 = vrot.lane.b32.xlu0 %v1949, 120
  %v2238 = vpop.permute.xlu0 %2237
  %2239 = vrot.lane.b32.xlu0 %v1950, 120
  %v2240 = vpop.permute.xlu0 %2239
  %2241 = vrot.lane.b32.xlu0 %v1951, 120
  %v2242 = vpop.permute.xlu0 %2241
  %2243 = vrot.lane.b32.xlu0 %v1952, 120
  %v2244 = vpop.permute.xlu0 %2243
  %2245 = vrot.lane.b32.xlu0 %v1953, 120
  %v2246 = vpop.permute.xlu0 %2245
  %2247 = vrot.lane.b32.xlu0 %v1954, 120
  %v2248 = vpop.permute.xlu0 %2247
  %2249 = vrot.lane.b32.xlu0 %v1955, 120
  %v2250 = vpop.permute.xlu0 %2249
  %2251 = vrot.lane.b32.xlu0 %v1956, 120
  %v2252 = vpop.permute.xlu0 %2251
  %2253 = vrot.lane.b32.xlu0 %v1957, 120
  %v2254 = vpop.permute.xlu0 %2253
  %2255 = vrot.lane.b32.xlu0 %v1958, 120
  %v2256 = vpop.permute.xlu0 %2255
  %2257 = vrot.lane.b32.xlu0 %v1959, 120
  %v2258 = vpop.permute.xlu0 %2257
  %2259 = vrot.lane.b32.xlu0 %v1960, 120
  %v2260 = vpop.permute.xlu0 %2259
  %2261 = vrot.lane.b32.xlu0 %v1961, 120
  %v2262 = vpop.permute.xlu0 %2261
  %2263 = vrot.lane.b32.xlu0 %v1962, 120
  %v2264 = vpop.permute.xlu0 %2263
  %2265 = vrot.lane.b32.xlu0 %v1963, 120
  %v2266 = vpop.permute.xlu0 %2265
  %2267 = vrot.lane.b32.xlu0 %v1964, 120
  %v2268 = vpop.permute.xlu0 %2267
  %2269 = vrot.lane.b32.xlu0 %v1965, 120
  %v2270 = vpop.permute.xlu0 %2269
  %2271 = vrot.lane.b32.xlu0 %v1966, 120
  %v2272 = vpop.permute.xlu0 %2271
  %2273 = vrot.lane.b32.xlu0 %v1967, 120
  %v2274 = vpop.permute.xlu0 %2273
  %2275 = vrot.lane.b32.xlu0 %v1968, 120
  %v2276 = vpop.permute.xlu0 %2275
  %2277 = vrot.lane.b32.xlu0 %v1969, 120
  %v2278 = vpop.permute.xlu0 %2277
  %2279 = vrot.lane.b32.xlu0 %v1970, 120
  %v2280 = vpop.permute.xlu0 %2279
  %2281 = vrot.lane.b32.xlu0 %v1971, 120
  %v2282 = vpop.permute.xlu0 %2281
  %2283 = vrot.lane.b32.xlu0 %v1972, 120
  %v2284 = vpop.permute.xlu0 %2283
  %2285 = vrot.lane.b32.xlu0 %v1973, 120
  %v2286 = vpop.permute.xlu0 %2285
  %2287 = vrot.lane.b32.xlu0 %v1974, 120
  %v2288 = vpop.permute.xlu0 %2287
  %2289 = vrot.lane.b32.xlu0 %v1975, 120
  %v2290 = vpop.permute.xlu0 %2289
  %2291 = vrot.lane.b32.xlu0 %v1976, 120
  %v2292 = vpop.permute.xlu0 %2291
  %2293 = vrot.lane.b32.xlu0 %v1977, 120
  %v2294 = vpop.permute.xlu0 %2293
  %2295 = vrot.lane.b32.xlu0 %v1978, 120
  %v2296 = vpop.permute.xlu0 %2295
  %2297 = vrot.lane.b32.xlu0 %v1979, 120
  %v2298 = vpop.permute.xlu0 %2297
  %2299 = vrot.lane.b32.xlu0 %v1980, 120
  %v2300 = vpop.permute.xlu0 %2299
  %2301 = vrot.lane.b32.xlu0 %v1981, 120
  %v2302 = vpop.permute.xlu0 %2301
  %2303 = vrot.lane.b32.xlu0 %v1982, 120
  %v2304 = vpop.permute.xlu0 %2303
  %2305 = vrot.lane.b32.xlu0 %v1983, 120
  %v2306 = vpop.permute.xlu0 %2305
  %2307 = vrot.lane.b32.xlu0 %v1984, 120
  %v2308 = vpop.permute.xlu0 %2307
  %2309 = vrot.lane.b32.xlu0 %v1985, 120
  %v2310 = vpop.permute.xlu0 %2309
  %2311 = vrot.lane.b32.xlu0 %v1986, 120
  %v2312 = vpop.permute.xlu0 %2311
  %2313 = vrot.lane.b32.xlu0 %v1987, 120
  %v2314 = vpop.permute.xlu0 %2313
  %2315 = vrot.lane.b32.xlu0 %v1988, 120
  %v2316 = vpop.permute.xlu0 %2315
  %2317 = vrot.lane.b32.xlu0 %v1989, 120
  %v2318 = vpop.permute.xlu0 %2317
  %2319 = vrot.lane.b32.xlu0 %v1990, 120
  %v2320 = vpop.permute.xlu0 %2319
  %2321 = vrot.lane.b32.xlu0 %v1991, 120
  %v2322 = vpop.permute.xlu0 %2321
  %2323 = vrot.lane.b32.xlu0 %v1992, 120
  %v2324 = vpop.permute.xlu0 %2323
  %2325 = vrot.lane.b32.xlu0 %v1993, 120
  %v2326 = vpop.permute.xlu0 %2325
  %2327 = vrot.lane.b32.xlu0 %v1994, 120
  %v2328 = vpop.permute.xlu0 %2327
  %2329 = vrot.lane.b32.xlu0 %v1995, 120
  %v2330 = vpop.permute.xlu0 %2329
  %2331 = vrot.lane.b32.xlu0 %v1996, 120
  %v2332 = vpop.permute.xlu0 %2331
  %2333 = vrot.lane.b32.xlu0 %v1997, 120
  %v2334 = vpop.permute.xlu0 %2333
  %2335 = vrot.lane.b32.xlu0 %v1998, 120
  %v2336 = vpop.permute.xlu0 %2335
  %2337 = vrot.lane.b32.xlu0 %v1999, 120
  %v2338 = vpop.permute.xlu0 %2337
  %2339 = vrot.lane.b32.xlu0 %v2000, 120
  %v2340 = vpop.permute.xlu0 %2339
  %2341 = vrot.lane.b32.xlu0 %v2001, 120
  %v2342 = vpop.permute.xlu0 %2341
  %2343 = vrot.lane.b32.xlu0 %v2002, 120
  %v2344 = vpop.permute.xlu0 %2343
  %2345 = vrot.lane.b32.xlu0 %v2003, 120
  %v2346 = vpop.permute.xlu0 %2345
  %2347 = vrot.lane.b32.xlu0 %v2004, 120
  %v2348 = vpop.permute.xlu0 %2347
  %2349 = vrot.lane.b32.xlu0 %v2005, 120
  %v2350 = vpop.permute.xlu0 %2349
  %2351 = vrot.lane.b32.xlu0 %v2006, 120
  %v2352 = vpop.permute.xlu0 %2351
  %2353 = vrot.lane.b32.xlu0 %v2007, 120
  %v2354 = vpop.permute.xlu0 %2353
  %2355 = vrot.lane.b32.xlu0 %v2008, 120
  %v2356 = vpop.permute.xlu0 %2355
  %2357 = vrot.lane.b32.xlu0 %v2009, 120
  %v2358 = vpop.permute.xlu0 %2357
  %2359 = vrot.lane.b32.xlu0 %v2010, 120
  %v2360 = vpop.permute.xlu0 %2359
  %2361 = vrot.lane.b32.xlu0 %v2011, 120
  %v2362 = vpop.permute.xlu0 %2361
  %2363 = vrot.lane.b32.xlu0 %v2012, 120
  %v2364 = vpop.permute.xlu0 %2363
  %2365 = vrot.lane.b32.xlu0 %v2013, 120
  %v2366 = vpop.permute.xlu0 %2365
  %2367 = vrot.lane.b32.xlu0 %v2014, 120
  %v2368 = vpop.permute.xlu0 %2367
  %2369 = vrot.lane.b32.xlu0 %v2015, 120
  %v2370 = vpop.permute.xlu0 %2369
  %2371 = vrot.lane.b32.xlu0 %v2016, 120
  %v2372 = vpop.permute.xlu0 %2371
  %2373 = vrot.lane.b32.xlu0 %v2017, 120
  %v2374 = vpop.permute.xlu0 %2373
  %2375 = vrot.lane.b32.xlu0 %v2018, 120
  %v2376 = vpop.permute.xlu0 %2375
  %2377 = vrot.lane.b32.xlu0 %v2019, 120
  %v2378 = vpop.permute.xlu0 %2377
  %2379 = vrot.lane.b32.xlu0 %v2020, 120
  %v2380 = vpop.permute.xlu0 %2379
  %2381 = vrot.lane.b32.xlu0 %v2021, 120
  %v2382 = vpop.permute.xlu0 %2381
  %2383 = vrot.lane.b32.xlu0 %v2022, 120
  %v2384 = vpop.permute.xlu0 %2383
  %2385 = vrot.lane.b32.xlu0 %v2023, 120
  %v2386 = vpop.permute.xlu0 %2385
  %2387 = vrot.lane.b32.xlu0 %v2024, 120
  %v2388 = vpop.permute.xlu0 %2387
  %2389 = vrot.lane.b32.xlu0 %v2025, 120
  %v2390 = vpop.permute.xlu0 %2389
  %2391 = vrot.lane.b32.xlu0 %v2026, 120
  %v2392 = vpop.permute.xlu0 %2391
  %2393 = vrot.lane.b32.xlu0 %v2027, 120
  %v2394 = vpop.permute.xlu0 %2393
  %2395 = vrot.lane.b32.xlu0 %v2028, 120
  %v2396 = vpop.permute.xlu0 %2395
  %2397 = vrot.lane.b32.xlu0 %v2029, 120
  %v2398 = vpop.permute.xlu0 %2397
  %2399 = vrot.lane.b32.xlu0 %v2030, 120
  %v2400 = vpop.permute.xlu0 %2399
  %2401 = vrot.lane.b32.xlu0 %v2031, 120
  %v2402 = vpop.permute.xlu0 %2401
  %2403 = vrot.lane.b32.xlu0 %v2032, 120
  %v2404 = vpop.permute.xlu0 %2403
  %2405 = vrot.lane.b32.xlu0 %v2033, 120
  %v2406 = vpop.permute.xlu0 %2405
  %2407 = vrot.lane.b32.xlu0 %v2034, 120
  %v2408 = vpop.permute.xlu0 %2407
  %2409 = vrot.lane.b32.xlu0 %v2035, 120
  %v2410 = vpop.permute.xlu0 %2409
  %2411 = vrot.lane.b32.xlu0 %v2036, 120
  %v2412 = vpop.permute.xlu0 %2411
  %2413 = vrot.lane.b32.xlu0 %v2037, 120
  %v2414 = vpop.permute.xlu0 %2413
  %2415 = vrot.lane.b32.xlu0 %v2038, 120
  %v2416 = vpop.permute.xlu0 %2415
  %2417 = vrot.lane.b32.xlu0 %v2039, 120
  %v2418 = vpop.permute.xlu0 %2417
  %2419 = vrot.lane.b32.xlu0 %v2040, 120
  %v2420 = vpop.permute.xlu0 %2419
  %2421 = vrot.lane.b32.xlu0 %v2041, 120
  %v2422 = vpop.permute.xlu0 %2421
  %2423 = vrot.lane.b32.xlu0 %v2042, 120
  %v2424 = vpop.permute.xlu0 %2423
  %2425 = vrot.lane.b32.xlu0 %v2043, 120
  %v2426 = vpop.permute.xlu0 %2425
  %2427 = vrot.lane.b32.xlu0 %v2044, 120
  %v2428 = vpop.permute.xlu0 %2427
  %v2429 = vld [vmem:[%s0] sm:$0xf]
  %v2430 = vld [vmem:[%s0 + $0x4] sm:$0xf]
  %v2431 = vld [vmem:[%s0 + $0x8] sm:$0xf]
  %v2432 = vld [vmem:[%s0 + $0xc] sm:$0xf]
  %v2433 = vld [vmem:[%s0 + $0x10] sm:$0xf]
  %v2434 = vld [vmem:[%s0 + $0x14] sm:$0xf]
  %v2435 = vld [vmem:[%s0 + $0x18] sm:$0xf]
  %v2436 = vld [vmem:[%s0 + $0x1c] sm:$0xf]
  %v2437 = vld [vmem:[%s0 + $0x20] sm:$0xf]
  %v2438 = vld [vmem:[%s0 + $0x24] sm:$0xf]
  %v2439 = vld [vmem:[%s0 + $0x28] sm:$0xf]
  %v2440 = vld [vmem:[%s0 + $0x2c] sm:$0xf]
  %v2441 = vld [vmem:[%s0 + $0x30] sm:$0xf]
  %v2442 = vld [vmem:[%s0 + $0x34] sm:$0xf]
  %v2443 = vld [vmem:[%s0 + $0x38] sm:$0xf]
  %v2444 = vld [vmem:[%s0 + $0x3c] sm:$0xf]
  %v2445 = vld [vmem:[%s0 + $0x40] sm:$0xf]
  %v2446 = vld [vmem:[%s0 + $0x44] sm:$0xf]
  %v2447 = vld [vmem:[%s0 + $0x48] sm:$0xf]
  %v2448 = vld [vmem:[%s0 + $0x4c] sm:$0xf]
  %v2449 = vld [vmem:[%s0 + $0x50] sm:$0xf]
  %v2450 = vld [vmem:[%s0 + $0x54] sm:$0xf]
  %v2451 = vld [vmem:[%s0 + $0x58] sm:$0xf]
  %v2452 = vld [vmem:[%s0 + $0x5c] sm:$0xf]
  %v2453 = vld [vmem:[%s0 + $0x60] sm:$0xf]
  %v2454 = vld [vmem:[%s0 + $0x64] sm:$0xf]
  %v2455 = vld [vmem:[%s0 + $0x68] sm:$0xf]
  %v2456 = vld [vmem:[%s0 + $0x6c] sm:$0xf]
  %v2457 = vld [vmem:[%s0 + $0x70] sm:$0xf]
  %v2458 = vld [vmem:[%s0 + $0x74] sm:$0xf]
  %v2459 = vld [vmem:[%s0 + $0x78] sm:$0xf]
  %v2460 = vld [vmem:[%s0 + $0x7c] sm:$0xf]
  %v2461 = vld [vmem:[%s0 + $0x80] sm:$0xf]
  %v2462 = vld [vmem:[%s0 + $0x84] sm:$0xf]
  %v2463 = vld [vmem:[%s0 + $0x88] sm:$0xf]
  %v2464 = vld [vmem:[%s0 + $0x8c] sm:$0xf]
  %v2465 = vld [vmem:[%s0 + $0x90] sm:$0xf]
  %v2466 = vld [vmem:[%s0 + $0x94] sm:$0xf]
  %v2467 = vld [vmem:[%s0 + $0x98] sm:$0xf]
  %v2468 = vld [vmem:[%s0 + $0x9c] sm:$0xf]
  %v2469 = vld [vmem:[%s0 + $0xa0] sm:$0xf]
  %v2470 = vld [vmem:[%s0 + $0xa4] sm:$0xf]
  %v2471 = vld [vmem:[%s0 + $0xa8] sm:$0xf]
  %v2472 = vld [vmem:[%s0 + $0xac] sm:$0xf]
  %v2473 = vld [vmem:[%s0 + $0xb0] sm:$0xf]
  %v2474 = vld [vmem:[%s0 + $0xb4] sm:$0xf]
  %v2475 = vld [vmem:[%s0 + $0xb8] sm:$0xf]
  %v2476 = vld [vmem:[%s0 + $0xbc] sm:$0xf]
  %v2477 = vld [vmem:[%s0 + $0xc0] sm:$0xf]
  %v2478 = vld [vmem:[%s0 + $0xc4] sm:$0xf]
  %v2479 = vld [vmem:[%s0 + $0xc8] sm:$0xf]
  %v2480 = vld [vmem:[%s0 + $0xcc] sm:$0xf]
  %v2481 = vld [vmem:[%s0 + $0xd0] sm:$0xf]
  %v2482 = vld [vmem:[%s0 + $0xd4] sm:$0xf]
  %v2483 = vld [vmem:[%s0 + $0xd8] sm:$0xf]
  %v2484 = vld [vmem:[%s0 + $0xdc] sm:$0xf]
  %v2485 = vld [vmem:[%s0 + $0xe0] sm:$0xf]
  %v2486 = vld [vmem:[%s0 + $0xe4] sm:$0xf]
  %v2487 = vld [vmem:[%s0 + $0xe8] sm:$0xf]
  %v2488 = vld [vmem:[%s0 + $0xec] sm:$0xf]
  %v2489 = vld [vmem:[%s0 + $0xf0] sm:$0xf]
  %v2490 = vld [vmem:[%s0 + $0xf4] sm:$0xf]
  %v2491 = vld [vmem:[%s0 + $0xf8] sm:$0xf]
  %v2492 = vld [vmem:[%s0 + $0xfc] sm:$0xf]
  %v2557 = vunpack.c.l.b16 %v2429
  %v2558 = vunpack.c.l.b16 %v2430
  %v2559 = vunpack.c.l.b16 %v2431
  %v2560 = vunpack.c.l.b16 %v2432
  %v2561 = vunpack.c.l.b16 %v2433
  %v2562 = vunpack.c.l.b16 %v2434
  %v2563 = vunpack.c.l.b16 %v2435
  %v2564 = vunpack.c.l.b16 %v2436
  %v2565 = vunpack.c.l.b16 %v2437
  %v2566 = vunpack.c.l.b16 %v2438
  %v2567 = vunpack.c.l.b16 %v2439
  %v2568 = vunpack.c.l.b16 %v2440
  %v2569 = vunpack.c.l.b16 %v2441
  %v2570 = vunpack.c.l.b16 %v2442
  %v2571 = vunpack.c.l.b16 %v2443
  %v2572 = vunpack.c.l.b16 %v2444
  %v2573 = vunpack.c.l.b16 %v2445
  %v2574 = vunpack.c.l.b16 %v2446
  %v2575 = vunpack.c.l.b16 %v2447
  %v2576 = vunpack.c.l.b16 %v2448
  %v2577 = vunpack.c.l.b16 %v2449
  %v2578 = vunpack.c.l.b16 %v2450
  %v2579 = vunpack.c.l.b16 %v2451
  %v2580 = vunpack.c.l.b16 %v2452
  %v2581 = vunpack.c.l.b16 %v2453
  %v2582 = vunpack.c.l.b16 %v2454
  %v2583 = vunpack.c.l.b16 %v2455
  %v2584 = vunpack.c.l.b16 %v2456
  %v2585 = vunpack.c.l.b16 %v2457
  %v2586 = vunpack.c.l.b16 %v2458
  %v2587 = vunpack.c.l.b16 %v2459
  %v2588 = vunpack.c.l.b16 %v2460
  %v2589 = vunpack.c.l.b16 %v2461
  %v2590 = vunpack.c.l.b16 %v2462
  %v2591 = vunpack.c.l.b16 %v2463
  %v2592 = vunpack.c.l.b16 %v2464
  %v2593 = vunpack.c.l.b16 %v2465
  %v2594 = vunpack.c.l.b16 %v2466
  %v2595 = vunpack.c.l.b16 %v2467
  %v2596 = vunpack.c.l.b16 %v2468
  %v2597 = vunpack.c.l.b16 %v2469
  %v2598 = vunpack.c.l.b16 %v2470
  %v2599 = vunpack.c.l.b16 %v2471
  %v2600 = vunpack.c.l.b16 %v2472
  %v2601 = vunpack.c.l.b16 %v2473
  %v2602 = vunpack.c.l.b16 %v2474
  %v2603 = vunpack.c.l.b16 %v2475
  %v2604 = vunpack.c.l.b16 %v2476
  %v2605 = vunpack.c.l.b16 %v2477
  %v2606 = vunpack.c.l.b16 %v2478
  %v2607 = vunpack.c.l.b16 %v2479
  %v2608 = vunpack.c.l.b16 %v2480
  %v2609 = vunpack.c.l.b16 %v2481
  %v2610 = vunpack.c.l.b16 %v2482
  %v2611 = vunpack.c.l.b16 %v2483
  %v2612 = vunpack.c.l.b16 %v2484
  %v2613 = vunpack.c.l.b16 %v2485
  %v2614 = vunpack.c.l.b16 %v2486
  %v2615 = vunpack.c.l.b16 %v2487
  %v2616 = vunpack.c.l.b16 %v2488
  %v2617 = vunpack.c.l.b16 %v2489
  %v2618 = vunpack.c.l.b16 %v2490
  %v2619 = vunpack.c.l.b16 %v2491
  %v2620 = vunpack.c.l.b16 %v2492
  %v2621 = vpack.c.b16 %v2558, %v2557
  %v2622 = vpack.c.b16 %v2560, %v2559
  %v2623 = vpack.c.b16 %v2562, %v2561
  %v2624 = vpack.c.b16 %v2564, %v2563
  %v2625 = vpack.c.b16 %v2566, %v2565
  %v2626 = vpack.c.b16 %v2568, %v2567
  %v2627 = vpack.c.b16 %v2570, %v2569
  %v2628 = vpack.c.b16 %v2572, %v2571
  %v2629 = vpack.c.b16 %v2574, %v2573
  %v2630 = vpack.c.b16 %v2576, %v2575
  %v2631 = vpack.c.b16 %v2578, %v2577
  %v2632 = vpack.c.b16 %v2580, %v2579
  %v2633 = vpack.c.b16 %v2582, %v2581
  %v2634 = vpack.c.b16 %v2584, %v2583
  %v2635 = vpack.c.b16 %v2586, %v2585
  %v2636 = vpack.c.b16 %v2588, %v2587
  %v2637 = vpack.c.b16 %v2590, %v2589
  %v2638 = vpack.c.b16 %v2592, %v2591
  %v2639 = vpack.c.b16 %v2594, %v2593
  %v2640 = vpack.c.b16 %v2596, %v2595
  %v2641 = vpack.c.b16 %v2598, %v2597
  %v2642 = vpack.c.b16 %v2600, %v2599
  %v2643 = vpack.c.b16 %v2602, %v2601
  %v2644 = vpack.c.b16 %v2604, %v2603
  %v2645 = vpack.c.b16 %v2606, %v2605
  %v2646 = vpack.c.b16 %v2608, %v2607
  %v2647 = vpack.c.b16 %v2610, %v2609
  %v2648 = vpack.c.b16 %v2612, %v2611
  %v2649 = vpack.c.b16 %v2614, %v2613
  %v2650 = vpack.c.b16 %v2616, %v2615
  %v2651 = vpack.c.b16 %v2618, %v2617
  %v2652 = vpack.c.b16 %v2620, %v2619
  %v2653 = vcombine.low %v1917, %v1918
  %v2654 = vcombine.low %v1919, %v1920
  %v2655 = vcombine.low %v1921, %v1922
  %v2656 = vcombine.low %v1923, %v1924
  %v2658 = vunpack.c.l.s4 1966171168
  %v2659 = vunpack.c.0.s8 %v2658
  %v2660 = vlaneseq
  %v2661 = vshrl.u32 %v2660, 7
  %v2662 = vsub.s32 %v2659, %v2661
  %v2663 = vrot.slane %v2653, %v2662
  %v2665 = vunpack.c.l.s4 1966171168
  %v2666 = vunpack.c.0.s8 %v2665
  %v2667 = vlaneseq
  %v2668 = vshrl.u32 %v2667, 7
  %v2669 = vsub.s32 %v2666, %v2668
  %v2670 = vrot.slane %v2654, %v2669
  %v2672 = vunpack.c.l.s4 1966171168
  %v2673 = vunpack.c.0.s8 %v2672
  %v2674 = vlaneseq
  %v2675 = vshrl.u32 %v2674, 7
  %v2676 = vsub.s32 %v2673, %v2675
  %v2677 = vrot.slane %v2655, %v2676
  %v2679 = vunpack.c.l.s4 1966171168
  %v2680 = vunpack.c.0.s8 %v2679
  %v2681 = vlaneseq
  %v2682 = vshrl.u32 %v2681, 7
  %v2683 = vsub.s32 %v2680, %v2682
  %v2684 = vrot.slane %v2656, %v2683
  %v2685 = vcombine.low %v2663, %v2670
  %v2686 = vcombine.low %v2677, %v2684
  %v2688 = vunpack.c.l.s4 1966171168
  %v2689 = vunpack.c.0.s8 %v2688
  %v2690 = vlaneseq
  %v2691 = vshrl.u32 %v2690, 7
  %v2692 = vsub.s32 %v2689, %v2691
  %v2693 = vrot.slane %v2685, %v2692
  %v2695 = vunpack.c.l.s4 1966171168
  %v2696 = vunpack.c.0.s8 %v2695
  %v2697 = vlaneseq
  %v2698 = vshrl.u32 %v2697, 7
  %v2699 = vsub.s32 %v2696, %v2698
  %v2700 = vrot.slane %v2686, %v2699
  %v2701 = vcombine.low %v2693, %v2700
  %v2702 = vcombine.low %v2174, %v2176
  %v2703 = vcombine.low %v2178, %v2180
  %v2704 = vcombine.low %v2182, %v2184
  %v2705 = vcombine.low %v2186, %v2188
  %v2707 = vunpack.c.l.s4 1966171168
  %v2708 = vunpack.c.0.s8 %v2707
  %v2709 = vlaneseq
  %v2710 = vshrl.u32 %v2709, 7
  %v2711 = vsub.s32 %v2708, %v2710
  %v2712 = vrot.slane %v2702, %v2711
  %v2714 = vunpack.c.l.s4 1966171168
  %v2715 = vunpack.c.0.s8 %v2714
  %v2716 = vlaneseq
  %v2717 = vshrl.u32 %v2716, 7
  %v2718 = vsub.s32 %v2715, %v2717
  %v2719 = vrot.slane %v2703, %v2718
  %v2721 = vunpack.c.l.s4 1966171168
  %v2722 = vunpack.c.0.s8 %v2721
  %v2723 = vlaneseq
  %v2724 = vshrl.u32 %v2723, 7
  %v2725 = vsub.s32 %v2722, %v2724
  %v2726 = vrot.slane %v2704, %v2725
  %v2728 = vunpack.c.l.s4 1966171168
  %v2729 = vunpack.c.0.s8 %v2728
  %v2730 = vlaneseq
  %v2731 = vshrl.u32 %v2730, 7
  %v2732 = vsub.s32 %v2729, %v2731
  %v2733 = vrot.slane %v2705, %v2732
  %v2734 = vcombine.low %v2712, %v2719
  %v2735 = vcombine.low %v2726, %v2733
  %v2737 = vunpack.c.l.s4 1966171168
  %v2738 = vunpack.c.0.s8 %v2737
  %v2739 = vlaneseq
  %v2740 = vshrl.u32 %v2739, 7
  %v2741 = vsub.s32 %v2738, %v2740
  %v2742 = vrot.slane %v2734, %v2741
  %v2744 = vunpack.c.l.s4 1966171168
  %v2745 = vunpack.c.0.s8 %v2744
  %v2746 = vlaneseq
  %v2747 = vshrl.u32 %v2746, 7
  %v2748 = vsub.s32 %v2745, %v2747
  %v2749 = vrot.slane %v2735, %v2748
  %v2750 = vcombine.low %v2742, %v2749
  %v2751 = vcombine.low %v1925, %v1926
  %v2752 = vcombine.low %v1927, %v1928
  %v2753 = vcombine.low %v1929, %v1930
  %v2754 = vcombine.low %v1931, %v1932
  %v2756 = vunpack.c.l.s4 1966171168
  %v2757 = vunpack.c.0.s8 %v2756
  %v2758 = vlaneseq
  %v2759 = vshrl.u32 %v2758, 7
  %v2760 = vsub.s32 %v2757, %v2759
  %v2761 = vrot.slane %v2751, %v2760
  %v2763 = vunpack.c.l.s4 1966171168
  %v2764 = vunpack.c.0.s8 %v2763
  %v2765 = vlaneseq
  %v2766 = vshrl.u32 %v2765, 7
  %v2767 = vsub.s32 %v2764, %v2766
  %v2768 = vrot.slane %v2752, %v2767
  %v2770 = vunpack.c.l.s4 1966171168
  %v2771 = vunpack.c.0.s8 %v2770
  %v2772 = vlaneseq
  %v2773 = vshrl.u32 %v2772, 7
  %v2774 = vsub.s32 %v2771, %v2773
  %v2775 = vrot.slane %v2753, %v2774
  %v2777 = vunpack.c.l.s4 1966171168
  %v2778 = vunpack.c.0.s8 %v2777
  %v2779 = vlaneseq
  %v2780 = vshrl.u32 %v2779, 7
  %v2781 = vsub.s32 %v2778, %v2780
  %v2782 = vrot.slane %v2754, %v2781
  %v2783 = vcombine.low %v2761, %v2768
  %v2784 = vcombine.low %v2775, %v2782
  %v2786 = vunpack.c.l.s4 1966171168
  %v2787 = vunpack.c.0.s8 %v2786
  %v2788 = vlaneseq
  %v2789 = vshrl.u32 %v2788, 7
  %v2790 = vsub.s32 %v2787, %v2789
  %v2791 = vrot.slane %v2783, %v2790
  %v2793 = vunpack.c.l.s4 1966171168
  %v2794 = vunpack.c.0.s8 %v2793
  %v2795 = vlaneseq
  %v2796 = vshrl.u32 %v2795, 7
  %v2797 = vsub.s32 %v2794, %v2796
  %v2798 = vrot.slane %v2784, %v2797
  %v2799 = vcombine.low %v2791, %v2798
  %v2800 = vcombine.low %v2190, %v2192
  %v2801 = vcombine.low %v2194, %v2196
  %v2802 = vcombine.low %v2198, %v2200
  %v2803 = vcombine.low %v2202, %v2204
  %v2805 = vunpack.c.l.s4 1966171168
  %v2806 = vunpack.c.0.s8 %v2805
  %v2807 = vlaneseq
  %v2808 = vshrl.u32 %v2807, 7
  %v2809 = vsub.s32 %v2806, %v2808
  %v2810 = vrot.slane %v2800, %v2809
  %v2812 = vunpack.c.l.s4 1966171168
  %v2813 = vunpack.c.0.s8 %v2812
  %v2814 = vlaneseq
  %v2815 = vshrl.u32 %v2814, 7
  %v2816 = vsub.s32 %v2813, %v2815
  %v2817 = vrot.slane %v2801, %v2816
  %v2819 = vunpack.c.l.s4 1966171168
  %v2820 = vunpack.c.0.s8 %v2819
  %v2821 = vlaneseq
  %v2822 = vshrl.u32 %v2821, 7
  %v2823 = vsub.s32 %v2820, %v2822
  %v2824 = vrot.slane %v2802, %v2823
  %v2826 = vunpack.c.l.s4 1966171168
  %v2827 = vunpack.c.0.s8 %v2826
  %v2828 = vlaneseq
  %v2829 = vshrl.u32 %v2828, 7
  %v2830 = vsub.s32 %v2827, %v2829
  %v2831 = vrot.slane %v2803, %v2830
  %v2832 = vcombine.low %v2810, %v2817
  %v2833 = vcombine.low %v2824, %v2831
  %v2835 = vunpack.c.l.s4 1966171168
  %v2836 = vunpack.c.0.s8 %v2835
  %v2837 = vlaneseq
  %v2838 = vshrl.u32 %v2837, 7
  %v2839 = vsub.s32 %v2836, %v2838
  %v2840 = vrot.slane %v2832, %v2839
  %v2842 = vunpack.c.l.s4 1966171168
  %v2843 = vunpack.c.0.s8 %v2842
  %v2844 = vlaneseq
  %v2845 = vshrl.u32 %v2844, 7
  %v2846 = vsub.s32 %v2843, %v2845
  %v2847 = vrot.slane %v2833, %v2846
  %v2848 = vcombine.low %v2840, %v2847
  %v2849 = vcombine.low %v1933, %v1934
  %v2850 = vcombine.low %v1935, %v1936
  %v2851 = vcombine.low %v1937, %v1938
  %v2852 = vcombine.low %v1939, %v1940
  %v2854 = vunpack.c.l.s4 1966171168
  %v2855 = vunpack.c.0.s8 %v2854
  %v2856 = vlaneseq
  %v2857 = vshrl.u32 %v2856, 7
  %v2858 = vsub.s32 %v2855, %v2857
  %v2859 = vrot.slane %v2849, %v2858
  %v2861 = vunpack.c.l.s4 1966171168
  %v2862 = vunpack.c.0.s8 %v2861
  %v2863 = vlaneseq
  %v2864 = vshrl.u32 %v2863, 7
  %v2865 = vsub.s32 %v2862, %v2864
  %v2866 = vrot.slane %v2850, %v2865
  %v2868 = vunpack.c.l.s4 1966171168
  %v2869 = vunpack.c.0.s8 %v2868
  %v2870 = vlaneseq
  %v2871 = vshrl.u32 %v2870, 7
  %v2872 = vsub.s32 %v2869, %v2871
  %v2873 = vrot.slane %v2851, %v2872
  %v2875 = vunpack.c.l.s4 1966171168
  %v2876 = vunpack.c.0.s8 %v2875
  %v2877 = vlaneseq
  %v2878 = vshrl.u32 %v2877, 7
  %v2879 = vsub.s32 %v2876, %v2878
  %v2880 = vrot.slane %v2852, %v2879
  %v2881 = vcombine.low %v2859, %v2866
  %v2882 = vcombine.low %v2873, %v2880
  %v2884 = vunpack.c.l.s4 1966171168
  %v2885 = vunpack.c.0.s8 %v2884
  %v2886 = vlaneseq
  %v2887 = vshrl.u32 %v2886, 7
  %v2888 = vsub.s32 %v2885, %v2887
  %v2889 = vrot.slane %v2881, %v2888
  %v2891 = vunpack.c.l.s4 1966171168
  %v2892 = vunpack.c.0.s8 %v2891
  %v2893 = vlaneseq
  %v2894 = vshrl.u32 %v2893, 7
  %v2895 = vsub.s32 %v2892, %v2894
  %v2896 = vrot.slane %v2882, %v2895
  %v2897 = vcombine.low %v2889, %v2896
  %v2898 = vcombine.low %v2206, %v2208
  %v2899 = vcombine.low %v2210, %v2212
  %v2900 = vcombine.low %v2214, %v2216
  %v2901 = vcombine.low %v2218, %v2220
  %v2903 = vunpack.c.l.s4 1966171168
  %v2904 = vunpack.c.0.s8 %v2903
  %v2905 = vlaneseq
  %v2906 = vshrl.u32 %v2905, 7
  %v2907 = vsub.s32 %v2904, %v2906
  %v2908 = vrot.slane %v2898, %v2907
  %v2910 = vunpack.c.l.s4 1966171168
  %v2911 = vunpack.c.0.s8 %v2910
  %v2912 = vlaneseq
  %v2913 = vshrl.u32 %v2912, 7
  %v2914 = vsub.s32 %v2911, %v2913
  %v2915 = vrot.slane %v2899, %v2914
  %v2917 = vunpack.c.l.s4 1966171168
  %v2918 = vunpack.c.0.s8 %v2917
  %v2919 = vlaneseq
  %v2920 = vshrl.u32 %v2919, 7
  %v2921 = vsub.s32 %v2918, %v2920
  %v2922 = vrot.slane %v2900, %v2921
  %v2924 = vunpack.c.l.s4 1966171168
  %v2925 = vunpack.c.0.s8 %v2924
  %v2926 = vlaneseq
  %v2927 = vshrl.u32 %v2926, 7
  %v2928 = vsub.s32 %v2925, %v2927
  %v2929 = vrot.slane %v2901, %v2928
  %v2930 = vcombine.low %v2908, %v2915
  %v2931 = vcombine.low %v2922, %v2929
  %v2933 = vunpack.c.l.s4 1966171168
  %v2934 = vunpack.c.0.s8 %v2933
  %v2935 = vlaneseq
  %v2936 = vshrl.u32 %v2935, 7
  %v2937 = vsub.s32 %v2934, %v2936
  %v2938 = vrot.slane %v2930, %v2937
  %v2940 = vunpack.c.l.s4 1966171168
  %v2941 = vunpack.c.0.s8 %v2940
  %v2942 = vlaneseq
  %v2943 = vshrl.u32 %v2942, 7
  %v2944 = vsub.s32 %v2941, %v2943
  %v2945 = vrot.slane %v2931, %v2944
  %v2946 = vcombine.low %v2938, %v2945
  %v2947 = vcombine.low %v1941, %v1942
  %v2948 = vcombine.low %v1943, %v1944
  %v2949 = vcombine.low %v1945, %v1946
  %v2950 = vcombine.low %v1947, %v1948
  %v2952 = vunpack.c.l.s4 1966171168
  %v2953 = vunpack.c.0.s8 %v2952
  %v2954 = vlaneseq
  %v2955 = vshrl.u32 %v2954, 7
  %v2956 = vsub.s32 %v2953, %v2955
  %v2957 = vrot.slane %v2947, %v2956
  %v2959 = vunpack.c.l.s4 1966171168
  %v2960 = vunpack.c.0.s8 %v2959
  %v2961 = vlaneseq
  %v2962 = vshrl.u32 %v2961, 7
  %v2963 = vsub.s32 %v2960, %v2962
  %v2964 = vrot.slane %v2948, %v2963
  %v2966 = vunpack.c.l.s4 1966171168
  %v2967 = vunpack.c.0.s8 %v2966
  %v2968 = vlaneseq
  %v2969 = vshrl.u32 %v2968, 7
  %v2970 = vsub.s32 %v2967, %v2969
  %v2971 = vrot.slane %v2949, %v2970
  %v2973 = vunpack.c.l.s4 1966171168
  %v2974 = vunpack.c.0.s8 %v2973
  %v2975 = vlaneseq
  %v2976 = vshrl.u32 %v2975, 7
  %v2977 = vsub.s32 %v2974, %v2976
  %v2978 = vrot.slane %v2950, %v2977
  %v2979 = vcombine.low %v2957, %v2964
  %v2980 = vcombine.low %v2971, %v2978
  %v2982 = vunpack.c.l.s4 1966171168
  %v2983 = vunpack.c.0.s8 %v2982
  %v2984 = vlaneseq
  %v2985 = vshrl.u32 %v2984, 7
  %v2986 = vsub.s32 %v2983, %v2985
  %v2987 = vrot.slane %v2979, %v2986
  %v2989 = vunpack.c.l.s4 1966171168
  %v2990 = vunpack.c.0.s8 %v2989
  %v2991 = vlaneseq
  %v2992 = vshrl.u32 %v2991, 7
  %v2993 = vsub.s32 %v2990, %v2992
  %v2994 = vrot.slane %v2980, %v2993
  %v2995 = vcombine.low %v2987, %v2994
  %v2996 = vcombine.low %v2222, %v2224
  %v2997 = vcombine.low %v2226, %v2228
  %v2998 = vcombine.low %v2230, %v2232
  %v2999 = vcombine.low %v2234, %v2236
  %v3001 = vunpack.c.l.s4 1966171168
  %v3002 = vunpack.c.0.s8 %v3001
  %v3003 = vlaneseq
  %v3004 = vshrl.u32 %v3003, 7
  %v3005 = vsub.s32 %v3002, %v3004
  %v3006 = vrot.slane %v2996, %v3005
  %v3008 = vunpack.c.l.s4 1966171168
  %v3009 = vunpack.c.0.s8 %v3008
  %v3010 = vlaneseq
  %v3011 = vshrl.u32 %v3010, 7
  %v3012 = vsub.s32 %v3009, %v3011
  %v3013 = vrot.slane %v2997, %v3012
  %v3015 = vunpack.c.l.s4 1966171168
  %v3016 = vunpack.c.0.s8 %v3015
  %v3017 = vlaneseq
  %v3018 = vshrl.u32 %v3017, 7
  %v3019 = vsub.s32 %v3016, %v3018
  %v3020 = vrot.slane %v2998, %v3019
  %v3022 = vunpack.c.l.s4 1966171168
  %v3023 = vunpack.c.0.s8 %v3022
  %v3024 = vlaneseq
  %v3025 = vshrl.u32 %v3024, 7
  %v3026 = vsub.s32 %v3023, %v3025
  %v3027 = vrot.slane %v2999, %v3026
  %v3028 = vcombine.low %v3006, %v3013
  %v3029 = vcombine.low %v3020, %v3027
  %v3031 = vunpack.c.l.s4 1966171168
  %v3032 = vunpack.c.0.s8 %v3031
  %v3033 = vlaneseq
  %v3034 = vshrl.u32 %v3033, 7
  %v3035 = vsub.s32 %v3032, %v3034
  %v3036 = vrot.slane %v3028, %v3035
  %v3038 = vunpack.c.l.s4 1966171168
  %v3039 = vunpack.c.0.s8 %v3038
  %v3040 = vlaneseq
  %v3041 = vshrl.u32 %v3040, 7
  %v3042 = vsub.s32 %v3039, %v3041
  %v3043 = vrot.slane %v3029, %v3042
  %v3044 = vcombine.low %v3036, %v3043
  %v3045 = vcombine.low %v1949, %v1950
  %v3046 = vcombine.low %v1951, %v1952
  %v3047 = vcombine.low %v1953, %v1954
  %v3048 = vcombine.low %v1955, %v1956
  %v3050 = vunpack.c.l.s4 1966171168
  %v3051 = vunpack.c.0.s8 %v3050
  %v3052 = vlaneseq
  %v3053 = vshrl.u32 %v3052, 7
  %v3054 = vsub.s32 %v3051, %v3053
  %v3055 = vrot.slane %v3045, %v3054
  %v3057 = vunpack.c.l.s4 1966171168
  %v3058 = vunpack.c.0.s8 %v3057
  %v3059 = vlaneseq
  %v3060 = vshrl.u32 %v3059, 7
  %v3061 = vsub.s32 %v3058, %v3060
  %v3062 = vrot.slane %v3046, %v3061
  %v3064 = vunpack.c.l.s4 1966171168
  %v3065 = vunpack.c.0.s8 %v3064
  %v3066 = vlaneseq
  %v3067 = vshrl.u32 %v3066, 7
  %v3068 = vsub.s32 %v3065, %v3067
  %v3069 = vrot.slane %v3047, %v3068
  %v3071 = vunpack.c.l.s4 1966171168
  %v3072 = vunpack.c.0.s8 %v3071
  %v3073 = vlaneseq
  %v3074 = vshrl.u32 %v3073, 7
  %v3075 = vsub.s32 %v3072, %v3074
  %v3076 = vrot.slane %v3048, %v3075
  %v3077 = vcombine.low %v3055, %v3062
  %v3078 = vcombine.low %v3069, %v3076
  %v3080 = vunpack.c.l.s4 1966171168
  %v3081 = vunpack.c.0.s8 %v3080
  %v3082 = vlaneseq
  %v3083 = vshrl.u32 %v3082, 7
  %v3084 = vsub.s32 %v3081, %v3083
  %v3085 = vrot.slane %v3077, %v3084
  %v3087 = vunpack.c.l.s4 1966171168
  %v3088 = vunpack.c.0.s8 %v3087
  %v3089 = vlaneseq
  %v3090 = vshrl.u32 %v3089, 7
  %v3091 = vsub.s32 %v3088, %v3090
  %v3092 = vrot.slane %v3078, %v3091
  %v3093 = vcombine.low %v3085, %v3092
  %v3094 = vcombine.low %v2238, %v2240
  %v3095 = vcombine.low %v2242, %v2244
  %v3096 = vcombine.low %v2246, %v2248
  %v3097 = vcombine.low %v2250, %v2252
  %v3099 = vunpack.c.l.s4 1966171168
  %v3100 = vunpack.c.0.s8 %v3099
  %v3101 = vlaneseq
  %v3102 = vshrl.u32 %v3101, 7
  %v3103 = vsub.s32 %v3100, %v3102
  %v3104 = vrot.slane %v3094, %v3103
  %v3106 = vunpack.c.l.s4 1966171168
  %v3107 = vunpack.c.0.s8 %v3106
  %v3108 = vlaneseq
  %v3109 = vshrl.u32 %v3108, 7
  %v3110 = vsub.s32 %v3107, %v3109
  %v3111 = vrot.slane %v3095, %v3110
  %v3113 = vunpack.c.l.s4 1966171168
  %v3114 = vunpack.c.0.s8 %v3113
  %v3115 = vlaneseq
  %v3116 = vshrl.u32 %v3115, 7
  %v3117 = vsub.s32 %v3114, %v3116
  %v3118 = vrot.slane %v3096, %v3117
  %v3120 = vunpack.c.l.s4 1966171168
  %v3121 = vunpack.c.0.s8 %v3120
  %v3122 = vlaneseq
  %v3123 = vshrl.u32 %v3122, 7
  %v3124 = vsub.s32 %v3121, %v3123
  %v3125 = vrot.slane %v3097, %v3124
  %v3126 = vcombine.low %v3104, %v3111
  %v3127 = vcombine.low %v3118, %v3125
  %v3129 = vunpack.c.l.s4 1966171168
  %v3130 = vunpack.c.0.s8 %v3129
  %v3131 = vlaneseq
  %v3132 = vshrl.u32 %v3131, 7
  %v3133 = vsub.s32 %v3130, %v3132
  %v3134 = vrot.slane %v3126, %v3133
  %v3136 = vunpack.c.l.s4 1966171168
  %v3137 = vunpack.c.0.s8 %v3136
  %v3138 = vlaneseq
  %v3139 = vshrl.u32 %v3138, 7
  %v3140 = vsub.s32 %v3137, %v3139
  %v3141 = vrot.slane %v3127, %v3140
  %v3142 = vcombine.low %v3134, %v3141
  %v3143 = vcombine.low %v1957, %v1958
  %v3144 = vcombine.low %v1959, %v1960
  %v3145 = vcombine.low %v1961, %v1962
  %v3146 = vcombine.low %v1963, %v1964
  %v3148 = vunpack.c.l.s4 1966171168
  %v3149 = vunpack.c.0.s8 %v3148
  %v3150 = vlaneseq
  %v3151 = vshrl.u32 %v3150, 7
  %v3152 = vsub.s32 %v3149, %v3151
  %v3153 = vrot.slane %v3143, %v3152
  %v3155 = vunpack.c.l.s4 1966171168
  %v3156 = vunpack.c.0.s8 %v3155
  %v3157 = vlaneseq
  %v3158 = vshrl.u32 %v3157, 7
  %v3159 = vsub.s32 %v3156, %v3158
  %v3160 = vrot.slane %v3144, %v3159
  %v3162 = vunpack.c.l.s4 1966171168
  %v3163 = vunpack.c.0.s8 %v3162
  %v3164 = vlaneseq
  %v3165 = vshrl.u32 %v3164, 7
  %v3166 = vsub.s32 %v3163, %v3165
  %v3167 = vrot.slane %v3145, %v3166
  %v3169 = vunpack.c.l.s4 1966171168
  %v3170 = vunpack.c.0.s8 %v3169
  %v3171 = vlaneseq
  %v3172 = vshrl.u32 %v3171, 7
  %v3173 = vsub.s32 %v3170, %v3172
  %v3174 = vrot.slane %v3146, %v3173
  %v3175 = vcombine.low %v3153, %v3160
  %v3176 = vcombine.low %v3167, %v3174
  %v3178 = vunpack.c.l.s4 1966171168
  %v3179 = vunpack.c.0.s8 %v3178
  %v3180 = vlaneseq
  %v3181 = vshrl.u32 %v3180, 7
  %v3182 = vsub.s32 %v3179, %v3181
  %v3183 = vrot.slane %v3175, %v3182
  %v3185 = vunpack.c.l.s4 1966171168
  %v3186 = vunpack.c.0.s8 %v3185
  %v3187 = vlaneseq
  %v3188 = vshrl.u32 %v3187, 7
  %v3189 = vsub.s32 %v3186, %v3188
  %v3190 = vrot.slane %v3176, %v3189
  %v3191 = vcombine.low %v3183, %v3190
  %v3192 = vcombine.low %v2254, %v2256
  %v3193 = vcombine.low %v2258, %v2260
  %v3194 = vcombine.low %v2262, %v2264
  %v3195 = vcombine.low %v2266, %v2268
  %v3197 = vunpack.c.l.s4 1966171168
  %v3198 = vunpack.c.0.s8 %v3197
  %v3199 = vlaneseq
  %v3200 = vshrl.u32 %v3199, 7
  %v3201 = vsub.s32 %v3198, %v3200
  %v3202 = vrot.slane %v3192, %v3201
  %v3204 = vunpack.c.l.s4 1966171168
  %v3205 = vunpack.c.0.s8 %v3204
  %v3206 = vlaneseq
  %v3207 = vshrl.u32 %v3206, 7
  %v3208 = vsub.s32 %v3205, %v3207
  %v3209 = vrot.slane %v3193, %v3208
  %v3211 = vunpack.c.l.s4 1966171168
  %v3212 = vunpack.c.0.s8 %v3211
  %v3213 = vlaneseq
  %v3214 = vshrl.u32 %v3213, 7
  %v3215 = vsub.s32 %v3212, %v3214
  %v3216 = vrot.slane %v3194, %v3215
  %v3218 = vunpack.c.l.s4 1966171168
  %v3219 = vunpack.c.0.s8 %v3218
  %v3220 = vlaneseq
  %v3221 = vshrl.u32 %v3220, 7
  %v3222 = vsub.s32 %v3219, %v3221
  %v3223 = vrot.slane %v3195, %v3222
  %v3224 = vcombine.low %v3202, %v3209
  %v3225 = vcombine.low %v3216, %v3223
  %v3227 = vunpack.c.l.s4 1966171168
  %v3228 = vunpack.c.0.s8 %v3227
  %v3229 = vlaneseq
  %v3230 = vshrl.u32 %v3229, 7
  %v3231 = vsub.s32 %v3228, %v3230
  %v3232 = vrot.slane %v3224, %v3231
  %v3234 = vunpack.c.l.s4 1966171168
  %v3235 = vunpack.c.0.s8 %v3234
  %v3236 = vlaneseq
  %v3237 = vshrl.u32 %v3236, 7
  %v3238 = vsub.s32 %v3235, %v3237
  %v3239 = vrot.slane %v3225, %v3238
  %v3240 = vcombine.low %v3232, %v3239
  %v3241 = vcombine.low %v1965, %v1966
  %v3242 = vcombine.low %v1967, %v1968
  %v3243 = vcombine.low %v1969, %v1970
  %v3244 = vcombine.low %v1971, %v1972
  %v3246 = vunpack.c.l.s4 1966171168
  %v3247 = vunpack.c.0.s8 %v3246
  %v3248 = vlaneseq
  %v3249 = vshrl.u32 %v3248, 7
  %v3250 = vsub.s32 %v3247, %v3249
  %v3251 = vrot.slane %v3241, %v3250
  %v3253 = vunpack.c.l.s4 1966171168
  %v3254 = vunpack.c.0.s8 %v3253
  %v3255 = vlaneseq
  %v3256 = vshrl.u32 %v3255, 7
  %v3257 = vsub.s32 %v3254, %v3256
  %v3258 = vrot.slane %v3242, %v3257
  %v3260 = vunpack.c.l.s4 1966171168
  %v3261 = vunpack.c.0.s8 %v3260
  %v3262 = vlaneseq
  %v3263 = vshrl.u32 %v3262, 7
  %v3264 = vsub.s32 %v3261, %v3263
  %v3265 = vrot.slane %v3243, %v3264
  %v3267 = vunpack.c.l.s4 1966171168
  %v3268 = vunpack.c.0.s8 %v3267
  %v3269 = vlaneseq
  %v3270 = vshrl.u32 %v3269, 7
  %v3271 = vsub.s32 %v3268, %v3270
  %v3272 = vrot.slane %v3244, %v3271
  %v3273 = vcombine.low %v3251, %v3258
  %v3274 = vcombine.low %v3265, %v3272
  %v3276 = vunpack.c.l.s4 1966171168
  %v3277 = vunpack.c.0.s8 %v3276
  %v3278 = vlaneseq
  %v3279 = vshrl.u32 %v3278, 7
  %v3280 = vsub.s32 %v3277, %v3279
  %v3281 = vrot.slane %v3273, %v3280
  %v3283 = vunpack.c.l.s4 1966171168
  %v3284 = vunpack.c.0.s8 %v3283
  %v3285 = vlaneseq
  %v3286 = vshrl.u32 %v3285, 7
  %v3287 = vsub.s32 %v3284, %v3286
  %v3288 = vrot.slane %v3274, %v3287
  %v3289 = vcombine.low %v3281, %v3288
  %v3290 = vcombine.low %v2270, %v2272
  %v3291 = vcombine.low %v2274, %v2276
  %v3292 = vcombine.low %v2278, %v2280
  %v3293 = vcombine.low %v2282, %v2284
  %v3295 = vunpack.c.l.s4 1966171168
  %v3296 = vunpack.c.0.s8 %v3295
  %v3297 = vlaneseq
  %v3298 = vshrl.u32 %v3297, 7
  %v3299 = vsub.s32 %v3296, %v3298
  %v3300 = vrot.slane %v3290, %v3299
  %v3302 = vunpack.c.l.s4 1966171168
  %v3303 = vunpack.c.0.s8 %v3302
  %v3304 = vlaneseq
  %v3305 = vshrl.u32 %v3304, 7
  %v3306 = vsub.s32 %v3303, %v3305
  %v3307 = vrot.slane %v3291, %v3306
  %v3309 = vunpack.c.l.s4 1966171168
  %v3310 = vunpack.c.0.s8 %v3309
  %v3311 = vlaneseq
  %v3312 = vshrl.u32 %v3311, 7
  %v3313 = vsub.s32 %v3310, %v3312
  %v3314 = vrot.slane %v3292, %v3313
  %v3316 = vunpack.c.l.s4 1966171168
  %v3317 = vunpack.c.0.s8 %v3316
  %v3318 = vlaneseq
  %v3319 = vshrl.u32 %v3318, 7
  %v3320 = vsub.s32 %v3317, %v3319
  %v3321 = vrot.slane %v3293, %v3320
  %v3322 = vcombine.low %v3300, %v3307
  %v3323 = vcombine.low %v3314, %v3321
  %v3325 = vunpack.c.l.s4 1966171168
  %v3326 = vunpack.c.0.s8 %v3325
  %v3327 = vlaneseq
  %v3328 = vshrl.u32 %v3327, 7
  %v3329 = vsub.s32 %v3326, %v3328
  %v3330 = vrot.slane %v3322, %v3329
  %v3332 = vunpack.c.l.s4 1966171168
  %v3333 = vunpack.c.0.s8 %v3332
  %v3334 = vlaneseq
  %v3335 = vshrl.u32 %v3334, 7
  %v3336 = vsub.s32 %v3333, %v3335
  %v3337 = vrot.slane %v3323, %v3336
  %v3338 = vcombine.low %v3330, %v3337
  %v3339 = vcombine.low %v1973, %v1974
  %v3340 = vcombine.low %v1975, %v1976
  %v3341 = vcombine.low %v1977, %v1978
  %v3342 = vcombine.low %v1979, %v1980
  %v3344 = vunpack.c.l.s4 1966171168
  %v3345 = vunpack.c.0.s8 %v3344
  %v3346 = vlaneseq
  %v3347 = vshrl.u32 %v3346, 7
  %v3348 = vsub.s32 %v3345, %v3347
  %v3349 = vrot.slane %v3339, %v3348
  %v3351 = vunpack.c.l.s4 1966171168
  %v3352 = vunpack.c.0.s8 %v3351
  %v3353 = vlaneseq
  %v3354 = vshrl.u32 %v3353, 7
  %v3355 = vsub.s32 %v3352, %v3354
  %v3356 = vrot.slane %v3340, %v3355
  %v3358 = vunpack.c.l.s4 1966171168
  %v3359 = vunpack.c.0.s8 %v3358
  %v3360 = vlaneseq
  %v3361 = vshrl.u32 %v3360, 7
  %v3362 = vsub.s32 %v3359, %v3361
  %v3363 = vrot.slane %v3341, %v3362
  %v3365 = vunpack.c.l.s4 1966171168
  %v3366 = vunpack.c.0.s8 %v3365
  %v3367 = vlaneseq
  %v3368 = vshrl.u32 %v3367, 7
  %v3369 = vsub.s32 %v3366, %v3368
  %v3370 = vrot.slane %v3342, %v3369
  %v3371 = vcombine.low %v3349, %v3356
  %v3372 = vcombine.low %v3363, %v3370
  %v3374 = vunpack.c.l.s4 1966171168
  %v3375 = vunpack.c.0.s8 %v3374
  %v3376 = vlaneseq
  %v3377 = vshrl.u32 %v3376, 7
  %v3378 = vsub.s32 %v3375, %v3377
  %v3379 = vrot.slane %v3371, %v3378
  %v3381 = vunpack.c.l.s4 1966171168
  %v3382 = vunpack.c.0.s8 %v3381
  %v3383 = vlaneseq
  %v3384 = vshrl.u32 %v3383, 7
  %v3385 = vsub.s32 %v3382, %v3384
  %v3386 = vrot.slane %v3372, %v3385
  %v3387 = vcombine.low %v3379, %v3386
  %v3388 = vcombine.low %v2286, %v2288
  %v3389 = vcombine.low %v2290, %v2292
  %v3390 = vcombine.low %v2294, %v2296
  %v3391 = vcombine.low %v2298, %v2300
  %v3393 = vunpack.c.l.s4 1966171168
  %v3394 = vunpack.c.0.s8 %v3393
  %v3395 = vlaneseq
  %v3396 = vshrl.u32 %v3395, 7
  %v3397 = vsub.s32 %v3394, %v3396
  %v3398 = vrot.slane %v3388, %v3397
  %v3400 = vunpack.c.l.s4 1966171168
  %v3401 = vunpack.c.0.s8 %v3400
  %v3402 = vlaneseq
  %v3403 = vshrl.u32 %v3402, 7
  %v3404 = vsub.s32 %v3401, %v3403
  %v3405 = vrot.slane %v3389, %v3404
  %v3407 = vunpack.c.l.s4 1966171168
  %v3408 = vunpack.c.0.s8 %v3407
  %v3409 = vlaneseq
  %v3410 = vshrl.u32 %v3409, 7
  %v3411 = vsub.s32 %v3408, %v3410
  %v3412 = vrot.slane %v3390, %v3411
  %v3414 = vunpack.c.l.s4 1966171168
  %v3415 = vunpack.c.0.s8 %v3414
  %v3416 = vlaneseq
  %v3417 = vshrl.u32 %v3416, 7
  %v3418 = vsub.s32 %v3415, %v3417
  %v3419 = vrot.slane %v3391, %v3418
  %v3420 = vcombine.low %v3398, %v3405
  %v3421 = vcombine.low %v3412, %v3419
  %v3423 = vunpack.c.l.s4 1966171168
  %v3424 = vunpack.c.0.s8 %v3423
  %v3425 = vlaneseq
  %v3426 = vshrl.u32 %v3425, 7
  %v3427 = vsub.s32 %v3424, %v3426
  %v3428 = vrot.slane %v3420, %v3427
  %v3430 = vunpack.c.l.s4 1966171168
  %v3431 = vunpack.c.0.s8 %v3430
  %v3432 = vlaneseq
  %v3433 = vshrl.u32 %v3432, 7
  %v3434 = vsub.s32 %v3431, %v3433
  %v3435 = vrot.slane %v3421, %v3434
  %v3436 = vcombine.low %v3428, %v3435
  %v3437 = vcombine.low %v1981, %v1982
  %v3438 = vcombine.low %v1983, %v1984
  %v3439 = vcombine.low %v1985, %v1986
  %v3440 = vcombine.low %v1987, %v1988
  %v3442 = vunpack.c.l.s4 1966171168
  %v3443 = vunpack.c.0.s8 %v3442
  %v3444 = vlaneseq
  %v3445 = vshrl.u32 %v3444, 7
  %v3446 = vsub.s32 %v3443, %v3445
  %v3447 = vrot.slane %v3437, %v3446
  %v3449 = vunpack.c.l.s4 1966171168
  %v3450 = vunpack.c.0.s8 %v3449
  %v3451 = vlaneseq
  %v3452 = vshrl.u32 %v3451, 7
  %v3453 = vsub.s32 %v3450, %v3452
  %v3454 = vrot.slane %v3438, %v3453
  %v3456 = vunpack.c.l.s4 1966171168
  %v3457 = vunpack.c.0.s8 %v3456
  %v3458 = vlaneseq
  %v3459 = vshrl.u32 %v3458, 7
  %v3460 = vsub.s32 %v3457, %v3459
  %v3461 = vrot.slane %v3439, %v3460
  %v3463 = vunpack.c.l.s4 1966171168
  %v3464 = vunpack.c.0.s8 %v3463
  %v3465 = vlaneseq
  %v3466 = vshrl.u32 %v3465, 7
  %v3467 = vsub.s32 %v3464, %v3466
  %v3468 = vrot.slane %v3440, %v3467
  %v3469 = vcombine.low %v3447, %v3454
  %v3470 = vcombine.low %v3461, %v3468
  %v3472 = vunpack.c.l.s4 1966171168
  %v3473 = vunpack.c.0.s8 %v3472
  %v3474 = vlaneseq
  %v3475 = vshrl.u32 %v3474, 7
  %v3476 = vsub.s32 %v3473, %v3475
  %v3477 = vrot.slane %v3469, %v3476
  %v3479 = vunpack.c.l.s4 1966171168
  %v3480 = vunpack.c.0.s8 %v3479
  %v3481 = vlaneseq
  %v3482 = vshrl.u32 %v3481, 7
  %v3483 = vsub.s32 %v3480, %v3482
  %v3484 = vrot.slane %v3470, %v3483
  %v3485 = vcombine.low %v3477, %v3484
  %v3486 = vcombine.low %v2302, %v2304
  %v3487 = vcombine.low %v2306, %v2308
  %v3488 = vcombine.low %v2310, %v2312
  %v3489 = vcombine.low %v2314, %v2316
  %v3491 = vunpack.c.l.s4 1966171168
  %v3492 = vunpack.c.0.s8 %v3491
  %v3493 = vlaneseq
  %v3494 = vshrl.u32 %v3493, 7
  %v3495 = vsub.s32 %v3492, %v3494
  %v3496 = vrot.slane %v3486, %v3495
  %v3498 = vunpack.c.l.s4 1966171168
  %v3499 = vunpack.c.0.s8 %v3498
  %v3500 = vlaneseq
  %v3501 = vshrl.u32 %v3500, 7
  %v3502 = vsub.s32 %v3499, %v3501
  %v3503 = vrot.slane %v3487, %v3502
  %v3505 = vunpack.c.l.s4 1966171168
  %v3506 = vunpack.c.0.s8 %v3505
  %v3507 = vlaneseq
  %v3508 = vshrl.u32 %v3507, 7
  %v3509 = vsub.s32 %v3506, %v3508
  %v3510 = vrot.slane %v3488, %v3509
  %v3512 = vunpack.c.l.s4 1966171168
  %v3513 = vunpack.c.0.s8 %v3512
  %v3514 = vlaneseq
  %v3515 = vshrl.u32 %v3514, 7
  %v3516 = vsub.s32 %v3513, %v3515
  %v3517 = vrot.slane %v3489, %v3516
  %v3518 = vcombine.low %v3496, %v3503
  %v3519 = vcombine.low %v3510, %v3517
  %v3521 = vunpack.c.l.s4 1966171168
  %v3522 = vunpack.c.0.s8 %v3521
  %v3523 = vlaneseq
  %v3524 = vshrl.u32 %v3523, 7
  %v3525 = vsub.s32 %v3522, %v3524
  %v3526 = vrot.slane %v3518, %v3525
  %v3528 = vunpack.c.l.s4 1966171168
  %v3529 = vunpack.c.0.s8 %v3528
  %v3530 = vlaneseq
  %v3531 = vshrl.u32 %v3530, 7
  %v3532 = vsub.s32 %v3529, %v3531
  %v3533 = vrot.slane %v3519, %v3532
  %v3534 = vcombine.low %v3526, %v3533
  %v3535 = vcombine.low %v1989, %v1990
  %v3536 = vcombine.low %v1991, %v1992
  %v3537 = vcombine.low %v1993, %v1994
  %v3538 = vcombine.low %v1995, %v1996
  %v3540 = vunpack.c.l.s4 1966171168
  %v3541 = vunpack.c.0.s8 %v3540
  %v3542 = vlaneseq
  %v3543 = vshrl.u32 %v3542, 7
  %v3544 = vsub.s32 %v3541, %v3543
  %v3545 = vrot.slane %v3535, %v3544
  %v3547 = vunpack.c.l.s4 1966171168
  %v3548 = vunpack.c.0.s8 %v3547
  %v3549 = vlaneseq
  %v3550 = vshrl.u32 %v3549, 7
  %v3551 = vsub.s32 %v3548, %v3550
  %v3552 = vrot.slane %v3536, %v3551
  %v3554 = vunpack.c.l.s4 1966171168
  %v3555 = vunpack.c.0.s8 %v3554
  %v3556 = vlaneseq
  %v3557 = vshrl.u32 %v3556, 7
  %v3558 = vsub.s32 %v3555, %v3557
  %v3559 = vrot.slane %v3537, %v3558
  %v3561 = vunpack.c.l.s4 1966171168
  %v3562 = vunpack.c.0.s8 %v3561
  %v3563 = vlaneseq
  %v3564 = vshrl.u32 %v3563, 7
  %v3565 = vsub.s32 %v3562, %v3564
  %v3566 = vrot.slane %v3538, %v3565
  %v3567 = vcombine.low %v3545, %v3552
  %v3568 = vcombine.low %v3559, %v3566
  %v3570 = vunpack.c.l.s4 1966171168
  %v3571 = vunpack.c.0.s8 %v3570
  %v3572 = vlaneseq
  %v3573 = vshrl.u32 %v3572, 7
  %v3574 = vsub.s32 %v3571, %v3573
  %v3575 = vrot.slane %v3567, %v3574
  %v3577 = vunpack.c.l.s4 1966171168
  %v3578 = vunpack.c.0.s8 %v3577
  %v3579 = vlaneseq
  %v3580 = vshrl.u32 %v3579, 7
  %v3581 = vsub.s32 %v3578, %v3580
  %v3582 = vrot.slane %v3568, %v3581
  %v3583 = vcombine.low %v3575, %v3582
  %v3584 = vcombine.low %v2318, %v2320
  %v3585 = vcombine.low %v2322, %v2324
  %v3586 = vcombine.low %v2326, %v2328
  %v3587 = vcombine.low %v2330, %v2332
  %v3589 = vunpack.c.l.s4 1966171168
  %v3590 = vunpack.c.0.s8 %v3589
  %v3591 = vlaneseq
  %v3592 = vshrl.u32 %v3591, 7
  %v3593 = vsub.s32 %v3590, %v3592
  %v3594 = vrot.slane %v3584, %v3593
  %v3596 = vunpack.c.l.s4 1966171168
  %v3597 = vunpack.c.0.s8 %v3596
  %v3598 = vlaneseq
  %v3599 = vshrl.u32 %v3598, 7
  %v3600 = vsub.s32 %v3597, %v3599
  %v3601 = vrot.slane %v3585, %v3600
  %v3603 = vunpack.c.l.s4 1966171168
  %v3604 = vunpack.c.0.s8 %v3603
  %v3605 = vlaneseq
  %v3606 = vshrl.u32 %v3605, 7
  %v3607 = vsub.s32 %v3604, %v3606
  %v3608 = vrot.slane %v3586, %v3607
  %v3610 = vunpack.c.l.s4 1966171168
  %v3611 = vunpack.c.0.s8 %v3610
  %v3612 = vlaneseq
  %v3613 = vshrl.u32 %v3612, 7
  %v3614 = vsub.s32 %v3611, %v3613
  %v3615 = vrot.slane %v3587, %v3614
  %v3616 = vcombine.low %v3594, %v3601
  %v3617 = vcombine.low %v3608, %v3615
  %v3619 = vunpack.c.l.s4 1966171168
  %v3620 = vunpack.c.0.s8 %v3619
  %v3621 = vlaneseq
  %v3622 = vshrl.u32 %v3621, 7
  %v3623 = vsub.s32 %v3620, %v3622
  %v3624 = vrot.slane %v3616, %v3623
  %v3626 = vunpack.c.l.s4 1966171168
  %v3627 = vunpack.c.0.s8 %v3626
  %v3628 = vlaneseq
  %v3629 = vshrl.u32 %v3628, 7
  %v3630 = vsub.s32 %v3627, %v3629
  %v3631 = vrot.slane %v3617, %v3630
  %v3632 = vcombine.low %v3624, %v3631
  %v3633 = vcombine.low %v1997, %v1998
  %v3634 = vcombine.low %v1999, %v2000
  %v3635 = vcombine.low %v2001, %v2002
  %v3636 = vcombine.low %v2003, %v2004
  %v3638 = vunpack.c.l.s4 1966171168
  %v3639 = vunpack.c.0.s8 %v3638
  %v3640 = vlaneseq
  %v3641 = vshrl.u32 %v3640, 7
  %v3642 = vsub.s32 %v3639, %v3641
  %v3643 = vrot.slane %v3633, %v3642
  %v3645 = vunpack.c.l.s4 1966171168
  %v3646 = vunpack.c.0.s8 %v3645
  %v3647 = vlaneseq
  %v3648 = vshrl.u32 %v3647, 7
  %v3649 = vsub.s32 %v3646, %v3648
  %v3650 = vrot.slane %v3634, %v3649
  %v3652 = vunpack.c.l.s4 1966171168
  %v3653 = vunpack.c.0.s8 %v3652
  %v3654 = vlaneseq
  %v3655 = vshrl.u32 %v3654, 7
  %v3656 = vsub.s32 %v3653, %v3655
  %v3657 = vrot.slane %v3635, %v3656
  %v3659 = vunpack.c.l.s4 1966171168
  %v3660 = vunpack.c.0.s8 %v3659
  %v3661 = vlaneseq
  %v3662 = vshrl.u32 %v3661, 7
  %v3663 = vsub.s32 %v3660, %v3662
  %v3664 = vrot.slane %v3636, %v3663
  %v3665 = vcombine.low %v3643, %v3650
  %v3666 = vcombine.low %v3657, %v3664
  %v3668 = vunpack.c.l.s4 1966171168
  %v3669 = vunpack.c.0.s8 %v3668
  %v3670 = vlaneseq
  %v3671 = vshrl.u32 %v3670, 7
  %v3672 = vsub.s32 %v3669, %v3671
  %v3673 = vrot.slane %v3665, %v3672
  %v3675 = vunpack.c.l.s4 1966171168
  %v3676 = vunpack.c.0.s8 %v3675
  %v3677 = vlaneseq
  %v3678 = vshrl.u32 %v3677, 7
  %v3679 = vsub.s32 %v3676, %v3678
  %v3680 = vrot.slane %v3666, %v3679
  %v3681 = vcombine.low %v3673, %v3680
  %v3682 = vcombine.low %v2334, %v2336
  %v3683 = vcombine.low %v2338, %v2340
  %v3684 = vcombine.low %v2342, %v2344
  %v3685 = vcombine.low %v2346, %v2348
  %v3687 = vunpack.c.l.s4 1966171168
  %v3688 = vunpack.c.0.s8 %v3687
  %v3689 = vlaneseq
  %v3690 = vshrl.u32 %v3689, 7
  %v3691 = vsub.s32 %v3688, %v3690
  %v3692 = vrot.slane %v3682, %v3691
  %v3694 = vunpack.c.l.s4 1966171168
  %v3695 = vunpack.c.0.s8 %v3694
  %v3696 = vlaneseq
  %v3697 = vshrl.u32 %v3696, 7
  %v3698 = vsub.s32 %v3695, %v3697
  %v3699 = vrot.slane %v3683, %v3698
  %v3701 = vunpack.c.l.s4 1966171168
  %v3702 = vunpack.c.0.s8 %v3701
  %v3703 = vlaneseq
  %v3704 = vshrl.u32 %v3703, 7
  %v3705 = vsub.s32 %v3702, %v3704
  %v3706 = vrot.slane %v3684, %v3705
  %v3708 = vunpack.c.l.s4 1966171168
  %v3709 = vunpack.c.0.s8 %v3708
  %v3710 = vlaneseq
  %v3711 = vshrl.u32 %v3710, 7
  %v3712 = vsub.s32 %v3709, %v3711
  %v3713 = vrot.slane %v3685, %v3712
  %v3714 = vcombine.low %v3692, %v3699
  %v3715 = vcombine.low %v3706, %v3713
  %v3717 = vunpack.c.l.s4 1966171168
  %v3718 = vunpack.c.0.s8 %v3717
  %v3719 = vlaneseq
  %v3720 = vshrl.u32 %v3719, 7
  %v3721 = vsub.s32 %v3718, %v3720
  %v3722 = vrot.slane %v3714, %v3721
  %v3724 = vunpack.c.l.s4 1966171168
  %v3725 = vunpack.c.0.s8 %v3724
  %v3726 = vlaneseq
  %v3727 = vshrl.u32 %v3726, 7
  %v3728 = vsub.s32 %v3725, %v3727
  %v3729 = vrot.slane %v3715, %v3728
  %v3730 = vcombine.low %v3722, %v3729
  %v3731 = vcombine.low %v2005, %v2006
  %v3732 = vcombine.low %v2007, %v2008
  %v3733 = vcombine.low %v2009, %v2010
  %v3734 = vcombine.low %v2011, %v2012
  %v3736 = vunpack.c.l.s4 1966171168
  %v3737 = vunpack.c.0.s8 %v3736
  %v3738 = vlaneseq
  %v3739 = vshrl.u32 %v3738, 7
  %v3740 = vsub.s32 %v3737, %v3739
  %v3741 = vrot.slane %v3731, %v3740
  %v3743 = vunpack.c.l.s4 1966171168
  %v3744 = vunpack.c.0.s8 %v3743
  %v3745 = vlaneseq
  %v3746 = vshrl.u32 %v3745, 7
  %v3747 = vsub.s32 %v3744, %v3746
  %v3748 = vrot.slane %v3732, %v3747
  %v3750 = vunpack.c.l.s4 1966171168
  %v3751 = vunpack.c.0.s8 %v3750
  %v3752 = vlaneseq
  %v3753 = vshrl.u32 %v3752, 7
  %v3754 = vsub.s32 %v3751, %v3753
  %v3755 = vrot.slane %v3733, %v3754
  %v3757 = vunpack.c.l.s4 1966171168
  %v3758 = vunpack.c.0.s8 %v3757
  %v3759 = vlaneseq
  %v3760 = vshrl.u32 %v3759, 7
  %v3761 = vsub.s32 %v3758, %v3760
  %v3762 = vrot.slane %v3734, %v3761
  %v3763 = vcombine.low %v3741, %v3748
  %v3764 = vcombine.low %v3755, %v3762
  %v3766 = vunpack.c.l.s4 1966171168
  %v3767 = vunpack.c.0.s8 %v3766
  %v3768 = vlaneseq
  %v3769 = vshrl.u32 %v3768, 7
  %v3770 = vsub.s32 %v3767, %v3769
  %v3771 = vrot.slane %v3763, %v3770
  %v3773 = vunpack.c.l.s4 1966171168
  %v3774 = vunpack.c.0.s8 %v3773
  %v3775 = vlaneseq
  %v3776 = vshrl.u32 %v3775, 7
  %v3777 = vsub.s32 %v3774, %v3776
  %v3778 = vrot.slane %v3764, %v3777
  %v3779 = vcombine.low %v3771, %v3778
  %v3780 = vcombine.low %v2350, %v2352
  %v3781 = vcombine.low %v2354, %v2356
  %v3782 = vcombine.low %v2358, %v2360
  %v3783 = vcombine.low %v2362, %v2364
  %v3785 = vunpack.c.l.s4 1966171168
  %v3786 = vunpack.c.0.s8 %v3785
  %v3787 = vlaneseq
  %v3788 = vshrl.u32 %v3787, 7
  %v3789 = vsub.s32 %v3786, %v3788
  %v3790 = vrot.slane %v3780, %v3789
  %v3792 = vunpack.c.l.s4 1966171168
  %v3793 = vunpack.c.0.s8 %v3792
  %v3794 = vlaneseq
  %v3795 = vshrl.u32 %v3794, 7
  %v3796 = vsub.s32 %v3793, %v3795
  %v3797 = vrot.slane %v3781, %v3796
  %v3799 = vunpack.c.l.s4 1966171168
  %v3800 = vunpack.c.0.s8 %v3799
  %v3801 = vlaneseq
  %v3802 = vshrl.u32 %v3801, 7
  %v3803 = vsub.s32 %v3800, %v3802
  %v3804 = vrot.slane %v3782, %v3803
  %v3806 = vunpack.c.l.s4 1966171168
  %v3807 = vunpack.c.0.s8 %v3806
  %v3808 = vlaneseq
  %v3809 = vshrl.u32 %v3808, 7
  %v3810 = vsub.s32 %v3807, %v3809
  %v3811 = vrot.slane %v3783, %v3810
  %v3812 = vcombine.low %v3790, %v3797
  %v3813 = vcombine.low %v3804, %v3811
  %v3815 = vunpack.c.l.s4 1966171168
  %v3816 = vunpack.c.0.s8 %v3815
  %v3817 = vlaneseq
  %v3818 = vshrl.u32 %v3817, 7
  %v3819 = vsub.s32 %v3816, %v3818
  %v3820 = vrot.slane %v3812, %v3819
  %v3822 = vunpack.c.l.s4 1966171168
  %v3823 = vunpack.c.0.s8 %v3822
  %v3824 = vlaneseq
  %v3825 = vshrl.u32 %v3824, 7
  %v3826 = vsub.s32 %v3823, %v3825
  %v3827 = vrot.slane %v3813, %v3826
  %v3828 = vcombine.low %v3820, %v3827
  %v3829 = vcombine.low %v2013, %v2014
  %v3830 = vcombine.low %v2015, %v2016
  %v3831 = vcombine.low %v2017, %v2018
  %v3832 = vcombine.low %v2019, %v2020
  %v3834 = vunpack.c.l.s4 1966171168
  %v3835 = vunpack.c.0.s8 %v3834
  %v3836 = vlaneseq
  %v3837 = vshrl.u32 %v3836, 7
  %v3838 = vsub.s32 %v3835, %v3837
  %v3839 = vrot.slane %v3829, %v3838
  %v3841 = vunpack.c.l.s4 1966171168
  %v3842 = vunpack.c.0.s8 %v3841
  %v3843 = vlaneseq
  %v3844 = vshrl.u32 %v3843, 7
  %v3845 = vsub.s32 %v3842, %v3844
  %v3846 = vrot.slane %v3830, %v3845
  %v3848 = vunpack.c.l.s4 1966171168
  %v3849 = vunpack.c.0.s8 %v3848
  %v3850 = vlaneseq
  %v3851 = vshrl.u32 %v3850, 7
  %v3852 = vsub.s32 %v3849, %v3851
  %v3853 = vrot.slane %v3831, %v3852
  %v3855 = vunpack.c.l.s4 1966171168
  %v3856 = vunpack.c.0.s8 %v3855
  %v3857 = vlaneseq
  %v3858 = vshrl.u32 %v3857, 7
  %v3859 = vsub.s32 %v3856, %v3858
  %v3860 = vrot.slane %v3832, %v3859
  %v3861 = vcombine.low %v3839, %v3846
  %v3862 = vcombine.low %v3853, %v3860
  %v3864 = vunpack.c.l.s4 1966171168
  %v3865 = vunpack.c.0.s8 %v3864
  %v3866 = vlaneseq
  %v3867 = vshrl.u32 %v3866, 7
  %v3868 = vsub.s32 %v3865, %v3867
  %v3869 = vrot.slane %v3861, %v3868
  %v3871 = vunpack.c.l.s4 1966171168
  %v3872 = vunpack.c.0.s8 %v3871
  %v3873 = vlaneseq
  %v3874 = vshrl.u32 %v3873, 7
  %v3875 = vsub.s32 %v3872, %v3874
  %v3876 = vrot.slane %v3862, %v3875
  %v3877 = vcombine.low %v3869, %v3876
  %v3878 = vcombine.low %v2366, %v2368
  %v3879 = vcombine.low %v2370, %v2372
  %v3880 = vcombine.low %v2374, %v2376
  %v3881 = vcombine.low %v2378, %v2380
  %v3883 = vunpack.c.l.s4 1966171168
  %v3884 = vunpack.c.0.s8 %v3883
  %v3885 = vlaneseq
  %v3886 = vshrl.u32 %v3885, 7
  %v3887 = vsub.s32 %v3884, %v3886
  %v3888 = vrot.slane %v3878, %v3887
  %v3890 = vunpack.c.l.s4 1966171168
  %v3891 = vunpack.c.0.s8 %v3890
  %v3892 = vlaneseq
  %v3893 = vshrl.u32 %v3892, 7
  %v3894 = vsub.s32 %v3891, %v3893
  %v3895 = vrot.slane %v3879, %v3894
  %v3897 = vunpack.c.l.s4 1966171168
  %v3898 = vunpack.c.0.s8 %v3897
  %v3899 = vlaneseq
  %v3900 = vshrl.u32 %v3899, 7
  %v3901 = vsub.s32 %v3898, %v3900
  %v3902 = vrot.slane %v3880, %v3901
  %v3904 = vunpack.c.l.s4 1966171168
  %v3905 = vunpack.c.0.s8 %v3904
  %v3906 = vlaneseq
  %v3907 = vshrl.u32 %v3906, 7
  %v3908 = vsub.s32 %v3905, %v3907
  %v3909 = vrot.slane %v3881, %v3908
  %v3910 = vcombine.low %v3888, %v3895
  %v3911 = vcombine.low %v3902, %v3909
  %v3913 = vunpack.c.l.s4 1966171168
  %v3914 = vunpack.c.0.s8 %v3913
  %v3915 = vlaneseq
  %v3916 = vshrl.u32 %v3915, 7
  %v3917 = vsub.s32 %v3914, %v3916
  %v3918 = vrot.slane %v3910, %v3917
  %v3920 = vunpack.c.l.s4 1966171168
  %v3921 = vunpack.c.0.s8 %v3920
  %v3922 = vlaneseq
  %v3923 = vshrl.u32 %v3922, 7
  %v3924 = vsub.s32 %v3921, %v3923
  %v3925 = vrot.slane %v3911, %v3924
  %v3926 = vcombine.low %v3918, %v3925
  %v3927 = vcombine.low %v2021, %v2022
  %v3928 = vcombine.low %v2023, %v2024
  %v3929 = vcombine.low %v2025, %v2026
  %v3930 = vcombine.low %v2027, %v2028
  %v3932 = vunpack.c.l.s4 1966171168
  %v3933 = vunpack.c.0.s8 %v3932
  %v3934 = vlaneseq
  %v3935 = vshrl.u32 %v3934, 7
  %v3936 = vsub.s32 %v3933, %v3935
  %v3937 = vrot.slane %v3927, %v3936
  %v3939 = vunpack.c.l.s4 1966171168
  %v3940 = vunpack.c.0.s8 %v3939
  %v3941 = vlaneseq
  %v3942 = vshrl.u32 %v3941, 7
  %v3943 = vsub.s32 %v3940, %v3942
  %v3944 = vrot.slane %v3928, %v3943
  %v3946 = vunpack.c.l.s4 1966171168
  %v3947 = vunpack.c.0.s8 %v3946
  %v3948 = vlaneseq
  %v3949 = vshrl.u32 %v3948, 7
  %v3950 = vsub.s32 %v3947, %v3949
  %v3951 = vrot.slane %v3929, %v3950
  %v3953 = vunpack.c.l.s4 1966171168
  %v3954 = vunpack.c.0.s8 %v3953
  %v3955 = vlaneseq
  %v3956 = vshrl.u32 %v3955, 7
  %v3957 = vsub.s32 %v3954, %v3956
  %v3958 = vrot.slane %v3930, %v3957
  %v3959 = vcombine.low %v3937, %v3944
  %v3960 = vcombine.low %v3951, %v3958
  %v3962 = vunpack.c.l.s4 1966171168
  %v3963 = vunpack.c.0.s8 %v3962
  %v3964 = vlaneseq
  %v3965 = vshrl.u32 %v3964, 7
  %v3966 = vsub.s32 %v3963, %v3965
  %v3967 = vrot.slane %v3959, %v3966
  %v3969 = vunpack.c.l.s4 1966171168
  %v3970 = vunpack.c.0.s8 %v3969
  %v3971 = vlaneseq
  %v3972 = vshrl.u32 %v3971, 7
  %v3973 = vsub.s32 %v3970, %v3972
  %v3974 = vrot.slane %v3960, %v3973
  %v3975 = vcombine.low %v3967, %v3974
  %v3976 = vcombine.low %v2382, %v2384
  %v3977 = vcombine.low %v2386, %v2388
  %v3978 = vcombine.low %v2390, %v2392
  %v3979 = vcombine.low %v2394, %v2396
  %v3981 = vunpack.c.l.s4 1966171168
  %v3982 = vunpack.c.0.s8 %v3981
  %v3983 = vlaneseq
  %v3984 = vshrl.u32 %v3983, 7
  %v3985 = vsub.s32 %v3982, %v3984
  %v3986 = vrot.slane %v3976, %v3985
  %v3988 = vunpack.c.l.s4 1966171168
  %v3989 = vunpack.c.0.s8 %v3988
  %v3990 = vlaneseq
  %v3991 = vshrl.u32 %v3990, 7
  %v3992 = vsub.s32 %v3989, %v3991
  %v3993 = vrot.slane %v3977, %v3992
  %v3995 = vunpack.c.l.s4 1966171168
  %v3996 = vunpack.c.0.s8 %v3995
  %v3997 = vlaneseq
  %v3998 = vshrl.u32 %v3997, 7
  %v3999 = vsub.s32 %v3996, %v3998
  %v4000 = vrot.slane %v3978, %v3999
  %v4002 = vunpack.c.l.s4 1966171168
  %v4003 = vunpack.c.0.s8 %v4002
  %v4004 = vlaneseq
  %v4005 = vshrl.u32 %v4004, 7
  %v4006 = vsub.s32 %v4003, %v4005
  %v4007 = vrot.slane %v3979, %v4006
  %v4008 = vcombine.low %v3986, %v3993
  %v4009 = vcombine.low %v4000, %v4007
  %v4011 = vunpack.c.l.s4 1966171168
  %v4012 = vunpack.c.0.s8 %v4011
  %v4013 = vlaneseq
  %v4014 = vshrl.u32 %v4013, 7
  %v4015 = vsub.s32 %v4012, %v4014
  %v4016 = vrot.slane %v4008, %v4015
  %v4018 = vunpack.c.l.s4 1966171168
  %v4019 = vunpack.c.0.s8 %v4018
  %v4020 = vlaneseq
  %v4021 = vshrl.u32 %v4020, 7
  %v4022 = vsub.s32 %v4019, %v4021
  %v4023 = vrot.slane %v4009, %v4022
  %v4024 = vcombine.low %v4016, %v4023
  %v4025 = vcombine.low %v2029, %v2030
  %v4026 = vcombine.low %v2031, %v2032
  %v4027 = vcombine.low %v2033, %v2034
  %v4028 = vcombine.low %v2035, %v2036
  %v4030 = vunpack.c.l.s4 1966171168
  %v4031 = vunpack.c.0.s8 %v4030
  %v4032 = vlaneseq
  %v4033 = vshrl.u32 %v4032, 7
  %v4034 = vsub.s32 %v4031, %v4033
  %v4035 = vrot.slane %v4025, %v4034
  %v4037 = vunpack.c.l.s4 1966171168
  %v4038 = vunpack.c.0.s8 %v4037
  %v4039 = vlaneseq
  %v4040 = vshrl.u32 %v4039, 7
  %v4041 = vsub.s32 %v4038, %v4040
  %v4042 = vrot.slane %v4026, %v4041
  %v4044 = vunpack.c.l.s4 1966171168
  %v4045 = vunpack.c.0.s8 %v4044
  %v4046 = vlaneseq
  %v4047 = vshrl.u32 %v4046, 7
  %v4048 = vsub.s32 %v4045, %v4047
  %v4049 = vrot.slane %v4027, %v4048
  %v4051 = vunpack.c.l.s4 1966171168
  %v4052 = vunpack.c.0.s8 %v4051
  %v4053 = vlaneseq
  %v4054 = vshrl.u32 %v4053, 7
  %v4055 = vsub.s32 %v4052, %v4054
  %v4056 = vrot.slane %v4028, %v4055
  %v4057 = vcombine.low %v4035, %v4042
  %v4058 = vcombine.low %v4049, %v4056
  %v4060 = vunpack.c.l.s4 1966171168
  %v4061 = vunpack.c.0.s8 %v4060
  %v4062 = vlaneseq
  %v4063 = vshrl.u32 %v4062, 7
  %v4064 = vsub.s32 %v4061, %v4063
  %v4065 = vrot.slane %v4057, %v4064
  %v4067 = vunpack.c.l.s4 1966171168
  %v4068 = vunpack.c.0.s8 %v4067
  %v4069 = vlaneseq
  %v4070 = vshrl.u32 %v4069, 7
  %v4071 = vsub.s32 %v4068, %v4070
  %v4072 = vrot.slane %v4058, %v4071
  %v4073 = vcombine.low %v4065, %v4072
  %v4074 = vcombine.low %v2398, %v2400
  %v4075 = vcombine.low %v2402, %v2404
  %v4076 = vcombine.low %v2406, %v2408
  %v4077 = vcombine.low %v2410, %v2412
  %v4079 = vunpack.c.l.s4 1966171168
  %v4080 = vunpack.c.0.s8 %v4079
  %v4081 = vlaneseq
  %v4082 = vshrl.u32 %v4081, 7
  %v4083 = vsub.s32 %v4080, %v4082
  %v4084 = vrot.slane %v4074, %v4083
  %v4086 = vunpack.c.l.s4 1966171168
  %v4087 = vunpack.c.0.s8 %v4086
  %v4088 = vlaneseq
  %v4089 = vshrl.u32 %v4088, 7
  %v4090 = vsub.s32 %v4087, %v4089
  %v4091 = vrot.slane %v4075, %v4090
  %v4093 = vunpack.c.l.s4 1966171168
  %v4094 = vunpack.c.0.s8 %v4093
  %v4095 = vlaneseq
  %v4096 = vshrl.u32 %v4095, 7
  %v4097 = vsub.s32 %v4094, %v4096
  %v4098 = vrot.slane %v4076, %v4097
  %v4100 = vunpack.c.l.s4 1966171168
  %v4101 = vunpack.c.0.s8 %v4100
  %v4102 = vlaneseq
  %v4103 = vshrl.u32 %v4102, 7
  %v4104 = vsub.s32 %v4101, %v4103
  %v4105 = vrot.slane %v4077, %v4104
  %v4106 = vcombine.low %v4084, %v4091
  %v4107 = vcombine.low %v4098, %v4105
  %v4109 = vunpack.c.l.s4 1966171168
  %v4110 = vunpack.c.0.s8 %v4109
  %v4111 = vlaneseq
  %v4112 = vshrl.u32 %v4111, 7
  %v4113 = vsub.s32 %v4110, %v4112
  %v4114 = vrot.slane %v4106, %v4113
  %v4116 = vunpack.c.l.s4 1966171168
  %v4117 = vunpack.c.0.s8 %v4116
  %v4118 = vlaneseq
  %v4119 = vshrl.u32 %v4118, 7
  %v4120 = vsub.s32 %v4117, %v4119
  %v4121 = vrot.slane %v4107, %v4120
  %v4122 = vcombine.low %v4114, %v4121
  %v4123 = vcombine.low %v2037, %v2038
  %v4124 = vcombine.low %v2039, %v2040
  %v4125 = vcombine.low %v2041, %v2042
  %v4126 = vcombine.low %v2043, %v2044
  %v4128 = vunpack.c.l.s4 1966171168
  %v4129 = vunpack.c.0.s8 %v4128
  %v4130 = vlaneseq
  %v4131 = vshrl.u32 %v4130, 7
  %v4132 = vsub.s32 %v4129, %v4131
  %v4133 = vrot.slane %v4123, %v4132
  %v4135 = vunpack.c.l.s4 1966171168
  %v4136 = vunpack.c.0.s8 %v4135
  %v4137 = vlaneseq
  %v4138 = vshrl.u32 %v4137, 7
  %v4139 = vsub.s32 %v4136, %v4138
  %v4140 = vrot.slane %v4124, %v4139
  %v4142 = vunpack.c.l.s4 1966171168
  %v4143 = vunpack.c.0.s8 %v4142
  %v4144 = vlaneseq
  %v4145 = vshrl.u32 %v4144, 7
  %v4146 = vsub.s32 %v4143, %v4145
  %v4147 = vrot.slane %v4125, %v4146
  %v4149 = vunpack.c.l.s4 1966171168
  %v4150 = vunpack.c.0.s8 %v4149
  %v4151 = vlaneseq
  %v4152 = vshrl.u32 %v4151, 7
  %v4153 = vsub.s32 %v4150, %v4152
  %v4154 = vrot.slane %v4126, %v4153
  %v4155 = vcombine.low %v4133, %v4140
  %v4156 = vcombine.low %v4147, %v4154
  %v4158 = vunpack.c.l.s4 1966171168
  %v4159 = vunpack.c.0.s8 %v4158
  %v4160 = vlaneseq
  %v4161 = vshrl.u32 %v4160, 7
  %v4162 = vsub.s32 %v4159, %v4161
  %v4163 = vrot.slane %v4155, %v4162
  %v4165 = vunpack.c.l.s4 1966171168
  %v4166 = vunpack.c.0.s8 %v4165
  %v4167 = vlaneseq
  %v4168 = vshrl.u32 %v4167, 7
  %v4169 = vsub.s32 %v4166, %v4168
  %v4170 = vrot.slane %v4156, %v4169
  %v4171 = vcombine.low %v4163, %v4170
  %v4172 = vcombine.low %v2414, %v2416
  %v4173 = vcombine.low %v2418, %v2420
  %v4174 = vcombine.low %v2422, %v2424
  %v4175 = vcombine.low %v2426, %v2428
  %v4177 = vunpack.c.l.s4 1966171168
  %v4178 = vunpack.c.0.s8 %v4177
  %v4179 = vlaneseq
  %v4180 = vshrl.u32 %v4179, 7
  %v4181 = vsub.s32 %v4178, %v4180
  %v4182 = vrot.slane %v4172, %v4181
  %v4184 = vunpack.c.l.s4 1966171168
  %v4185 = vunpack.c.0.s8 %v4184
  %v4186 = vlaneseq
  %v4187 = vshrl.u32 %v4186, 7
  %v4188 = vsub.s32 %v4185, %v4187
  %v4189 = vrot.slane %v4173, %v4188
  %v4191 = vunpack.c.l.s4 1966171168
  %v4192 = vunpack.c.0.s8 %v4191
  %v4193 = vlaneseq
  %v4194 = vshrl.u32 %v4193, 7
  %v4195 = vsub.s32 %v4192, %v4194
  %v4196 = vrot.slane %v4174, %v4195
  %v4198 = vunpack.c.l.s4 1966171168
  %v4199 = vunpack.c.0.s8 %v4198
  %v4200 = vlaneseq
  %v4201 = vshrl.u32 %v4200, 7
  %v4202 = vsub.s32 %v4199, %v4201
  %v4203 = vrot.slane %v4175, %v4202
  %v4204 = vcombine.low %v4182, %v4189
  %v4205 = vcombine.low %v4196, %v4203
  %v4207 = vunpack.c.l.s4 1966171168
  %v4208 = vunpack.c.0.s8 %v4207
  %v4209 = vlaneseq
  %v4210 = vshrl.u32 %v4209, 7
  %v4211 = vsub.s32 %v4208, %v4210
  %v4212 = vrot.slane %v4204, %v4211
  %v4214 = vunpack.c.l.s4 1966171168
  %v4215 = vunpack.c.0.s8 %v4214
  %v4216 = vlaneseq
  %v4217 = vshrl.u32 %v4216, 7
  %v4218 = vsub.s32 %v4215, %v4217
  %v4219 = vrot.slane %v4205, %v4218
  %v4220 = vcombine.low %v4212, %v4219
  %4221 = vrot.lane.b32.xlu0 %v2701, 4
  %v4222 = vpop.permute.xlu0 %4221
  %4223 = vrot.lane.b32.xlu0 %v2750, 4
  %v4224 = vpop.permute.xlu0 %4223
  %4225 = vrot.lane.b32.xlu0 %v2799, 4
  %v4226 = vpop.permute.xlu0 %4225
  %4227 = vrot.lane.b32.xlu0 %v2848, 4
  %v4228 = vpop.permute.xlu0 %4227
  %4229 = vrot.lane.b32.xlu0 %v2897, 4
  %v4230 = vpop.permute.xlu0 %4229
  %4231 = vrot.lane.b32.xlu0 %v2946, 4
  %v4232 = vpop.permute.xlu0 %4231
  %4233 = vrot.lane.b32.xlu0 %v2995, 4
  %v4234 = vpop.permute.xlu0 %4233
  %4235 = vrot.lane.b32.xlu0 %v3044, 4
  %v4236 = vpop.permute.xlu0 %4235
  %4237 = vrot.lane.b32.xlu0 %v3093, 4
  %v4238 = vpop.permute.xlu0 %4237
  %4239 = vrot.lane.b32.xlu0 %v3142, 4
  %v4240 = vpop.permute.xlu0 %4239
  %4241 = vrot.lane.b32.xlu0 %v3191, 4
  %v4242 = vpop.permute.xlu0 %4241
  %4243 = vrot.lane.b32.xlu0 %v3240, 4
  %v4244 = vpop.permute.xlu0 %4243
  %4245 = vrot.lane.b32.xlu0 %v3289, 4
  %v4246 = vpop.permute.xlu0 %4245
  %4247 = vrot.lane.b32.xlu0 %v3338, 4
  %v4248 = vpop.permute.xlu0 %4247
  %4249 = vrot.lane.b32.xlu0 %v3387, 4
  %v4250 = vpop.permute.xlu0 %4249
  %4251 = vrot.lane.b32.xlu0 %v3436, 4
  %v4252 = vpop.permute.xlu0 %4251
  %4253 = vrot.lane.b32.xlu0 %v3485, 4
  %v4254 = vpop.permute.xlu0 %4253
  %4255 = vrot.lane.b32.xlu0 %v3534, 4
  %v4256 = vpop.permute.xlu0 %4255
  %4257 = vrot.lane.b32.xlu0 %v3583, 4
  %v4258 = vpop.permute.xlu0 %4257
  %4259 = vrot.lane.b32.xlu0 %v3632, 4
  %v4260 = vpop.permute.xlu0 %4259
  %4261 = vrot.lane.b32.xlu0 %v3681, 4
  %v4262 = vpop.permute.xlu0 %4261
  %4263 = vrot.lane.b32.xlu0 %v3730, 4
  %v4264 = vpop.permute.xlu0 %4263
  %4265 = vrot.lane.b32.xlu0 %v3779, 4
  %v4266 = vpop.permute.xlu0 %4265
  %4267 = vrot.lane.b32.xlu0 %v3828, 4
  %v4268 = vpop.permute.xlu0 %4267
  %4269 = vrot.lane.b32.xlu0 %v3877, 4
  %v4270 = vpop.permute.xlu0 %4269
  %4271 = vrot.lane.b32.xlu0 %v3926, 4
  %v4272 = vpop.permute.xlu0 %4271
  %4273 = vrot.lane.b32.xlu0 %v3975, 4
  %v4274 = vpop.permute.xlu0 %4273
  %4275 = vrot.lane.b32.xlu0 %v4024, 4
  %v4276 = vpop.permute.xlu0 %4275
  %4277 = vrot.lane.b32.xlu0 %v4073, 4
  %v4278 = vpop.permute.xlu0 %4277
  %4279 = vrot.lane.b32.xlu0 %v4122, 4
  %v4280 = vpop.permute.xlu0 %4279
  %4281 = vrot.lane.b32.xlu0 %v4171, 4
  %v4282 = vpop.permute.xlu0 %4281
  %4283 = vrot.lane.b32.xlu0 %v4220, 4
  %v4284 = vpop.permute.xlu0 %4283
  %vm4285 = vcmask 31744
  %v4288 = vsel %vm4285, %v2621, %v4222
  %v4291 = vsel %vm4285, %v2622, %v4224
  %v4294 = vsel %vm4285, %v2623, %v4226
  %v4297 = vsel %vm4285, %v2624, %v4228
  %v4300 = vsel %vm4285, %v2625, %v4230
  %v4303 = vsel %vm4285, %v2626, %v4232
  %v4306 = vsel %vm4285, %v2627, %v4234
  %v4309 = vsel %vm4285, %v2628, %v4236
  %v4312 = vsel %vm4285, %v2629, %v4238
  %v4315 = vsel %vm4285, %v2630, %v4240
  %v4318 = vsel %vm4285, %v2631, %v4242
  %v4321 = vsel %vm4285, %v2632, %v4244
  %v4324 = vsel %vm4285, %v2633, %v4246
  %v4327 = vsel %vm4285, %v2634, %v4248
  %v4330 = vsel %vm4285, %v2635, %v4250
  %v4333 = vsel %vm4285, %v2636, %v4252
  %v4336 = vsel %vm4285, %v2637, %v4254
  %v4339 = vsel %vm4285, %v2638, %v4256
  %v4342 = vsel %vm4285, %v2639, %v4258
  %v4345 = vsel %vm4285, %v2640, %v4260
  %v4348 = vsel %vm4285, %v2641, %v4262
  %v4351 = vsel %vm4285, %v2642, %v4264
  %v4354 = vsel %vm4285, %v2643, %v4266
  %v4357 = vsel %vm4285, %v2644, %v4268
  %v4360 = vsel %vm4285, %v2645, %v4270
  %v4363 = vsel %vm4285, %v2646, %v4272
  %v4366 = vsel %vm4285, %v2647, %v4274
  %v4369 = vsel %vm4285, %v2648, %v4276
  %v4372 = vsel %vm4285, %v2649, %v4278
  %v4375 = vsel %vm4285, %v2650, %v4280
  %v4378 = vsel %vm4285, %v2651, %v4282
  %v4381 = vsel %vm4285, %v2652, %v4284
  %v4382 = vshrl.u32 %v4288, 16
  %v4384 = vshll.u32 %v4288, 16
  %v4386 = vrot.slane %v4384, 1
  %v4387 = vor.u32 %v4382, %v4386
  %v4388 = vshrl.u32 %v4291, 16
  %v4390 = vshll.u32 %v4291, 16
  %v4392 = vrot.slane %v4390, 1
  %v4393 = vor.u32 %v4388, %v4392
  %v4394 = vshrl.u32 %v4294, 16
  %v4396 = vshll.u32 %v4294, 16
  %v4398 = vrot.slane %v4396, 1
  %v4399 = vor.u32 %v4394, %v4398
  %v4400 = vshrl.u32 %v4297, 16
  %v4402 = vshll.u32 %v4297, 16
  %v4404 = vrot.slane %v4402, 1
  %v4405 = vor.u32 %v4400, %v4404
  %v4406 = vshrl.u32 %v4300, 16
  %v4408 = vshll.u32 %v4300, 16
  %v4410 = vrot.slane %v4408, 1
  %v4411 = vor.u32 %v4406, %v4410
  %v4412 = vshrl.u32 %v4303, 16
  %v4414 = vshll.u32 %v4303, 16
  %v4416 = vrot.slane %v4414, 1
  %v4417 = vor.u32 %v4412, %v4416
  %v4418 = vshrl.u32 %v4306, 16
  %v4420 = vshll.u32 %v4306, 16
  %v4422 = vrot.slane %v4420, 1
  %v4423 = vor.u32 %v4418, %v4422
  %v4424 = vshrl.u32 %v4309, 16
  %v4426 = vshll.u32 %v4309, 16
  %v4428 = vrot.slane %v4426, 1
  %v4429 = vor.u32 %v4424, %v4428
  %v4430 = vshrl.u32 %v4312, 16
  %v4432 = vshll.u32 %v4312, 16
  %v4434 = vrot.slane %v4432, 1
  %v4435 = vor.u32 %v4430, %v4434
  %v4436 = vshrl.u32 %v4315, 16
  %v4438 = vshll.u32 %v4315, 16
  %v4440 = vrot.slane %v4438, 1
  %v4441 = vor.u32 %v4436, %v4440
  %v4442 = vshrl.u32 %v4318, 16
  %v4444 = vshll.u32 %v4318, 16
  %v4446 = vrot.slane %v4444, 1
  %v4447 = vor.u32 %v4442, %v4446
  %v4448 = vshrl.u32 %v4321, 16
  %v4450 = vshll.u32 %v4321, 16
  %v4452 = vrot.slane %v4450, 1
  %v4453 = vor.u32 %v4448, %v4452
  %v4454 = vshrl.u32 %v4324, 16
  %v4456 = vshll.u32 %v4324, 16
  %v4458 = vrot.slane %v4456, 1
  %v4459 = vor.u32 %v4454, %v4458
  %v4460 = vshrl.u32 %v4327, 16
  %v4462 = vshll.u32 %v4327, 16
  %v4464 = vrot.slane %v4462, 1
  %v4465 = vor.u32 %v4460, %v4464
  %v4466 = vshrl.u32 %v4330, 16
  %v4468 = vshll.u32 %v4330, 16
  %v4470 = vrot.slane %v4468, 1
  %v4471 = vor.u32 %v4466, %v4470
  %v4472 = vshrl.u32 %v4333, 16
  %v4474 = vshll.u32 %v4333, 16
  %v4476 = vrot.slane %v4474, 1
  %v4477 = vor.u32 %v4472, %v4476
  %v4478 = vshrl.u32 %v4336, 16
  %v4480 = vshll.u32 %v4336, 16
  %v4482 = vrot.slane %v4480, 1
  %v4483 = vor.u32 %v4478, %v4482
  %v4484 = vshrl.u32 %v4339, 16
  %v4486 = vshll.u32 %v4339, 16
  %v4488 = vrot.slane %v4486, 1
  %v4489 = vor.u32 %v4484, %v4488
  %v4490 = vshrl.u32 %v4342, 16
  %v4492 = vshll.u32 %v4342, 16
  %v4494 = vrot.slane %v4492, 1
  %v4495 = vor.u32 %v4490, %v4494
  %v4496 = vshrl.u32 %v4345, 16
  %v4498 = vshll.u32 %v4345, 16
  %v4500 = vrot.slane %v4498, 1
  %v4501 = vor.u32 %v4496, %v4500
  %v4502 = vshrl.u32 %v4348, 16
  %v4504 = vshll.u32 %v4348, 16
  %v4506 = vrot.slane %v4504, 1
  %v4507 = vor.u32 %v4502, %v4506
  %v4508 = vshrl.u32 %v4351, 16
  %v4510 = vshll.u32 %v4351, 16
  %v4512 = vrot.slane %v4510, 1
  %v4513 = vor.u32 %v4508, %v4512
  %v4514 = vshrl.u32 %v4354, 16
  %v4516 = vshll.u32 %v4354, 16
  %v4518 = vrot.slane %v4516, 1
  %v4519 = vor.u32 %v4514, %v4518
  %v4520 = vshrl.u32 %v4357, 16
  %v4522 = vshll.u32 %v4357, 16
  %v4524 = vrot.slane %v4522, 1
  %v4525 = vor.u32 %v4520, %v4524
  %v4526 = vshrl.u32 %v4360, 16
  %v4528 = vshll.u32 %v4360, 16
  %v4530 = vrot.slane %v4528, 1
  %v4531 = vor.u32 %v4526, %v4530
  %v4532 = vshrl.u32 %v4363, 16
  %v4534 = vshll.u32 %v4363, 16
  %v4536 = vrot.slane %v4534, 1
  %v4537 = vor.u32 %v4532, %v4536
  %v4538 = vshrl.u32 %v4366, 16
  %v4540 = vshll.u32 %v4366, 16
  %v4542 = vrot.slane %v4540, 1
  %v4543 = vor.u32 %v4538, %v4542
  %v4544 = vshrl.u32 %v4369, 16
  %v4546 = vshll.u32 %v4369, 16
  %v4548 = vrot.slane %v4546, 1
  %v4549 = vor.u32 %v4544, %v4548
  %v4550 = vshrl.u32 %v4372, 16
  %v4552 = vshll.u32 %v4372, 16
  %v4554 = vrot.slane %v4552, 1
  %v4555 = vor.u32 %v4550, %v4554
  %v4556 = vshrl.u32 %v4375, 16
  %v4558 = vshll.u32 %v4375, 16
  %v4560 = vrot.slane %v4558, 1
  %v4561 = vor.u32 %v4556, %v4560
  %v4562 = vshrl.u32 %v4378, 16
  %v4564 = vshll.u32 %v4378, 16
  %v4566 = vrot.slane %v4564, 1
  %v4567 = vor.u32 %v4562, %v4566
  %v4568 = vshrl.u32 %v4381, 16
  %v4570 = vshll.u32 %v4381, 16
  %v4572 = vrot.slane %v4570, 1
  %v4573 = vor.u32 %v4568, %v4572
  %4574 = vrot.lane.b32.xlu0 %v4387, 8
  %v4575 = vpop.permute.xlu0 %4574
  %4576 = vrot.lane.b32.xlu0 %v4393, 8
  %v4577 = vpop.permute.xlu0 %4576
  %4578 = vrot.lane.b32.xlu0 %v4399, 8
  %v4579 = vpop.permute.xlu0 %4578
  %4580 = vrot.lane.b32.xlu0 %v4405, 8
  %v4581 = vpop.permute.xlu0 %4580
  %4582 = vrot.lane.b32.xlu0 %v4411, 8
  %v4583 = vpop.permute.xlu0 %4582
  %4584 = vrot.lane.b32.xlu0 %v4417, 8
  %v4585 = vpop.permute.xlu0 %4584
  %4586 = vrot.lane.b32.xlu0 %v4423, 8
  %v4587 = vpop.permute.xlu0 %4586
  %4588 = vrot.lane.b32.xlu0 %v4429, 8
  %v4589 = vpop.permute.xlu0 %4588
  %4590 = vrot.lane.b32.xlu0 %v4435, 8
  %v4591 = vpop.permute.xlu0 %4590
  %4592 = vrot.lane.b32.xlu0 %v4441, 8
  %v4593 = vpop.permute.xlu0 %4592
  %4594 = vrot.lane.b32.xlu0 %v4447, 8
  %v4595 = vpop.permute.xlu0 %4594
  %4596 = vrot.lane.b32.xlu0 %v4453, 8
  %v4597 = vpop.permute.xlu0 %4596
  %4598 = vrot.lane.b32.xlu0 %v4459, 8
  %v4599 = vpop.permute.xlu0 %4598
  %4600 = vrot.lane.b32.xlu0 %v4465, 8
  %v4601 = vpop.permute.xlu0 %4600
  %4602 = vrot.lane.b32.xlu0 %v4471, 8
  %v4603 = vpop.permute.xlu0 %4602
  %4604 = vrot.lane.b32.xlu0 %v4477, 8
  %v4605 = vpop.permute.xlu0 %4604
  %4606 = vrot.lane.b32.xlu0 %v4483, 8
  %v4607 = vpop.permute.xlu0 %4606
  %4608 = vrot.lane.b32.xlu0 %v4489, 8
  %v4609 = vpop.permute.xlu0 %4608
  %4610 = vrot.lane.b32.xlu0 %v4495, 8
  %v4611 = vpop.permute.xlu0 %4610
  %4612 = vrot.lane.b32.xlu0 %v4501, 8
  %v4613 = vpop.permute.xlu0 %4612
  %4614 = vrot.lane.b32.xlu0 %v4507, 8
  %v4615 = vpop.permute.xlu0 %4614
  %4616 = vrot.lane.b32.xlu0 %v4513, 8
  %v4617 = vpop.permute.xlu0 %4616
  %4618 = vrot.lane.b32.xlu0 %v4519, 8
  %v4619 = vpop.permute.xlu0 %4618
  %4620 = vrot.lane.b32.xlu0 %v4525, 8
  %v4621 = vpop.permute.xlu0 %4620
  %4622 = vrot.lane.b32.xlu0 %v4531, 8
  %v4623 = vpop.permute.xlu0 %4622
  %4624 = vrot.lane.b32.xlu0 %v4537, 8
  %v4625 = vpop.permute.xlu0 %4624
  %4626 = vrot.lane.b32.xlu0 %v4543, 8
  %v4627 = vpop.permute.xlu0 %4626
  %4628 = vrot.lane.b32.xlu0 %v4549, 8
  %v4629 = vpop.permute.xlu0 %4628
  %4630 = vrot.lane.b32.xlu0 %v4555, 8
  %v4631 = vpop.permute.xlu0 %4630
  %4632 = vrot.lane.b32.xlu0 %v4561, 8
  %v4633 = vpop.permute.xlu0 %4632
  %4634 = vrot.lane.b32.xlu0 %v4567, 8
  %v4635 = vpop.permute.xlu0 %4634
  %4636 = vrot.lane.b32.xlu0 %v4573, 8
  %v4637 = vpop.permute.xlu0 %4636
  %v4670 = vrot.slane %v4288, 1
  %v4671 = vrot.slane %v4291, 1
  %v4672 = vrot.slane %v4294, 1
  %v4673 = vrot.slane %v4297, 1
  %v4674 = vrot.slane %v4300, 1
  %v4675 = vrot.slane %v4303, 1
  %v4676 = vrot.slane %v4306, 1
  %v4677 = vrot.slane %v4309, 1
  %v4678 = vrot.slane %v4312, 1
  %v4679 = vrot.slane %v4315, 1
  %v4680 = vrot.slane %v4318, 1
  %v4681 = vrot.slane %v4321, 1
  %v4682 = vrot.slane %v4324, 1
  %v4683 = vrot.slane %v4327, 1
  %v4684 = vrot.slane %v4330, 1
  %v4685 = vrot.slane %v4333, 1
  %v4686 = vrot.slane %v4336, 1
  %v4687 = vrot.slane %v4339, 1
  %v4688 = vrot.slane %v4342, 1
  %v4689 = vrot.slane %v4345, 1
  %v4690 = vrot.slane %v4348, 1
  %v4691 = vrot.slane %v4351, 1
  %v4692 = vrot.slane %v4354, 1
  %v4693 = vrot.slane %v4357, 1
  %v4694 = vrot.slane %v4360, 1
  %v4695 = vrot.slane %v4363, 1
  %v4696 = vrot.slane %v4366, 1
  %v4697 = vrot.slane %v4369, 1
  %v4698 = vrot.slane %v4372, 1
  %v4699 = vrot.slane %v4375, 1
  %v4700 = vrot.slane %v4378, 1
  %v4701 = vrot.slane %v4381, 1
  %4702 = vrot.lane.b32.xlu0 %v4670, 16
  %v4703 = vpop.permute.xlu0 %4702
  %4704 = vrot.lane.b32.xlu0 %v4671, 16
  %v4705 = vpop.permute.xlu0 %4704
  %4706 = vrot.lane.b32.xlu0 %v4672, 16
  %v4707 = vpop.permute.xlu0 %4706
  %4708 = vrot.lane.b32.xlu0 %v4673, 16
  %v4709 = vpop.permute.xlu0 %4708
  %4710 = vrot.lane.b32.xlu0 %v4674, 16
  %v4711 = vpop.permute.xlu0 %4710
  %4712 = vrot.lane.b32.xlu0 %v4675, 16
  %v4713 = vpop.permute.xlu0 %4712
  %4714 = vrot.lane.b32.xlu0 %v4676, 16
  %v4715 = vpop.permute.xlu0 %4714
  %4716 = vrot.lane.b32.xlu0 %v4677, 16
  %v4717 = vpop.permute.xlu0 %4716
  %4718 = vrot.lane.b32.xlu0 %v4678, 16
  %v4719 = vpop.permute.xlu0 %4718
  %4720 = vrot.lane.b32.xlu0 %v4679, 16
  %v4721 = vpop.permute.xlu0 %4720
  %4722 = vrot.lane.b32.xlu0 %v4680, 16
  %v4723 = vpop.permute.xlu0 %4722
  %4724 = vrot.lane.b32.xlu0 %v4681, 16
  %v4725 = vpop.permute.xlu0 %4724
  %4726 = vrot.lane.b32.xlu0 %v4682, 16
  %v4727 = vpop.permute.xlu0 %4726
  %4728 = vrot.lane.b32.xlu0 %v4683, 16
  %v4729 = vpop.permute.xlu0 %4728
  %4730 = vrot.lane.b32.xlu0 %v4684, 16
  %v4731 = vpop.permute.xlu0 %4730
  %4732 = vrot.lane.b32.xlu0 %v4685, 16
  %v4733 = vpop.permute.xlu0 %4732
  %4734 = vrot.lane.b32.xlu0 %v4686, 16
  %v4735 = vpop.permute.xlu0 %4734
  %4736 = vrot.lane.b32.xlu0 %v4687, 16
  %v4737 = vpop.permute.xlu0 %4736
  %4738 = vrot.lane.b32.xlu0 %v4688, 16
  %v4739 = vpop.permute.xlu0 %4738
  %4740 = vrot.lane.b32.xlu0 %v4689, 16
  %v4741 = vpop.permute.xlu0 %4740
  %4742 = vrot.lane.b32.xlu0 %v4690, 16
  %v4743 = vpop.permute.xlu0 %4742
  %4744 = vrot.lane.b32.xlu0 %v4691, 16
  %v4745 = vpop.permute.xlu0 %4744
  %4746 = vrot.lane.b32.xlu0 %v4692, 16
  %v4747 = vpop.permute.xlu0 %4746
  %4748 = vrot.lane.b32.xlu0 %v4693, 16
  %v4749 = vpop.permute.xlu0 %4748
  %4750 = vrot.lane.b32.xlu0 %v4694, 16
  %v4751 = vpop.permute.xlu0 %4750
  %4752 = vrot.lane.b32.xlu0 %v4695, 16
  %v4753 = vpop.permute.xlu0 %4752
  %4754 = vrot.lane.b32.xlu0 %v4696, 16
  %v4755 = vpop.permute.xlu0 %4754
  %4756 = vrot.lane.b32.xlu0 %v4697, 16
  %v4757 = vpop.permute.xlu0 %4756
  %4758 = vrot.lane.b32.xlu0 %v4698, 16
  %v4759 = vpop.permute.xlu0 %4758
  %4760 = vrot.lane.b32.xlu0 %v4699, 16
  %v4761 = vpop.permute.xlu0 %4760
  %4762 = vrot.lane.b32.xlu0 %v4700, 16
  %v4763 = vpop.permute.xlu0 %4762
  %4764 = vrot.lane.b32.xlu0 %v4701, 16
  %v4765 = vpop.permute.xlu0 %4764
  %v4767 = vsel %vm100, %v4288, %v4575
  %v4769 = vsel %vm100, %v4291, %v4577
  %v4771 = vsel %vm100, %v4294, %v4579
  %v4773 = vsel %vm100, %v4297, %v4581
  %v4775 = vsel %vm100, %v4300, %v4583
  %v4777 = vsel %vm100, %v4303, %v4585
  %v4779 = vsel %vm100, %v4306, %v4587
  %v4781 = vsel %vm100, %v4309, %v4589
  %v4783 = vsel %vm100, %v4312, %v4591
  %v4785 = vsel %vm100, %v4315, %v4593
  %v4787 = vsel %vm100, %v4318, %v4595
  %v4789 = vsel %vm100, %v4321, %v4597
  %v4791 = vsel %vm100, %v4324, %v4599
  %v4793 = vsel %vm100, %v4327, %v4601
  %v4795 = vsel %vm100, %v4330, %v4603
  %v4797 = vsel %vm100, %v4333, %v4605
  %v4799 = vsel %vm100, %v4336, %v4607
  %v4801 = vsel %vm100, %v4339, %v4609
  %v4803 = vsel %vm100, %v4342, %v4611
  %v4805 = vsel %vm100, %v4345, %v4613
  %v4807 = vsel %vm100, %v4348, %v4615
  %v4809 = vsel %vm100, %v4351, %v4617
  %v4811 = vsel %vm100, %v4354, %v4619
  %v4813 = vsel %vm100, %v4357, %v4621
  %v4815 = vsel %vm100, %v4360, %v4623
  %v4817 = vsel %vm100, %v4363, %v4625
  %v4819 = vsel %vm100, %v4366, %v4627
  %v4821 = vsel %vm100, %v4369, %v4629
  %v4823 = vsel %vm100, %v4372, %v4631
  %v4825 = vsel %vm100, %v4375, %v4633
  %v4827 = vsel %vm100, %v4378, %v4635
  %v4829 = vsel %vm100, %v4381, %v4637
  %vm4830 = vcmask 130048
  %v4832 = vsel %vm4830, %v4767, %v4703
  %v4834 = vsel %vm4830, %v4769, %v4705
  %v4836 = vsel %vm4830, %v4771, %v4707
  %v4838 = vsel %vm4830, %v4773, %v4709
  %v4840 = vsel %vm4830, %v4775, %v4711
  %v4842 = vsel %vm4830, %v4777, %v4713
  %v4844 = vsel %vm4830, %v4779, %v4715
  %v4846 = vsel %vm4830, %v4781, %v4717
  %v4848 = vsel %vm4830, %v4783, %v4719
  %v4850 = vsel %vm4830, %v4785, %v4721
  %v4852 = vsel %vm4830, %v4787, %v4723
  %v4854 = vsel %vm4830, %v4789, %v4725
  %v4856 = vsel %vm4830, %v4791, %v4727
  %v4858 = vsel %vm4830, %v4793, %v4729
  %v4860 = vsel %vm4830, %v4795, %v4731
  %v4862 = vsel %vm4830, %v4797, %v4733
  %v4864 = vsel %vm4830, %v4799, %v4735
  %v4866 = vsel %vm4830, %v4801, %v4737
  %v4868 = vsel %vm4830, %v4803, %v4739
  %v4870 = vsel %vm4830, %v4805, %v4741
  %v4872 = vsel %vm4830, %v4807, %v4743
  %v4874 = vsel %vm4830, %v4809, %v4745
  %v4876 = vsel %vm4830, %v4811, %v4747
  %v4878 = vsel %vm4830, %v4813, %v4749
  %v4880 = vsel %vm4830, %v4815, %v4751
  %v4882 = vsel %vm4830, %v4817, %v4753
  %v4884 = vsel %vm4830, %v4819, %v4755
  %v4886 = vsel %vm4830, %v4821, %v4757
  %v4888 = vsel %vm4830, %v4823, %v4759
  %v4890 = vsel %vm4830, %v4825, %v4761
  %v4892 = vsel %vm4830, %v4827, %v4763
  %v4894 = vsel %vm4830, %v4829, %v4765
  %4923 = vrot.lane.b32.xlu0 %v4834, 24
  %v4924 = vpop.permute.xlu0 %4923
  %4925 = vrot.lane.b32.xlu0 %v4836, 24
  %v4926 = vpop.permute.xlu0 %4925
  %4927 = vrot.lane.b32.xlu0 %v4838, 24
  %v4928 = vpop.permute.xlu0 %4927
  %4929 = vrot.lane.b32.xlu0 %v4840, 24
  %v4930 = vpop.permute.xlu0 %4929
  %4931 = vrot.lane.b32.xlu0 %v4842, 24
  %v4932 = vpop.permute.xlu0 %4931
  %4933 = vrot.lane.b32.xlu0 %v4844, 24
  %v4934 = vpop.permute.xlu0 %4933
  %4935 = vrot.lane.b32.xlu0 %v4846, 24
  %v4936 = vpop.permute.xlu0 %4935
  %4937 = vrot.lane.b32.xlu0 %v4848, 24
  %v4938 = vpop.permute.xlu0 %4937
  %4939 = vrot.lane.b32.xlu0 %v4850, 24
  %v4940 = vpop.permute.xlu0 %4939
  %4941 = vrot.lane.b32.xlu0 %v4852, 24
  %v4942 = vpop.permute.xlu0 %4941
  %4943 = vrot.lane.b32.xlu0 %v4854, 24
  %v4944 = vpop.permute.xlu0 %4943
  %4945 = vrot.lane.b32.xlu0 %v4856, 24
  %v4946 = vpop.permute.xlu0 %4945
  %4947 = vrot.lane.b32.xlu0 %v4858, 24
  %v4948 = vpop.permute.xlu0 %4947
  %4949 = vrot.lane.b32.xlu0 %v4860, 24
  %v4950 = vpop.permute.xlu0 %4949
  %4951 = vrot.lane.b32.xlu0 %v4866, 24
  %v4952 = vpop.permute.xlu0 %4951
  %4953 = vrot.lane.b32.xlu0 %v4868, 24
  %v4954 = vpop.permute.xlu0 %4953
  %4955 = vrot.lane.b32.xlu0 %v4870, 24
  %v4956 = vpop.permute.xlu0 %4955
  %4957 = vrot.lane.b32.xlu0 %v4872, 24
  %v4958 = vpop.permute.xlu0 %4957
  %4959 = vrot.lane.b32.xlu0 %v4874, 24
  %v4960 = vpop.permute.xlu0 %4959
  %4961 = vrot.lane.b32.xlu0 %v4876, 24
  %v4962 = vpop.permute.xlu0 %4961
  %4963 = vrot.lane.b32.xlu0 %v4878, 24
  %v4964 = vpop.permute.xlu0 %4963
  %4965 = vrot.lane.b32.xlu0 %v4880, 24
  %v4966 = vpop.permute.xlu0 %4965
  %4967 = vrot.lane.b32.xlu0 %v4882, 24
  %v4968 = vpop.permute.xlu0 %4967
  %4969 = vrot.lane.b32.xlu0 %v4884, 24
  %v4970 = vpop.permute.xlu0 %4969
  %4971 = vrot.lane.b32.xlu0 %v4886, 24
  %v4972 = vpop.permute.xlu0 %4971
  %4973 = vrot.lane.b32.xlu0 %v4888, 24
  %v4974 = vpop.permute.xlu0 %4973
  %4975 = vrot.lane.b32.xlu0 %v4890, 24
  %v4976 = vpop.permute.xlu0 %4975
  %4977 = vrot.lane.b32.xlu0 %v4892, 24
  %v4978 = vpop.permute.xlu0 %4977
  %4981 = vrot.lane.b32.xlu0 %v4836, 48
  %v4982 = vpop.permute.xlu0 %4981
  %4983 = vrot.lane.b32.xlu0 %v4838, 48
  %v4984 = vpop.permute.xlu0 %4983
  %4985 = vrot.lane.b32.xlu0 %v4840, 48
  %v4986 = vpop.permute.xlu0 %4985
  %4987 = vrot.lane.b32.xlu0 %v4842, 48
  %v4988 = vpop.permute.xlu0 %4987
  %4989 = vrot.lane.b32.xlu0 %v4844, 48
  %v4990 = vpop.permute.xlu0 %4989
  %4991 = vrot.lane.b32.xlu0 %v4846, 48
  %v4992 = vpop.permute.xlu0 %4991
  %4993 = vrot.lane.b32.xlu0 %v4848, 48
  %v4994 = vpop.permute.xlu0 %4993
  %4995 = vrot.lane.b32.xlu0 %v4850, 48
  %v4996 = vpop.permute.xlu0 %4995
  %4997 = vrot.lane.b32.xlu0 %v4852, 48
  %v4998 = vpop.permute.xlu0 %4997
  %4999 = vrot.lane.b32.xlu0 %v4854, 48
  %v5000 = vpop.permute.xlu0 %4999
  %5001 = vrot.lane.b32.xlu0 %v4856, 48
  %v5002 = vpop.permute.xlu0 %5001
  %5003 = vrot.lane.b32.xlu0 %v4858, 48
  %v5004 = vpop.permute.xlu0 %5003
  %5005 = vrot.lane.b32.xlu0 %v4860, 48
  %v5006 = vpop.permute.xlu0 %5005
  %5007 = vrot.lane.b32.xlu0 %v4862, 48
  %v5008 = vpop.permute.xlu0 %5007
  %5009 = vrot.lane.b32.xlu0 %v4868, 48
  %v5010 = vpop.permute.xlu0 %5009
  %5011 = vrot.lane.b32.xlu0 %v4870, 48
  %v5012 = vpop.permute.xlu0 %5011
  %5013 = vrot.lane.b32.xlu0 %v4872, 48
  %v5014 = vpop.permute.xlu0 %5013
  %5015 = vrot.lane.b32.xlu0 %v4874, 48
  %v5016 = vpop.permute.xlu0 %5015
  %5017 = vrot.lane.b32.xlu0 %v4876, 48
  %v5018 = vpop.permute.xlu0 %5017
  %5019 = vrot.lane.b32.xlu0 %v4878, 48
  %v5020 = vpop.permute.xlu0 %5019
  %5021 = vrot.lane.b32.xlu0 %v4880, 48
  %v5022 = vpop.permute.xlu0 %5021
  %5023 = vrot.lane.b32.xlu0 %v4882, 48
  %v5024 = vpop.permute.xlu0 %5023
  %5025 = vrot.lane.b32.xlu0 %v4884, 48
  %v5026 = vpop.permute.xlu0 %5025
  %5027 = vrot.lane.b32.xlu0 %v4886, 48
  %v5028 = vpop.permute.xlu0 %5027
  %5029 = vrot.lane.b32.xlu0 %v4888, 48
  %v5030 = vpop.permute.xlu0 %5029
  %5031 = vrot.lane.b32.xlu0 %v4890, 48
  %v5032 = vpop.permute.xlu0 %5031
  %5033 = vrot.lane.b32.xlu0 %v4892, 48
  %v5034 = vpop.permute.xlu0 %5033
  %5035 = vrot.lane.b32.xlu0 %v4894, 48
  %v5036 = vpop.permute.xlu0 %5035
  %vm5037 = vcmask 195584
  %v5039 = vsel %vm5037, %v4832, %v4924
  %v5041 = vsel %vm5037, %v4834, %v4926
  %v5043 = vsel %vm5037, %v4836, %v4928
  %v5045 = vsel %vm5037, %v4838, %v4930
  %v5047 = vsel %vm5037, %v4840, %v4932
  %v5049 = vsel %vm5037, %v4842, %v4934
  %v5051 = vsel %vm5037, %v4844, %v4936
  %v5053 = vsel %vm5037, %v4846, %v4938
  %v5055 = vsel %vm5037, %v4848, %v4940
  %v5057 = vsel %vm5037, %v4850, %v4942
  %v5059 = vsel %vm5037, %v4852, %v4944
  %v5061 = vsel %vm5037, %v4854, %v4946
  %v5063 = vsel %vm5037, %v4856, %v4948
  %v5065 = vsel %vm5037, %v4858, %v4950
  %v5067 = vsel %vm5037, %v4864, %v4952
  %v5069 = vsel %vm5037, %v4866, %v4954
  %v5071 = vsel %vm5037, %v4868, %v4956
  %v5073 = vsel %vm5037, %v4870, %v4958
  %v5075 = vsel %vm5037, %v4872, %v4960
  %v5077 = vsel %vm5037, %v4874, %v4962
  %v5079 = vsel %vm5037, %v4876, %v4964
  %v5081 = vsel %vm5037, %v4878, %v4966
  %v5083 = vsel %vm5037, %v4880, %v4968
  %v5085 = vsel %vm5037, %v4882, %v4970
  %v5087 = vsel %vm5037, %v4884, %v4972
  %v5089 = vsel %vm5037, %v4886, %v4974
  %v5091 = vsel %vm5037, %v4888, %v4976
  %v5093 = vsel %vm5037, %v4890, %v4978
  %vm5094 = vcmask 392192
  %v5096 = vsel %vm5094, %v5039, %v4982
  %v5098 = vsel %vm5094, %v5041, %v4984
  %v5100 = vsel %vm5094, %v5043, %v4986
  %v5102 = vsel %vm5094, %v5045, %v4988
  %v5104 = vsel %vm5094, %v5047, %v4990
  %v5106 = vsel %vm5094, %v5049, %v4992
  %v5108 = vsel %vm5094, %v5051, %v4994
  %v5110 = vsel %vm5094, %v5053, %v4996
  %v5112 = vsel %vm5094, %v5055, %v4998
  %v5114 = vsel %vm5094, %v5057, %v5000
  %v5116 = vsel %vm5094, %v5059, %v5002
  %v5118 = vsel %vm5094, %v5061, %v5004
  %v5120 = vsel %vm5094, %v5063, %v5006
  %v5122 = vsel %vm5094, %v5065, %v5008
  %v5124 = vsel %vm5094, %v5067, %v5010
  %v5126 = vsel %vm5094, %v5069, %v5012
  %v5128 = vsel %vm5094, %v5071, %v5014
  %v5130 = vsel %vm5094, %v5073, %v5016
  %v5132 = vsel %vm5094, %v5075, %v5018
  %v5134 = vsel %vm5094, %v5077, %v5020
  %v5136 = vsel %vm5094, %v5079, %v5022
  %v5138 = vsel %vm5094, %v5081, %v5024
  %v5140 = vsel %vm5094, %v5083, %v5026
  %v5142 = vsel %vm5094, %v5085, %v5028
  %v5144 = vsel %vm5094, %v5087, %v5030
  %v5146 = vsel %vm5094, %v5089, %v5032
  %v5148 = vsel %vm5094, %v5091, %v5034
  %v5150 = vsel %vm5094, %v5093, %v5036
  %v5179 = vcombine.high %v5096, %v5096
  %v5181 = vunpack.c.l.s4 1966171168
  %v5182 = vunpack.c.0.s8 %v5181
  %v5183 = vlaneseq
  %v5184 = vshrl.u32 %v5183, 7
  %v5185 = vsub.s32 %v5182, %v5184
  %v5186 = vrot.slane %v5096, %v5185
  %v5188 = vunpack.c.l.s4 1966171168
  %v5189 = vunpack.c.0.s8 %v5188
  %v5190 = vlaneseq
  %v5191 = vshrl.u32 %v5190, 7
  %v5192 = vsub.s32 %v5189, %v5191
  %v5193 = vrot.slane %v5179, %v5192
  %v5194 = vcombine.high %v5186, %v5186
  %v5195 = vcombine.high %v5193, %v5193
  %v5197 = vunpack.c.l.s4 1966171168
  %v5198 = vunpack.c.0.s8 %v5197
  %v5199 = vlaneseq
  %v5200 = vshrl.u32 %v5199, 7
  %v5201 = vsub.s32 %v5198, %v5200
  %v5202 = vrot.slane %v5186, %v5201
  %v5204 = vunpack.c.l.s4 1966171168
  %v5205 = vunpack.c.0.s8 %v5204
  %v5206 = vlaneseq
  %v5207 = vshrl.u32 %v5206, 7
  %v5208 = vsub.s32 %v5205, %v5207
  %v5209 = vrot.slane %v5193, %v5208
  %v5211 = vunpack.c.l.s4 1966171168
  %v5212 = vunpack.c.0.s8 %v5211
  %v5213 = vlaneseq
  %v5214 = vshrl.u32 %v5213, 7
  %v5215 = vsub.s32 %v5212, %v5214
  %v5216 = vrot.slane %v5194, %v5215
  %v5218 = vunpack.c.l.s4 1966171168
  %v5219 = vunpack.c.0.s8 %v5218
  %v5220 = vlaneseq
  %v5221 = vshrl.u32 %v5220, 7
  %v5222 = vsub.s32 %v5219, %v5221
  %v5223 = vrot.slane %v5195, %v5222
  %v5224 = vcombine.high %v5202, %v5202
  %v5225 = vcombine.high %v5209, %v5209
  %v5226 = vcombine.high %v5216, %v5216
  %v5227 = vcombine.high %v5098, %v5098
  %v5229 = vunpack.c.l.s4 1966171168
  %v5230 = vunpack.c.0.s8 %v5229
  %v5231 = vlaneseq
  %v5232 = vshrl.u32 %v5231, 7
  %v5233 = vsub.s32 %v5230, %v5232
  %v5234 = vrot.slane %v5098, %v5233
  %v5236 = vunpack.c.l.s4 1966171168
  %v5237 = vunpack.c.0.s8 %v5236
  %v5238 = vlaneseq
  %v5239 = vshrl.u32 %v5238, 7
  %v5240 = vsub.s32 %v5237, %v5239
  %v5241 = vrot.slane %v5227, %v5240
  %v5242 = vcombine.high %v5234, %v5234
  %v5243 = vcombine.high %v5241, %v5241
  %v5245 = vunpack.c.l.s4 1966171168
  %v5246 = vunpack.c.0.s8 %v5245
  %v5247 = vlaneseq
  %v5248 = vshrl.u32 %v5247, 7
  %v5249 = vsub.s32 %v5246, %v5248
  %v5250 = vrot.slane %v5234, %v5249
  %v5252 = vunpack.c.l.s4 1966171168
  %v5253 = vunpack.c.0.s8 %v5252
  %v5254 = vlaneseq
  %v5255 = vshrl.u32 %v5254, 7
  %v5256 = vsub.s32 %v5253, %v5255
  %v5257 = vrot.slane %v5241, %v5256
  %v5259 = vunpack.c.l.s4 1966171168
  %v5260 = vunpack.c.0.s8 %v5259
  %v5261 = vlaneseq
  %v5262 = vshrl.u32 %v5261, 7
  %v5263 = vsub.s32 %v5260, %v5262
  %v5264 = vrot.slane %v5242, %v5263
  %v5266 = vunpack.c.l.s4 1966171168
  %v5267 = vunpack.c.0.s8 %v5266
  %v5268 = vlaneseq
  %v5269 = vshrl.u32 %v5268, 7
  %v5270 = vsub.s32 %v5267, %v5269
  %v5271 = vrot.slane %v5243, %v5270
  %v5272 = vcombine.high %v5250, %v5250
  %v5273 = vcombine.high %v5257, %v5257
  %v5274 = vcombine.high %v5264, %v5264
  %v5275 = vcombine.high %v5100, %v5100
  %v5277 = vunpack.c.l.s4 1966171168
  %v5278 = vunpack.c.0.s8 %v5277
  %v5279 = vlaneseq
  %v5280 = vshrl.u32 %v5279, 7
  %v5281 = vsub.s32 %v5278, %v5280
  %v5282 = vrot.slane %v5100, %v5281
  %v5284 = vunpack.c.l.s4 1966171168
  %v5285 = vunpack.c.0.s8 %v5284
  %v5286 = vlaneseq
  %v5287 = vshrl.u32 %v5286, 7
  %v5288 = vsub.s32 %v5285, %v5287
  %v5289 = vrot.slane %v5275, %v5288
  %v5290 = vcombine.high %v5282, %v5282
  %v5291 = vcombine.high %v5289, %v5289
  %v5293 = vunpack.c.l.s4 1966171168
  %v5294 = vunpack.c.0.s8 %v5293
  %v5295 = vlaneseq
  %v5296 = vshrl.u32 %v5295, 7
  %v5297 = vsub.s32 %v5294, %v5296
  %v5298 = vrot.slane %v5282, %v5297
  %v5300 = vunpack.c.l.s4 1966171168
  %v5301 = vunpack.c.0.s8 %v5300
  %v5302 = vlaneseq
  %v5303 = vshrl.u32 %v5302, 7
  %v5304 = vsub.s32 %v5301, %v5303
  %v5305 = vrot.slane %v5289, %v5304
  %v5307 = vunpack.c.l.s4 1966171168
  %v5308 = vunpack.c.0.s8 %v5307
  %v5309 = vlaneseq
  %v5310 = vshrl.u32 %v5309, 7
  %v5311 = vsub.s32 %v5308, %v5310
  %v5312 = vrot.slane %v5290, %v5311
  %v5314 = vunpack.c.l.s4 1966171168
  %v5315 = vunpack.c.0.s8 %v5314
  %v5316 = vlaneseq
  %v5317 = vshrl.u32 %v5316, 7
  %v5318 = vsub.s32 %v5315, %v5317
  %v5319 = vrot.slane %v5291, %v5318
  %v5320 = vcombine.high %v5298, %v5298
  %v5321 = vcombine.high %v5305, %v5305
  %v5322 = vcombine.high %v5312, %v5312
  %v5323 = vcombine.high %v5102, %v5102
  %v5325 = vunpack.c.l.s4 1966171168
  %v5326 = vunpack.c.0.s8 %v5325
  %v5327 = vlaneseq
  %v5328 = vshrl.u32 %v5327, 7
  %v5329 = vsub.s32 %v5326, %v5328
  %v5330 = vrot.slane %v5102, %v5329
  %v5332 = vunpack.c.l.s4 1966171168
  %v5333 = vunpack.c.0.s8 %v5332
  %v5334 = vlaneseq
  %v5335 = vshrl.u32 %v5334, 7
  %v5336 = vsub.s32 %v5333, %v5335
  %v5337 = vrot.slane %v5323, %v5336
  %v5338 = vcombine.high %v5330, %v5330
  %v5339 = vcombine.high %v5337, %v5337
  %v5341 = vunpack.c.l.s4 1966171168
  %v5342 = vunpack.c.0.s8 %v5341
  %v5343 = vlaneseq
  %v5344 = vshrl.u32 %v5343, 7
  %v5345 = vsub.s32 %v5342, %v5344
  %v5346 = vrot.slane %v5330, %v5345
  %v5348 = vunpack.c.l.s4 1966171168
  %v5349 = vunpack.c.0.s8 %v5348
  %v5350 = vlaneseq
  %v5351 = vshrl.u32 %v5350, 7
  %v5352 = vsub.s32 %v5349, %v5351
  %v5353 = vrot.slane %v5337, %v5352
  %v5355 = vunpack.c.l.s4 1966171168
  %v5356 = vunpack.c.0.s8 %v5355
  %v5357 = vlaneseq
  %v5358 = vshrl.u32 %v5357, 7
  %v5359 = vsub.s32 %v5356, %v5358
  %v5360 = vrot.slane %v5338, %v5359
  %v5362 = vunpack.c.l.s4 1966171168
  %v5363 = vunpack.c.0.s8 %v5362
  %v5364 = vlaneseq
  %v5365 = vshrl.u32 %v5364, 7
  %v5366 = vsub.s32 %v5363, %v5365
  %v5367 = vrot.slane %v5339, %v5366
  %v5368 = vcombine.high %v5346, %v5346
  %v5369 = vcombine.high %v5353, %v5353
  %v5370 = vcombine.high %v5360, %v5360
  %v5371 = vcombine.high %v5104, %v5104
  %v5373 = vunpack.c.l.s4 1966171168
  %v5374 = vunpack.c.0.s8 %v5373
  %v5375 = vlaneseq
  %v5376 = vshrl.u32 %v5375, 7
  %v5377 = vsub.s32 %v5374, %v5376
  %v5378 = vrot.slane %v5104, %v5377
  %v5380 = vunpack.c.l.s4 1966171168
  %v5381 = vunpack.c.0.s8 %v5380
  %v5382 = vlaneseq
  %v5383 = vshrl.u32 %v5382, 7
  %v5384 = vsub.s32 %v5381, %v5383
  %v5385 = vrot.slane %v5371, %v5384
  %v5386 = vcombine.high %v5378, %v5378
  %v5387 = vcombine.high %v5385, %v5385
  %v5389 = vunpack.c.l.s4 1966171168
  %v5390 = vunpack.c.0.s8 %v5389
  %v5391 = vlaneseq
  %v5392 = vshrl.u32 %v5391, 7
  %v5393 = vsub.s32 %v5390, %v5392
  %v5394 = vrot.slane %v5378, %v5393
  %v5396 = vunpack.c.l.s4 1966171168
  %v5397 = vunpack.c.0.s8 %v5396
  %v5398 = vlaneseq
  %v5399 = vshrl.u32 %v5398, 7
  %v5400 = vsub.s32 %v5397, %v5399
  %v5401 = vrot.slane %v5385, %v5400
  %v5403 = vunpack.c.l.s4 1966171168
  %v5404 = vunpack.c.0.s8 %v5403
  %v5405 = vlaneseq
  %v5406 = vshrl.u32 %v5405, 7
  %v5407 = vsub.s32 %v5404, %v5406
  %v5408 = vrot.slane %v5386, %v5407
  %v5410 = vunpack.c.l.s4 1966171168
  %v5411 = vunpack.c.0.s8 %v5410
  %v5412 = vlaneseq
  %v5413 = vshrl.u32 %v5412, 7
  %v5414 = vsub.s32 %v5411, %v5413
  %v5415 = vrot.slane %v5387, %v5414
  %v5416 = vcombine.high %v5394, %v5394
  %v5417 = vcombine.high %v5401, %v5401
  %v5418 = vcombine.high %v5408, %v5408
  %v5419 = vcombine.high %v5106, %v5106
  %v5421 = vunpack.c.l.s4 1966171168
  %v5422 = vunpack.c.0.s8 %v5421
  %v5423 = vlaneseq
  %v5424 = vshrl.u32 %v5423, 7
  %v5425 = vsub.s32 %v5422, %v5424
  %v5426 = vrot.slane %v5106, %v5425
  %v5428 = vunpack.c.l.s4 1966171168
  %v5429 = vunpack.c.0.s8 %v5428
  %v5430 = vlaneseq
  %v5431 = vshrl.u32 %v5430, 7
  %v5432 = vsub.s32 %v5429, %v5431
  %v5433 = vrot.slane %v5419, %v5432
  %v5434 = vcombine.high %v5426, %v5426
  %v5435 = vcombine.high %v5433, %v5433
  %v5437 = vunpack.c.l.s4 1966171168
  %v5438 = vunpack.c.0.s8 %v5437
  %v5439 = vlaneseq
  %v5440 = vshrl.u32 %v5439, 7
  %v5441 = vsub.s32 %v5438, %v5440
  %v5442 = vrot.slane %v5426, %v5441
  %v5444 = vunpack.c.l.s4 1966171168
  %v5445 = vunpack.c.0.s8 %v5444
  %v5446 = vlaneseq
  %v5447 = vshrl.u32 %v5446, 7
  %v5448 = vsub.s32 %v5445, %v5447
  %v5449 = vrot.slane %v5433, %v5448
  %v5451 = vunpack.c.l.s4 1966171168
  %v5452 = vunpack.c.0.s8 %v5451
  %v5453 = vlaneseq
  %v5454 = vshrl.u32 %v5453, 7
  %v5455 = vsub.s32 %v5452, %v5454
  %v5456 = vrot.slane %v5434, %v5455
  %v5458 = vunpack.c.l.s4 1966171168
  %v5459 = vunpack.c.0.s8 %v5458
  %v5460 = vlaneseq
  %v5461 = vshrl.u32 %v5460, 7
  %v5462 = vsub.s32 %v5459, %v5461
  %v5463 = vrot.slane %v5435, %v5462
  %v5464 = vcombine.high %v5442, %v5442
  %v5465 = vcombine.high %v5449, %v5449
  %v5466 = vcombine.high %v5456, %v5456
  %v5467 = vcombine.high %v5108, %v5108
  %v5469 = vunpack.c.l.s4 1966171168
  %v5470 = vunpack.c.0.s8 %v5469
  %v5471 = vlaneseq
  %v5472 = vshrl.u32 %v5471, 7
  %v5473 = vsub.s32 %v5470, %v5472
  %v5474 = vrot.slane %v5108, %v5473
  %v5476 = vunpack.c.l.s4 1966171168
  %v5477 = vunpack.c.0.s8 %v5476
  %v5478 = vlaneseq
  %v5479 = vshrl.u32 %v5478, 7
  %v5480 = vsub.s32 %v5477, %v5479
  %v5481 = vrot.slane %v5467, %v5480
  %v5482 = vcombine.high %v5474, %v5474
  %v5483 = vcombine.high %v5481, %v5481
  %v5485 = vunpack.c.l.s4 1966171168
  %v5486 = vunpack.c.0.s8 %v5485
  %v5487 = vlaneseq
  %v5488 = vshrl.u32 %v5487, 7
  %v5489 = vsub.s32 %v5486, %v5488
  %v5490 = vrot.slane %v5474, %v5489
  %v5492 = vunpack.c.l.s4 1966171168
  %v5493 = vunpack.c.0.s8 %v5492
  %v5494 = vlaneseq
  %v5495 = vshrl.u32 %v5494, 7
  %v5496 = vsub.s32 %v5493, %v5495
  %v5497 = vrot.slane %v5481, %v5496
  %v5499 = vunpack.c.l.s4 1966171168
  %v5500 = vunpack.c.0.s8 %v5499
  %v5501 = vlaneseq
  %v5502 = vshrl.u32 %v5501, 7
  %v5503 = vsub.s32 %v5500, %v5502
  %v5504 = vrot.slane %v5482, %v5503
  %v5506 = vunpack.c.l.s4 1966171168
  %v5507 = vunpack.c.0.s8 %v5506
  %v5508 = vlaneseq
  %v5509 = vshrl.u32 %v5508, 7
  %v5510 = vsub.s32 %v5507, %v5509
  %v5511 = vrot.slane %v5483, %v5510
  %v5512 = vcombine.high %v5490, %v5490
  %v5513 = vcombine.high %v5497, %v5497
  %v5514 = vcombine.high %v5504, %v5504
  %v5515 = vcombine.high %v5110, %v5110
  %v5517 = vunpack.c.l.s4 1966171168
  %v5518 = vunpack.c.0.s8 %v5517
  %v5519 = vlaneseq
  %v5520 = vshrl.u32 %v5519, 7
  %v5521 = vsub.s32 %v5518, %v5520
  %v5522 = vrot.slane %v5110, %v5521
  %v5524 = vunpack.c.l.s4 1966171168
  %v5525 = vunpack.c.0.s8 %v5524
  %v5526 = vlaneseq
  %v5527 = vshrl.u32 %v5526, 7
  %v5528 = vsub.s32 %v5525, %v5527
  %v5529 = vrot.slane %v5515, %v5528
  %v5530 = vcombine.high %v5522, %v5522
  %v5531 = vcombine.high %v5529, %v5529
  %v5533 = vunpack.c.l.s4 1966171168
  %v5534 = vunpack.c.0.s8 %v5533
  %v5535 = vlaneseq
  %v5536 = vshrl.u32 %v5535, 7
  %v5537 = vsub.s32 %v5534, %v5536
  %v5538 = vrot.slane %v5522, %v5537
  %v5540 = vunpack.c.l.s4 1966171168
  %v5541 = vunpack.c.0.s8 %v5540
  %v5542 = vlaneseq
  %v5543 = vshrl.u32 %v5542, 7
  %v5544 = vsub.s32 %v5541, %v5543
  %v5545 = vrot.slane %v5529, %v5544
  %v5547 = vunpack.c.l.s4 1966171168
  %v5548 = vunpack.c.0.s8 %v5547
  %v5549 = vlaneseq
  %v5550 = vshrl.u32 %v5549, 7
  %v5551 = vsub.s32 %v5548, %v5550
  %v5552 = vrot.slane %v5530, %v5551
  %v5554 = vunpack.c.l.s4 1966171168
  %v5555 = vunpack.c.0.s8 %v5554
  %v5556 = vlaneseq
  %v5557 = vshrl.u32 %v5556, 7
  %v5558 = vsub.s32 %v5555, %v5557
  %v5559 = vrot.slane %v5531, %v5558
  %v5560 = vcombine.high %v5538, %v5538
  %v5561 = vcombine.high %v5545, %v5545
  %v5562 = vcombine.high %v5552, %v5552
  %v5563 = vcombine.high %v5112, %v5112
  %v5565 = vunpack.c.l.s4 1966171168
  %v5566 = vunpack.c.0.s8 %v5565
  %v5567 = vlaneseq
  %v5568 = vshrl.u32 %v5567, 7
  %v5569 = vsub.s32 %v5566, %v5568
  %v5570 = vrot.slane %v5112, %v5569
  %v5572 = vunpack.c.l.s4 1966171168
  %v5573 = vunpack.c.0.s8 %v5572
  %v5574 = vlaneseq
  %v5575 = vshrl.u32 %v5574, 7
  %v5576 = vsub.s32 %v5573, %v5575
  %v5577 = vrot.slane %v5563, %v5576
  %v5578 = vcombine.high %v5570, %v5570
  %v5579 = vcombine.high %v5577, %v5577
  %v5581 = vunpack.c.l.s4 1966171168
  %v5582 = vunpack.c.0.s8 %v5581
  %v5583 = vlaneseq
  %v5584 = vshrl.u32 %v5583, 7
  %v5585 = vsub.s32 %v5582, %v5584
  %v5586 = vrot.slane %v5570, %v5585
  %v5588 = vunpack.c.l.s4 1966171168
  %v5589 = vunpack.c.0.s8 %v5588
  %v5590 = vlaneseq
  %v5591 = vshrl.u32 %v5590, 7
  %v5592 = vsub.s32 %v5589, %v5591
  %v5593 = vrot.slane %v5577, %v5592
  %v5595 = vunpack.c.l.s4 1966171168
  %v5596 = vunpack.c.0.s8 %v5595
  %v5597 = vlaneseq
  %v5598 = vshrl.u32 %v5597, 7
  %v5599 = vsub.s32 %v5596, %v5598
  %v5600 = vrot.slane %v5578, %v5599
  %v5602 = vunpack.c.l.s4 1966171168
  %v5603 = vunpack.c.0.s8 %v5602
  %v5604 = vlaneseq
  %v5605 = vshrl.u32 %v5604, 7
  %v5606 = vsub.s32 %v5603, %v5605
  %v5607 = vrot.slane %v5579, %v5606
  %v5608 = vcombine.high %v5586, %v5586
  %v5609 = vcombine.high %v5593, %v5593
  %v5610 = vcombine.high %v5600, %v5600
  %v5611 = vcombine.high %v5114, %v5114
  %v5613 = vunpack.c.l.s4 1966171168
  %v5614 = vunpack.c.0.s8 %v5613
  %v5615 = vlaneseq
  %v5616 = vshrl.u32 %v5615, 7
  %v5617 = vsub.s32 %v5614, %v5616
  %v5618 = vrot.slane %v5114, %v5617
  %v5620 = vunpack.c.l.s4 1966171168
  %v5621 = vunpack.c.0.s8 %v5620
  %v5622 = vlaneseq
  %v5623 = vshrl.u32 %v5622, 7
  %v5624 = vsub.s32 %v5621, %v5623
  %v5625 = vrot.slane %v5611, %v5624
  %v5626 = vcombine.high %v5618, %v5618
  %v5627 = vcombine.high %v5625, %v5625
  %v5629 = vunpack.c.l.s4 1966171168
  %v5630 = vunpack.c.0.s8 %v5629
  %v5631 = vlaneseq
  %v5632 = vshrl.u32 %v5631, 7
  %v5633 = vsub.s32 %v5630, %v5632
  %v5634 = vrot.slane %v5618, %v5633
  %v5636 = vunpack.c.l.s4 1966171168
  %v5637 = vunpack.c.0.s8 %v5636
  %v5638 = vlaneseq
  %v5639 = vshrl.u32 %v5638, 7
  %v5640 = vsub.s32 %v5637, %v5639
  %v5641 = vrot.slane %v5625, %v5640
  %v5643 = vunpack.c.l.s4 1966171168
  %v5644 = vunpack.c.0.s8 %v5643
  %v5645 = vlaneseq
  %v5646 = vshrl.u32 %v5645, 7
  %v5647 = vsub.s32 %v5644, %v5646
  %v5648 = vrot.slane %v5626, %v5647
  %v5650 = vunpack.c.l.s4 1966171168
  %v5651 = vunpack.c.0.s8 %v5650
  %v5652 = vlaneseq
  %v5653 = vshrl.u32 %v5652, 7
  %v5654 = vsub.s32 %v5651, %v5653
  %v5655 = vrot.slane %v5627, %v5654
  %v5656 = vcombine.high %v5634, %v5634
  %v5657 = vcombine.high %v5641, %v5641
  %v5658 = vcombine.high %v5648, %v5648
  %v5659 = vcombine.high %v5116, %v5116
  %v5661 = vunpack.c.l.s4 1966171168
  %v5662 = vunpack.c.0.s8 %v5661
  %v5663 = vlaneseq
  %v5664 = vshrl.u32 %v5663, 7
  %v5665 = vsub.s32 %v5662, %v5664
  %v5666 = vrot.slane %v5116, %v5665
  %v5668 = vunpack.c.l.s4 1966171168
  %v5669 = vunpack.c.0.s8 %v5668
  %v5670 = vlaneseq
  %v5671 = vshrl.u32 %v5670, 7
  %v5672 = vsub.s32 %v5669, %v5671
  %v5673 = vrot.slane %v5659, %v5672
  %v5674 = vcombine.high %v5666, %v5666
  %v5675 = vcombine.high %v5673, %v5673
  %v5677 = vunpack.c.l.s4 1966171168
  %v5678 = vunpack.c.0.s8 %v5677
  %v5679 = vlaneseq
  %v5680 = vshrl.u32 %v5679, 7
  %v5681 = vsub.s32 %v5678, %v5680
  %v5682 = vrot.slane %v5666, %v5681
  %v5684 = vunpack.c.l.s4 1966171168
  %v5685 = vunpack.c.0.s8 %v5684
  %v5686 = vlaneseq
  %v5687 = vshrl.u32 %v5686, 7
  %v5688 = vsub.s32 %v5685, %v5687
  %v5689 = vrot.slane %v5673, %v5688
  %v5691 = vunpack.c.l.s4 1966171168
  %v5692 = vunpack.c.0.s8 %v5691
  %v5693 = vlaneseq
  %v5694 = vshrl.u32 %v5693, 7
  %v5695 = vsub.s32 %v5692, %v5694
  %v5696 = vrot.slane %v5674, %v5695
  %v5698 = vunpack.c.l.s4 1966171168
  %v5699 = vunpack.c.0.s8 %v5698
  %v5700 = vlaneseq
  %v5701 = vshrl.u32 %v5700, 7
  %v5702 = vsub.s32 %v5699, %v5701
  %v5703 = vrot.slane %v5675, %v5702
  %v5704 = vcombine.high %v5682, %v5682
  %v5705 = vcombine.high %v5689, %v5689
  %v5706 = vcombine.high %v5696, %v5696
  %v5707 = vcombine.high %v5118, %v5118
  %v5709 = vunpack.c.l.s4 1966171168
  %v5710 = vunpack.c.0.s8 %v5709
  %v5711 = vlaneseq
  %v5712 = vshrl.u32 %v5711, 7
  %v5713 = vsub.s32 %v5710, %v5712
  %v5714 = vrot.slane %v5118, %v5713
  %v5716 = vunpack.c.l.s4 1966171168
  %v5717 = vunpack.c.0.s8 %v5716
  %v5718 = vlaneseq
  %v5719 = vshrl.u32 %v5718, 7
  %v5720 = vsub.s32 %v5717, %v5719
  %v5721 = vrot.slane %v5707, %v5720
  %v5722 = vcombine.high %v5714, %v5714
  %v5723 = vcombine.high %v5721, %v5721
  %v5725 = vunpack.c.l.s4 1966171168
  %v5726 = vunpack.c.0.s8 %v5725
  %v5727 = vlaneseq
  %v5728 = vshrl.u32 %v5727, 7
  %v5729 = vsub.s32 %v5726, %v5728
  %v5730 = vrot.slane %v5714, %v5729
  %v5732 = vunpack.c.l.s4 1966171168
  %v5733 = vunpack.c.0.s8 %v5732
  %v5734 = vlaneseq
  %v5735 = vshrl.u32 %v5734, 7
  %v5736 = vsub.s32 %v5733, %v5735
  %v5737 = vrot.slane %v5721, %v5736
  %v5739 = vunpack.c.l.s4 1966171168
  %v5740 = vunpack.c.0.s8 %v5739
  %v5741 = vlaneseq
  %v5742 = vshrl.u32 %v5741, 7
  %v5743 = vsub.s32 %v5740, %v5742
  %v5744 = vrot.slane %v5722, %v5743
  %v5746 = vunpack.c.l.s4 1966171168
  %v5747 = vunpack.c.0.s8 %v5746
  %v5748 = vlaneseq
  %v5749 = vshrl.u32 %v5748, 7
  %v5750 = vsub.s32 %v5747, %v5749
  %v5751 = vrot.slane %v5723, %v5750
  %v5752 = vcombine.high %v5730, %v5730
  %v5753 = vcombine.high %v5737, %v5737
  %v5754 = vcombine.high %v5744, %v5744
  %v5755 = vcombine.high %v5120, %v5120
  %v5757 = vunpack.c.l.s4 1966171168
  %v5758 = vunpack.c.0.s8 %v5757
  %v5759 = vlaneseq
  %v5760 = vshrl.u32 %v5759, 7
  %v5761 = vsub.s32 %v5758, %v5760
  %v5762 = vrot.slane %v5120, %v5761
  %v5764 = vunpack.c.l.s4 1966171168
  %v5765 = vunpack.c.0.s8 %v5764
  %v5766 = vlaneseq
  %v5767 = vshrl.u32 %v5766, 7
  %v5768 = vsub.s32 %v5765, %v5767
  %v5769 = vrot.slane %v5755, %v5768
  %v5770 = vcombine.high %v5762, %v5762
  %v5771 = vcombine.high %v5769, %v5769
  %v5773 = vunpack.c.l.s4 1966171168
  %v5774 = vunpack.c.0.s8 %v5773
  %v5775 = vlaneseq
  %v5776 = vshrl.u32 %v5775, 7
  %v5777 = vsub.s32 %v5774, %v5776
  %v5778 = vrot.slane %v5762, %v5777
  %v5780 = vunpack.c.l.s4 1966171168
  %v5781 = vunpack.c.0.s8 %v5780
  %v5782 = vlaneseq
  %v5783 = vshrl.u32 %v5782, 7
  %v5784 = vsub.s32 %v5781, %v5783
  %v5785 = vrot.slane %v5769, %v5784
  %v5787 = vunpack.c.l.s4 1966171168
  %v5788 = vunpack.c.0.s8 %v5787
  %v5789 = vlaneseq
  %v5790 = vshrl.u32 %v5789, 7
  %v5791 = vsub.s32 %v5788, %v5790
  %v5792 = vrot.slane %v5770, %v5791
  %v5794 = vunpack.c.l.s4 1966171168
  %v5795 = vunpack.c.0.s8 %v5794
  %v5796 = vlaneseq
  %v5797 = vshrl.u32 %v5796, 7
  %v5798 = vsub.s32 %v5795, %v5797
  %v5799 = vrot.slane %v5771, %v5798
  %v5800 = vcombine.high %v5778, %v5778
  %v5801 = vcombine.high %v5785, %v5785
  %v5802 = vcombine.high %v5792, %v5792
  %v5803 = vcombine.high %v5122, %v5122
  %v5805 = vunpack.c.l.s4 1966171168
  %v5806 = vunpack.c.0.s8 %v5805
  %v5807 = vlaneseq
  %v5808 = vshrl.u32 %v5807, 7
  %v5809 = vsub.s32 %v5806, %v5808
  %v5810 = vrot.slane %v5122, %v5809
  %v5812 = vunpack.c.l.s4 1966171168
  %v5813 = vunpack.c.0.s8 %v5812
  %v5814 = vlaneseq
  %v5815 = vshrl.u32 %v5814, 7
  %v5816 = vsub.s32 %v5813, %v5815
  %v5817 = vrot.slane %v5803, %v5816
  %v5818 = vcombine.high %v5810, %v5810
  %v5819 = vcombine.high %v5817, %v5817
  %v5821 = vunpack.c.l.s4 1966171168
  %v5822 = vunpack.c.0.s8 %v5821
  %v5823 = vlaneseq
  %v5824 = vshrl.u32 %v5823, 7
  %v5825 = vsub.s32 %v5822, %v5824
  %v5826 = vrot.slane %v5810, %v5825
  %v5828 = vunpack.c.l.s4 1966171168
  %v5829 = vunpack.c.0.s8 %v5828
  %v5830 = vlaneseq
  %v5831 = vshrl.u32 %v5830, 7
  %v5832 = vsub.s32 %v5829, %v5831
  %v5833 = vrot.slane %v5817, %v5832
  %v5835 = vunpack.c.l.s4 1966171168
  %v5836 = vunpack.c.0.s8 %v5835
  %v5837 = vlaneseq
  %v5838 = vshrl.u32 %v5837, 7
  %v5839 = vsub.s32 %v5836, %v5838
  %v5840 = vrot.slane %v5818, %v5839
  %v5842 = vunpack.c.l.s4 1966171168
  %v5843 = vunpack.c.0.s8 %v5842
  %v5844 = vlaneseq
  %v5845 = vshrl.u32 %v5844, 7
  %v5846 = vsub.s32 %v5843, %v5845
  %v5847 = vrot.slane %v5819, %v5846
  %v5848 = vcombine.high %v5826, %v5826
  %v5849 = vcombine.high %v5833, %v5833
  %v5850 = vcombine.high %v5840, %v5840
  %v5851 = vcombine.high %v5124, %v5124
  %v5853 = vunpack.c.l.s4 1966171168
  %v5854 = vunpack.c.0.s8 %v5853
  %v5855 = vlaneseq
  %v5856 = vshrl.u32 %v5855, 7
  %v5857 = vsub.s32 %v5854, %v5856
  %v5858 = vrot.slane %v5124, %v5857
  %v5860 = vunpack.c.l.s4 1966171168
  %v5861 = vunpack.c.0.s8 %v5860
  %v5862 = vlaneseq
  %v5863 = vshrl.u32 %v5862, 7
  %v5864 = vsub.s32 %v5861, %v5863
  %v5865 = vrot.slane %v5851, %v5864
  %v5866 = vcombine.high %v5858, %v5858
  %v5867 = vcombine.high %v5865, %v5865
  %v5869 = vunpack.c.l.s4 1966171168
  %v5870 = vunpack.c.0.s8 %v5869
  %v5871 = vlaneseq
  %v5872 = vshrl.u32 %v5871, 7
  %v5873 = vsub.s32 %v5870, %v5872
  %v5874 = vrot.slane %v5858, %v5873
  %v5876 = vunpack.c.l.s4 1966171168
  %v5877 = vunpack.c.0.s8 %v5876
  %v5878 = vlaneseq
  %v5879 = vshrl.u32 %v5878, 7
  %v5880 = vsub.s32 %v5877, %v5879
  %v5881 = vrot.slane %v5865, %v5880
  %v5883 = vunpack.c.l.s4 1966171168
  %v5884 = vunpack.c.0.s8 %v5883
  %v5885 = vlaneseq
  %v5886 = vshrl.u32 %v5885, 7
  %v5887 = vsub.s32 %v5884, %v5886
  %v5888 = vrot.slane %v5866, %v5887
  %v5890 = vunpack.c.l.s4 1966171168
  %v5891 = vunpack.c.0.s8 %v5890
  %v5892 = vlaneseq
  %v5893 = vshrl.u32 %v5892, 7
  %v5894 = vsub.s32 %v5891, %v5893
  %v5895 = vrot.slane %v5867, %v5894
  %v5896 = vcombine.high %v5874, %v5874
  %v5897 = vcombine.high %v5881, %v5881
  %v5898 = vcombine.high %v5888, %v5888
  %v5899 = vcombine.high %v5126, %v5126
  %v5901 = vunpack.c.l.s4 1966171168
  %v5902 = vunpack.c.0.s8 %v5901
  %v5903 = vlaneseq
  %v5904 = vshrl.u32 %v5903, 7
  %v5905 = vsub.s32 %v5902, %v5904
  %v5906 = vrot.slane %v5126, %v5905
  %v5908 = vunpack.c.l.s4 1966171168
  %v5909 = vunpack.c.0.s8 %v5908
  %v5910 = vlaneseq
  %v5911 = vshrl.u32 %v5910, 7
  %v5912 = vsub.s32 %v5909, %v5911
  %v5913 = vrot.slane %v5899, %v5912
  %v5914 = vcombine.high %v5906, %v5906
  %v5915 = vcombine.high %v5913, %v5913
  %v5917 = vunpack.c.l.s4 1966171168
  %v5918 = vunpack.c.0.s8 %v5917
  %v5919 = vlaneseq
  %v5920 = vshrl.u32 %v5919, 7
  %v5921 = vsub.s32 %v5918, %v5920
  %v5922 = vrot.slane %v5906, %v5921
  %v5924 = vunpack.c.l.s4 1966171168
  %v5925 = vunpack.c.0.s8 %v5924
  %v5926 = vlaneseq
  %v5927 = vshrl.u32 %v5926, 7
  %v5928 = vsub.s32 %v5925, %v5927
  %v5929 = vrot.slane %v5913, %v5928
  %v5931 = vunpack.c.l.s4 1966171168
  %v5932 = vunpack.c.0.s8 %v5931
  %v5933 = vlaneseq
  %v5934 = vshrl.u32 %v5933, 7
  %v5935 = vsub.s32 %v5932, %v5934
  %v5936 = vrot.slane %v5914, %v5935
  %v5938 = vunpack.c.l.s4 1966171168
  %v5939 = vunpack.c.0.s8 %v5938
  %v5940 = vlaneseq
  %v5941 = vshrl.u32 %v5940, 7
  %v5942 = vsub.s32 %v5939, %v5941
  %v5943 = vrot.slane %v5915, %v5942
  %v5944 = vcombine.high %v5922, %v5922
  %v5945 = vcombine.high %v5929, %v5929
  %v5946 = vcombine.high %v5936, %v5936
  %v5947 = vcombine.high %v5128, %v5128
  %v5949 = vunpack.c.l.s4 1966171168
  %v5950 = vunpack.c.0.s8 %v5949
  %v5951 = vlaneseq
  %v5952 = vshrl.u32 %v5951, 7
  %v5953 = vsub.s32 %v5950, %v5952
  %v5954 = vrot.slane %v5128, %v5953
  %v5956 = vunpack.c.l.s4 1966171168
  %v5957 = vunpack.c.0.s8 %v5956
  %v5958 = vlaneseq
  %v5959 = vshrl.u32 %v5958, 7
  %v5960 = vsub.s32 %v5957, %v5959
  %v5961 = vrot.slane %v5947, %v5960
  %v5962 = vcombine.high %v5954, %v5954
  %v5963 = vcombine.high %v5961, %v5961
  %v5965 = vunpack.c.l.s4 1966171168
  %v5966 = vunpack.c.0.s8 %v5965
  %v5967 = vlaneseq
  %v5968 = vshrl.u32 %v5967, 7
  %v5969 = vsub.s32 %v5966, %v5968
  %v5970 = vrot.slane %v5954, %v5969
  %v5972 = vunpack.c.l.s4 1966171168
  %v5973 = vunpack.c.0.s8 %v5972
  %v5974 = vlaneseq
  %v5975 = vshrl.u32 %v5974, 7
  %v5976 = vsub.s32 %v5973, %v5975
  %v5977 = vrot.slane %v5961, %v5976
  %v5979 = vunpack.c.l.s4 1966171168
  %v5980 = vunpack.c.0.s8 %v5979
  %v5981 = vlaneseq
  %v5982 = vshrl.u32 %v5981, 7
  %v5983 = vsub.s32 %v5980, %v5982
  %v5984 = vrot.slane %v5962, %v5983
  %v5986 = vunpack.c.l.s4 1966171168
  %v5987 = vunpack.c.0.s8 %v5986
  %v5988 = vlaneseq
  %v5989 = vshrl.u32 %v5988, 7
  %v5990 = vsub.s32 %v5987, %v5989
  %v5991 = vrot.slane %v5963, %v5990
  %v5992 = vcombine.high %v5970, %v5970
  %v5993 = vcombine.high %v5977, %v5977
  %v5994 = vcombine.high %v5984, %v5984
  %v5995 = vcombine.high %v5130, %v5130
  %v5997 = vunpack.c.l.s4 1966171168
  %v5998 = vunpack.c.0.s8 %v5997
  %v5999 = vlaneseq
  %v6000 = vshrl.u32 %v5999, 7
  %v6001 = vsub.s32 %v5998, %v6000
  %v6002 = vrot.slane %v5130, %v6001
  %v6004 = vunpack.c.l.s4 1966171168
  %v6005 = vunpack.c.0.s8 %v6004
  %v6006 = vlaneseq
  %v6007 = vshrl.u32 %v6006, 7
  %v6008 = vsub.s32 %v6005, %v6007
  %v6009 = vrot.slane %v5995, %v6008
  %v6010 = vcombine.high %v6002, %v6002
  %v6011 = vcombine.high %v6009, %v6009
  %v6013 = vunpack.c.l.s4 1966171168
  %v6014 = vunpack.c.0.s8 %v6013
  %v6015 = vlaneseq
  %v6016 = vshrl.u32 %v6015, 7
  %v6017 = vsub.s32 %v6014, %v6016
  %v6018 = vrot.slane %v6002, %v6017
  %v6020 = vunpack.c.l.s4 1966171168
  %v6021 = vunpack.c.0.s8 %v6020
  %v6022 = vlaneseq
  %v6023 = vshrl.u32 %v6022, 7
  %v6024 = vsub.s32 %v6021, %v6023
  %v6025 = vrot.slane %v6009, %v6024
  %v6027 = vunpack.c.l.s4 1966171168
  %v6028 = vunpack.c.0.s8 %v6027
  %v6029 = vlaneseq
  %v6030 = vshrl.u32 %v6029, 7
  %v6031 = vsub.s32 %v6028, %v6030
  %v6032 = vrot.slane %v6010, %v6031
  %v6034 = vunpack.c.l.s4 1966171168
  %v6035 = vunpack.c.0.s8 %v6034
  %v6036 = vlaneseq
  %v6037 = vshrl.u32 %v6036, 7
  %v6038 = vsub.s32 %v6035, %v6037
  %v6039 = vrot.slane %v6011, %v6038
  %v6040 = vcombine.high %v6018, %v6018
  %v6041 = vcombine.high %v6025, %v6025
  %v6042 = vcombine.high %v6032, %v6032
  %v6043 = vcombine.high %v5132, %v5132
  %v6045 = vunpack.c.l.s4 1966171168
  %v6046 = vunpack.c.0.s8 %v6045
  %v6047 = vlaneseq
  %v6048 = vshrl.u32 %v6047, 7
  %v6049 = vsub.s32 %v6046, %v6048
  %v6050 = vrot.slane %v5132, %v6049
  %v6052 = vunpack.c.l.s4 1966171168
  %v6053 = vunpack.c.0.s8 %v6052
  %v6054 = vlaneseq
  %v6055 = vshrl.u32 %v6054, 7
  %v6056 = vsub.s32 %v6053, %v6055
  %v6057 = vrot.slane %v6043, %v6056
  %v6058 = vcombine.high %v6050, %v6050
  %v6059 = vcombine.high %v6057, %v6057
  %v6061 = vunpack.c.l.s4 1966171168
  %v6062 = vunpack.c.0.s8 %v6061
  %v6063 = vlaneseq
  %v6064 = vshrl.u32 %v6063, 7
  %v6065 = vsub.s32 %v6062, %v6064
  %v6066 = vrot.slane %v6050, %v6065
  %v6068 = vunpack.c.l.s4 1966171168
  %v6069 = vunpack.c.0.s8 %v6068
  %v6070 = vlaneseq
  %v6071 = vshrl.u32 %v6070, 7
  %v6072 = vsub.s32 %v6069, %v6071
  %v6073 = vrot.slane %v6057, %v6072
  %v6075 = vunpack.c.l.s4 1966171168
  %v6076 = vunpack.c.0.s8 %v6075
  %v6077 = vlaneseq
  %v6078 = vshrl.u32 %v6077, 7
  %v6079 = vsub.s32 %v6076, %v6078
  %v6080 = vrot.slane %v6058, %v6079
  %v6082 = vunpack.c.l.s4 1966171168
  %v6083 = vunpack.c.0.s8 %v6082
  %v6084 = vlaneseq
  %v6085 = vshrl.u32 %v6084, 7
  %v6086 = vsub.s32 %v6083, %v6085
  %v6087 = vrot.slane %v6059, %v6086
  %v6088 = vcombine.high %v6066, %v6066
  %v6089 = vcombine.high %v6073, %v6073
  %v6090 = vcombine.high %v6080, %v6080
  %v6091 = vcombine.high %v5134, %v5134
  %v6093 = vunpack.c.l.s4 1966171168
  %v6094 = vunpack.c.0.s8 %v6093
  %v6095 = vlaneseq
  %v6096 = vshrl.u32 %v6095, 7
  %v6097 = vsub.s32 %v6094, %v6096
  %v6098 = vrot.slane %v5134, %v6097
  %v6100 = vunpack.c.l.s4 1966171168
  %v6101 = vunpack.c.0.s8 %v6100
  %v6102 = vlaneseq
  %v6103 = vshrl.u32 %v6102, 7
  %v6104 = vsub.s32 %v6101, %v6103
  %v6105 = vrot.slane %v6091, %v6104
  %v6106 = vcombine.high %v6098, %v6098
  %v6107 = vcombine.high %v6105, %v6105
  %v6109 = vunpack.c.l.s4 1966171168
  %v6110 = vunpack.c.0.s8 %v6109
  %v6111 = vlaneseq
  %v6112 = vshrl.u32 %v6111, 7
  %v6113 = vsub.s32 %v6110, %v6112
  %v6114 = vrot.slane %v6098, %v6113
  %v6116 = vunpack.c.l.s4 1966171168
  %v6117 = vunpack.c.0.s8 %v6116
  %v6118 = vlaneseq
  %v6119 = vshrl.u32 %v6118, 7
  %v6120 = vsub.s32 %v6117, %v6119
  %v6121 = vrot.slane %v6105, %v6120
  %v6123 = vunpack.c.l.s4 1966171168
  %v6124 = vunpack.c.0.s8 %v6123
  %v6125 = vlaneseq
  %v6126 = vshrl.u32 %v6125, 7
  %v6127 = vsub.s32 %v6124, %v6126
  %v6128 = vrot.slane %v6106, %v6127
  %v6130 = vunpack.c.l.s4 1966171168
  %v6131 = vunpack.c.0.s8 %v6130
  %v6132 = vlaneseq
  %v6133 = vshrl.u32 %v6132, 7
  %v6134 = vsub.s32 %v6131, %v6133
  %v6135 = vrot.slane %v6107, %v6134
  %v6136 = vcombine.high %v6114, %v6114
  %v6137 = vcombine.high %v6121, %v6121
  %v6138 = vcombine.high %v6128, %v6128
  %v6139 = vcombine.high %v5136, %v5136
  %v6141 = vunpack.c.l.s4 1966171168
  %v6142 = vunpack.c.0.s8 %v6141
  %v6143 = vlaneseq
  %v6144 = vshrl.u32 %v6143, 7
  %v6145 = vsub.s32 %v6142, %v6144
  %v6146 = vrot.slane %v5136, %v6145
  %v6148 = vunpack.c.l.s4 1966171168
  %v6149 = vunpack.c.0.s8 %v6148
  %v6150 = vlaneseq
  %v6151 = vshrl.u32 %v6150, 7
  %v6152 = vsub.s32 %v6149, %v6151
  %v6153 = vrot.slane %v6139, %v6152
  %v6154 = vcombine.high %v6146, %v6146
  %v6155 = vcombine.high %v6153, %v6153
  %v6157 = vunpack.c.l.s4 1966171168
  %v6158 = vunpack.c.0.s8 %v6157
  %v6159 = vlaneseq
  %v6160 = vshrl.u32 %v6159, 7
  %v6161 = vsub.s32 %v6158, %v6160
  %v6162 = vrot.slane %v6146, %v6161
  %v6164 = vunpack.c.l.s4 1966171168
  %v6165 = vunpack.c.0.s8 %v6164
  %v6166 = vlaneseq
  %v6167 = vshrl.u32 %v6166, 7
  %v6168 = vsub.s32 %v6165, %v6167
  %v6169 = vrot.slane %v6153, %v6168
  %v6171 = vunpack.c.l.s4 1966171168
  %v6172 = vunpack.c.0.s8 %v6171
  %v6173 = vlaneseq
  %v6174 = vshrl.u32 %v6173, 7
  %v6175 = vsub.s32 %v6172, %v6174
  %v6176 = vrot.slane %v6154, %v6175
  %v6178 = vunpack.c.l.s4 1966171168
  %v6179 = vunpack.c.0.s8 %v6178
  %v6180 = vlaneseq
  %v6181 = vshrl.u32 %v6180, 7
  %v6182 = vsub.s32 %v6179, %v6181
  %v6183 = vrot.slane %v6155, %v6182
  %v6184 = vcombine.high %v6162, %v6162
  %v6185 = vcombine.high %v6169, %v6169
  %v6186 = vcombine.high %v6176, %v6176
  %v6187 = vcombine.high %v5138, %v5138
  %v6189 = vunpack.c.l.s4 1966171168
  %v6190 = vunpack.c.0.s8 %v6189
  %v6191 = vlaneseq
  %v6192 = vshrl.u32 %v6191, 7
  %v6193 = vsub.s32 %v6190, %v6192
  %v6194 = vrot.slane %v5138, %v6193
  %v6196 = vunpack.c.l.s4 1966171168
  %v6197 = vunpack.c.0.s8 %v6196
  %v6198 = vlaneseq
  %v6199 = vshrl.u32 %v6198, 7
  %v6200 = vsub.s32 %v6197, %v6199
  %v6201 = vrot.slane %v6187, %v6200
  %v6202 = vcombine.high %v6194, %v6194
  %v6203 = vcombine.high %v6201, %v6201
  %v6205 = vunpack.c.l.s4 1966171168
  %v6206 = vunpack.c.0.s8 %v6205
  %v6207 = vlaneseq
  %v6208 = vshrl.u32 %v6207, 7
  %v6209 = vsub.s32 %v6206, %v6208
  %v6210 = vrot.slane %v6194, %v6209
  %v6212 = vunpack.c.l.s4 1966171168
  %v6213 = vunpack.c.0.s8 %v6212
  %v6214 = vlaneseq
  %v6215 = vshrl.u32 %v6214, 7
  %v6216 = vsub.s32 %v6213, %v6215
  %v6217 = vrot.slane %v6201, %v6216
  %v6219 = vunpack.c.l.s4 1966171168
  %v6220 = vunpack.c.0.s8 %v6219
  %v6221 = vlaneseq
  %v6222 = vshrl.u32 %v6221, 7
  %v6223 = vsub.s32 %v6220, %v6222
  %v6224 = vrot.slane %v6202, %v6223
  %v6226 = vunpack.c.l.s4 1966171168
  %v6227 = vunpack.c.0.s8 %v6226
  %v6228 = vlaneseq
  %v6229 = vshrl.u32 %v6228, 7
  %v6230 = vsub.s32 %v6227, %v6229
  %v6231 = vrot.slane %v6203, %v6230
  %v6232 = vcombine.high %v6210, %v6210
  %v6233 = vcombine.high %v6217, %v6217
  %v6234 = vcombine.high %v6224, %v6224
  %v6235 = vcombine.high %v5140, %v5140
  %v6237 = vunpack.c.l.s4 1966171168
  %v6238 = vunpack.c.0.s8 %v6237
  %v6239 = vlaneseq
  %v6240 = vshrl.u32 %v6239, 7
  %v6241 = vsub.s32 %v6238, %v6240
  %v6242 = vrot.slane %v5140, %v6241
  %v6244 = vunpack.c.l.s4 1966171168
  %v6245 = vunpack.c.0.s8 %v6244
  %v6246 = vlaneseq
  %v6247 = vshrl.u32 %v6246, 7
  %v6248 = vsub.s32 %v6245, %v6247
  %v6249 = vrot.slane %v6235, %v6248
  %v6250 = vcombine.high %v6242, %v6242
  %v6251 = vcombine.high %v6249, %v6249
  %v6253 = vunpack.c.l.s4 1966171168
  %v6254 = vunpack.c.0.s8 %v6253
  %v6255 = vlaneseq
  %v6256 = vshrl.u32 %v6255, 7
  %v6257 = vsub.s32 %v6254, %v6256
  %v6258 = vrot.slane %v6242, %v6257
  %v6260 = vunpack.c.l.s4 1966171168
  %v6261 = vunpack.c.0.s8 %v6260
  %v6262 = vlaneseq
  %v6263 = vshrl.u32 %v6262, 7
  %v6264 = vsub.s32 %v6261, %v6263
  %v6265 = vrot.slane %v6249, %v6264
  %v6267 = vunpack.c.l.s4 1966171168
  %v6268 = vunpack.c.0.s8 %v6267
  %v6269 = vlaneseq
  %v6270 = vshrl.u32 %v6269, 7
  %v6271 = vsub.s32 %v6268, %v6270
  %v6272 = vrot.slane %v6250, %v6271
  %v6274 = vunpack.c.l.s4 1966171168
  %v6275 = vunpack.c.0.s8 %v6274
  %v6276 = vlaneseq
  %v6277 = vshrl.u32 %v6276, 7
  %v6278 = vsub.s32 %v6275, %v6277
  %v6279 = vrot.slane %v6251, %v6278
  %v6280 = vcombine.high %v6258, %v6258
  %v6281 = vcombine.high %v6265, %v6265
  %v6282 = vcombine.high %v6272, %v6272
  %v6283 = vcombine.high %v5142, %v5142
  %v6285 = vunpack.c.l.s4 1966171168
  %v6286 = vunpack.c.0.s8 %v6285
  %v6287 = vlaneseq
  %v6288 = vshrl.u32 %v6287, 7
  %v6289 = vsub.s32 %v6286, %v6288
  %v6290 = vrot.slane %v5142, %v6289
  %v6292 = vunpack.c.l.s4 1966171168
  %v6293 = vunpack.c.0.s8 %v6292
  %v6294 = vlaneseq
  %v6295 = vshrl.u32 %v6294, 7
  %v6296 = vsub.s32 %v6293, %v6295
  %v6297 = vrot.slane %v6283, %v6296
  %v6298 = vcombine.high %v6290, %v6290
  %v6299 = vcombine.high %v6297, %v6297
  %v6301 = vunpack.c.l.s4 1966171168
  %v6302 = vunpack.c.0.s8 %v6301
  %v6303 = vlaneseq
  %v6304 = vshrl.u32 %v6303, 7
  %v6305 = vsub.s32 %v6302, %v6304
  %v6306 = vrot.slane %v6290, %v6305
  %v6308 = vunpack.c.l.s4 1966171168
  %v6309 = vunpack.c.0.s8 %v6308
  %v6310 = vlaneseq
  %v6311 = vshrl.u32 %v6310, 7
  %v6312 = vsub.s32 %v6309, %v6311
  %v6313 = vrot.slane %v6297, %v6312
  %v6315 = vunpack.c.l.s4 1966171168
  %v6316 = vunpack.c.0.s8 %v6315
  %v6317 = vlaneseq
  %v6318 = vshrl.u32 %v6317, 7
  %v6319 = vsub.s32 %v6316, %v6318
  %v6320 = vrot.slane %v6298, %v6319
  %v6322 = vunpack.c.l.s4 1966171168
  %v6323 = vunpack.c.0.s8 %v6322
  %v6324 = vlaneseq
  %v6325 = vshrl.u32 %v6324, 7
  %v6326 = vsub.s32 %v6323, %v6325
  %v6327 = vrot.slane %v6299, %v6326
  %v6328 = vcombine.high %v6306, %v6306
  %v6329 = vcombine.high %v6313, %v6313
  %v6330 = vcombine.high %v6320, %v6320
  %v6331 = vcombine.high %v5144, %v5144
  %v6333 = vunpack.c.l.s4 1966171168
  %v6334 = vunpack.c.0.s8 %v6333
  %v6335 = vlaneseq
  %v6336 = vshrl.u32 %v6335, 7
  %v6337 = vsub.s32 %v6334, %v6336
  %v6338 = vrot.slane %v5144, %v6337
  %v6340 = vunpack.c.l.s4 1966171168
  %v6341 = vunpack.c.0.s8 %v6340
  %v6342 = vlaneseq
  %v6343 = vshrl.u32 %v6342, 7
  %v6344 = vsub.s32 %v6341, %v6343
  %v6345 = vrot.slane %v6331, %v6344
  %v6346 = vcombine.high %v6338, %v6338
  %v6347 = vcombine.high %v6345, %v6345
  %v6349 = vunpack.c.l.s4 1966171168
  %v6350 = vunpack.c.0.s8 %v6349
  %v6351 = vlaneseq
  %v6352 = vshrl.u32 %v6351, 7
  %v6353 = vsub.s32 %v6350, %v6352
  %v6354 = vrot.slane %v6338, %v6353
  %v6356 = vunpack.c.l.s4 1966171168
  %v6357 = vunpack.c.0.s8 %v6356
  %v6358 = vlaneseq
  %v6359 = vshrl.u32 %v6358, 7
  %v6360 = vsub.s32 %v6357, %v6359
  %v6361 = vrot.slane %v6345, %v6360
  %v6363 = vunpack.c.l.s4 1966171168
  %v6364 = vunpack.c.0.s8 %v6363
  %v6365 = vlaneseq
  %v6366 = vshrl.u32 %v6365, 7
  %v6367 = vsub.s32 %v6364, %v6366
  %v6368 = vrot.slane %v6346, %v6367
  %v6370 = vunpack.c.l.s4 1966171168
  %v6371 = vunpack.c.0.s8 %v6370
  %v6372 = vlaneseq
  %v6373 = vshrl.u32 %v6372, 7
  %v6374 = vsub.s32 %v6371, %v6373
  %v6375 = vrot.slane %v6347, %v6374
  %v6376 = vcombine.high %v6354, %v6354
  %v6377 = vcombine.high %v6361, %v6361
  %v6378 = vcombine.high %v6368, %v6368
  %v6379 = vcombine.high %v5146, %v5146
  %v6381 = vunpack.c.l.s4 1966171168
  %v6382 = vunpack.c.0.s8 %v6381
  %v6383 = vlaneseq
  %v6384 = vshrl.u32 %v6383, 7
  %v6385 = vsub.s32 %v6382, %v6384
  %v6386 = vrot.slane %v5146, %v6385
  %v6388 = vunpack.c.l.s4 1966171168
  %v6389 = vunpack.c.0.s8 %v6388
  %v6390 = vlaneseq
  %v6391 = vshrl.u32 %v6390, 7
  %v6392 = vsub.s32 %v6389, %v6391
  %v6393 = vrot.slane %v6379, %v6392
  %v6394 = vcombine.high %v6386, %v6386
  %v6395 = vcombine.high %v6393, %v6393
  %v6397 = vunpack.c.l.s4 1966171168
  %v6398 = vunpack.c.0.s8 %v6397
  %v6399 = vlaneseq
  %v6400 = vshrl.u32 %v6399, 7
  %v6401 = vsub.s32 %v6398, %v6400
  %v6402 = vrot.slane %v6386, %v6401
  %v6404 = vunpack.c.l.s4 1966171168
  %v6405 = vunpack.c.0.s8 %v6404
  %v6406 = vlaneseq
  %v6407 = vshrl.u32 %v6406, 7
  %v6408 = vsub.s32 %v6405, %v6407
  %v6409 = vrot.slane %v6393, %v6408
  %v6411 = vunpack.c.l.s4 1966171168
  %v6412 = vunpack.c.0.s8 %v6411
  %v6413 = vlaneseq
  %v6414 = vshrl.u32 %v6413, 7
  %v6415 = vsub.s32 %v6412, %v6414
  %v6416 = vrot.slane %v6394, %v6415
  %v6418 = vunpack.c.l.s4 1966171168
  %v6419 = vunpack.c.0.s8 %v6418
  %v6420 = vlaneseq
  %v6421 = vshrl.u32 %v6420, 7
  %v6422 = vsub.s32 %v6419, %v6421
  %v6423 = vrot.slane %v6395, %v6422
  %v6424 = vcombine.high %v6402, %v6402
  %v6425 = vcombine.high %v6409, %v6409
  %v6426 = vcombine.high %v6416, %v6416
  %v6427 = vcombine.high %v5148, %v5148
  %v6429 = vunpack.c.l.s4 1966171168
  %v6430 = vunpack.c.0.s8 %v6429
  %v6431 = vlaneseq
  %v6432 = vshrl.u32 %v6431, 7
  %v6433 = vsub.s32 %v6430, %v6432
  %v6434 = vrot.slane %v5148, %v6433
  %v6436 = vunpack.c.l.s4 1966171168
  %v6437 = vunpack.c.0.s8 %v6436
  %v6438 = vlaneseq
  %v6439 = vshrl.u32 %v6438, 7
  %v6440 = vsub.s32 %v6437, %v6439
  %v6441 = vrot.slane %v6427, %v6440
  %v6442 = vcombine.high %v6434, %v6434
  %v6443 = vcombine.high %v6441, %v6441
  %v6445 = vunpack.c.l.s4 1966171168
  %v6446 = vunpack.c.0.s8 %v6445
  %v6447 = vlaneseq
  %v6448 = vshrl.u32 %v6447, 7
  %v6449 = vsub.s32 %v6446, %v6448
  %v6450 = vrot.slane %v6434, %v6449
  %v6452 = vunpack.c.l.s4 1966171168
  %v6453 = vunpack.c.0.s8 %v6452
  %v6454 = vlaneseq
  %v6455 = vshrl.u32 %v6454, 7
  %v6456 = vsub.s32 %v6453, %v6455
  %v6457 = vrot.slane %v6441, %v6456
  %v6459 = vunpack.c.l.s4 1966171168
  %v6460 = vunpack.c.0.s8 %v6459
  %v6461 = vlaneseq
  %v6462 = vshrl.u32 %v6461, 7
  %v6463 = vsub.s32 %v6460, %v6462
  %v6464 = vrot.slane %v6442, %v6463
  %v6466 = vunpack.c.l.s4 1966171168
  %v6467 = vunpack.c.0.s8 %v6466
  %v6468 = vlaneseq
  %v6469 = vshrl.u32 %v6468, 7
  %v6470 = vsub.s32 %v6467, %v6469
  %v6471 = vrot.slane %v6443, %v6470
  %v6472 = vcombine.high %v6450, %v6450
  %v6473 = vcombine.high %v6457, %v6457
  %v6474 = vcombine.high %v6464, %v6464
  %v6475 = vcombine.high %v5150, %v5150
  %v6477 = vunpack.c.l.s4 1966171168
  %v6478 = vunpack.c.0.s8 %v6477
  %v6479 = vlaneseq
  %v6480 = vshrl.u32 %v6479, 7
  %v6481 = vsub.s32 %v6478, %v6480
  %v6482 = vrot.slane %v5150, %v6481
  %v6484 = vunpack.c.l.s4 1966171168
  %v6485 = vunpack.c.0.s8 %v6484
  %v6486 = vlaneseq
  %v6487 = vshrl.u32 %v6486, 7
  %v6488 = vsub.s32 %v6485, %v6487
  %v6489 = vrot.slane %v6475, %v6488
  %v6490 = vcombine.high %v6482, %v6482
  %v6491 = vcombine.high %v6489, %v6489
  %v6493 = vunpack.c.l.s4 1966171168
  %v6494 = vunpack.c.0.s8 %v6493
  %v6495 = vlaneseq
  %v6496 = vshrl.u32 %v6495, 7
  %v6497 = vsub.s32 %v6494, %v6496
  %v6498 = vrot.slane %v6482, %v6497
  %v6500 = vunpack.c.l.s4 1966171168
  %v6501 = vunpack.c.0.s8 %v6500
  %v6502 = vlaneseq
  %v6503 = vshrl.u32 %v6502, 7
  %v6504 = vsub.s32 %v6501, %v6503
  %v6505 = vrot.slane %v6489, %v6504
  %v6507 = vunpack.c.l.s4 1966171168
  %v6508 = vunpack.c.0.s8 %v6507
  %v6509 = vlaneseq
  %v6510 = vshrl.u32 %v6509, 7
  %v6511 = vsub.s32 %v6508, %v6510
  %v6512 = vrot.slane %v6490, %v6511
  %v6514 = vunpack.c.l.s4 1966171168
  %v6515 = vunpack.c.0.s8 %v6514
  %v6516 = vlaneseq
  %v6517 = vshrl.u32 %v6516, 7
  %v6518 = vsub.s32 %v6515, %v6517
  %v6519 = vrot.slane %v6491, %v6518
  %v6520 = vcombine.high %v6498, %v6498
  %v6521 = vcombine.high %v6505, %v6505
  %v6522 = vcombine.high %v6512, %v6512
  %v6523 = vld [vmem:[%s4] sm:$0xf]
  %v6524 = vld [vmem:[%s4 + $0x4] sm:$0xf]
  %v6525 = vld [vmem:[%s4 + $0x8] sm:$0xf]
  %v6526 = vld [vmem:[%s4 + $0xc] sm:$0xf]
  %v6527 = vld [vmem:[%s4 + $0x10] sm:$0xf]
  %v6528 = vld [vmem:[%s4 + $0x14] sm:$0xf]
  %v6529 = vld [vmem:[%s4 + $0x18] sm:$0xf]
  %v6530 = vld [vmem:[%s4 + $0x1c] sm:$0xf]
  %v6531 = vld [vmem:[%s4 + $0x20] sm:$0xf]
  %v6532 = vcombine.low %v5202, %v5216
  %v6533 = vcombine.low %v5224, %v5226
  %v6534 = vcombine.low %v5209, %v5223
  %v6535 = vcombine.low %v5225, %v5250
  %v6537 = vunpack.c.l.s4 1966171168
  %v6538 = vunpack.c.0.s8 %v6537
  %v6539 = vlaneseq
  %v6540 = vshrl.u32 %v6539, 7
  %v6541 = vsub.s32 %v6538, %v6540
  %v6542 = vrot.slane %v6532, %v6541
  %v6544 = vunpack.c.l.s4 1966171168
  %v6545 = vunpack.c.0.s8 %v6544
  %v6546 = vlaneseq
  %v6547 = vshrl.u32 %v6546, 7
  %v6548 = vsub.s32 %v6545, %v6547
  %v6549 = vrot.slane %v6533, %v6548
  %v6551 = vunpack.c.l.s4 1966171168
  %v6552 = vunpack.c.0.s8 %v6551
  %v6553 = vlaneseq
  %v6554 = vshrl.u32 %v6553, 7
  %v6555 = vsub.s32 %v6552, %v6554
  %v6556 = vrot.slane %v6534, %v6555
  %v6558 = vunpack.c.l.s4 1966171168
  %v6559 = vunpack.c.0.s8 %v6558
  %v6560 = vlaneseq
  %v6561 = vshrl.u32 %v6560, 7
  %v6562 = vsub.s32 %v6559, %v6561
  %v6563 = vrot.slane %v6535, %v6562
  %v6564 = vcombine.low %v6542, %v6549
  %v6565 = vcombine.low %v6556, %v6563
  %v6567 = vunpack.c.l.s4 1966171168
  %v6568 = vunpack.c.0.s8 %v6567
  %v6569 = vlaneseq
  %v6570 = vshrl.u32 %v6569, 7
  %v6571 = vsub.s32 %v6568, %v6570
  %v6572 = vrot.slane %v6564, %v6571
  %v6574 = vunpack.c.l.s4 1966171168
  %v6575 = vunpack.c.0.s8 %v6574
  %v6576 = vlaneseq
  %v6577 = vshrl.u32 %v6576, 7
  %v6578 = vsub.s32 %v6575, %v6577
  %v6579 = vrot.slane %v6565, %v6578
  %v6580 = vcombine.low %v6572, %v6579
  %v6581 = vcombine.low %v5264, %v5272
  %v6582 = vcombine.low %v5274, %v5257
  %v6583 = vcombine.low %v5271, %v5273
  %v6584 = vcombine.low %v5298, %v5312
  %v6586 = vunpack.c.l.s4 1966171168
  %v6587 = vunpack.c.0.s8 %v6586
  %v6588 = vlaneseq
  %v6589 = vshrl.u32 %v6588, 7
  %v6590 = vsub.s32 %v6587, %v6589
  %v6591 = vrot.slane %v6581, %v6590
  %v6593 = vunpack.c.l.s4 1966171168
  %v6594 = vunpack.c.0.s8 %v6593
  %v6595 = vlaneseq
  %v6596 = vshrl.u32 %v6595, 7
  %v6597 = vsub.s32 %v6594, %v6596
  %v6598 = vrot.slane %v6582, %v6597
  %v6600 = vunpack.c.l.s4 1966171168
  %v6601 = vunpack.c.0.s8 %v6600
  %v6602 = vlaneseq
  %v6603 = vshrl.u32 %v6602, 7
  %v6604 = vsub.s32 %v6601, %v6603
  %v6605 = vrot.slane %v6583, %v6604
  %v6607 = vunpack.c.l.s4 1966171168
  %v6608 = vunpack.c.0.s8 %v6607
  %v6609 = vlaneseq
  %v6610 = vshrl.u32 %v6609, 7
  %v6611 = vsub.s32 %v6608, %v6610
  %v6612 = vrot.slane %v6584, %v6611
  %v6613 = vcombine.low %v6591, %v6598
  %v6614 = vcombine.low %v6605, %v6612
  %v6616 = vunpack.c.l.s4 1966171168
  %v6617 = vunpack.c.0.s8 %v6616
  %v6618 = vlaneseq
  %v6619 = vshrl.u32 %v6618, 7
  %v6620 = vsub.s32 %v6617, %v6619
  %v6621 = vrot.slane %v6613, %v6620
  %v6623 = vunpack.c.l.s4 1966171168
  %v6624 = vunpack.c.0.s8 %v6623
  %v6625 = vlaneseq
  %v6626 = vshrl.u32 %v6625, 7
  %v6627 = vsub.s32 %v6624, %v6626
  %v6628 = vrot.slane %v6614, %v6627
  %v6629 = vcombine.low %v6621, %v6628
  %v6630 = vcombine.low %v5320, %v5322
  %v6631 = vcombine.low %v5305, %v5319
  %v6632 = vcombine.low %v5321, %v5346
  %v6633 = vcombine.low %v5360, %v5368
  %v6635 = vunpack.c.l.s4 1966171168
  %v6636 = vunpack.c.0.s8 %v6635
  %v6637 = vlaneseq
  %v6638 = vshrl.u32 %v6637, 7
  %v6639 = vsub.s32 %v6636, %v6638
  %v6640 = vrot.slane %v6630, %v6639
  %v6642 = vunpack.c.l.s4 1966171168
  %v6643 = vunpack.c.0.s8 %v6642
  %v6644 = vlaneseq
  %v6645 = vshrl.u32 %v6644, 7
  %v6646 = vsub.s32 %v6643, %v6645
  %v6647 = vrot.slane %v6631, %v6646
  %v6649 = vunpack.c.l.s4 1966171168
  %v6650 = vunpack.c.0.s8 %v6649
  %v6651 = vlaneseq
  %v6652 = vshrl.u32 %v6651, 7
  %v6653 = vsub.s32 %v6650, %v6652
  %v6654 = vrot.slane %v6632, %v6653
  %v6656 = vunpack.c.l.s4 1966171168
  %v6657 = vunpack.c.0.s8 %v6656
  %v6658 = vlaneseq
  %v6659 = vshrl.u32 %v6658, 7
  %v6660 = vsub.s32 %v6657, %v6659
  %v6661 = vrot.slane %v6633, %v6660
  %v6662 = vcombine.low %v6640, %v6647
  %v6663 = vcombine.low %v6654, %v6661
  %v6665 = vunpack.c.l.s4 1966171168
  %v6666 = vunpack.c.0.s8 %v6665
  %v6667 = vlaneseq
  %v6668 = vshrl.u32 %v6667, 7
  %v6669 = vsub.s32 %v6666, %v6668
  %v6670 = vrot.slane %v6662, %v6669
  %v6672 = vunpack.c.l.s4 1966171168
  %v6673 = vunpack.c.0.s8 %v6672
  %v6674 = vlaneseq
  %v6675 = vshrl.u32 %v6674, 7
  %v6676 = vsub.s32 %v6673, %v6675
  %v6677 = vrot.slane %v6663, %v6676
  %v6678 = vcombine.low %v6670, %v6677
  %v6679 = vcombine.low %v5370, %v5353
  %v6680 = vcombine.low %v5367, %v5369
  %v6681 = vcombine.low %v5394, %v5408
  %v6682 = vcombine.low %v5416, %v5418
  %v6684 = vunpack.c.l.s4 1966171168
  %v6685 = vunpack.c.0.s8 %v6684
  %v6686 = vlaneseq
  %v6687 = vshrl.u32 %v6686, 7
  %v6688 = vsub.s32 %v6685, %v6687
  %v6689 = vrot.slane %v6679, %v6688
  %v6691 = vunpack.c.l.s4 1966171168
  %v6692 = vunpack.c.0.s8 %v6691
  %v6693 = vlaneseq
  %v6694 = vshrl.u32 %v6693, 7
  %v6695 = vsub.s32 %v6692, %v6694
  %v6696 = vrot.slane %v6680, %v6695
  %v6698 = vunpack.c.l.s4 1966171168
  %v6699 = vunpack.c.0.s8 %v6698
  %v6700 = vlaneseq
  %v6701 = vshrl.u32 %v6700, 7
  %v6702 = vsub.s32 %v6699, %v6701
  %v6703 = vrot.slane %v6681, %v6702
  %v6705 = vunpack.c.l.s4 1966171168
  %v6706 = vunpack.c.0.s8 %v6705
  %v6707 = vlaneseq
  %v6708 = vshrl.u32 %v6707, 7
  %v6709 = vsub.s32 %v6706, %v6708
  %v6710 = vrot.slane %v6682, %v6709
  %v6711 = vcombine.low %v6689, %v6696
  %v6712 = vcombine.low %v6703, %v6710
  %v6714 = vunpack.c.l.s4 1966171168
  %v6715 = vunpack.c.0.s8 %v6714
  %v6716 = vlaneseq
  %v6717 = vshrl.u32 %v6716, 7
  %v6718 = vsub.s32 %v6715, %v6717
  %v6719 = vrot.slane %v6711, %v6718
  %v6721 = vunpack.c.l.s4 1966171168
  %v6722 = vunpack.c.0.s8 %v6721
  %v6723 = vlaneseq
  %v6724 = vshrl.u32 %v6723, 7
  %v6725 = vsub.s32 %v6722, %v6724
  %v6726 = vrot.slane %v6712, %v6725
  %v6727 = vcombine.low %v6719, %v6726
  %v6728 = vcombine.low %v5401, %v5415
  %v6729 = vcombine.low %v5417, %v5442
  %v6730 = vcombine.low %v5456, %v5464
  %v6731 = vcombine.low %v5466, %v5449
  %v6733 = vunpack.c.l.s4 1966171168
  %v6734 = vunpack.c.0.s8 %v6733
  %v6735 = vlaneseq
  %v6736 = vshrl.u32 %v6735, 7
  %v6737 = vsub.s32 %v6734, %v6736
  %v6738 = vrot.slane %v6728, %v6737
  %v6740 = vunpack.c.l.s4 1966171168
  %v6741 = vunpack.c.0.s8 %v6740
  %v6742 = vlaneseq
  %v6743 = vshrl.u32 %v6742, 7
  %v6744 = vsub.s32 %v6741, %v6743
  %v6745 = vrot.slane %v6729, %v6744
  %v6747 = vunpack.c.l.s4 1966171168
  %v6748 = vunpack.c.0.s8 %v6747
  %v6749 = vlaneseq
  %v6750 = vshrl.u32 %v6749, 7
  %v6751 = vsub.s32 %v6748, %v6750
  %v6752 = vrot.slane %v6730, %v6751
  %v6754 = vunpack.c.l.s4 1966171168
  %v6755 = vunpack.c.0.s8 %v6754
  %v6756 = vlaneseq
  %v6757 = vshrl.u32 %v6756, 7
  %v6758 = vsub.s32 %v6755, %v6757
  %v6759 = vrot.slane %v6731, %v6758
  %v6760 = vcombine.low %v6738, %v6745
  %v6761 = vcombine.low %v6752, %v6759
  %v6763 = vunpack.c.l.s4 1966171168
  %v6764 = vunpack.c.0.s8 %v6763
  %v6765 = vlaneseq
  %v6766 = vshrl.u32 %v6765, 7
  %v6767 = vsub.s32 %v6764, %v6766
  %v6768 = vrot.slane %v6760, %v6767
  %v6770 = vunpack.c.l.s4 1966171168
  %v6771 = vunpack.c.0.s8 %v6770
  %v6772 = vlaneseq
  %v6773 = vshrl.u32 %v6772, 7
  %v6774 = vsub.s32 %v6771, %v6773
  %v6775 = vrot.slane %v6761, %v6774
  %v6776 = vcombine.low %v6768, %v6775
  %v6777 = vcombine.low %v5463, %v5465
  %v6778 = vcombine.low %v5490, %v5504
  %v6779 = vcombine.low %v5512, %v5514
  %v6780 = vcombine.low %v5497, %v5511
  %v6782 = vunpack.c.l.s4 1966171168
  %v6783 = vunpack.c.0.s8 %v6782
  %v6784 = vlaneseq
  %v6785 = vshrl.u32 %v6784, 7
  %v6786 = vsub.s32 %v6783, %v6785
  %v6787 = vrot.slane %v6777, %v6786
  %v6789 = vunpack.c.l.s4 1966171168
  %v6790 = vunpack.c.0.s8 %v6789
  %v6791 = vlaneseq
  %v6792 = vshrl.u32 %v6791, 7
  %v6793 = vsub.s32 %v6790, %v6792
  %v6794 = vrot.slane %v6778, %v6793
  %v6796 = vunpack.c.l.s4 1966171168
  %v6797 = vunpack.c.0.s8 %v6796
  %v6798 = vlaneseq
  %v6799 = vshrl.u32 %v6798, 7
  %v6800 = vsub.s32 %v6797, %v6799
  %v6801 = vrot.slane %v6779, %v6800
  %v6803 = vunpack.c.l.s4 1966171168
  %v6804 = vunpack.c.0.s8 %v6803
  %v6805 = vlaneseq
  %v6806 = vshrl.u32 %v6805, 7
  %v6807 = vsub.s32 %v6804, %v6806
  %v6808 = vrot.slane %v6780, %v6807
  %v6809 = vcombine.low %v6787, %v6794
  %v6810 = vcombine.low %v6801, %v6808
  %v6812 = vunpack.c.l.s4 1966171168
  %v6813 = vunpack.c.0.s8 %v6812
  %v6814 = vlaneseq
  %v6815 = vshrl.u32 %v6814, 7
  %v6816 = vsub.s32 %v6813, %v6815
  %v6817 = vrot.slane %v6809, %v6816
  %v6819 = vunpack.c.l.s4 1966171168
  %v6820 = vunpack.c.0.s8 %v6819
  %v6821 = vlaneseq
  %v6822 = vshrl.u32 %v6821, 7
  %v6823 = vsub.s32 %v6820, %v6822
  %v6824 = vrot.slane %v6810, %v6823
  %v6825 = vcombine.low %v6817, %v6824
  %v6826 = vcombine.low %v5513, %v5538
  %v6827 = vcombine.low %v5552, %v5560
  %v6828 = vcombine.low %v5562, %v5545
  %v6829 = vcombine.low %v5559, %v5561
  %v6831 = vunpack.c.l.s4 1966171168
  %v6832 = vunpack.c.0.s8 %v6831
  %v6833 = vlaneseq
  %v6834 = vshrl.u32 %v6833, 7
  %v6835 = vsub.s32 %v6832, %v6834
  %v6836 = vrot.slane %v6826, %v6835
  %v6838 = vunpack.c.l.s4 1966171168
  %v6839 = vunpack.c.0.s8 %v6838
  %v6840 = vlaneseq
  %v6841 = vshrl.u32 %v6840, 7
  %v6842 = vsub.s32 %v6839, %v6841
  %v6843 = vrot.slane %v6827, %v6842
  %v6845 = vunpack.c.l.s4 1966171168
  %v6846 = vunpack.c.0.s8 %v6845
  %v6847 = vlaneseq
  %v6848 = vshrl.u32 %v6847, 7
  %v6849 = vsub.s32 %v6846, %v6848
  %v6850 = vrot.slane %v6828, %v6849
  %v6852 = vunpack.c.l.s4 1966171168
  %v6853 = vunpack.c.0.s8 %v6852
  %v6854 = vlaneseq
  %v6855 = vshrl.u32 %v6854, 7
  %v6856 = vsub.s32 %v6853, %v6855
  %v6857 = vrot.slane %v6829, %v6856
  %v6858 = vcombine.low %v6836, %v6843
  %v6859 = vcombine.low %v6850, %v6857
  %v6861 = vunpack.c.l.s4 1966171168
  %v6862 = vunpack.c.0.s8 %v6861
  %v6863 = vlaneseq
  %v6864 = vshrl.u32 %v6863, 7
  %v6865 = vsub.s32 %v6862, %v6864
  %v6866 = vrot.slane %v6858, %v6865
  %v6868 = vunpack.c.l.s4 1966171168
  %v6869 = vunpack.c.0.s8 %v6868
  %v6870 = vlaneseq
  %v6871 = vshrl.u32 %v6870, 7
  %v6872 = vsub.s32 %v6869, %v6871
  %v6873 = vrot.slane %v6859, %v6872
  %v6874 = vcombine.low %v6866, %v6873
  %v6875 = vcombine.low %v5586, %v5600
  %v6876 = vcombine.low %v5608, %v5610
  %v6877 = vcombine.low %v5593, %v5607
  %v6878 = vcombine.low %v5609, %v5634
  %v6880 = vunpack.c.l.s4 1966171168
  %v6881 = vunpack.c.0.s8 %v6880
  %v6882 = vlaneseq
  %v6883 = vshrl.u32 %v6882, 7
  %v6884 = vsub.s32 %v6881, %v6883
  %v6885 = vrot.slane %v6875, %v6884
  %v6887 = vunpack.c.l.s4 1966171168
  %v6888 = vunpack.c.0.s8 %v6887
  %v6889 = vlaneseq
  %v6890 = vshrl.u32 %v6889, 7
  %v6891 = vsub.s32 %v6888, %v6890
  %v6892 = vrot.slane %v6876, %v6891
  %v6894 = vunpack.c.l.s4 1966171168
  %v6895 = vunpack.c.0.s8 %v6894
  %v6896 = vlaneseq
  %v6897 = vshrl.u32 %v6896, 7
  %v6898 = vsub.s32 %v6895, %v6897
  %v6899 = vrot.slane %v6877, %v6898
  %v6901 = vunpack.c.l.s4 1966171168
  %v6902 = vunpack.c.0.s8 %v6901
  %v6903 = vlaneseq
  %v6904 = vshrl.u32 %v6903, 7
  %v6905 = vsub.s32 %v6902, %v6904
  %v6906 = vrot.slane %v6878, %v6905
  %v6907 = vcombine.low %v6885, %v6892
  %v6908 = vcombine.low %v6899, %v6906
  %v6910 = vunpack.c.l.s4 1966171168
  %v6911 = vunpack.c.0.s8 %v6910
  %v6912 = vlaneseq
  %v6913 = vshrl.u32 %v6912, 7
  %v6914 = vsub.s32 %v6911, %v6913
  %v6915 = vrot.slane %v6907, %v6914
  %v6917 = vunpack.c.l.s4 1966171168
  %v6918 = vunpack.c.0.s8 %v6917
  %v6919 = vlaneseq
  %v6920 = vshrl.u32 %v6919, 7
  %v6921 = vsub.s32 %v6918, %v6920
  %v6922 = vrot.slane %v6908, %v6921
  %v6923 = vcombine.low %v6915, %v6922
  %v6924 = vcombine.low %v5648, %v5656
  %v6925 = vcombine.low %v5658, %v5641
  %v6926 = vcombine.low %v5655, %v5657
  %v6927 = vcombine.low %v5682, %v5696
  %v6929 = vunpack.c.l.s4 1966171168
  %v6930 = vunpack.c.0.s8 %v6929
  %v6931 = vlaneseq
  %v6932 = vshrl.u32 %v6931, 7
  %v6933 = vsub.s32 %v6930, %v6932
  %v6934 = vrot.slane %v6924, %v6933
  %v6936 = vunpack.c.l.s4 1966171168
  %v6937 = vunpack.c.0.s8 %v6936
  %v6938 = vlaneseq
  %v6939 = vshrl.u32 %v6938, 7
  %v6940 = vsub.s32 %v6937, %v6939
  %v6941 = vrot.slane %v6925, %v6940
  %v6943 = vunpack.c.l.s4 1966171168
  %v6944 = vunpack.c.0.s8 %v6943
  %v6945 = vlaneseq
  %v6946 = vshrl.u32 %v6945, 7
  %v6947 = vsub.s32 %v6944, %v6946
  %v6948 = vrot.slane %v6926, %v6947
  %v6950 = vunpack.c.l.s4 1966171168
  %v6951 = vunpack.c.0.s8 %v6950
  %v6952 = vlaneseq
  %v6953 = vshrl.u32 %v6952, 7
  %v6954 = vsub.s32 %v6951, %v6953
  %v6955 = vrot.slane %v6927, %v6954
  %v6956 = vcombine.low %v6934, %v6941
  %v6957 = vcombine.low %v6948, %v6955
  %v6959 = vunpack.c.l.s4 1966171168
  %v6960 = vunpack.c.0.s8 %v6959
  %v6961 = vlaneseq
  %v6962 = vshrl.u32 %v6961, 7
  %v6963 = vsub.s32 %v6960, %v6962
  %v6964 = vrot.slane %v6956, %v6963
  %v6966 = vunpack.c.l.s4 1966171168
  %v6967 = vunpack.c.0.s8 %v6966
  %v6968 = vlaneseq
  %v6969 = vshrl.u32 %v6968, 7
  %v6970 = vsub.s32 %v6967, %v6969
  %v6971 = vrot.slane %v6957, %v6970
  %v6972 = vcombine.low %v6964, %v6971
  %v6973 = vcombine.low %v5704, %v5706
  %v6974 = vcombine.low %v5689, %v5703
  %v6975 = vcombine.low %v5705, %v5730
  %v6976 = vcombine.low %v5744, %v5752
  %v6978 = vunpack.c.l.s4 1966171168
  %v6979 = vunpack.c.0.s8 %v6978
  %v6980 = vlaneseq
  %v6981 = vshrl.u32 %v6980, 7
  %v6982 = vsub.s32 %v6979, %v6981
  %v6983 = vrot.slane %v6973, %v6982
  %v6985 = vunpack.c.l.s4 1966171168
  %v6986 = vunpack.c.0.s8 %v6985
  %v6987 = vlaneseq
  %v6988 = vshrl.u32 %v6987, 7
  %v6989 = vsub.s32 %v6986, %v6988
  %v6990 = vrot.slane %v6974, %v6989
  %v6992 = vunpack.c.l.s4 1966171168
  %v6993 = vunpack.c.0.s8 %v6992
  %v6994 = vlaneseq
  %v6995 = vshrl.u32 %v6994, 7
  %v6996 = vsub.s32 %v6993, %v6995
  %v6997 = vrot.slane %v6975, %v6996
  %v6999 = vunpack.c.l.s4 1966171168
  %v7000 = vunpack.c.0.s8 %v6999
  %v7001 = vlaneseq
  %v7002 = vshrl.u32 %v7001, 7
  %v7003 = vsub.s32 %v7000, %v7002
  %v7004 = vrot.slane %v6976, %v7003
  %v7005 = vcombine.low %v6983, %v6990
  %v7006 = vcombine.low %v6997, %v7004
  %v7008 = vunpack.c.l.s4 1966171168
  %v7009 = vunpack.c.0.s8 %v7008
  %v7010 = vlaneseq
  %v7011 = vshrl.u32 %v7010, 7
  %v7012 = vsub.s32 %v7009, %v7011
  %v7013 = vrot.slane %v7005, %v7012
  %v7015 = vunpack.c.l.s4 1966171168
  %v7016 = vunpack.c.0.s8 %v7015
  %v7017 = vlaneseq
  %v7018 = vshrl.u32 %v7017, 7
  %v7019 = vsub.s32 %v7016, %v7018
  %v7020 = vrot.slane %v7006, %v7019
  %v7021 = vcombine.low %v7013, %v7020
  %v7022 = vcombine.low %v5754, %v5737
  %v7023 = vcombine.low %v5751, %v5753
  %v7024 = vcombine.low %v5778, %v5792
  %v7025 = vcombine.low %v5800, %v5802
  %v7027 = vunpack.c.l.s4 1966171168
  %v7028 = vunpack.c.0.s8 %v7027
  %v7029 = vlaneseq
  %v7030 = vshrl.u32 %v7029, 7
  %v7031 = vsub.s32 %v7028, %v7030
  %v7032 = vrot.slane %v7022, %v7031
  %v7034 = vunpack.c.l.s4 1966171168
  %v7035 = vunpack.c.0.s8 %v7034
  %v7036 = vlaneseq
  %v7037 = vshrl.u32 %v7036, 7
  %v7038 = vsub.s32 %v7035, %v7037
  %v7039 = vrot.slane %v7023, %v7038
  %v7041 = vunpack.c.l.s4 1966171168
  %v7042 = vunpack.c.0.s8 %v7041
  %v7043 = vlaneseq
  %v7044 = vshrl.u32 %v7043, 7
  %v7045 = vsub.s32 %v7042, %v7044
  %v7046 = vrot.slane %v7024, %v7045
  %v7048 = vunpack.c.l.s4 1966171168
  %v7049 = vunpack.c.0.s8 %v7048
  %v7050 = vlaneseq
  %v7051 = vshrl.u32 %v7050, 7
  %v7052 = vsub.s32 %v7049, %v7051
  %v7053 = vrot.slane %v7025, %v7052
  %v7054 = vcombine.low %v7032, %v7039
  %v7055 = vcombine.low %v7046, %v7053
  %v7057 = vunpack.c.l.s4 1966171168
  %v7058 = vunpack.c.0.s8 %v7057
  %v7059 = vlaneseq
  %v7060 = vshrl.u32 %v7059, 7
  %v7061 = vsub.s32 %v7058, %v7060
  %v7062 = vrot.slane %v7054, %v7061
  %v7064 = vunpack.c.l.s4 1966171168
  %v7065 = vunpack.c.0.s8 %v7064
  %v7066 = vlaneseq
  %v7067 = vshrl.u32 %v7066, 7
  %v7068 = vsub.s32 %v7065, %v7067
  %v7069 = vrot.slane %v7055, %v7068
  %v7070 = vcombine.low %v7062, %v7069
  %v7071 = vcombine.low %v5785, %v5799
  %v7072 = vcombine.low %v5801, %v5826
  %v7073 = vcombine.low %v5840, %v5848
  %v7074 = vcombine.low %v5850, %v5833
  %v7076 = vunpack.c.l.s4 1966171168
  %v7077 = vunpack.c.0.s8 %v7076
  %v7078 = vlaneseq
  %v7079 = vshrl.u32 %v7078, 7
  %v7080 = vsub.s32 %v7077, %v7079
  %v7081 = vrot.slane %v7071, %v7080
  %v7083 = vunpack.c.l.s4 1966171168
  %v7084 = vunpack.c.0.s8 %v7083
  %v7085 = vlaneseq
  %v7086 = vshrl.u32 %v7085, 7
  %v7087 = vsub.s32 %v7084, %v7086
  %v7088 = vrot.slane %v7072, %v7087
  %v7090 = vunpack.c.l.s4 1966171168
  %v7091 = vunpack.c.0.s8 %v7090
  %v7092 = vlaneseq
  %v7093 = vshrl.u32 %v7092, 7
  %v7094 = vsub.s32 %v7091, %v7093
  %v7095 = vrot.slane %v7073, %v7094
  %v7097 = vunpack.c.l.s4 1966171168
  %v7098 = vunpack.c.0.s8 %v7097
  %v7099 = vlaneseq
  %v7100 = vshrl.u32 %v7099, 7
  %v7101 = vsub.s32 %v7098, %v7100
  %v7102 = vrot.slane %v7074, %v7101
  %v7103 = vcombine.low %v7081, %v7088
  %v7104 = vcombine.low %v7095, %v7102
  %v7106 = vunpack.c.l.s4 1966171168
  %v7107 = vunpack.c.0.s8 %v7106
  %v7108 = vlaneseq
  %v7109 = vshrl.u32 %v7108, 7
  %v7110 = vsub.s32 %v7107, %v7109
  %v7111 = vrot.slane %v7103, %v7110
  %v7113 = vunpack.c.l.s4 1966171168
  %v7114 = vunpack.c.0.s8 %v7113
  %v7115 = vlaneseq
  %v7116 = vshrl.u32 %v7115, 7
  %v7117 = vsub.s32 %v7114, %v7116
  %v7118 = vrot.slane %v7104, %v7117
  %v7119 = vcombine.low %v7111, %v7118
  %v7120 = vcombine.low %v5847, %v5849
  %v7121 = vcombine.low %v5874, %v5888
  %v7122 = vcombine.low %v5896, %v5898
  %v7123 = vcombine.low %v5881, %v5895
  %v7125 = vunpack.c.l.s4 1966171168
  %v7126 = vunpack.c.0.s8 %v7125
  %v7127 = vlaneseq
  %v7128 = vshrl.u32 %v7127, 7
  %v7129 = vsub.s32 %v7126, %v7128
  %v7130 = vrot.slane %v7120, %v7129
  %v7132 = vunpack.c.l.s4 1966171168
  %v7133 = vunpack.c.0.s8 %v7132
  %v7134 = vlaneseq
  %v7135 = vshrl.u32 %v7134, 7
  %v7136 = vsub.s32 %v7133, %v7135
  %v7137 = vrot.slane %v7121, %v7136
  %v7139 = vunpack.c.l.s4 1966171168
  %v7140 = vunpack.c.0.s8 %v7139
  %v7141 = vlaneseq
  %v7142 = vshrl.u32 %v7141, 7
  %v7143 = vsub.s32 %v7140, %v7142
  %v7144 = vrot.slane %v7122, %v7143
  %v7146 = vunpack.c.l.s4 1966171168
  %v7147 = vunpack.c.0.s8 %v7146
  %v7148 = vlaneseq
  %v7149 = vshrl.u32 %v7148, 7
  %v7150 = vsub.s32 %v7147, %v7149
  %v7151 = vrot.slane %v7123, %v7150
  %v7152 = vcombine.low %v7130, %v7137
  %v7153 = vcombine.low %v7144, %v7151
  %v7155 = vunpack.c.l.s4 1966171168
  %v7156 = vunpack.c.0.s8 %v7155
  %v7157 = vlaneseq
  %v7158 = vshrl.u32 %v7157, 7
  %v7159 = vsub.s32 %v7156, %v7158
  %v7160 = vrot.slane %v7152, %v7159
  %v7162 = vunpack.c.l.s4 1966171168
  %v7163 = vunpack.c.0.s8 %v7162
  %v7164 = vlaneseq
  %v7165 = vshrl.u32 %v7164, 7
  %v7166 = vsub.s32 %v7163, %v7165
  %v7167 = vrot.slane %v7153, %v7166
  %v7168 = vcombine.low %v7160, %v7167
  %v7169 = vcombine.low %v5897, %v5922
  %v7170 = vcombine.low %v5936, %v5944
  %v7171 = vcombine.low %v5946, %v5929
  %v7172 = vcombine.low %v5943, %v5945
  %v7174 = vunpack.c.l.s4 1966171168
  %v7175 = vunpack.c.0.s8 %v7174
  %v7176 = vlaneseq
  %v7177 = vshrl.u32 %v7176, 7
  %v7178 = vsub.s32 %v7175, %v7177
  %v7179 = vrot.slane %v7169, %v7178
  %v7181 = vunpack.c.l.s4 1966171168
  %v7182 = vunpack.c.0.s8 %v7181
  %v7183 = vlaneseq
  %v7184 = vshrl.u32 %v7183, 7
  %v7185 = vsub.s32 %v7182, %v7184
  %v7186 = vrot.slane %v7170, %v7185
  %v7188 = vunpack.c.l.s4 1966171168
  %v7189 = vunpack.c.0.s8 %v7188
  %v7190 = vlaneseq
  %v7191 = vshrl.u32 %v7190, 7
  %v7192 = vsub.s32 %v7189, %v7191
  %v7193 = vrot.slane %v7171, %v7192
  %v7195 = vunpack.c.l.s4 1966171168
  %v7196 = vunpack.c.0.s8 %v7195
  %v7197 = vlaneseq
  %v7198 = vshrl.u32 %v7197, 7
  %v7199 = vsub.s32 %v7196, %v7198
  %v7200 = vrot.slane %v7172, %v7199
  %v7201 = vcombine.low %v7179, %v7186
  %v7202 = vcombine.low %v7193, %v7200
  %v7204 = vunpack.c.l.s4 1966171168
  %v7205 = vunpack.c.0.s8 %v7204
  %v7206 = vlaneseq
  %v7207 = vshrl.u32 %v7206, 7
  %v7208 = vsub.s32 %v7205, %v7207
  %v7209 = vrot.slane %v7201, %v7208
  %v7211 = vunpack.c.l.s4 1966171168
  %v7212 = vunpack.c.0.s8 %v7211
  %v7213 = vlaneseq
  %v7214 = vshrl.u32 %v7213, 7
  %v7215 = vsub.s32 %v7212, %v7214
  %v7216 = vrot.slane %v7202, %v7215
  %v7217 = vcombine.low %v7209, %v7216
  %v7218 = vcombine.low %v5970, %v5984
  %v7219 = vcombine.low %v5992, %v5994
  %v7220 = vcombine.low %v5977, %v5991
  %v7221 = vcombine.low %v5993, %v6018
  %v7223 = vunpack.c.l.s4 1966171168
  %v7224 = vunpack.c.0.s8 %v7223
  %v7225 = vlaneseq
  %v7226 = vshrl.u32 %v7225, 7
  %v7227 = vsub.s32 %v7224, %v7226
  %v7228 = vrot.slane %v7218, %v7227
  %v7230 = vunpack.c.l.s4 1966171168
  %v7231 = vunpack.c.0.s8 %v7230
  %v7232 = vlaneseq
  %v7233 = vshrl.u32 %v7232, 7
  %v7234 = vsub.s32 %v7231, %v7233
  %v7235 = vrot.slane %v7219, %v7234
  %v7237 = vunpack.c.l.s4 1966171168
  %v7238 = vunpack.c.0.s8 %v7237
  %v7239 = vlaneseq
  %v7240 = vshrl.u32 %v7239, 7
  %v7241 = vsub.s32 %v7238, %v7240
  %v7242 = vrot.slane %v7220, %v7241
  %v7244 = vunpack.c.l.s4 1966171168
  %v7245 = vunpack.c.0.s8 %v7244
  %v7246 = vlaneseq
  %v7247 = vshrl.u32 %v7246, 7
  %v7248 = vsub.s32 %v7245, %v7247
  %v7249 = vrot.slane %v7221, %v7248
  %v7250 = vcombine.low %v7228, %v7235
  %v7251 = vcombine.low %v7242, %v7249
  %v7253 = vunpack.c.l.s4 1966171168
  %v7254 = vunpack.c.0.s8 %v7253
  %v7255 = vlaneseq
  %v7256 = vshrl.u32 %v7255, 7
  %v7257 = vsub.s32 %v7254, %v7256
  %v7258 = vrot.slane %v7250, %v7257
  %v7260 = vunpack.c.l.s4 1966171168
  %v7261 = vunpack.c.0.s8 %v7260
  %v7262 = vlaneseq
  %v7263 = vshrl.u32 %v7262, 7
  %v7264 = vsub.s32 %v7261, %v7263
  %v7265 = vrot.slane %v7251, %v7264
  %v7266 = vcombine.low %v7258, %v7265
  %v7267 = vcombine.low %v6032, %v6040
  %v7268 = vcombine.low %v6042, %v6025
  %v7269 = vcombine.low %v6039, %v6041
  %v7270 = vcombine.low %v6066, %v6080
  %v7272 = vunpack.c.l.s4 1966171168
  %v7273 = vunpack.c.0.s8 %v7272
  %v7274 = vlaneseq
  %v7275 = vshrl.u32 %v7274, 7
  %v7276 = vsub.s32 %v7273, %v7275
  %v7277 = vrot.slane %v7267, %v7276
  %v7279 = vunpack.c.l.s4 1966171168
  %v7280 = vunpack.c.0.s8 %v7279
  %v7281 = vlaneseq
  %v7282 = vshrl.u32 %v7281, 7
  %v7283 = vsub.s32 %v7280, %v7282
  %v7284 = vrot.slane %v7268, %v7283
  %v7286 = vunpack.c.l.s4 1966171168
  %v7287 = vunpack.c.0.s8 %v7286
  %v7288 = vlaneseq
  %v7289 = vshrl.u32 %v7288, 7
  %v7290 = vsub.s32 %v7287, %v7289
  %v7291 = vrot.slane %v7269, %v7290
  %v7293 = vunpack.c.l.s4 1966171168
  %v7294 = vunpack.c.0.s8 %v7293
  %v7295 = vlaneseq
  %v7296 = vshrl.u32 %v7295, 7
  %v7297 = vsub.s32 %v7294, %v7296
  %v7298 = vrot.slane %v7270, %v7297
  %v7299 = vcombine.low %v7277, %v7284
  %v7300 = vcombine.low %v7291, %v7298
  %v7302 = vunpack.c.l.s4 1966171168
  %v7303 = vunpack.c.0.s8 %v7302
  %v7304 = vlaneseq
  %v7305 = vshrl.u32 %v7304, 7
  %v7306 = vsub.s32 %v7303, %v7305
  %v7307 = vrot.slane %v7299, %v7306
  %v7309 = vunpack.c.l.s4 1966171168
  %v7310 = vunpack.c.0.s8 %v7309
  %v7311 = vlaneseq
  %v7312 = vshrl.u32 %v7311, 7
  %v7313 = vsub.s32 %v7310, %v7312
  %v7314 = vrot.slane %v7300, %v7313
  %v7315 = vcombine.low %v7307, %v7314
  %v7316 = vcombine.low %v6088, %v6090
  %v7317 = vcombine.low %v6073, %v6087
  %v7318 = vcombine.low %v6089, %v6114
  %v7319 = vcombine.low %v6128, %v6136
  %v7321 = vunpack.c.l.s4 1966171168
  %v7322 = vunpack.c.0.s8 %v7321
  %v7323 = vlaneseq
  %v7324 = vshrl.u32 %v7323, 7
  %v7325 = vsub.s32 %v7322, %v7324
  %v7326 = vrot.slane %v7316, %v7325
  %v7328 = vunpack.c.l.s4 1966171168
  %v7329 = vunpack.c.0.s8 %v7328
  %v7330 = vlaneseq
  %v7331 = vshrl.u32 %v7330, 7
  %v7332 = vsub.s32 %v7329, %v7331
  %v7333 = vrot.slane %v7317, %v7332
  %v7335 = vunpack.c.l.s4 1966171168
  %v7336 = vunpack.c.0.s8 %v7335
  %v7337 = vlaneseq
  %v7338 = vshrl.u32 %v7337, 7
  %v7339 = vsub.s32 %v7336, %v7338
  %v7340 = vrot.slane %v7318, %v7339
  %v7342 = vunpack.c.l.s4 1966171168
  %v7343 = vunpack.c.0.s8 %v7342
  %v7344 = vlaneseq
  %v7345 = vshrl.u32 %v7344, 7
  %v7346 = vsub.s32 %v7343, %v7345
  %v7347 = vrot.slane %v7319, %v7346
  %v7348 = vcombine.low %v7326, %v7333
  %v7349 = vcombine.low %v7340, %v7347
  %v7351 = vunpack.c.l.s4 1966171168
  %v7352 = vunpack.c.0.s8 %v7351
  %v7353 = vlaneseq
  %v7354 = vshrl.u32 %v7353, 7
  %v7355 = vsub.s32 %v7352, %v7354
  %v7356 = vrot.slane %v7348, %v7355
  %v7358 = vunpack.c.l.s4 1966171168
  %v7359 = vunpack.c.0.s8 %v7358
  %v7360 = vlaneseq
  %v7361 = vshrl.u32 %v7360, 7
  %v7362 = vsub.s32 %v7359, %v7361
  %v7363 = vrot.slane %v7349, %v7362
  %v7364 = vcombine.low %v7356, %v7363
  %v7365 = vcombine.low %v6138, %v6121
  %v7366 = vcombine.low %v6135, %v6137
  %v7367 = vcombine.low %v6162, %v6176
  %v7368 = vcombine.low %v6184, %v6186
  %v7370 = vunpack.c.l.s4 1966171168
  %v7371 = vunpack.c.0.s8 %v7370
  %v7372 = vlaneseq
  %v7373 = vshrl.u32 %v7372, 7
  %v7374 = vsub.s32 %v7371, %v7373
  %v7375 = vrot.slane %v7365, %v7374
  %v7377 = vunpack.c.l.s4 1966171168
  %v7378 = vunpack.c.0.s8 %v7377
  %v7379 = vlaneseq
  %v7380 = vshrl.u32 %v7379, 7
  %v7381 = vsub.s32 %v7378, %v7380
  %v7382 = vrot.slane %v7366, %v7381
  %v7384 = vunpack.c.l.s4 1966171168
  %v7385 = vunpack.c.0.s8 %v7384
  %v7386 = vlaneseq
  %v7387 = vshrl.u32 %v7386, 7
  %v7388 = vsub.s32 %v7385, %v7387
  %v7389 = vrot.slane %v7367, %v7388
  %v7391 = vunpack.c.l.s4 1966171168
  %v7392 = vunpack.c.0.s8 %v7391
  %v7393 = vlaneseq
  %v7394 = vshrl.u32 %v7393, 7
  %v7395 = vsub.s32 %v7392, %v7394
  %v7396 = vrot.slane %v7368, %v7395
  %v7397 = vcombine.low %v7375, %v7382
  %v7398 = vcombine.low %v7389, %v7396
  %v7400 = vunpack.c.l.s4 1966171168
  %v7401 = vunpack.c.0.s8 %v7400
  %v7402 = vlaneseq
  %v7403 = vshrl.u32 %v7402, 7
  %v7404 = vsub.s32 %v7401, %v7403
  %v7405 = vrot.slane %v7397, %v7404
  %v7407 = vunpack.c.l.s4 1966171168
  %v7408 = vunpack.c.0.s8 %v7407
  %v7409 = vlaneseq
  %v7410 = vshrl.u32 %v7409, 7
  %v7411 = vsub.s32 %v7408, %v7410
  %v7412 = vrot.slane %v7398, %v7411
  %v7413 = vcombine.low %v7405, %v7412
  %v7414 = vcombine.low %v6169, %v6183
  %v7415 = vcombine.low %v6185, %v6210
  %v7416 = vcombine.low %v6224, %v6232
  %v7417 = vcombine.low %v6234, %v6217
  %v7419 = vunpack.c.l.s4 1966171168
  %v7420 = vunpack.c.0.s8 %v7419
  %v7421 = vlaneseq
  %v7422 = vshrl.u32 %v7421, 7
  %v7423 = vsub.s32 %v7420, %v7422
  %v7424 = vrot.slane %v7414, %v7423
  %v7426 = vunpack.c.l.s4 1966171168
  %v7427 = vunpack.c.0.s8 %v7426
  %v7428 = vlaneseq
  %v7429 = vshrl.u32 %v7428, 7
  %v7430 = vsub.s32 %v7427, %v7429
  %v7431 = vrot.slane %v7415, %v7430
  %v7433 = vunpack.c.l.s4 1966171168
  %v7434 = vunpack.c.0.s8 %v7433
  %v7435 = vlaneseq
  %v7436 = vshrl.u32 %v7435, 7
  %v7437 = vsub.s32 %v7434, %v7436
  %v7438 = vrot.slane %v7416, %v7437
  %v7440 = vunpack.c.l.s4 1966171168
  %v7441 = vunpack.c.0.s8 %v7440
  %v7442 = vlaneseq
  %v7443 = vshrl.u32 %v7442, 7
  %v7444 = vsub.s32 %v7441, %v7443
  %v7445 = vrot.slane %v7417, %v7444
  %v7446 = vcombine.low %v7424, %v7431
  %v7447 = vcombine.low %v7438, %v7445
  %v7449 = vunpack.c.l.s4 1966171168
  %v7450 = vunpack.c.0.s8 %v7449
  %v7451 = vlaneseq
  %v7452 = vshrl.u32 %v7451, 7
  %v7453 = vsub.s32 %v7450, %v7452
  %v7454 = vrot.slane %v7446, %v7453
  %v7456 = vunpack.c.l.s4 1966171168
  %v7457 = vunpack.c.0.s8 %v7456
  %v7458 = vlaneseq
  %v7459 = vshrl.u32 %v7458, 7
  %v7460 = vsub.s32 %v7457, %v7459
  %v7461 = vrot.slane %v7447, %v7460
  %v7462 = vcombine.low %v7454, %v7461
  %v7463 = vcombine.low %v6231, %v6233
  %v7464 = vcombine.low %v6258, %v6272
  %v7465 = vcombine.low %v6280, %v6282
  %v7466 = vcombine.low %v6265, %v6279
  %v7468 = vunpack.c.l.s4 1966171168
  %v7469 = vunpack.c.0.s8 %v7468
  %v7470 = vlaneseq
  %v7471 = vshrl.u32 %v7470, 7
  %v7472 = vsub.s32 %v7469, %v7471
  %v7473 = vrot.slane %v7463, %v7472
  %v7475 = vunpack.c.l.s4 1966171168
  %v7476 = vunpack.c.0.s8 %v7475
  %v7477 = vlaneseq
  %v7478 = vshrl.u32 %v7477, 7
  %v7479 = vsub.s32 %v7476, %v7478
  %v7480 = vrot.slane %v7464, %v7479
  %v7482 = vunpack.c.l.s4 1966171168
  %v7483 = vunpack.c.0.s8 %v7482
  %v7484 = vlaneseq
  %v7485 = vshrl.u32 %v7484, 7
  %v7486 = vsub.s32 %v7483, %v7485
  %v7487 = vrot.slane %v7465, %v7486
  %v7489 = vunpack.c.l.s4 1966171168
  %v7490 = vunpack.c.0.s8 %v7489
  %v7491 = vlaneseq
  %v7492 = vshrl.u32 %v7491, 7
  %v7493 = vsub.s32 %v7490, %v7492
  %v7494 = vrot.slane %v7466, %v7493
  %v7495 = vcombine.low %v7473, %v7480
  %v7496 = vcombine.low %v7487, %v7494
  %v7498 = vunpack.c.l.s4 1966171168
  %v7499 = vunpack.c.0.s8 %v7498
  %v7500 = vlaneseq
  %v7501 = vshrl.u32 %v7500, 7
  %v7502 = vsub.s32 %v7499, %v7501
  %v7503 = vrot.slane %v7495, %v7502
  %v7505 = vunpack.c.l.s4 1966171168
  %v7506 = vunpack.c.0.s8 %v7505
  %v7507 = vlaneseq
  %v7508 = vshrl.u32 %v7507, 7
  %v7509 = vsub.s32 %v7506, %v7508
  %v7510 = vrot.slane %v7496, %v7509
  %v7511 = vcombine.low %v7503, %v7510
  %v7512 = vcombine.low %v6281, %v6306
  %v7513 = vcombine.low %v6320, %v6328
  %v7514 = vcombine.low %v6330, %v6313
  %v7515 = vcombine.low %v6327, %v6329
  %v7517 = vunpack.c.l.s4 1966171168
  %v7518 = vunpack.c.0.s8 %v7517
  %v7519 = vlaneseq
  %v7520 = vshrl.u32 %v7519, 7
  %v7521 = vsub.s32 %v7518, %v7520
  %v7522 = vrot.slane %v7512, %v7521
  %v7524 = vunpack.c.l.s4 1966171168
  %v7525 = vunpack.c.0.s8 %v7524
  %v7526 = vlaneseq
  %v7527 = vshrl.u32 %v7526, 7
  %v7528 = vsub.s32 %v7525, %v7527
  %v7529 = vrot.slane %v7513, %v7528
  %v7531 = vunpack.c.l.s4 1966171168
  %v7532 = vunpack.c.0.s8 %v7531
  %v7533 = vlaneseq
  %v7534 = vshrl.u32 %v7533, 7
  %v7535 = vsub.s32 %v7532, %v7534
  %v7536 = vrot.slane %v7514, %v7535
  %v7538 = vunpack.c.l.s4 1966171168
  %v7539 = vunpack.c.0.s8 %v7538
  %v7540 = vlaneseq
  %v7541 = vshrl.u32 %v7540, 7
  %v7542 = vsub.s32 %v7539, %v7541
  %v7543 = vrot.slane %v7515, %v7542
  %v7544 = vcombine.low %v7522, %v7529
  %v7545 = vcombine.low %v7536, %v7543
  %v7547 = vunpack.c.l.s4 1966171168
  %v7548 = vunpack.c.0.s8 %v7547
  %v7549 = vlaneseq
  %v7550 = vshrl.u32 %v7549, 7
  %v7551 = vsub.s32 %v7548, %v7550
  %v7552 = vrot.slane %v7544, %v7551
  %v7554 = vunpack.c.l.s4 1966171168
  %v7555 = vunpack.c.0.s8 %v7554
  %v7556 = vlaneseq
  %v7557 = vshrl.u32 %v7556, 7
  %v7558 = vsub.s32 %v7555, %v7557
  %v7559 = vrot.slane %v7545, %v7558
  %v7560 = vcombine.low %v7552, %v7559
  %v7561 = vcombine.low %v6354, %v6368
  %v7562 = vcombine.low %v6376, %v6378
  %v7563 = vcombine.low %v6361, %v6375
  %v7564 = vcombine.low %v6377, %v6402
  %v7566 = vunpack.c.l.s4 1966171168
  %v7567 = vunpack.c.0.s8 %v7566
  %v7568 = vlaneseq
  %v7569 = vshrl.u32 %v7568, 7
  %v7570 = vsub.s32 %v7567, %v7569
  %v7571 = vrot.slane %v7561, %v7570
  %v7573 = vunpack.c.l.s4 1966171168
  %v7574 = vunpack.c.0.s8 %v7573
  %v7575 = vlaneseq
  %v7576 = vshrl.u32 %v7575, 7
  %v7577 = vsub.s32 %v7574, %v7576
  %v7578 = vrot.slane %v7562, %v7577
  %v7580 = vunpack.c.l.s4 1966171168
  %v7581 = vunpack.c.0.s8 %v7580
  %v7582 = vlaneseq
  %v7583 = vshrl.u32 %v7582, 7
  %v7584 = vsub.s32 %v7581, %v7583
  %v7585 = vrot.slane %v7563, %v7584
  %v7587 = vunpack.c.l.s4 1966171168
  %v7588 = vunpack.c.0.s8 %v7587
  %v7589 = vlaneseq
  %v7590 = vshrl.u32 %v7589, 7
  %v7591 = vsub.s32 %v7588, %v7590
  %v7592 = vrot.slane %v7564, %v7591
  %v7593 = vcombine.low %v7571, %v7578
  %v7594 = vcombine.low %v7585, %v7592
  %v7596 = vunpack.c.l.s4 1966171168
  %v7597 = vunpack.c.0.s8 %v7596
  %v7598 = vlaneseq
  %v7599 = vshrl.u32 %v7598, 7
  %v7600 = vsub.s32 %v7597, %v7599
  %v7601 = vrot.slane %v7593, %v7600
  %v7603 = vunpack.c.l.s4 1966171168
  %v7604 = vunpack.c.0.s8 %v7603
  %v7605 = vlaneseq
  %v7606 = vshrl.u32 %v7605, 7
  %v7607 = vsub.s32 %v7604, %v7606
  %v7608 = vrot.slane %v7594, %v7607
  %v7609 = vcombine.low %v7601, %v7608
  %v7610 = vcombine.low %v6416, %v6424
  %v7611 = vcombine.low %v6426, %v6409
  %v7612 = vcombine.low %v6423, %v6425
  %v7613 = vcombine.low %v6450, %v6464
  %v7615 = vunpack.c.l.s4 1966171168
  %v7616 = vunpack.c.0.s8 %v7615
  %v7617 = vlaneseq
  %v7618 = vshrl.u32 %v7617, 7
  %v7619 = vsub.s32 %v7616, %v7618
  %v7620 = vrot.slane %v7610, %v7619
  %v7622 = vunpack.c.l.s4 1966171168
  %v7623 = vunpack.c.0.s8 %v7622
  %v7624 = vlaneseq
  %v7625 = vshrl.u32 %v7624, 7
  %v7626 = vsub.s32 %v7623, %v7625
  %v7627 = vrot.slane %v7611, %v7626
  %v7629 = vunpack.c.l.s4 1966171168
  %v7630 = vunpack.c.0.s8 %v7629
  %v7631 = vlaneseq
  %v7632 = vshrl.u32 %v7631, 7
  %v7633 = vsub.s32 %v7630, %v7632
  %v7634 = vrot.slane %v7612, %v7633
  %v7636 = vunpack.c.l.s4 1966171168
  %v7637 = vunpack.c.0.s8 %v7636
  %v7638 = vlaneseq
  %v7639 = vshrl.u32 %v7638, 7
  %v7640 = vsub.s32 %v7637, %v7639
  %v7641 = vrot.slane %v7613, %v7640
  %v7642 = vcombine.low %v7620, %v7627
  %v7643 = vcombine.low %v7634, %v7641
  %v7645 = vunpack.c.l.s4 1966171168
  %v7646 = vunpack.c.0.s8 %v7645
  %v7647 = vlaneseq
  %v7648 = vshrl.u32 %v7647, 7
  %v7649 = vsub.s32 %v7646, %v7648
  %v7650 = vrot.slane %v7642, %v7649
  %v7652 = vunpack.c.l.s4 1966171168
  %v7653 = vunpack.c.0.s8 %v7652
  %v7654 = vlaneseq
  %v7655 = vshrl.u32 %v7654, 7
  %v7656 = vsub.s32 %v7653, %v7655
  %v7657 = vrot.slane %v7643, %v7656
  %v7658 = vcombine.low %v7650, %v7657
  %v7659 = vcombine.low %v6472, %v6474
  %v7660 = vcombine.low %v6457, %v6471
  %v7661 = vcombine.low %v6473, %v6498
  %v7662 = vcombine.low %v6512, %v6520
  %v7664 = vunpack.c.l.s4 1966171168
  %v7665 = vunpack.c.0.s8 %v7664
  %v7666 = vlaneseq
  %v7667 = vshrl.u32 %v7666, 7
  %v7668 = vsub.s32 %v7665, %v7667
  %v7669 = vrot.slane %v7659, %v7668
  %v7671 = vunpack.c.l.s4 1966171168
  %v7672 = vunpack.c.0.s8 %v7671
  %v7673 = vlaneseq
  %v7674 = vshrl.u32 %v7673, 7
  %v7675 = vsub.s32 %v7672, %v7674
  %v7676 = vrot.slane %v7660, %v7675
  %v7678 = vunpack.c.l.s4 1966171168
  %v7679 = vunpack.c.0.s8 %v7678
  %v7680 = vlaneseq
  %v7681 = vshrl.u32 %v7680, 7
  %v7682 = vsub.s32 %v7679, %v7681
  %v7683 = vrot.slane %v7661, %v7682
  %v7685 = vunpack.c.l.s4 1966171168
  %v7686 = vunpack.c.0.s8 %v7685
  %v7687 = vlaneseq
  %v7688 = vshrl.u32 %v7687, 7
  %v7689 = vsub.s32 %v7686, %v7688
  %v7690 = vrot.slane %v7662, %v7689
  %v7691 = vcombine.low %v7669, %v7676
  %v7692 = vcombine.low %v7683, %v7690
  %v7694 = vunpack.c.l.s4 1966171168
  %v7695 = vunpack.c.0.s8 %v7694
  %v7696 = vlaneseq
  %v7697 = vshrl.u32 %v7696, 7
  %v7698 = vsub.s32 %v7695, %v7697
  %v7699 = vrot.slane %v7691, %v7698
  %v7701 = vunpack.c.l.s4 1966171168
  %v7702 = vunpack.c.0.s8 %v7701
  %v7703 = vlaneseq
  %v7704 = vshrl.u32 %v7703, 7
  %v7705 = vsub.s32 %v7702, %v7704
  %v7706 = vrot.slane %v7692, %v7705
  %v7707 = vcombine.low %v7699, %v7706
  %v7708 = vcombine.low %v6522, %v6505
  %v7709 = vcombine.low %v6519, %v6521
  %v7711 = vunpack.c.l.s4 1966171168
  %v7712 = vunpack.c.0.s8 %v7711
  %v7713 = vlaneseq
  %v7714 = vshrl.u32 %v7713, 7
  %v7715 = vsub.s32 %v7712, %v7714
  %v7716 = vrot.slane %v7708, %v7715
  %v7718 = vunpack.c.l.s4 1966171168
  %v7719 = vunpack.c.0.s8 %v7718
  %v7720 = vlaneseq
  %v7721 = vshrl.u32 %v7720, 7
  %v7722 = vsub.s32 %v7719, %v7721
  %v7723 = vrot.slane %v7709, %v7722
  %v7724 = vcombine.low %v7716, %v7723
  %v7726 = vunpack.c.l.s4 1966171168
  %v7727 = vunpack.c.0.s8 %v7726
  %v7728 = vlaneseq
  %v7729 = vshrl.u32 %v7728, 7
  %v7730 = vsub.s32 %v7727, %v7729
  %v7731 = vrot.slane %v7724, %v7730
  %v7741 = vunpack.c.l.b16 %v6523
  %v7742 = vunpack.c.l.b16 %v6524
  %v7743 = vunpack.c.l.b16 %v6525
  %v7744 = vunpack.c.l.b16 %v6526
  %v7745 = vunpack.c.l.b16 %v6527
  %v7746 = vunpack.c.l.b16 %v6528
  %v7747 = vunpack.c.l.b16 %v6529
  %v7748 = vunpack.c.l.b16 %v6530
  %v7749 = vunpack.c.l.b16 %v6531
  %v7750 = vpack.c.b16 %v7742, %v7741
  %v7751 = vpack.c.b16 %v7744, %v7743
  %v7752 = vpack.c.b16 %v7746, %v7745
  %v7753 = vpack.c.b16 %v7748, %v7747
  %v7754 = vpack.c.b16 %v7749, %v7749
  %vm7759 = vcmask 588800
  %v7761 = vsel %vm7759, %v6580, 0
  %v7764 = vsel %vm7759, %v6629, 0
  %v7767 = vsel %vm7759, %v6678, 0
  %v7770 = vsel %vm7759, %v6727, 0
  %v7773 = vsel %vm7759, %v6776, 0
  %v7776 = vsel %vm7759, %v6825, 0
  %v7779 = vsel %vm7759, %v6874, 0
  %v7782 = vsel %vm7759, %v6923, 0
  %v7785 = vsel %vm7759, %v6972, 0
  %v7788 = vsel %vm7759, %v7021, 0
  %v7791 = vsel %vm7759, %v7070, 0
  %v7794 = vsel %vm7759, %v7119, 0
  %v7797 = vsel %vm7759, %v7168, 0
  %v7800 = vsel %vm7759, %v7217, 0
  %v7803 = vsel %vm7759, %v7266, 0
  %v7806 = vsel %vm7759, %v7315, 0
  %v7809 = vsel %vm7759, %v7364, 0
  %v7812 = vsel %vm7759, %v7413, 0
  %v7815 = vsel %vm7759, %v7462, 0
  %v7818 = vsel %vm7759, %v7511, 0
  %v7821 = vsel %vm7759, %v7560, 0
  %v7824 = vsel %vm7759, %v7609, 0
  %v7827 = vsel %vm7759, %v7658, 0
  %v7830 = vsel %vm7759, %v7707, 0
  %v7833 = vsel %vm7759, %v7731, 0
  %v7836 = vsel %vm125, %v7754, 0
  %7838 = vmatprep.subr.bf16.mxu0 0
  %7839 = vmatpush1.bf16.msra.mxu0 %v7750
  %7840 = vmatprep.subr.bf16.mxu0 0
  %7841 = vmatpush1.bf16.msra.mxu0 %v7751
  %7842 = vmatprep.subr.bf16.mxu0 0
  %7843 = vmatpush1.bf16.msra.mxu0 %v7752
  %7844 = vmatprep.subr.bf16.mxu0 0
  %7845 = vmatpush1.bf16.msra.mxu0 %v7753
  %7846 = vmatprep.subr.bf16.mxu0 0
  %7847 = vmatpush1.bf16.msra.mxu0 %v7836
  %7848 = vmatprep.subr.bf16.mxu0 0
  %7849 = vmatpush1.bf16.msra.mxu0 0
  %7850 = vmatprep.subr.bf16.mxu0 0
  %7851 = vmatpush1.bf16.msra.mxu0 0
  %7852 = vmatprep.subr.bf16.mxu0 0
  %7853 = vmatpush1.bf16.msra.mxu0 0
  %7854 = vmatprep.subr.bf16.mxu0 0
  %7855 = vmatpush1.bf16.msra.mxu0 0
  %7856 = vmatprep.subr.bf16.mxu0 0
  %7857 = vmatpush1.bf16.msra.mxu0 0
  %7858 = vmatprep.subr.bf16.mxu0 0
  %7859 = vmatpush1.bf16.msra.mxu0 0
  %7860 = vmatprep.subr.bf16.mxu0 0
  %7861 = vmatpush1.bf16.msra.mxu0 0
  %7862 = vmatprep.subr.bf16.mxu0 0
  %7863 = vmatpush1.bf16.msra.mxu0 0
  %7864 = vmatprep.subr.bf16.mxu0 0
  %7865 = vmatpush1.bf16.msra.mxu0 0
  %7866 = vmatprep.subr.bf16.mxu0 0
  %7867 = vmatpush1.bf16.msra.mxu0 0
  %7868 = vmatprep.subr.bf16.mxu0 0
  %7869 = vmatpush1.bf16.msra.mxu0 0
  %7870 = vmatprep.mubr.bf16.mxu0 0
  %7871 = vmatmul.mubr.bf16.gmra.mrb[0].mxu0 %v7761
  %v7872 = vpop.f32.mrb[0].mxu0
  %v7873 = vadd.f32 0.0, %v7872
  %v7874 = vpop.f32.mrb[0].mxu0
  %v7875 = vpop.f32.mrb[0].mxu0
  %v7876 = vadd.f32 0.0, %v7875
  %v7877 = vpop.f32.mrb[0].mxu0
  %7878 = vmatprep.mubr.bf16.mxu0 0
  %7879 = vmatmul.mubr.bf16.gmra.mrb[0].mxu0 %v7764
  %v7880 = vpop.f32.mrb[0].mxu0
  %v7881 = vadd.f32 0.0, %v7880
  %v7882 = vpop.f32.mrb[0].mxu0
  %v7883 = vpop.f32.mrb[0].mxu0
  %v7884 = vadd.f32 0.0, %v7883
  %v7885 = vpop.f32.mrb[0].mxu0
  %7886 = vmatprep.mubr.bf16.mxu0 0
  %7887 = vmatmul.mubr.bf16.gmra.mrb[0].mxu0 %v7767
  %v7888 = vpop.f32.mrb[0].mxu0
  %v7889 = vadd.f32 0.0, %v7888
  %v7890 = vpop.f32.mrb[0].mxu0
  %v7891 = vpop.f32.mrb[0].mxu0
  %v7892 = vadd.f32 0.0, %v7891
  %v7893 = vpop.f32.mrb[0].mxu0
  %7894 = vmatprep.mubr.bf16.mxu0 0
  %7895 = vmatmul.mubr.bf16.gmra.mrb[0].mxu0 %v7770
  %v7896 = vpop.f32.mrb[0].mxu0
  %v7897 = vadd.f32 0.0, %v7896
  %v7898 = vpop.f32.mrb[0].mxu0
  %v7899 = vpop.f32.mrb[0].mxu0
  %v7900 = vadd.f32 0.0, %v7899
  %v7901 = vpop.f32.mrb[0].mxu0
  %7902 = vmatprep.mubr.bf16.mxu0 0
  %7903 = vmatmul.mubr.bf16.gmra.mrb[0].mxu0 %v7773
  %v7904 = vpop.f32.mrb[0].mxu0
  %v7905 = vadd.f32 0.0, %v7904
  %v7906 = vpop.f32.mrb[0].mxu0
  %v7907 = vpop.f32.mrb[0].mxu0
  %v7908 = vadd.f32 0.0, %v7907
  %v7909 = vpop.f32.mrb[0].mxu0
  %7910 = vmatprep.mubr.bf16.mxu0 0
  %7911 = vmatmul.mubr.bf16.gmra.mrb[0].mxu0 %v7776
  %v7912 = vpop.f32.mrb[0].mxu0
  %v7913 = vadd.f32 0.0, %v7912
  %v7914 = vpop.f32.mrb[0].mxu0
  %v7915 = vpop.f32.mrb[0].mxu0
  %v7916 = vadd.f32 0.0, %v7915
  %v7917 = vpop.f32.mrb[0].mxu0
  %7918 = vmatprep.mubr.bf16.mxu0 0
  %7919 = vmatmul.mubr.bf16.gmra.mrb[0].mxu0 %v7779
  %v7920 = vpop.f32.mrb[0].mxu0
  %v7921 = vadd.f32 0.0, %v7920
  %v7922 = vpop.f32.mrb[0].mxu0
  %v7923 = vpop.f32.mrb[0].mxu0
  %v7924 = vadd.f32 0.0, %v7923
  %v7925 = vpop.f32.mrb[0].mxu0
  %7926 = vmatprep.mubr.bf16.mxu0 0
  %7927 = vmatmul.mubr.bf16.gmra.mrb[0].mxu0 %v7782
  %v7928 = vpop.f32.mrb[0].mxu0
  %v7929 = vadd.f32 0.0, %v7928
  %v7930 = vpop.f32.mrb[0].mxu0
  %v7931 = vpop.f32.mrb[0].mxu0
  %v7932 = vadd.f32 0.0, %v7931
  %v7933 = vpop.f32.mrb[0].mxu0
  %7934 = vmatprep.mubr.bf16.mxu0 0
  %7935 = vmatmul.mubr.bf16.gmra.mrb[0].mxu0 %v7785
  %v7936 = vpop.f32.mrb[0].mxu0
  %v7937 = vadd.f32 0.0, %v7936
  %v7938 = vpop.f32.mrb[0].mxu0
  %v7939 = vpop.f32.mrb[0].mxu0
  %v7940 = vadd.f32 0.0, %v7939
  %v7941 = vpop.f32.mrb[0].mxu0
  %7942 = vmatprep.mubr.bf16.mxu0 0
  %7943 = vmatmul.mubr.bf16.gmra.mrb[0].mxu0 %v7788
  %v7944 = vpop.f32.mrb[0].mxu0
  %v7945 = vadd.f32 0.0, %v7944
  %v7946 = vpop.f32.mrb[0].mxu0
  %v7947 = vpop.f32.mrb[0].mxu0
  %v7948 = vadd.f32 0.0, %v7947
  %v7949 = vpop.f32.mrb[0].mxu0
  %7950 = vmatprep.mubr.bf16.mxu0 0
  %7951 = vmatmul.mubr.bf16.gmra.mrb[0].mxu0 %v7791
  %v7952 = vpop.f32.mrb[0].mxu0
  %v7953 = vadd.f32 0.0, %v7952
  %v7954 = vpop.f32.mrb[0].mxu0
  %v7955 = vpop.f32.mrb[0].mxu0
  %v7956 = vadd.f32 0.0, %v7955
  %v7957 = vpop.f32.mrb[0].mxu0
  %7958 = vmatprep.mubr.bf16.mxu0 0
  %7959 = vmatmul.mubr.bf16.gmra.mrb[0].mxu0 %v7794
  %v7960 = vpop.f32.mrb[0].mxu0
  %v7961 = vadd.f32 0.0, %v7960
  %v7962 = vpop.f32.mrb[0].mxu0
  %v7963 = vpop.f32.mrb[0].mxu0
  %v7964 = vadd.f32 0.0, %v7963
  %v7965 = vpop.f32.mrb[0].mxu0
  %7966 = vmatprep.mubr.bf16.mxu0 0
  %7967 = vmatmul.mubr.bf16.gmra.mrb[0].mxu0 %v7797
  %v7968 = vpop.f32.mrb[0].mxu0
  %v7969 = vadd.f32 0.0, %v7968
  %v7970 = vpop.f32.mrb[0].mxu0
  %v7971 = vpop.f32.mrb[0].mxu0
  %v7972 = vadd.f32 0.0, %v7971
  %v7973 = vpop.f32.mrb[0].mxu0
  %7974 = vmatprep.mubr.bf16.mxu0 0
  %7975 = vmatmul.mubr.bf16.gmra.mrb[0].mxu0 %v7800
  %v7976 = vpop.f32.mrb[0].mxu0
  %v7977 = vadd.f32 0.0, %v7976
  %v7978 = vpop.f32.mrb[0].mxu0
  %v7979 = vpop.f32.mrb[0].mxu0
  %v7980 = vadd.f32 0.0, %v7979
  %v7981 = vpop.f32.mrb[0].mxu0
  %7982 = vmatprep.mubr.bf16.mxu0 0
  %7983 = vmatmul.mubr.bf16.gmra.mrb[0].mxu0 %v7803
  %v7984 = vpop.f32.mrb[0].mxu0
  %v7985 = vadd.f32 0.0, %v7984
  %v7986 = vpop.f32.mrb[0].mxu0
  %v7987 = vpop.f32.mrb[0].mxu0
  %v7988 = vadd.f32 0.0, %v7987
  %v7989 = vpop.f32.mrb[0].mxu0
  %7990 = vmatprep.mubr.bf16.mxu0 0
  %7991 = vmatmul.mubr.bf16.gmra.mrb[0].mxu0 %v7806
  %v7992 = vpop.f32.mrb[0].mxu0
  %v7993 = vadd.f32 0.0, %v7992
  %v7994 = vpop.f32.mrb[0].mxu0
  %v7995 = vpop.f32.mrb[0].mxu0
  %v7996 = vadd.f32 0.0, %v7995
  %v7997 = vpop.f32.mrb[0].mxu0
  %7998 = vmatprep.mubr.bf16.mxu0 0
  %7999 = vmatmul.mubr.bf16.gmra.mrb[0].mxu0 %v7809
  %v8000 = vpop.f32.mrb[0].mxu0
  %v8001 = vadd.f32 0.0, %v8000
  %v8002 = vpop.f32.mrb[0].mxu0
  %v8003 = vpop.f32.mrb[0].mxu0
  %v8004 = vadd.f32 0.0, %v8003
  %v8005 = vpop.f32.mrb[0].mxu0
  %8006 = vmatprep.mubr.bf16.mxu0 0
  %8007 = vmatmul.mubr.bf16.gmra.mrb[0].mxu0 %v7812
  %v8008 = vpop.f32.mrb[0].mxu0
  %v8009 = vadd.f32 0.0, %v8008
  %v8010 = vpop.f32.mrb[0].mxu0
  %v8011 = vpop.f32.mrb[0].mxu0
  %v8012 = vadd.f32 0.0, %v8011
  %v8013 = vpop.f32.mrb[0].mxu0
  %8014 = vmatprep.mubr.bf16.mxu0 0
  %8015 = vmatmul.mubr.bf16.gmra.mrb[0].mxu0 %v7815
  %v8016 = vpop.f32.mrb[0].mxu0
  %v8017 = vadd.f32 0.0, %v8016
  %v8018 = vpop.f32.mrb[0].mxu0
  %v8019 = vpop.f32.mrb[0].mxu0
  %v8020 = vadd.f32 0.0, %v8019
  %v8021 = vpop.f32.mrb[0].mxu0
  %8022 = vmatprep.mubr.bf16.mxu0 0
  %8023 = vmatmul.mubr.bf16.gmra.mrb[0].mxu0 %v7818
  %v8024 = vpop.f32.mrb[0].mxu0
  %v8025 = vadd.f32 0.0, %v8024
  %v8026 = vpop.f32.mrb[0].mxu0
  %v8027 = vpop.f32.mrb[0].mxu0
  %v8028 = vadd.f32 0.0, %v8027
  %v8029 = vpop.f32.mrb[0].mxu0
  %8030 = vmatprep.mubr.bf16.mxu0 0
  %8031 = vmatmul.mubr.bf16.gmra.mrb[0].mxu0 %v7821
  %v8032 = vpop.f32.mrb[0].mxu0
  %v8033 = vadd.f32 0.0, %v8032
  %v8034 = vpop.f32.mrb[0].mxu0
  %v8035 = vpop.f32.mrb[0].mxu0
  %v8036 = vadd.f32 0.0, %v8035
  %v8037 = vpop.f32.mrb[0].mxu0
  %8038 = vmatprep.mubr.bf16.mxu0 0
  %8039 = vmatmul.mubr.bf16.gmra.mrb[0].mxu0 %v7824
  %v8040 = vpop.f32.mrb[0].mxu0
  %v8041 = vadd.f32 0.0, %v8040
  %v8042 = vpop.f32.mrb[0].mxu0
  %v8043 = vpop.f32.mrb[0].mxu0
  %v8044 = vadd.f32 0.0, %v8043
  %v8045 = vpop.f32.mrb[0].mxu0
  %8046 = vmatprep.mubr.bf16.mxu0 0
  %8047 = vmatmul.mubr.bf16.gmra.mrb[0].mxu0 %v7827
  %v8048 = vpop.f32.mrb[0].mxu0
  %v8049 = vadd.f32 0.0, %v8048
  %v8050 = vpop.f32.mrb[0].mxu0
  %v8051 = vpop.f32.mrb[0].mxu0
  %v8052 = vadd.f32 0.0, %v8051
  %v8053 = vpop.f32.mrb[0].mxu0
  %8054 = vmatprep.mubr.bf16.mxu0 0
  %8055 = vmatmul.mubr.bf16.gmra.mrb[0].mxu0 %v7830
  %v8056 = vpop.f32.mrb[0].mxu0
  %v8057 = vadd.f32 0.0, %v8056
  %v8058 = vpop.f32.mrb[0].mxu0
  %v8059 = vpop.f32.mrb[0].mxu0
  %v8060 = vadd.f32 0.0, %v8059
  %v8061 = vpop.f32.mrb[0].mxu0
  %8062 = vmatprep.mubr.bf16.mxu0 0
  %8063 = vmatmul.mubr.bf16.gmra.mrb[0].mxu0 %v7833
  %v8064 = vpop.f32.mrb[0].mxu0
  %v8065 = vadd.f32 0.0, %v8064
  %v8066 = vpop.f32.mrb[0].mxu0
  %v8067 = vpop.f32.mrb[0].mxu0
  %v8068 = vpop.f32.mrb[0].mxu0
  %8069 = vdwg.mxu0
  %v8070 = vld [vmem:[%s5] sm:$0x1]
  %v8071 = vld [vmem:[%s6] sm:$0x1]
  %v8072 = vsel %vm4285, %v7873, 0.0
  %v8073 = vsel %vm4285, %v7876, 0.0
  %v8074 = vadd.f32 %v8072, %v8073
  %v8075 = vsel %vm4285, %v7881, 0.0
  %v8076 = vadd.f32 %v8074, %v8075
  %v8077 = vsel %vm4285, %v7884, 0.0
  %v8078 = vadd.f32 %v8076, %v8077
  %v8079 = vsel %vm4285, %v7889, 0.0
  %v8080 = vadd.f32 %v8078, %v8079
  %v8081 = vsel %vm4285, %v7892, 0.0
  %v8082 = vadd.f32 %v8080, %v8081
  %v8083 = vsel %vm4285, %v7897, 0.0
  %v8084 = vadd.f32 %v8082, %v8083
  %v8085 = vsel %vm4285, %v7900, 0.0
  %v8086 = vadd.f32 %v8084, %v8085
  %v8087 = vsel %vm4285, %v7905, 0.0
  %v8088 = vadd.f32 %v8086, %v8087
  %v8089 = vsel %vm4285, %v7908, 0.0
  %v8090 = vadd.f32 %v8088, %v8089
  %v8091 = vsel %vm4285, %v7913, 0.0
  %v8092 = vadd.f32 %v8090, %v8091
  %v8093 = vsel %vm4285, %v7916, 0.0
  %v8094 = vadd.f32 %v8092, %v8093
  %v8095 = vsel %vm4285, %v7921, 0.0
  %v8096 = vadd.f32 %v8094, %v8095
  %v8097 = vsel %vm4285, %v7924, 0.0
  %v8098 = vadd.f32 %v8096, %v8097
  %v8099 = vsel %vm4285, %v7929, 0.0
  %v8100 = vadd.f32 %v8098, %v8099
  %v8101 = vsel %vm4285, %v7932, 0.0
  %v8102 = vadd.f32 %v8100, %v8101
  %v8103 = vsel %vm4285, %v7937, 0.0
  %v8104 = vadd.f32 %v8102, %v8103
  %v8105 = vsel %vm4285, %v7940, 0.0
  %v8106 = vadd.f32 %v8104, %v8105
  %v8107 = vsel %vm4285, %v7945, 0.0
  %v8108 = vadd.f32 %v8106, %v8107
  %v8109 = vsel %vm4285, %v7948, 0.0
  %v8110 = vadd.f32 %v8108, %v8109
  %v8111 = vsel %vm4285, %v7953, 0.0
  %v8112 = vadd.f32 %v8110, %v8111
  %v8113 = vsel %vm4285, %v7956, 0.0
  %v8114 = vadd.f32 %v8112, %v8113
  %v8115 = vsel %vm4285, %v7961, 0.0
  %v8116 = vadd.f32 %v8114, %v8115
  %v8117 = vsel %vm4285, %v7964, 0.0
  %v8118 = vadd.f32 %v8116, %v8117
  %v8119 = vsel %vm4285, %v7969, 0.0
  %v8120 = vadd.f32 %v8118, %v8119
  %v8121 = vsel %vm4285, %v7972, 0.0
  %v8122 = vadd.f32 %v8120, %v8121
  %v8123 = vsel %vm4285, %v7977, 0.0
  %v8124 = vadd.f32 %v8122, %v8123
  %v8125 = vsel %vm4285, %v7980, 0.0
  %v8126 = vadd.f32 %v8124, %v8125
  %v8127 = vsel %vm4285, %v7985, 0.0
  %v8128 = vadd.f32 %v8126, %v8127
  %v8129 = vsel %vm4285, %v7988, 0.0
  %v8130 = vadd.f32 %v8128, %v8129
  %v8131 = vsel %vm4285, %v7993, 0.0
  %v8132 = vadd.f32 %v8130, %v8131
  %v8133 = vsel %vm4285, %v7996, 0.0
  %v8134 = vadd.f32 %v8132, %v8133
  %v8135 = vsel %vm4285, %v8001, 0.0
  %v8136 = vadd.f32 %v8134, %v8135
  %v8137 = vsel %vm4285, %v8004, 0.0
  %v8138 = vadd.f32 %v8136, %v8137
  %v8139 = vsel %vm4285, %v8009, 0.0
  %v8140 = vadd.f32 %v8138, %v8139
  %v8141 = vsel %vm4285, %v8012, 0.0
  %v8142 = vadd.f32 %v8140, %v8141
  %v8143 = vsel %vm4285, %v8017, 0.0
  %v8144 = vadd.f32 %v8142, %v8143
  %v8145 = vsel %vm4285, %v8020, 0.0
  %v8146 = vadd.f32 %v8144, %v8145
  %v8147 = vsel %vm4285, %v8025, 0.0
  %v8148 = vadd.f32 %v8146, %v8147
  %v8149 = vsel %vm4285, %v8028, 0.0
  %v8150 = vadd.f32 %v8148, %v8149
  %v8151 = vsel %vm4285, %v8033, 0.0
  %v8152 = vadd.f32 %v8150, %v8151
  %v8153 = vsel %vm4285, %v8036, 0.0
  %v8154 = vadd.f32 %v8152, %v8153
  %v8155 = vsel %vm4285, %v8041, 0.0
  %v8156 = vadd.f32 %v8154, %v8155
  %v8157 = vsel %vm4285, %v8044, 0.0
  %v8158 = vadd.f32 %v8156, %v8157
  %v8159 = vsel %vm4285, %v8049, 0.0
  %v8160 = vadd.f32 %v8158, %v8159
  %v8161 = vsel %vm4285, %v8052, 0.0
  %v8162 = vadd.f32 %v8160, %v8161
  %v8163 = vsel %vm4285, %v8057, 0.0
  %v8164 = vadd.f32 %v8162, %v8163
  %v8165 = vsel %vm4285, %v8060, 0.0
  %v8166 = vadd.f32 %v8164, %v8165
  %v8167 = vsel %vm4285, %v8065, 0.0
  %v8168 = vadd.f32 %v8166, %v8167
  %v8169 = vrot.slane %v8168, 4
  %v8170 = vadd.f32 %v8168, %v8169
  %v8171 = vrot.slane %v8170, 2
  %v8172 = vadd.f32 %v8170, %v8171
  %v8173 = vrot.slane %v8172, 1
  %v8174 = vadd.f32 %v8172, %v8173
  %v8175 = vrcp.pop 392.0
  %v8176 = vmul.f32 %v8174, %v8175
  %v8177 = vsub.f32 %v7873, %v8176
  %v8178 = vsub.f32 %v7876, %v8176
  %v8179 = vsub.f32 %v7881, %v8176
  %v8180 = vsub.f32 %v7884, %v8176
  %v8181 = vsub.f32 %v7889, %v8176
  %v8182 = vsub.f32 %v7892, %v8176
  %v8183 = vsub.f32 %v7897, %v8176
  %v8184 = vsub.f32 %v7900, %v8176
  %v8185 = vsub.f32 %v7905, %v8176
  %v8186 = vsub.f32 %v7908, %v8176
  %v8187 = vsub.f32 %v7913, %v8176
  %v8188 = vsub.f32 %v7916, %v8176
  %v8189 = vsub.f32 %v7921, %v8176
  %v8190 = vsub.f32 %v7924, %v8176
  %v8191 = vsub.f32 %v7929, %v8176
  %v8192 = vsub.f32 %v7932, %v8176
  %v8193 = vsub.f32 %v7937, %v8176
  %v8194 = vsub.f32 %v7940, %v8176
  %v8195 = vsub.f32 %v7945, %v8176
  %v8196 = vsub.f32 %v7948, %v8176
  %v8197 = vsub.f32 %v7953, %v8176
  %v8198 = vsub.f32 %v7956, %v8176
  %v8199 = vsub.f32 %v7961, %v8176
  %v8200 = vsub.f32 %v7964, %v8176
  %v8201 = vsub.f32 %v7969, %v8176
  %v8202 = vsub.f32 %v7972, %v8176
  %v8203 = vsub.f32 %v7977, %v8176
  %v8204 = vsub.f32 %v7980, %v8176
  %v8205 = vsub.f32 %v7985, %v8176
  %v8206 = vsub.f32 %v7988, %v8176
  %v8207 = vsub.f32 %v7993, %v8176
  %v8208 = vsub.f32 %v7996, %v8176
  %v8209 = vsub.f32 %v8001, %v8176
  %v8210 = vsub.f32 %v8004, %v8176
  %v8211 = vsub.f32 %v8009, %v8176
  %v8212 = vsub.f32 %v8012, %v8176
  %v8213 = vsub.f32 %v8017, %v8176
  %v8214 = vsub.f32 %v8020, %v8176
  %v8215 = vsub.f32 %v8025, %v8176
  %v8216 = vsub.f32 %v8028, %v8176
  %v8217 = vsub.f32 %v8033, %v8176
  %v8218 = vsub.f32 %v8036, %v8176
  %v8219 = vsub.f32 %v8041, %v8176
  %v8220 = vsub.f32 %v8044, %v8176
  %v8221 = vsub.f32 %v8049, %v8176
  %v8222 = vsub.f32 %v8052, %v8176
  %v8223 = vsub.f32 %v8057, %v8176
  %v8224 = vsub.f32 %v8060, %v8176
  %v8225 = vsub.f32 %v8065, %v8176
  %v8226 = vmul.f32 %v8177, %v8177
  %v8227 = vmul.f32 %v8178, %v8178
  %v8228 = vmul.f32 %v8179, %v8179
  %v8229 = vmul.f32 %v8180, %v8180
  %v8230 = vmul.f32 %v8181, %v8181
  %v8231 = vmul.f32 %v8182, %v8182
  %v8232 = vmul.f32 %v8183, %v8183
  %v8233 = vmul.f32 %v8184, %v8184
  %v8234 = vmul.f32 %v8185, %v8185
  %v8235 = vmul.f32 %v8186, %v8186
  %v8236 = vmul.f32 %v8187, %v8187
  %v8237 = vmul.f32 %v8188, %v8188
  %v8238 = vmul.f32 %v8189, %v8189
  %v8239 = vmul.f32 %v8190, %v8190
  %v8240 = vmul.f32 %v8191, %v8191
  %v8241 = vmul.f32 %v8192, %v8192
  %v8242 = vmul.f32 %v8193, %v8193
  %v8243 = vmul.f32 %v8194, %v8194
  %v8244 = vmul.f32 %v8195, %v8195
  %v8245 = vmul.f32 %v8196, %v8196
  %v8246 = vmul.f32 %v8197, %v8197
  %v8247 = vmul.f32 %v8198, %v8198
  %v8248 = vmul.f32 %v8199, %v8199
  %v8249 = vmul.f32 %v8200, %v8200
  %v8250 = vmul.f32 %v8201, %v8201
  %v8251 = vmul.f32 %v8202, %v8202
  %v8252 = vmul.f32 %v8203, %v8203
  %v8253 = vmul.f32 %v8204, %v8204
  %v8254 = vmul.f32 %v8205, %v8205
  %v8255 = vmul.f32 %v8206, %v8206
  %v8256 = vmul.f32 %v8207, %v8207
  %v8257 = vmul.f32 %v8208, %v8208
  %v8258 = vmul.f32 %v8209, %v8209
  %v8259 = vmul.f32 %v8210, %v8210
  %v8260 = vmul.f32 %v8211, %v8211
  %v8261 = vmul.f32 %v8212, %v8212
  %v8262 = vmul.f32 %v8213, %v8213
  %v8263 = vmul.f32 %v8214, %v8214
  %v8264 = vmul.f32 %v8215, %v8215
  %v8265 = vmul.f32 %v8216, %v8216
  %v8266 = vmul.f32 %v8217, %v8217
  %v8267 = vmul.f32 %v8218, %v8218
  %v8268 = vmul.f32 %v8219, %v8219
  %v8269 = vmul.f32 %v8220, %v8220
  %v8270 = vmul.f32 %v8221, %v8221
  %v8271 = vmul.f32 %v8222, %v8222
  %v8272 = vmul.f32 %v8223, %v8223
  %v8273 = vmul.f32 %v8224, %v8224
  %v8274 = vmul.f32 %v8225, %v8225
  %v8275 = vsel %vm4285, %v8226, 0.0
  %v8276 = vsel %vm4285, %v8227, 0.0
  %v8277 = vadd.f32 %v8275, %v8276
  %v8278 = vsel %vm4285, %v8228, 0.0
  %v8279 = vadd.f32 %v8277, %v8278
  %v8280 = vsel %vm4285, %v8229, 0.0
  %v8281 = vadd.f32 %v8279, %v8280
  %v8282 = vsel %vm4285, %v8230, 0.0
  %v8283 = vadd.f32 %v8281, %v8282
  %v8284 = vsel %vm4285, %v8231, 0.0
  %v8285 = vadd.f32 %v8283, %v8284
  %v8286 = vsel %vm4285, %v8232, 0.0
  %v8287 = vadd.f32 %v8285, %v8286
  %v8288 = vsel %vm4285, %v8233, 0.0
  %v8289 = vadd.f32 %v8287, %v8288
  %v8290 = vsel %vm4285, %v8234, 0.0
  %v8291 = vadd.f32 %v8289, %v8290
  %v8292 = vsel %vm4285, %v8235, 0.0
  %v8293 = vadd.f32 %v8291, %v8292
  %v8294 = vsel %vm4285, %v8236, 0.0
  %v8295 = vadd.f32 %v8293, %v8294
  %v8296 = vsel %vm4285, %v8237, 0.0
  %v8297 = vadd.f32 %v8295, %v8296
  %v8298 = vsel %vm4285, %v8238, 0.0
  %v8299 = vadd.f32 %v8297, %v8298
  %v8300 = vsel %vm4285, %v8239, 0.0
  %v8301 = vadd.f32 %v8299, %v8300
  %v8302 = vsel %vm4285, %v8240, 0.0
  %v8303 = vadd.f32 %v8301, %v8302
  %v8304 = vsel %vm4285, %v8241, 0.0
  %v8305 = vadd.f32 %v8303, %v8304
  %v8306 = vsel %vm4285, %v8242, 0.0
  %v8307 = vadd.f32 %v8305, %v8306
  %v8308 = vsel %vm4285, %v8243, 0.0
  %v8309 = vadd.f32 %v8307, %v8308
  %v8310 = vsel %vm4285, %v8244, 0.0
  %v8311 = vadd.f32 %v8309, %v8310
  %v8312 = vsel %vm4285, %v8245, 0.0
  %v8313 = vadd.f32 %v8311, %v8312
  %v8314 = vsel %vm4285, %v8246, 0.0
  %v8315 = vadd.f32 %v8313, %v8314
  %v8316 = vsel %vm4285, %v8247, 0.0
  %v8317 = vadd.f32 %v8315, %v8316
  %v8318 = vsel %vm4285, %v8248, 0.0
  %v8319 = vadd.f32 %v8317, %v8318
  %v8320 = vsel %vm4285, %v8249, 0.0
  %v8321 = vadd.f32 %v8319, %v8320
  %v8322 = vsel %vm4285, %v8250, 0.0
  %v8323 = vadd.f32 %v8321, %v8322
  %v8324 = vsel %vm4285, %v8251, 0.0
  %v8325 = vadd.f32 %v8323, %v8324
  %v8326 = vsel %vm4285, %v8252, 0.0
  %v8327 = vadd.f32 %v8325, %v8326
  %v8328 = vsel %vm4285, %v8253, 0.0
  %v8329 = vadd.f32 %v8327, %v8328
  %v8330 = vsel %vm4285, %v8254, 0.0
  %v8331 = vadd.f32 %v8329, %v8330
  %v8332 = vsel %vm4285, %v8255, 0.0
  %v8333 = vadd.f32 %v8331, %v8332
  %v8334 = vsel %vm4285, %v8256, 0.0
  %v8335 = vadd.f32 %v8333, %v8334
  %v8336 = vsel %vm4285, %v8257, 0.0
  %v8337 = vadd.f32 %v8335, %v8336
  %v8338 = vsel %vm4285, %v8258, 0.0
  %v8339 = vadd.f32 %v8337, %v8338
  %v8340 = vsel %vm4285, %v8259, 0.0
  %v8341 = vadd.f32 %v8339, %v8340
  %v8342 = vsel %vm4285, %v8260, 0.0
  %v8343 = vadd.f32 %v8341, %v8342
  %v8344 = vsel %vm4285, %v8261, 0.0
  %v8345 = vadd.f32 %v8343, %v8344
  %v8346 = vsel %vm4285, %v8262, 0.0
  %v8347 = vadd.f32 %v8345, %v8346
  %v8348 = vsel %vm4285, %v8263, 0.0
  %v8349 = vadd.f32 %v8347, %v8348
  %v8350 = vsel %vm4285, %v8264, 0.0
  %v8351 = vadd.f32 %v8349, %v8350
  %v8352 = vsel %vm4285, %v8265, 0.0
  %v8353 = vadd.f32 %v8351, %v8352
  %v8354 = vsel %vm4285, %v8266, 0.0
  %v8355 = vadd.f32 %v8353, %v8354
  %v8356 = vsel %vm4285, %v8267, 0.0
  %v8357 = vadd.f32 %v8355, %v8356
  %v8358 = vsel %vm4285, %v8268, 0.0
  %v8359 = vadd.f32 %v8357, %v8358
  %v8360 = vsel %vm4285, %v8269, 0.0
  %v8361 = vadd.f32 %v8359, %v8360
  %v8362 = vsel %vm4285, %v8270, 0.0
  %v8363 = vadd.f32 %v8361, %v8362
  %v8364 = vsel %vm4285, %v8271, 0.0
  %v8365 = vadd.f32 %v8363, %v8364
  %v8366 = vsel %vm4285, %v8272, 0.0
  %v8367 = vadd.f32 %v8365, %v8366
  %v8368 = vsel %vm4285, %v8273, 0.0
  %v8369 = vadd.f32 %v8367, %v8368
  %v8370 = vsel %vm4285, %v8274, 0.0
  %v8371 = vadd.f32 %v8369, %v8370
  %v8372 = vrot.slane %v8371, 4
  %v8373 = vadd.f32 %v8371, %v8372
  %v8374 = vrot.slane %v8373, 2
  %v8375 = vadd.f32 %v8373, %v8374
  %v8376 = vrot.slane %v8375, 1
  %v8377 = vadd.f32 %v8375, %v8376
  %v8378 = vmul.f32 %v8377, %v8175
  %v8379 = vadd.f32 %v8378, 1e-05
  %v8380 = vrsqrt.pop %v8379
  %v8381 = vmul.f32 %v8177, %v8380
  %v8382 = vmul.f32 %v8178, %v8380
  %v8383 = vmul.f32 %v8179, %v8380
  %v8384 = vmul.f32 %v8180, %v8380
  %v8385 = vmul.f32 %v8181, %v8380
  %v8386 = vmul.f32 %v8182, %v8380
  %v8387 = vmul.f32 %v8183, %v8380
  %v8388 = vmul.f32 %v8184, %v8380
  %v8389 = vmul.f32 %v8185, %v8380
  %v8390 = vmul.f32 %v8186, %v8380
  %v8391 = vmul.f32 %v8187, %v8380
  %v8392 = vmul.f32 %v8188, %v8380
  %v8393 = vmul.f32 %v8189, %v8380
  %v8394 = vmul.f32 %v8190, %v8380
  %v8395 = vmul.f32 %v8191, %v8380
  %v8396 = vmul.f32 %v8192, %v8380
  %v8397 = vmul.f32 %v8193, %v8380
  %v8398 = vmul.f32 %v8194, %v8380
  %v8399 = vmul.f32 %v8195, %v8380
  %v8400 = vmul.f32 %v8196, %v8380
  %v8401 = vmul.f32 %v8197, %v8380
  %v8402 = vmul.f32 %v8198, %v8380
  %v8403 = vmul.f32 %v8199, %v8380
  %v8404 = vmul.f32 %v8200, %v8380
  %v8405 = vmul.f32 %v8201, %v8380
  %v8406 = vmul.f32 %v8202, %v8380
  %v8407 = vmul.f32 %v8203, %v8380
  %v8408 = vmul.f32 %v8204, %v8380
  %v8409 = vmul.f32 %v8205, %v8380
  %v8410 = vmul.f32 %v8206, %v8380
  %v8411 = vmul.f32 %v8207, %v8380
  %v8412 = vmul.f32 %v8208, %v8380
  %v8413 = vmul.f32 %v8209, %v8380
  %v8414 = vmul.f32 %v8210, %v8380
  %v8415 = vmul.f32 %v8211, %v8380
  %v8416 = vmul.f32 %v8212, %v8380
  %v8417 = vmul.f32 %v8213, %v8380
  %v8418 = vmul.f32 %v8214, %v8380
  %v8419 = vmul.f32 %v8215, %v8380
  %v8420 = vmul.f32 %v8216, %v8380
  %v8421 = vmul.f32 %v8217, %v8380
  %v8422 = vmul.f32 %v8218, %v8380
  %v8423 = vmul.f32 %v8219, %v8380
  %v8424 = vmul.f32 %v8220, %v8380
  %v8425 = vmul.f32 %v8221, %v8380
  %v8426 = vmul.f32 %v8222, %v8380
  %v8427 = vmul.f32 %v8223, %v8380
  %v8428 = vmul.f32 %v8224, %v8380
  %v8429 = vmul.f32 %v8225, %v8380
  %v8431 = vlaneseq
  %v8432 = vshrl.u32 %v8431, 7
  %v8433 = vsub.s32 0, %v8432
  %v8434 = vrot.slane %v8070, %v8433
  %v8436 = vmul.f32 %v8381, %v8434
  %v8437 = vmul.f32 %v8382, %v8434
  %v8438 = vmul.f32 %v8383, %v8434
  %v8439 = vmul.f32 %v8384, %v8434
  %v8440 = vmul.f32 %v8385, %v8434
  %v8441 = vmul.f32 %v8386, %v8434
  %v8442 = vmul.f32 %v8387, %v8434
  %v8443 = vmul.f32 %v8388, %v8434
  %v8444 = vmul.f32 %v8389, %v8434
  %v8445 = vmul.f32 %v8390, %v8434
  %v8446 = vmul.f32 %v8391, %v8434
  %v8447 = vmul.f32 %v8392, %v8434
  %v8448 = vmul.f32 %v8393, %v8434
  %v8449 = vmul.f32 %v8394, %v8434
  %v8450 = vmul.f32 %v8395, %v8434
  %v8451 = vmul.f32 %v8396, %v8434
  %v8452 = vmul.f32 %v8397, %v8434
  %v8453 = vmul.f32 %v8398, %v8434
  %v8454 = vmul.f32 %v8399, %v8434
  %v8455 = vmul.f32 %v8400, %v8434
  %v8456 = vmul.f32 %v8401, %v8434
  %v8457 = vmul.f32 %v8402, %v8434
  %v8458 = vmul.f32 %v8403, %v8434
  %v8459 = vmul.f32 %v8404, %v8434
  %v8460 = vmul.f32 %v8405, %v8434
  %v8461 = vmul.f32 %v8406, %v8434
  %v8462 = vmul.f32 %v8407, %v8434
  %v8463 = vmul.f32 %v8408, %v8434
  %v8464 = vmul.f32 %v8409, %v8434
  %v8465 = vmul.f32 %v8410, %v8434
  %v8466 = vmul.f32 %v8411, %v8434
  %v8467 = vmul.f32 %v8412, %v8434
  %v8468 = vmul.f32 %v8413, %v8434
  %v8469 = vmul.f32 %v8414, %v8434
  %v8470 = vmul.f32 %v8415, %v8434
  %v8471 = vmul.f32 %v8416, %v8434
  %v8472 = vmul.f32 %v8417, %v8434
  %v8473 = vmul.f32 %v8418, %v8434
  %v8474 = vmul.f32 %v8419, %v8434
  %v8475 = vmul.f32 %v8420, %v8434
  %v8476 = vmul.f32 %v8421, %v8434
  %v8477 = vmul.f32 %v8422, %v8434
  %v8478 = vmul.f32 %v8423, %v8434
  %v8479 = vmul.f32 %v8424, %v8434
  %v8480 = vmul.f32 %v8425, %v8434
  %v8481 = vmul.f32 %v8426, %v8434
  %v8482 = vmul.f32 %v8427, %v8434
  %v8483 = vmul.f32 %v8428, %v8434
  %v8484 = vmul.f32 %v8429, %v8434
  %v8486 = vlaneseq
  %v8487 = vshrl.u32 %v8486, 7
  %v8488 = vsub.s32 0, %v8487
  %v8489 = vrot.slane %v8071, %v8488
  %v8491 = vadd.f32 %v8436, %v8489
  %v8492 = vadd.f32 %v8437, %v8489
  %v8493 = vadd.f32 %v8438, %v8489
  %v8494 = vadd.f32 %v8439, %v8489
  %v8495 = vadd.f32 %v8440, %v8489
  %v8496 = vadd.f32 %v8441, %v8489
  %v8497 = vadd.f32 %v8442, %v8489
  %v8498 = vadd.f32 %v8443, %v8489
  %v8499 = vadd.f32 %v8444, %v8489
  %v8500 = vadd.f32 %v8445, %v8489
  %v8501 = vadd.f32 %v8446, %v8489
  %v8502 = vadd.f32 %v8447, %v8489
  %v8503 = vadd.f32 %v8448, %v8489
  %v8504 = vadd.f32 %v8449, %v8489
  %v8505 = vadd.f32 %v8450, %v8489
  %v8506 = vadd.f32 %v8451, %v8489
  %v8507 = vadd.f32 %v8452, %v8489
  %v8508 = vadd.f32 %v8453, %v8489
  %v8509 = vadd.f32 %v8454, %v8489
  %v8510 = vadd.f32 %v8455, %v8489
  %v8511 = vadd.f32 %v8456, %v8489
  %v8512 = vadd.f32 %v8457, %v8489
  %v8513 = vadd.f32 %v8458, %v8489
  %v8514 = vadd.f32 %v8459, %v8489
  %v8515 = vadd.f32 %v8460, %v8489
  %v8516 = vadd.f32 %v8461, %v8489
  %v8517 = vadd.f32 %v8462, %v8489
  %v8518 = vadd.f32 %v8463, %v8489
  %v8519 = vadd.f32 %v8464, %v8489
  %v8520 = vadd.f32 %v8465, %v8489
  %v8521 = vadd.f32 %v8466, %v8489
  %v8522 = vadd.f32 %v8467, %v8489
  %v8523 = vadd.f32 %v8468, %v8489
  %v8524 = vadd.f32 %v8469, %v8489
  %v8525 = vadd.f32 %v8470, %v8489
  %v8526 = vadd.f32 %v8471, %v8489
  %v8527 = vadd.f32 %v8472, %v8489
  %v8528 = vadd.f32 %v8473, %v8489
  %v8529 = vadd.f32 %v8474, %v8489
  %v8530 = vadd.f32 %v8475, %v8489
  %v8531 = vadd.f32 %v8476, %v8489
  %v8532 = vadd.f32 %v8477, %v8489
  %v8533 = vadd.f32 %v8478, %v8489
  %v8534 = vadd.f32 %v8479, %v8489
  %v8535 = vadd.f32 %v8480, %v8489
  %v8536 = vadd.f32 %v8481, %v8489
  %v8537 = vadd.f32 %v8482, %v8489
  %v8538 = vadd.f32 %v8483, %v8489
  %v8539 = vadd.f32 %v8484, %v8489
  %v8540 = vmax.f32 %v8491, 0.0
  %v8541 = vmax.f32 %v8492, 0.0
  %v8542 = vmax.f32 %v8493, 0.0
  %v8543 = vmax.f32 %v8494, 0.0
  %v8544 = vmax.f32 %v8495, 0.0
  %v8545 = vmax.f32 %v8496, 0.0
  %v8546 = vmax.f32 %v8497, 0.0
  %v8547 = vmax.f32 %v8498, 0.0
  %v8548 = vmax.f32 %v8499, 0.0
  %v8549 = vmax.f32 %v8500, 0.0
  %v8550 = vmax.f32 %v8501, 0.0
  %v8551 = vmax.f32 %v8502, 0.0
  %v8552 = vmax.f32 %v8503, 0.0
  %v8553 = vmax.f32 %v8504, 0.0
  %v8554 = vmax.f32 %v8505, 0.0
  %v8555 = vmax.f32 %v8506, 0.0
  %v8556 = vmax.f32 %v8507, 0.0
  %v8557 = vmax.f32 %v8508, 0.0
  %v8558 = vmax.f32 %v8509, 0.0
  %v8559 = vmax.f32 %v8510, 0.0
  %v8560 = vmax.f32 %v8511, 0.0
  %v8561 = vmax.f32 %v8512, 0.0
  %v8562 = vmax.f32 %v8513, 0.0
  %v8563 = vmax.f32 %v8514, 0.0
  %v8564 = vmax.f32 %v8515, 0.0
  %v8565 = vmax.f32 %v8516, 0.0
  %v8566 = vmax.f32 %v8517, 0.0
  %v8567 = vmax.f32 %v8518, 0.0
  %v8568 = vmax.f32 %v8519, 0.0
  %v8569 = vmax.f32 %v8520, 0.0
  %v8570 = vmax.f32 %v8521, 0.0
  %v8571 = vmax.f32 %v8522, 0.0
  %v8572 = vmax.f32 %v8523, 0.0
  %v8573 = vmax.f32 %v8524, 0.0
  %v8574 = vmax.f32 %v8525, 0.0
  %v8575 = vmax.f32 %v8526, 0.0
  %v8576 = vmax.f32 %v8527, 0.0
  %v8577 = vmax.f32 %v8528, 0.0
  %v8578 = vmax.f32 %v8529, 0.0
  %v8579 = vmax.f32 %v8530, 0.0
  %v8580 = vmax.f32 %v8531, 0.0
  %v8581 = vmax.f32 %v8532, 0.0
  %v8582 = vmax.f32 %v8533, 0.0
  %v8583 = vmax.f32 %v8534, 0.0
  %v8584 = vmax.f32 %v8535, 0.0
  %v8585 = vmax.f32 %v8536, 0.0
  %v8586 = vmax.f32 %v8537, 0.0
  %v8587 = vmax.f32 %v8538, 0.0
  %v8588 = vmax.f32 %v8539, 0.0
  %v8638 = vcombine.high %v8540, %v8540
  %v8640 = vunpack.c.l.s4 1983009808
  %v8641 = vunpack.c.0.s8 %v8640
  %v8642 = vlaneseq
  %v8643 = vshrl.u32 %v8642, 7
  %v8644 = vsub.s32 %v8641, %v8643
  %v8645 = vrot.slane %v8540, %v8644
  %v8647 = vunpack.c.l.s4 1983009808
  %v8648 = vunpack.c.0.s8 %v8647
  %v8649 = vlaneseq
  %v8650 = vshrl.u32 %v8649, 7
  %v8651 = vsub.s32 %v8648, %v8650
  %v8652 = vrot.slane %v8638, %v8651
  %v8653 = vcombine.high %v8645, %v8645
  %v8654 = vcombine.high %v8652, %v8652
  %v8655 = vcombine.high %v8541, %v8541
  %v8657 = vunpack.c.l.s4 1983009808
  %v8658 = vunpack.c.0.s8 %v8657
  %v8659 = vlaneseq
  %v8660 = vshrl.u32 %v8659, 7
  %v8661 = vsub.s32 %v8658, %v8660
  %v8662 = vrot.slane %v8541, %v8661
  %v8664 = vunpack.c.l.s4 1983009808
  %v8665 = vunpack.c.0.s8 %v8664
  %v8666 = vlaneseq
  %v8667 = vshrl.u32 %v8666, 7
  %v8668 = vsub.s32 %v8665, %v8667
  %v8669 = vrot.slane %v8655, %v8668
  %v8670 = vcombine.high %v8662, %v8662
  %v8671 = vcombine.high %v8669, %v8669
  %v8672 = vcombine.high %v8542, %v8542
  %v8674 = vunpack.c.l.s4 1983009808
  %v8675 = vunpack.c.0.s8 %v8674
  %v8676 = vlaneseq
  %v8677 = vshrl.u32 %v8676, 7
  %v8678 = vsub.s32 %v8675, %v8677
  %v8679 = vrot.slane %v8542, %v8678
  %v8681 = vunpack.c.l.s4 1983009808
  %v8682 = vunpack.c.0.s8 %v8681
  %v8683 = vlaneseq
  %v8684 = vshrl.u32 %v8683, 7
  %v8685 = vsub.s32 %v8682, %v8684
  %v8686 = vrot.slane %v8672, %v8685
  %v8687 = vcombine.high %v8679, %v8679
  %v8688 = vcombine.high %v8686, %v8686
  %v8689 = vcombine.high %v8543, %v8543
  %v8691 = vunpack.c.l.s4 1983009808
  %v8692 = vunpack.c.0.s8 %v8691
  %v8693 = vlaneseq
  %v8694 = vshrl.u32 %v8693, 7
  %v8695 = vsub.s32 %v8692, %v8694
  %v8696 = vrot.slane %v8543, %v8695
  %v8698 = vunpack.c.l.s4 1983009808
  %v8699 = vunpack.c.0.s8 %v8698
  %v8700 = vlaneseq
  %v8701 = vshrl.u32 %v8700, 7
  %v8702 = vsub.s32 %v8699, %v8701
  %v8703 = vrot.slane %v8689, %v8702
  %v8704 = vcombine.high %v8696, %v8696
  %v8705 = vcombine.high %v8703, %v8703
  %v8706 = vcombine.high %v8544, %v8544
  %v8708 = vunpack.c.l.s4 1983009808
  %v8709 = vunpack.c.0.s8 %v8708
  %v8710 = vlaneseq
  %v8711 = vshrl.u32 %v8710, 7
  %v8712 = vsub.s32 %v8709, %v8711
  %v8713 = vrot.slane %v8544, %v8712
  %v8715 = vunpack.c.l.s4 1983009808
  %v8716 = vunpack.c.0.s8 %v8715
  %v8717 = vlaneseq
  %v8718 = vshrl.u32 %v8717, 7
  %v8719 = vsub.s32 %v8716, %v8718
  %v8720 = vrot.slane %v8706, %v8719
  %v8721 = vcombine.high %v8713, %v8713
  %v8722 = vcombine.high %v8720, %v8720
  %v8723 = vcombine.high %v8545, %v8545
  %v8725 = vunpack.c.l.s4 1983009808
  %v8726 = vunpack.c.0.s8 %v8725
  %v8727 = vlaneseq
  %v8728 = vshrl.u32 %v8727, 7
  %v8729 = vsub.s32 %v8726, %v8728
  %v8730 = vrot.slane %v8545, %v8729
  %v8732 = vunpack.c.l.s4 1983009808
  %v8733 = vunpack.c.0.s8 %v8732
  %v8734 = vlaneseq
  %v8735 = vshrl.u32 %v8734, 7
  %v8736 = vsub.s32 %v8733, %v8735
  %v8737 = vrot.slane %v8723, %v8736
  %v8738 = vcombine.high %v8730, %v8730
  %v8739 = vcombine.high %v8737, %v8737
  %v8740 = vcombine.high %v8546, %v8546
  %v8742 = vunpack.c.l.s4 1983009808
  %v8743 = vunpack.c.0.s8 %v8742
  %v8744 = vlaneseq
  %v8745 = vshrl.u32 %v8744, 7
  %v8746 = vsub.s32 %v8743, %v8745
  %v8747 = vrot.slane %v8546, %v8746
  %v8749 = vunpack.c.l.s4 1983009808
  %v8750 = vunpack.c.0.s8 %v8749
  %v8751 = vlaneseq
  %v8752 = vshrl.u32 %v8751, 7
  %v8753 = vsub.s32 %v8750, %v8752
  %v8754 = vrot.slane %v8740, %v8753
  %v8755 = vcombine.high %v8747, %v8747
  %v8756 = vcombine.high %v8754, %v8754
  %v8757 = vcombine.high %v8547, %v8547
  %v8759 = vunpack.c.l.s4 1983009808
  %v8760 = vunpack.c.0.s8 %v8759
  %v8761 = vlaneseq
  %v8762 = vshrl.u32 %v8761, 7
  %v8763 = vsub.s32 %v8760, %v8762
  %v8764 = vrot.slane %v8547, %v8763
  %v8766 = vunpack.c.l.s4 1983009808
  %v8767 = vunpack.c.0.s8 %v8766
  %v8768 = vlaneseq
  %v8769 = vshrl.u32 %v8768, 7
  %v8770 = vsub.s32 %v8767, %v8769
  %v8771 = vrot.slane %v8757, %v8770
  %v8772 = vcombine.high %v8764, %v8764
  %v8773 = vcombine.high %v8771, %v8771
  %v8774 = vcombine.high %v8548, %v8548
  %v8776 = vunpack.c.l.s4 1983009808
  %v8777 = vunpack.c.0.s8 %v8776
  %v8778 = vlaneseq
  %v8779 = vshrl.u32 %v8778, 7
  %v8780 = vsub.s32 %v8777, %v8779
  %v8781 = vrot.slane %v8548, %v8780
  %v8783 = vunpack.c.l.s4 1983009808
  %v8784 = vunpack.c.0.s8 %v8783
  %v8785 = vlaneseq
  %v8786 = vshrl.u32 %v8785, 7
  %v8787 = vsub.s32 %v8784, %v8786
  %v8788 = vrot.slane %v8774, %v8787
  %v8789 = vcombine.high %v8781, %v8781
  %v8790 = vcombine.high %v8788, %v8788
  %v8791 = vcombine.high %v8549, %v8549
  %v8793 = vunpack.c.l.s4 1983009808
  %v8794 = vunpack.c.0.s8 %v8793
  %v8795 = vlaneseq
  %v8796 = vshrl.u32 %v8795, 7
  %v8797 = vsub.s32 %v8794, %v8796
  %v8798 = vrot.slane %v8549, %v8797
  %v8800 = vunpack.c.l.s4 1983009808
  %v8801 = vunpack.c.0.s8 %v8800
  %v8802 = vlaneseq
  %v8803 = vshrl.u32 %v8802, 7
  %v8804 = vsub.s32 %v8801, %v8803
  %v8805 = vrot.slane %v8791, %v8804
  %v8806 = vcombine.high %v8798, %v8798
  %v8807 = vcombine.high %v8805, %v8805
  %v8808 = vcombine.high %v8550, %v8550
  %v8810 = vunpack.c.l.s4 1983009808
  %v8811 = vunpack.c.0.s8 %v8810
  %v8812 = vlaneseq
  %v8813 = vshrl.u32 %v8812, 7
  %v8814 = vsub.s32 %v8811, %v8813
  %v8815 = vrot.slane %v8550, %v8814
  %v8817 = vunpack.c.l.s4 1983009808
  %v8818 = vunpack.c.0.s8 %v8817
  %v8819 = vlaneseq
  %v8820 = vshrl.u32 %v8819, 7
  %v8821 = vsub.s32 %v8818, %v8820
  %v8822 = vrot.slane %v8808, %v8821
  %v8823 = vcombine.high %v8815, %v8815
  %v8824 = vcombine.high %v8822, %v8822
  %v8825 = vcombine.high %v8551, %v8551
  %v8827 = vunpack.c.l.s4 1983009808
  %v8828 = vunpack.c.0.s8 %v8827
  %v8829 = vlaneseq
  %v8830 = vshrl.u32 %v8829, 7
  %v8831 = vsub.s32 %v8828, %v8830
  %v8832 = vrot.slane %v8551, %v8831
  %v8834 = vunpack.c.l.s4 1983009808
  %v8835 = vunpack.c.0.s8 %v8834
  %v8836 = vlaneseq
  %v8837 = vshrl.u32 %v8836, 7
  %v8838 = vsub.s32 %v8835, %v8837
  %v8839 = vrot.slane %v8825, %v8838
  %v8840 = vcombine.high %v8832, %v8832
  %v8841 = vcombine.high %v8839, %v8839
  %v8842 = vcombine.high %v8552, %v8552
  %v8844 = vunpack.c.l.s4 1983009808
  %v8845 = vunpack.c.0.s8 %v8844
  %v8846 = vlaneseq
  %v8847 = vshrl.u32 %v8846, 7
  %v8848 = vsub.s32 %v8845, %v8847
  %v8849 = vrot.slane %v8552, %v8848
  %v8851 = vunpack.c.l.s4 1983009808
  %v8852 = vunpack.c.0.s8 %v8851
  %v8853 = vlaneseq
  %v8854 = vshrl.u32 %v8853, 7
  %v8855 = vsub.s32 %v8852, %v8854
  %v8856 = vrot.slane %v8842, %v8855
  %v8857 = vcombine.high %v8849, %v8849
  %v8858 = vcombine.high %v8856, %v8856
  %v8859 = vcombine.high %v8553, %v8553
  %v8861 = vunpack.c.l.s4 1983009808
  %v8862 = vunpack.c.0.s8 %v8861
  %v8863 = vlaneseq
  %v8864 = vshrl.u32 %v8863, 7
  %v8865 = vsub.s32 %v8862, %v8864
  %v8866 = vrot.slane %v8553, %v8865
  %v8868 = vunpack.c.l.s4 1983009808
  %v8869 = vunpack.c.0.s8 %v8868
  %v8870 = vlaneseq
  %v8871 = vshrl.u32 %v8870, 7
  %v8872 = vsub.s32 %v8869, %v8871
  %v8873 = vrot.slane %v8859, %v8872
  %v8874 = vcombine.high %v8866, %v8866
  %v8875 = vcombine.high %v8873, %v8873
  %v8876 = vcombine.high %v8554, %v8554
  %v8878 = vunpack.c.l.s4 1983009808
  %v8879 = vunpack.c.0.s8 %v8878
  %v8880 = vlaneseq
  %v8881 = vshrl.u32 %v8880, 7
  %v8882 = vsub.s32 %v8879, %v8881
  %v8883 = vrot.slane %v8554, %v8882
  %v8885 = vunpack.c.l.s4 1983009808
  %v8886 = vunpack.c.0.s8 %v8885
  %v8887 = vlaneseq
  %v8888 = vshrl.u32 %v8887, 7
  %v8889 = vsub.s32 %v8886, %v8888
  %v8890 = vrot.slane %v8876, %v8889
  %v8891 = vcombine.high %v8883, %v8883
  %v8892 = vcombine.high %v8890, %v8890
  %v8893 = vcombine.high %v8555, %v8555
  %v8895 = vunpack.c.l.s4 1983009808
  %v8896 = vunpack.c.0.s8 %v8895
  %v8897 = vlaneseq
  %v8898 = vshrl.u32 %v8897, 7
  %v8899 = vsub.s32 %v8896, %v8898
  %v8900 = vrot.slane %v8555, %v8899
  %v8902 = vunpack.c.l.s4 1983009808
  %v8903 = vunpack.c.0.s8 %v8902
  %v8904 = vlaneseq
  %v8905 = vshrl.u32 %v8904, 7
  %v8906 = vsub.s32 %v8903, %v8905
  %v8907 = vrot.slane %v8893, %v8906
  %v8908 = vcombine.high %v8900, %v8900
  %v8909 = vcombine.high %v8907, %v8907
  %v8910 = vcombine.high %v8556, %v8556
  %v8912 = vunpack.c.l.s4 1983009808
  %v8913 = vunpack.c.0.s8 %v8912
  %v8914 = vlaneseq
  %v8915 = vshrl.u32 %v8914, 7
  %v8916 = vsub.s32 %v8913, %v8915
  %v8917 = vrot.slane %v8556, %v8916
  %v8919 = vunpack.c.l.s4 1983009808
  %v8920 = vunpack.c.0.s8 %v8919
  %v8921 = vlaneseq
  %v8922 = vshrl.u32 %v8921, 7
  %v8923 = vsub.s32 %v8920, %v8922
  %v8924 = vrot.slane %v8910, %v8923
  %v8925 = vcombine.high %v8917, %v8917
  %v8926 = vcombine.high %v8924, %v8924
  %v8927 = vcombine.high %v8557, %v8557
  %v8929 = vunpack.c.l.s4 1983009808
  %v8930 = vunpack.c.0.s8 %v8929
  %v8931 = vlaneseq
  %v8932 = vshrl.u32 %v8931, 7
  %v8933 = vsub.s32 %v8930, %v8932
  %v8934 = vrot.slane %v8557, %v8933
  %v8936 = vunpack.c.l.s4 1983009808
  %v8937 = vunpack.c.0.s8 %v8936
  %v8938 = vlaneseq
  %v8939 = vshrl.u32 %v8938, 7
  %v8940 = vsub.s32 %v8937, %v8939
  %v8941 = vrot.slane %v8927, %v8940
  %v8942 = vcombine.high %v8934, %v8934
  %v8943 = vcombine.high %v8941, %v8941
  %v8944 = vcombine.high %v8558, %v8558
  %v8946 = vunpack.c.l.s4 1983009808
  %v8947 = vunpack.c.0.s8 %v8946
  %v8948 = vlaneseq
  %v8949 = vshrl.u32 %v8948, 7
  %v8950 = vsub.s32 %v8947, %v8949
  %v8951 = vrot.slane %v8558, %v8950
  %v8953 = vunpack.c.l.s4 1983009808
  %v8954 = vunpack.c.0.s8 %v8953
  %v8955 = vlaneseq
  %v8956 = vshrl.u32 %v8955, 7
  %v8957 = vsub.s32 %v8954, %v8956
  %v8958 = vrot.slane %v8944, %v8957
  %v8959 = vcombine.high %v8951, %v8951
  %v8960 = vcombine.high %v8958, %v8958
  %v8961 = vcombine.high %v8559, %v8559
  %v8963 = vunpack.c.l.s4 1983009808
  %v8964 = vunpack.c.0.s8 %v8963
  %v8965 = vlaneseq
  %v8966 = vshrl.u32 %v8965, 7
  %v8967 = vsub.s32 %v8964, %v8966
  %v8968 = vrot.slane %v8559, %v8967
  %v8970 = vunpack.c.l.s4 1983009808
  %v8971 = vunpack.c.0.s8 %v8970
  %v8972 = vlaneseq
  %v8973 = vshrl.u32 %v8972, 7
  %v8974 = vsub.s32 %v8971, %v8973
  %v8975 = vrot.slane %v8961, %v8974
  %v8976 = vcombine.high %v8968, %v8968
  %v8977 = vcombine.high %v8975, %v8975
  %v8978 = vcombine.high %v8560, %v8560
  %v8980 = vunpack.c.l.s4 1983009808
  %v8981 = vunpack.c.0.s8 %v8980
  %v8982 = vlaneseq
  %v8983 = vshrl.u32 %v8982, 7
  %v8984 = vsub.s32 %v8981, %v8983
  %v8985 = vrot.slane %v8560, %v8984
  %v8987 = vunpack.c.l.s4 1983009808
  %v8988 = vunpack.c.0.s8 %v8987
  %v8989 = vlaneseq
  %v8990 = vshrl.u32 %v8989, 7
  %v8991 = vsub.s32 %v8988, %v8990
  %v8992 = vrot.slane %v8978, %v8991
  %v8993 = vcombine.high %v8985, %v8985
  %v8994 = vcombine.high %v8992, %v8992
  %v8995 = vcombine.high %v8561, %v8561
  %v8997 = vunpack.c.l.s4 1983009808
  %v8998 = vunpack.c.0.s8 %v8997
  %v8999 = vlaneseq
  %v9000 = vshrl.u32 %v8999, 7
  %v9001 = vsub.s32 %v8998, %v9000
  %v9002 = vrot.slane %v8561, %v9001
  %v9004 = vunpack.c.l.s4 1983009808
  %v9005 = vunpack.c.0.s8 %v9004
  %v9006 = vlaneseq
  %v9007 = vshrl.u32 %v9006, 7
  %v9008 = vsub.s32 %v9005, %v9007
  %v9009 = vrot.slane %v8995, %v9008
  %v9010 = vcombine.high %v9002, %v9002
  %v9011 = vcombine.high %v9009, %v9009
  %v9012 = vcombine.high %v8562, %v8562
  %v9014 = vunpack.c.l.s4 1983009808
  %v9015 = vunpack.c.0.s8 %v9014
  %v9016 = vlaneseq
  %v9017 = vshrl.u32 %v9016, 7
  %v9018 = vsub.s32 %v9015, %v9017
  %v9019 = vrot.slane %v8562, %v9018
  %v9021 = vunpack.c.l.s4 1983009808
  %v9022 = vunpack.c.0.s8 %v9021
  %v9023 = vlaneseq
  %v9024 = vshrl.u32 %v9023, 7
  %v9025 = vsub.s32 %v9022, %v9024
  %v9026 = vrot.slane %v9012, %v9025
  %v9027 = vcombine.high %v9019, %v9019
  %v9028 = vcombine.high %v9026, %v9026
  %v9029 = vcombine.high %v8563, %v8563
  %v9031 = vunpack.c.l.s4 1983009808
  %v9032 = vunpack.c.0.s8 %v9031
  %v9033 = vlaneseq
  %v9034 = vshrl.u32 %v9033, 7
  %v9035 = vsub.s32 %v9032, %v9034
  %v9036 = vrot.slane %v8563, %v9035
  %v9038 = vunpack.c.l.s4 1983009808
  %v9039 = vunpack.c.0.s8 %v9038
  %v9040 = vlaneseq
  %v9041 = vshrl.u32 %v9040, 7
  %v9042 = vsub.s32 %v9039, %v9041
  %v9043 = vrot.slane %v9029, %v9042
  %v9044 = vcombine.high %v9036, %v9036
  %v9045 = vcombine.high %v9043, %v9043
  %v9046 = vcombine.high %v8564, %v8564
  %v9048 = vunpack.c.l.s4 1983009808
  %v9049 = vunpack.c.0.s8 %v9048
  %v9050 = vlaneseq
  %v9051 = vshrl.u32 %v9050, 7
  %v9052 = vsub.s32 %v9049, %v9051
  %v9053 = vrot.slane %v8564, %v9052
  %v9055 = vunpack.c.l.s4 1983009808
  %v9056 = vunpack.c.0.s8 %v9055
  %v9057 = vlaneseq
  %v9058 = vshrl.u32 %v9057, 7
  %v9059 = vsub.s32 %v9056, %v9058
  %v9060 = vrot.slane %v9046, %v9059
  %v9061 = vcombine.high %v9053, %v9053
  %v9062 = vcombine.high %v9060, %v9060
  %v9063 = vcombine.high %v8565, %v8565
  %v9065 = vunpack.c.l.s4 1983009808
  %v9066 = vunpack.c.0.s8 %v9065
  %v9067 = vlaneseq
  %v9068 = vshrl.u32 %v9067, 7
  %v9069 = vsub.s32 %v9066, %v9068
  %v9070 = vrot.slane %v8565, %v9069
  %v9072 = vunpack.c.l.s4 1983009808
  %v9073 = vunpack.c.0.s8 %v9072
  %v9074 = vlaneseq
  %v9075 = vshrl.u32 %v9074, 7
  %v9076 = vsub.s32 %v9073, %v9075
  %v9077 = vrot.slane %v9063, %v9076
  %v9078 = vcombine.high %v9070, %v9070
  %v9079 = vcombine.high %v9077, %v9077
  %v9080 = vcombine.high %v8566, %v8566
  %v9082 = vunpack.c.l.s4 1983009808
  %v9083 = vunpack.c.0.s8 %v9082
  %v9084 = vlaneseq
  %v9085 = vshrl.u32 %v9084, 7
  %v9086 = vsub.s32 %v9083, %v9085
  %v9087 = vrot.slane %v8566, %v9086
  %v9089 = vunpack.c.l.s4 1983009808
  %v9090 = vunpack.c.0.s8 %v9089
  %v9091 = vlaneseq
  %v9092 = vshrl.u32 %v9091, 7
  %v9093 = vsub.s32 %v9090, %v9092
  %v9094 = vrot.slane %v9080, %v9093
  %v9095 = vcombine.high %v9087, %v9087
  %v9096 = vcombine.high %v9094, %v9094
  %v9097 = vcombine.high %v8567, %v8567
  %v9099 = vunpack.c.l.s4 1983009808
  %v9100 = vunpack.c.0.s8 %v9099
  %v9101 = vlaneseq
  %v9102 = vshrl.u32 %v9101, 7
  %v9103 = vsub.s32 %v9100, %v9102
  %v9104 = vrot.slane %v8567, %v9103
  %v9106 = vunpack.c.l.s4 1983009808
  %v9107 = vunpack.c.0.s8 %v9106
  %v9108 = vlaneseq
  %v9109 = vshrl.u32 %v9108, 7
  %v9110 = vsub.s32 %v9107, %v9109
  %v9111 = vrot.slane %v9097, %v9110
  %v9112 = vcombine.high %v9104, %v9104
  %v9113 = vcombine.high %v9111, %v9111
  %v9114 = vcombine.high %v8568, %v8568
  %v9116 = vunpack.c.l.s4 1983009808
  %v9117 = vunpack.c.0.s8 %v9116
  %v9118 = vlaneseq
  %v9119 = vshrl.u32 %v9118, 7
  %v9120 = vsub.s32 %v9117, %v9119
  %v9121 = vrot.slane %v8568, %v9120
  %v9123 = vunpack.c.l.s4 1983009808
  %v9124 = vunpack.c.0.s8 %v9123
  %v9125 = vlaneseq
  %v9126 = vshrl.u32 %v9125, 7
  %v9127 = vsub.s32 %v9124, %v9126
  %v9128 = vrot.slane %v9114, %v9127
  %v9129 = vcombine.high %v9121, %v9121
  %v9130 = vcombine.high %v9128, %v9128
  %v9131 = vcombine.high %v8569, %v8569
  %v9133 = vunpack.c.l.s4 1983009808
  %v9134 = vunpack.c.0.s8 %v9133
  %v9135 = vlaneseq
  %v9136 = vshrl.u32 %v9135, 7
  %v9137 = vsub.s32 %v9134, %v9136
  %v9138 = vrot.slane %v8569, %v9137
  %v9140 = vunpack.c.l.s4 1983009808
  %v9141 = vunpack.c.0.s8 %v9140
  %v9142 = vlaneseq
  %v9143 = vshrl.u32 %v9142, 7
  %v9144 = vsub.s32 %v9141, %v9143
  %v9145 = vrot.slane %v9131, %v9144
  %v9146 = vcombine.high %v9138, %v9138
  %v9147 = vcombine.high %v9145, %v9145
  %v9148 = vcombine.high %v8570, %v8570
  %v9150 = vunpack.c.l.s4 1983009808
  %v9151 = vunpack.c.0.s8 %v9150
  %v9152 = vlaneseq
  %v9153 = vshrl.u32 %v9152, 7
  %v9154 = vsub.s32 %v9151, %v9153
  %v9155 = vrot.slane %v8570, %v9154
  %v9157 = vunpack.c.l.s4 1983009808
  %v9158 = vunpack.c.0.s8 %v9157
  %v9159 = vlaneseq
  %v9160 = vshrl.u32 %v9159, 7
  %v9161 = vsub.s32 %v9158, %v9160
  %v9162 = vrot.slane %v9148, %v9161
  %v9163 = vcombine.high %v9155, %v9155
  %v9164 = vcombine.high %v9162, %v9162
  %v9165 = vcombine.high %v8571, %v8571
  %v9167 = vunpack.c.l.s4 1983009808
  %v9168 = vunpack.c.0.s8 %v9167
  %v9169 = vlaneseq
  %v9170 = vshrl.u32 %v9169, 7
  %v9171 = vsub.s32 %v9168, %v9170
  %v9172 = vrot.slane %v8571, %v9171
  %v9174 = vunpack.c.l.s4 1983009808
  %v9175 = vunpack.c.0.s8 %v9174
  %v9176 = vlaneseq
  %v9177 = vshrl.u32 %v9176, 7
  %v9178 = vsub.s32 %v9175, %v9177
  %v9179 = vrot.slane %v9165, %v9178
  %v9180 = vcombine.high %v9172, %v9172
  %v9181 = vcombine.high %v9179, %v9179
  %v9182 = vcombine.high %v8572, %v8572
  %v9184 = vunpack.c.l.s4 1983009808
  %v9185 = vunpack.c.0.s8 %v9184
  %v9186 = vlaneseq
  %v9187 = vshrl.u32 %v9186, 7
  %v9188 = vsub.s32 %v9185, %v9187
  %v9189 = vrot.slane %v8572, %v9188
  %v9191 = vunpack.c.l.s4 1983009808
  %v9192 = vunpack.c.0.s8 %v9191
  %v9193 = vlaneseq
  %v9194 = vshrl.u32 %v9193, 7
  %v9195 = vsub.s32 %v9192, %v9194
  %v9196 = vrot.slane %v9182, %v9195
  %v9197 = vcombine.high %v9189, %v9189
  %v9198 = vcombine.high %v9196, %v9196
  %v9199 = vcombine.high %v8573, %v8573
  %v9201 = vunpack.c.l.s4 1983009808
  %v9202 = vunpack.c.0.s8 %v9201
  %v9203 = vlaneseq
  %v9204 = vshrl.u32 %v9203, 7
  %v9205 = vsub.s32 %v9202, %v9204
  %v9206 = vrot.slane %v8573, %v9205
  %v9208 = vunpack.c.l.s4 1983009808
  %v9209 = vunpack.c.0.s8 %v9208
  %v9210 = vlaneseq
  %v9211 = vshrl.u32 %v9210, 7
  %v9212 = vsub.s32 %v9209, %v9211
  %v9213 = vrot.slane %v9199, %v9212
  %v9214 = vcombine.high %v9206, %v9206
  %v9215 = vcombine.high %v9213, %v9213
  %v9216 = vcombine.high %v8574, %v8574
  %v9218 = vunpack.c.l.s4 1983009808
  %v9219 = vunpack.c.0.s8 %v9218
  %v9220 = vlaneseq
  %v9221 = vshrl.u32 %v9220, 7
  %v9222 = vsub.s32 %v9219, %v9221
  %v9223 = vrot.slane %v8574, %v9222
  %v9225 = vunpack.c.l.s4 1983009808
  %v9226 = vunpack.c.0.s8 %v9225
  %v9227 = vlaneseq
  %v9228 = vshrl.u32 %v9227, 7
  %v9229 = vsub.s32 %v9226, %v9228
  %v9230 = vrot.slane %v9216, %v9229
  %v9231 = vcombine.high %v9223, %v9223
  %v9232 = vcombine.high %v9230, %v9230
  %v9233 = vcombine.high %v8575, %v8575
  %v9235 = vunpack.c.l.s4 1983009808
  %v9236 = vunpack.c.0.s8 %v9235
  %v9237 = vlaneseq
  %v9238 = vshrl.u32 %v9237, 7
  %v9239 = vsub.s32 %v9236, %v9238
  %v9240 = vrot.slane %v8575, %v9239
  %v9242 = vunpack.c.l.s4 1983009808
  %v9243 = vunpack.c.0.s8 %v9242
  %v9244 = vlaneseq
  %v9245 = vshrl.u32 %v9244, 7
  %v9246 = vsub.s32 %v9243, %v9245
  %v9247 = vrot.slane %v9233, %v9246
  %v9248 = vcombine.high %v9240, %v9240
  %v9249 = vcombine.high %v9247, %v9247
  %v9250 = vcombine.high %v8576, %v8576
  %v9252 = vunpack.c.l.s4 1983009808
  %v9253 = vunpack.c.0.s8 %v9252
  %v9254 = vlaneseq
  %v9255 = vshrl.u32 %v9254, 7
  %v9256 = vsub.s32 %v9253, %v9255
  %v9257 = vrot.slane %v8576, %v9256
  %v9259 = vunpack.c.l.s4 1983009808
  %v9260 = vunpack.c.0.s8 %v9259
  %v9261 = vlaneseq
  %v9262 = vshrl.u32 %v9261, 7
  %v9263 = vsub.s32 %v9260, %v9262
  %v9264 = vrot.slane %v9250, %v9263
  %v9265 = vcombine.high %v9257, %v9257
  %v9266 = vcombine.high %v9264, %v9264
  %v9267 = vcombine.high %v8577, %v8577
  %v9269 = vunpack.c.l.s4 1983009808
  %v9270 = vunpack.c.0.s8 %v9269
  %v9271 = vlaneseq
  %v9272 = vshrl.u32 %v9271, 7
  %v9273 = vsub.s32 %v9270, %v9272
  %v9274 = vrot.slane %v8577, %v9273
  %v9276 = vunpack.c.l.s4 1983009808
  %v9277 = vunpack.c.0.s8 %v9276
  %v9278 = vlaneseq
  %v9279 = vshrl.u32 %v9278, 7
  %v9280 = vsub.s32 %v9277, %v9279
  %v9281 = vrot.slane %v9267, %v9280
  %v9282 = vcombine.high %v9274, %v9274
  %v9283 = vcombine.high %v9281, %v9281
  %v9284 = vcombine.high %v8578, %v8578
  %v9286 = vunpack.c.l.s4 1983009808
  %v9287 = vunpack.c.0.s8 %v9286
  %v9288 = vlaneseq
  %v9289 = vshrl.u32 %v9288, 7
  %v9290 = vsub.s32 %v9287, %v9289
  %v9291 = vrot.slane %v8578, %v9290
  %v9293 = vunpack.c.l.s4 1983009808
  %v9294 = vunpack.c.0.s8 %v9293
  %v9295 = vlaneseq
  %v9296 = vshrl.u32 %v9295, 7
  %v9297 = vsub.s32 %v9294, %v9296
  %v9298 = vrot.slane %v9284, %v9297
  %v9299 = vcombine.high %v9291, %v9291
  %v9300 = vcombine.high %v9298, %v9298
  %v9301 = vcombine.high %v8579, %v8579
  %v9303 = vunpack.c.l.s4 1983009808
  %v9304 = vunpack.c.0.s8 %v9303
  %v9305 = vlaneseq
  %v9306 = vshrl.u32 %v9305, 7
  %v9307 = vsub.s32 %v9304, %v9306
  %v9308 = vrot.slane %v8579, %v9307
  %v9310 = vunpack.c.l.s4 1983009808
  %v9311 = vunpack.c.0.s8 %v9310
  %v9312 = vlaneseq
  %v9313 = vshrl.u32 %v9312, 7
  %v9314 = vsub.s32 %v9311, %v9313
  %v9315 = vrot.slane %v9301, %v9314
  %v9316 = vcombine.high %v9308, %v9308
  %v9317 = vcombine.high %v9315, %v9315
  %v9318 = vcombine.high %v8580, %v8580
  %v9320 = vunpack.c.l.s4 1983009808
  %v9321 = vunpack.c.0.s8 %v9320
  %v9322 = vlaneseq
  %v9323 = vshrl.u32 %v9322, 7
  %v9324 = vsub.s32 %v9321, %v9323
  %v9325 = vrot.slane %v8580, %v9324
  %v9327 = vunpack.c.l.s4 1983009808
  %v9328 = vunpack.c.0.s8 %v9327
  %v9329 = vlaneseq
  %v9330 = vshrl.u32 %v9329, 7
  %v9331 = vsub.s32 %v9328, %v9330
  %v9332 = vrot.slane %v9318, %v9331
  %v9333 = vcombine.high %v9325, %v9325
  %v9334 = vcombine.high %v9332, %v9332
  %v9335 = vcombine.high %v8581, %v8581
  %v9337 = vunpack.c.l.s4 1983009808
  %v9338 = vunpack.c.0.s8 %v9337
  %v9339 = vlaneseq
  %v9340 = vshrl.u32 %v9339, 7
  %v9341 = vsub.s32 %v9338, %v9340
  %v9342 = vrot.slane %v8581, %v9341
  %v9344 = vunpack.c.l.s4 1983009808
  %v9345 = vunpack.c.0.s8 %v9344
  %v9346 = vlaneseq
  %v9347 = vshrl.u32 %v9346, 7
  %v9348 = vsub.s32 %v9345, %v9347
  %v9349 = vrot.slane %v9335, %v9348
  %v9350 = vcombine.high %v9342, %v9342
  %v9351 = vcombine.high %v9349, %v9349
  %v9352 = vcombine.high %v8582, %v8582
  %v9354 = vunpack.c.l.s4 1983009808
  %v9355 = vunpack.c.0.s8 %v9354
  %v9356 = vlaneseq
  %v9357 = vshrl.u32 %v9356, 7
  %v9358 = vsub.s32 %v9355, %v9357
  %v9359 = vrot.slane %v8582, %v9358
  %v9361 = vunpack.c.l.s4 1983009808
  %v9362 = vunpack.c.0.s8 %v9361
  %v9363 = vlaneseq
  %v9364 = vshrl.u32 %v9363, 7
  %v9365 = vsub.s32 %v9362, %v9364
  %v9366 = vrot.slane %v9352, %v9365
  %v9367 = vcombine.high %v9359, %v9359
  %v9368 = vcombine.high %v9366, %v9366
  %v9369 = vcombine.high %v8583, %v8583
  %v9371 = vunpack.c.l.s4 1983009808
  %v9372 = vunpack.c.0.s8 %v9371
  %v9373 = vlaneseq
  %v9374 = vshrl.u32 %v9373, 7
  %v9375 = vsub.s32 %v9372, %v9374
  %v9376 = vrot.slane %v8583, %v9375
  %v9378 = vunpack.c.l.s4 1983009808
  %v9379 = vunpack.c.0.s8 %v9378
  %v9380 = vlaneseq
  %v9381 = vshrl.u32 %v9380, 7
  %v9382 = vsub.s32 %v9379, %v9381
  %v9383 = vrot.slane %v9369, %v9382
  %v9384 = vcombine.high %v9376, %v9376
  %v9385 = vcombine.high %v9383, %v9383
  %v9386 = vcombine.high %v8584, %v8584
  %v9388 = vunpack.c.l.s4 1983009808
  %v9389 = vunpack.c.0.s8 %v9388
  %v9390 = vlaneseq
  %v9391 = vshrl.u32 %v9390, 7
  %v9392 = vsub.s32 %v9389, %v9391
  %v9393 = vrot.slane %v8584, %v9392
  %v9395 = vunpack.c.l.s4 1983009808
  %v9396 = vunpack.c.0.s8 %v9395
  %v9397 = vlaneseq
  %v9398 = vshrl.u32 %v9397, 7
  %v9399 = vsub.s32 %v9396, %v9398
  %v9400 = vrot.slane %v9386, %v9399
  %v9401 = vcombine.high %v9393, %v9393
  %v9402 = vcombine.high %v9400, %v9400
  %v9403 = vcombine.high %v8585, %v8585
  %v9405 = vunpack.c.l.s4 1983009808
  %v9406 = vunpack.c.0.s8 %v9405
  %v9407 = vlaneseq
  %v9408 = vshrl.u32 %v9407, 7
  %v9409 = vsub.s32 %v9406, %v9408
  %v9410 = vrot.slane %v8585, %v9409
  %v9412 = vunpack.c.l.s4 1983009808
  %v9413 = vunpack.c.0.s8 %v9412
  %v9414 = vlaneseq
  %v9415 = vshrl.u32 %v9414, 7
  %v9416 = vsub.s32 %v9413, %v9415
  %v9417 = vrot.slane %v9403, %v9416
  %v9418 = vcombine.high %v9410, %v9410
  %v9419 = vcombine.high %v9417, %v9417
  %v9420 = vcombine.high %v8586, %v8586
  %v9422 = vunpack.c.l.s4 1983009808
  %v9423 = vunpack.c.0.s8 %v9422
  %v9424 = vlaneseq
  %v9425 = vshrl.u32 %v9424, 7
  %v9426 = vsub.s32 %v9423, %v9425
  %v9427 = vrot.slane %v8586, %v9426
  %v9429 = vunpack.c.l.s4 1983009808
  %v9430 = vunpack.c.0.s8 %v9429
  %v9431 = vlaneseq
  %v9432 = vshrl.u32 %v9431, 7
  %v9433 = vsub.s32 %v9430, %v9432
  %v9434 = vrot.slane %v9420, %v9433
  %v9435 = vcombine.high %v9427, %v9427
  %v9436 = vcombine.high %v9434, %v9434
  %v9437 = vcombine.high %v8587, %v8587
  %v9439 = vunpack.c.l.s4 1983009808
  %v9440 = vunpack.c.0.s8 %v9439
  %v9441 = vlaneseq
  %v9442 = vshrl.u32 %v9441, 7
  %v9443 = vsub.s32 %v9440, %v9442
  %v9444 = vrot.slane %v8587, %v9443
  %v9446 = vunpack.c.l.s4 1983009808
  %v9447 = vunpack.c.0.s8 %v9446
  %v9448 = vlaneseq
  %v9449 = vshrl.u32 %v9448, 7
  %v9450 = vsub.s32 %v9447, %v9449
  %v9451 = vrot.slane %v9437, %v9450
  %v9452 = vcombine.high %v9444, %v9444
  %v9453 = vcombine.high %v9451, %v9451
  %v9454 = vcombine.high %v8588, %v8588
  %v9456 = vunpack.c.l.s4 1983009808
  %v9457 = vunpack.c.0.s8 %v9456
  %v9458 = vlaneseq
  %v9459 = vshrl.u32 %v9458, 7
  %v9460 = vsub.s32 %v9457, %v9459
  %v9461 = vrot.slane %v8588, %v9460
  %v9463 = vunpack.c.l.s4 1983009808
  %v9464 = vunpack.c.0.s8 %v9463
  %v9465 = vlaneseq
  %v9466 = vshrl.u32 %v9465, 7
  %v9467 = vsub.s32 %v9464, %v9466
  %v9468 = vrot.slane %v9454, %v9467
  %v9469 = vcombine.high %v9461, %v9461
  %v9470 = vcombine.high %v9468, %v9468
  %v9471 = vcombine.low %v8645, %v8653
  %v9472 = vcombine.low %v8652, %v8654
  %v9474 = vunpack.c.l.s4 1983009808
  %v9475 = vunpack.c.0.s8 %v9474
  %v9476 = vlaneseq
  %v9477 = vshrl.u32 %v9476, 7
  %v9478 = vsub.s32 %v9475, %v9477
  %v9479 = vrot.slane %v9471, %v9478
  %v9481 = vunpack.c.l.s4 1983009808
  %v9482 = vunpack.c.0.s8 %v9481
  %v9483 = vlaneseq
  %v9484 = vshrl.u32 %v9483, 7
  %v9485 = vsub.s32 %v9482, %v9484
  %v9486 = vrot.slane %v9472, %v9485
  %v9487 = vcombine.low %v9479, %v9486
  %v9488 = vcombine.low %v8662, %v8670
  %v9490 = vunpack.c.l.s4 1983009808
  %v9491 = vunpack.c.0.s8 %v9490
  %v9492 = vlaneseq
  %v9493 = vshrl.u32 %v9492, 7
  %v9494 = vsub.s32 %v9491, %v9493
  %v9495 = vrot.slane %v9488, %v9494
  %v9497 = vunpack.c.l.s4 1983009808
  %v9498 = vunpack.c.0.s8 %v9497
  %v9499 = vlaneseq
  %v9500 = vshrl.u32 %v9499, 7
  %v9501 = vsub.s32 %v9498, %v9500
  %v9502 = vrot.slane %v8669, %v9501
  %v9503 = vcombine.low %v9495, %v9502
  %v9504 = vcombine.low %v8671, %v8679
  %v9505 = vcombine.low %v8687, %v8686
  %v9507 = vunpack.c.l.s4 1983009808
  %v9508 = vunpack.c.0.s8 %v9507
  %v9509 = vlaneseq
  %v9510 = vshrl.u32 %v9509, 7
  %v9511 = vsub.s32 %v9508, %v9510
  %v9512 = vrot.slane %v9504, %v9511
  %v9514 = vunpack.c.l.s4 1983009808
  %v9515 = vunpack.c.0.s8 %v9514
  %v9516 = vlaneseq
  %v9517 = vshrl.u32 %v9516, 7
  %v9518 = vsub.s32 %v9515, %v9517
  %v9519 = vrot.slane %v9505, %v9518
  %v9520 = vcombine.low %v9512, %v9519
  %v9521 = vcombine.low %v8688, %v8696
  %v9523 = vunpack.c.l.s4 1983009808
  %v9524 = vunpack.c.0.s8 %v9523
  %v9525 = vlaneseq
  %v9526 = vshrl.u32 %v9525, 7
  %v9527 = vsub.s32 %v9524, %v9526
  %v9528 = vrot.slane %v9521, %v9527
  %v9530 = vunpack.c.l.s4 1983009808
  %v9531 = vunpack.c.0.s8 %v9530
  %v9532 = vlaneseq
  %v9533 = vshrl.u32 %v9532, 7
  %v9534 = vsub.s32 %v9531, %v9533
  %v9535 = vrot.slane %v8704, %v9534
  %v9536 = vcombine.low %v9528, %v9535
  %v9537 = vcombine.low %v8703, %v8705
  %v9538 = vcombine.low %v8713, %v8721
  %v9540 = vunpack.c.l.s4 1983009808
  %v9541 = vunpack.c.0.s8 %v9540
  %v9542 = vlaneseq
  %v9543 = vshrl.u32 %v9542, 7
  %v9544 = vsub.s32 %v9541, %v9543
  %v9545 = vrot.slane %v9537, %v9544
  %v9547 = vunpack.c.l.s4 1983009808
  %v9548 = vunpack.c.0.s8 %v9547
  %v9549 = vlaneseq
  %v9550 = vshrl.u32 %v9549, 7
  %v9551 = vsub.s32 %v9548, %v9550
  %v9552 = vrot.slane %v9538, %v9551
  %v9553 = vcombine.low %v9545, %v9552
  %v9554 = vcombine.low %v8720, %v8722
  %v9556 = vunpack.c.l.s4 1983009808
  %v9557 = vunpack.c.0.s8 %v9556
  %v9558 = vlaneseq
  %v9559 = vshrl.u32 %v9558, 7
  %v9560 = vsub.s32 %v9557, %v9559
  %v9561 = vrot.slane %v9554, %v9560
  %v9563 = vunpack.c.l.s4 1983009808
  %v9564 = vunpack.c.0.s8 %v9563
  %v9565 = vlaneseq
  %v9566 = vshrl.u32 %v9565, 7
  %v9567 = vsub.s32 %v9564, %v9566
  %v9568 = vrot.slane %v8730, %v9567
  %v9569 = vcombine.low %v9561, %v9568
  %v9570 = vcombine.low %v8738, %v8737
  %v9571 = vcombine.low %v8739, %v8747
  %v9573 = vunpack.c.l.s4 1983009808
  %v9574 = vunpack.c.0.s8 %v9573
  %v9575 = vlaneseq
  %v9576 = vshrl.u32 %v9575, 7
  %v9577 = vsub.s32 %v9574, %v9576
  %v9578 = vrot.slane %v9570, %v9577
  %v9580 = vunpack.c.l.s4 1983009808
  %v9581 = vunpack.c.0.s8 %v9580
  %v9582 = vlaneseq
  %v9583 = vshrl.u32 %v9582, 7
  %v9584 = vsub.s32 %v9581, %v9583
  %v9585 = vrot.slane %v9571, %v9584
  %v9586 = vcombine.low %v9578, %v9585
  %v9587 = vcombine.low %v8755, %v8754
  %v9589 = vunpack.c.l.s4 1983009808
  %v9590 = vunpack.c.0.s8 %v9589
  %v9591 = vlaneseq
  %v9592 = vshrl.u32 %v9591, 7
  %v9593 = vsub.s32 %v9590, %v9592
  %v9594 = vrot.slane %v9587, %v9593
  %v9596 = vunpack.c.l.s4 1983009808
  %v9597 = vunpack.c.0.s8 %v9596
  %v9598 = vlaneseq
  %v9599 = vshrl.u32 %v9598, 7
  %v9600 = vsub.s32 %v9597, %v9599
  %v9601 = vrot.slane %v8756, %v9600
  %v9602 = vcombine.low %v9594, %v9601
  %v9603 = vcombine.low %v8764, %v8772
  %v9604 = vcombine.low %v8771, %v8773
  %v9606 = vunpack.c.l.s4 1983009808
  %v9607 = vunpack.c.0.s8 %v9606
  %v9608 = vlaneseq
  %v9609 = vshrl.u32 %v9608, 7
  %v9610 = vsub.s32 %v9607, %v9609
  %v9611 = vrot.slane %v9603, %v9610
  %v9613 = vunpack.c.l.s4 1983009808
  %v9614 = vunpack.c.0.s8 %v9613
  %v9615 = vlaneseq
  %v9616 = vshrl.u32 %v9615, 7
  %v9617 = vsub.s32 %v9614, %v9616
  %v9618 = vrot.slane %v9604, %v9617
  %v9619 = vcombine.low %v9611, %v9618
  %v9620 = vcombine.low %v8781, %v8789
  %v9622 = vunpack.c.l.s4 1983009808
  %v9623 = vunpack.c.0.s8 %v9622
  %v9624 = vlaneseq
  %v9625 = vshrl.u32 %v9624, 7
  %v9626 = vsub.s32 %v9623, %v9625
  %v9627 = vrot.slane %v9620, %v9626
  %v9629 = vunpack.c.l.s4 1983009808
  %v9630 = vunpack.c.0.s8 %v9629
  %v9631 = vlaneseq
  %v9632 = vshrl.u32 %v9631, 7
  %v9633 = vsub.s32 %v9630, %v9632
  %v9634 = vrot.slane %v8788, %v9633
  %v9635 = vcombine.low %v9627, %v9634
  %v9636 = vcombine.low %v8790, %v8798
  %v9637 = vcombine.low %v8806, %v8805
  %v9639 = vunpack.c.l.s4 1983009808
  %v9640 = vunpack.c.0.s8 %v9639
  %v9641 = vlaneseq
  %v9642 = vshrl.u32 %v9641, 7
  %v9643 = vsub.s32 %v9640, %v9642
  %v9644 = vrot.slane %v9636, %v9643
  %v9646 = vunpack.c.l.s4 1983009808
  %v9647 = vunpack.c.0.s8 %v9646
  %v9648 = vlaneseq
  %v9649 = vshrl.u32 %v9648, 7
  %v9650 = vsub.s32 %v9647, %v9649
  %v9651 = vrot.slane %v9637, %v9650
  %v9652 = vcombine.low %v9644, %v9651
  %v9653 = vcombine.low %v8807, %v8815
  %v9655 = vunpack.c.l.s4 1983009808
  %v9656 = vunpack.c.0.s8 %v9655
  %v9657 = vlaneseq
  %v9658 = vshrl.u32 %v9657, 7
  %v9659 = vsub.s32 %v9656, %v9658
  %v9660 = vrot.slane %v9653, %v9659
  %v9662 = vunpack.c.l.s4 1983009808
  %v9663 = vunpack.c.0.s8 %v9662
  %v9664 = vlaneseq
  %v9665 = vshrl.u32 %v9664, 7
  %v9666 = vsub.s32 %v9663, %v9665
  %v9667 = vrot.slane %v8823, %v9666
  %v9668 = vcombine.low %v9660, %v9667
  %v9669 = vcombine.low %v8822, %v8824
  %v9670 = vcombine.low %v8832, %v8840
  %v9672 = vunpack.c.l.s4 1983009808
  %v9673 = vunpack.c.0.s8 %v9672
  %v9674 = vlaneseq
  %v9675 = vshrl.u32 %v9674, 7
  %v9676 = vsub.s32 %v9673, %v9675
  %v9677 = vrot.slane %v9669, %v9676
  %v9679 = vunpack.c.l.s4 1983009808
  %v9680 = vunpack.c.0.s8 %v9679
  %v9681 = vlaneseq
  %v9682 = vshrl.u32 %v9681, 7
  %v9683 = vsub.s32 %v9680, %v9682
  %v9684 = vrot.slane %v9670, %v9683
  %v9685 = vcombine.low %v9677, %v9684
  %v9686 = vcombine.low %v8839, %v8841
  %v9688 = vunpack.c.l.s4 1983009808
  %v9689 = vunpack.c.0.s8 %v9688
  %v9690 = vlaneseq
  %v9691 = vshrl.u32 %v9690, 7
  %v9692 = vsub.s32 %v9689, %v9691
  %v9693 = vrot.slane %v9686, %v9692
  %v9695 = vunpack.c.l.s4 1983009808
  %v9696 = vunpack.c.0.s8 %v9695
  %v9697 = vlaneseq
  %v9698 = vshrl.u32 %v9697, 7
  %v9699 = vsub.s32 %v9696, %v9698
  %v9700 = vrot.slane %v8849, %v9699
  %v9701 = vcombine.low %v9693, %v9700
  %v9702 = vcombine.low %v8857, %v8856
  %v9703 = vcombine.low %v8858, %v8866
  %v9705 = vunpack.c.l.s4 1983009808
  %v9706 = vunpack.c.0.s8 %v9705
  %v9707 = vlaneseq
  %v9708 = vshrl.u32 %v9707, 7
  %v9709 = vsub.s32 %v9706, %v9708
  %v9710 = vrot.slane %v9702, %v9709
  %v9712 = vunpack.c.l.s4 1983009808
  %v9713 = vunpack.c.0.s8 %v9712
  %v9714 = vlaneseq
  %v9715 = vshrl.u32 %v9714, 7
  %v9716 = vsub.s32 %v9713, %v9715
  %v9717 = vrot.slane %v9703, %v9716
  %v9718 = vcombine.low %v9710, %v9717
  %v9719 = vcombine.low %v8874, %v8873
  %v9721 = vunpack.c.l.s4 1983009808
  %v9722 = vunpack.c.0.s8 %v9721
  %v9723 = vlaneseq
  %v9724 = vshrl.u32 %v9723, 7
  %v9725 = vsub.s32 %v9722, %v9724
  %v9726 = vrot.slane %v9719, %v9725
  %v9728 = vunpack.c.l.s4 1983009808
  %v9729 = vunpack.c.0.s8 %v9728
  %v9730 = vlaneseq
  %v9731 = vshrl.u32 %v9730, 7
  %v9732 = vsub.s32 %v9729, %v9731
  %v9733 = vrot.slane %v8875, %v9732
  %v9734 = vcombine.low %v9726, %v9733
  %v9735 = vcombine.low %v8883, %v8891
  %v9736 = vcombine.low %v8890, %v8892
  %v9738 = vunpack.c.l.s4 1983009808
  %v9739 = vunpack.c.0.s8 %v9738
  %v9740 = vlaneseq
  %v9741 = vshrl.u32 %v9740, 7
  %v9742 = vsub.s32 %v9739, %v9741
  %v9743 = vrot.slane %v9735, %v9742
  %v9745 = vunpack.c.l.s4 1983009808
  %v9746 = vunpack.c.0.s8 %v9745
  %v9747 = vlaneseq
  %v9748 = vshrl.u32 %v9747, 7
  %v9749 = vsub.s32 %v9746, %v9748
  %v9750 = vrot.slane %v9736, %v9749
  %v9751 = vcombine.low %v9743, %v9750
  %v9752 = vcombine.low %v8900, %v8908
  %v9754 = vunpack.c.l.s4 1983009808
  %v9755 = vunpack.c.0.s8 %v9754
  %v9756 = vlaneseq
  %v9757 = vshrl.u32 %v9756, 7
  %v9758 = vsub.s32 %v9755, %v9757
  %v9759 = vrot.slane %v9752, %v9758
  %v9761 = vunpack.c.l.s4 1983009808
  %v9762 = vunpack.c.0.s8 %v9761
  %v9763 = vlaneseq
  %v9764 = vshrl.u32 %v9763, 7
  %v9765 = vsub.s32 %v9762, %v9764
  %v9766 = vrot.slane %v8907, %v9765
  %v9767 = vcombine.low %v9759, %v9766
  %v9768 = vcombine.low %v8909, %v8917
  %v9769 = vcombine.low %v8925, %v8924
  %v9771 = vunpack.c.l.s4 1983009808
  %v9772 = vunpack.c.0.s8 %v9771
  %v9773 = vlaneseq
  %v9774 = vshrl.u32 %v9773, 7
  %v9775 = vsub.s32 %v9772, %v9774
  %v9776 = vrot.slane %v9768, %v9775
  %v9778 = vunpack.c.l.s4 1983009808
  %v9779 = vunpack.c.0.s8 %v9778
  %v9780 = vlaneseq
  %v9781 = vshrl.u32 %v9780, 7
  %v9782 = vsub.s32 %v9779, %v9781
  %v9783 = vrot.slane %v9769, %v9782
  %v9784 = vcombine.low %v9776, %v9783
  %v9785 = vcombine.low %v8926, %v8934
  %v9787 = vunpack.c.l.s4 1983009808
  %v9788 = vunpack.c.0.s8 %v9787
  %v9789 = vlaneseq
  %v9790 = vshrl.u32 %v9789, 7
  %v9791 = vsub.s32 %v9788, %v9790
  %v9792 = vrot.slane %v9785, %v9791
  %v9794 = vunpack.c.l.s4 1983009808
  %v9795 = vunpack.c.0.s8 %v9794
  %v9796 = vlaneseq
  %v9797 = vshrl.u32 %v9796, 7
  %v9798 = vsub.s32 %v9795, %v9797
  %v9799 = vrot.slane %v8942, %v9798
  %v9800 = vcombine.low %v9792, %v9799
  %v9801 = vcombine.low %v8941, %v8943
  %v9802 = vcombine.low %v8951, %v8959
  %v9804 = vunpack.c.l.s4 1983009808
  %v9805 = vunpack.c.0.s8 %v9804
  %v9806 = vlaneseq
  %v9807 = vshrl.u32 %v9806, 7
  %v9808 = vsub.s32 %v9805, %v9807
  %v9809 = vrot.slane %v9801, %v9808
  %v9811 = vunpack.c.l.s4 1983009808
  %v9812 = vunpack.c.0.s8 %v9811
  %v9813 = vlaneseq
  %v9814 = vshrl.u32 %v9813, 7
  %v9815 = vsub.s32 %v9812, %v9814
  %v9816 = vrot.slane %v9802, %v9815
  %v9817 = vcombine.low %v9809, %v9816
  %v9818 = vcombine.low %v8958, %v8960
  %v9820 = vunpack.c.l.s4 1983009808
  %v9821 = vunpack.c.0.s8 %v9820
  %v9822 = vlaneseq
  %v9823 = vshrl.u32 %v9822, 7
  %v9824 = vsub.s32 %v9821, %v9823
  %v9825 = vrot.slane %v9818, %v9824
  %v9827 = vunpack.c.l.s4 1983009808
  %v9828 = vunpack.c.0.s8 %v9827
  %v9829 = vlaneseq
  %v9830 = vshrl.u32 %v9829, 7
  %v9831 = vsub.s32 %v9828, %v9830
  %v9832 = vrot.slane %v8968, %v9831
  %v9833 = vcombine.low %v9825, %v9832
  %v9834 = vcombine.low %v8976, %v8975
  %v9835 = vcombine.low %v8977, %v8985
  %v9837 = vunpack.c.l.s4 1983009808
  %v9838 = vunpack.c.0.s8 %v9837
  %v9839 = vlaneseq
  %v9840 = vshrl.u32 %v9839, 7
  %v9841 = vsub.s32 %v9838, %v9840
  %v9842 = vrot.slane %v9834, %v9841
  %v9844 = vunpack.c.l.s4 1983009808
  %v9845 = vunpack.c.0.s8 %v9844
  %v9846 = vlaneseq
  %v9847 = vshrl.u32 %v9846, 7
  %v9848 = vsub.s32 %v9845, %v9847
  %v9849 = vrot.slane %v9835, %v9848
  %v9850 = vcombine.low %v9842, %v9849
  %v9851 = vcombine.low %v8993, %v8992
  %v9853 = vunpack.c.l.s4 1983009808
  %v9854 = vunpack.c.0.s8 %v9853
  %v9855 = vlaneseq
  %v9856 = vshrl.u32 %v9855, 7
  %v9857 = vsub.s32 %v9854, %v9856
  %v9858 = vrot.slane %v9851, %v9857
  %v9860 = vunpack.c.l.s4 1983009808
  %v9861 = vunpack.c.0.s8 %v9860
  %v9862 = vlaneseq
  %v9863 = vshrl.u32 %v9862, 7
  %v9864 = vsub.s32 %v9861, %v9863
  %v9865 = vrot.slane %v8994, %v9864
  %v9866 = vcombine.low %v9858, %v9865
  %v9867 = vcombine.low %v9002, %v9010
  %v9868 = vcombine.low %v9009, %v9011
  %v9870 = vunpack.c.l.s4 1983009808
  %v9871 = vunpack.c.0.s8 %v9870
  %v9872 = vlaneseq
  %v9873 = vshrl.u32 %v9872, 7
  %v9874 = vsub.s32 %v9871, %v9873
  %v9875 = vrot.slane %v9867, %v9874
  %v9877 = vunpack.c.l.s4 1983009808
  %v9878 = vunpack.c.0.s8 %v9877
  %v9879 = vlaneseq
  %v9880 = vshrl.u32 %v9879, 7
  %v9881 = vsub.s32 %v9878, %v9880
  %v9882 = vrot.slane %v9868, %v9881
  %v9883 = vcombine.low %v9875, %v9882
  %v9884 = vcombine.low %v9019, %v9027
  %v9886 = vunpack.c.l.s4 1983009808
  %v9887 = vunpack.c.0.s8 %v9886
  %v9888 = vlaneseq
  %v9889 = vshrl.u32 %v9888, 7
  %v9890 = vsub.s32 %v9887, %v9889
  %v9891 = vrot.slane %v9884, %v9890
  %v9893 = vunpack.c.l.s4 1983009808
  %v9894 = vunpack.c.0.s8 %v9893
  %v9895 = vlaneseq
  %v9896 = vshrl.u32 %v9895, 7
  %v9897 = vsub.s32 %v9894, %v9896
  %v9898 = vrot.slane %v9026, %v9897
  %v9899 = vcombine.low %v9891, %v9898
  %v9900 = vcombine.low %v9028, %v9036
  %v9901 = vcombine.low %v9044, %v9043
  %v9903 = vunpack.c.l.s4 1983009808
  %v9904 = vunpack.c.0.s8 %v9903
  %v9905 = vlaneseq
  %v9906 = vshrl.u32 %v9905, 7
  %v9907 = vsub.s32 %v9904, %v9906
  %v9908 = vrot.slane %v9900, %v9907
  %v9910 = vunpack.c.l.s4 1983009808
  %v9911 = vunpack.c.0.s8 %v9910
  %v9912 = vlaneseq
  %v9913 = vshrl.u32 %v9912, 7
  %v9914 = vsub.s32 %v9911, %v9913
  %v9915 = vrot.slane %v9901, %v9914
  %v9916 = vcombine.low %v9908, %v9915
  %v9917 = vcombine.low %v9045, %v9053
  %v9919 = vunpack.c.l.s4 1983009808
  %v9920 = vunpack.c.0.s8 %v9919
  %v9921 = vlaneseq
  %v9922 = vshrl.u32 %v9921, 7
  %v9923 = vsub.s32 %v9920, %v9922
  %v9924 = vrot.slane %v9917, %v9923
  %v9926 = vunpack.c.l.s4 1983009808
  %v9927 = vunpack.c.0.s8 %v9926
  %v9928 = vlaneseq
  %v9929 = vshrl.u32 %v9928, 7
  %v9930 = vsub.s32 %v9927, %v9929
  %v9931 = vrot.slane %v9061, %v9930
  %v9932 = vcombine.low %v9924, %v9931
  %v9933 = vcombine.low %v9060, %v9062
  %v9934 = vcombine.low %v9070, %v9078
  %v9936 = vunpack.c.l.s4 1983009808
  %v9937 = vunpack.c.0.s8 %v9936
  %v9938 = vlaneseq
  %v9939 = vshrl.u32 %v9938, 7
  %v9940 = vsub.s32 %v9937, %v9939
  %v9941 = vrot.slane %v9933, %v9940
  %v9943 = vunpack.c.l.s4 1983009808
  %v9944 = vunpack.c.0.s8 %v9943
  %v9945 = vlaneseq
  %v9946 = vshrl.u32 %v9945, 7
  %v9947 = vsub.s32 %v9944, %v9946
  %v9948 = vrot.slane %v9934, %v9947
  %v9949 = vcombine.low %v9941, %v9948
  %v9950 = vcombine.low %v9077, %v9079
  %v9952 = vunpack.c.l.s4 1983009808
  %v9953 = vunpack.c.0.s8 %v9952
  %v9954 = vlaneseq
  %v9955 = vshrl.u32 %v9954, 7
  %v9956 = vsub.s32 %v9953, %v9955
  %v9957 = vrot.slane %v9950, %v9956
  %v9959 = vunpack.c.l.s4 1983009808
  %v9960 = vunpack.c.0.s8 %v9959
  %v9961 = vlaneseq
  %v9962 = vshrl.u32 %v9961, 7
  %v9963 = vsub.s32 %v9960, %v9962
  %v9964 = vrot.slane %v9087, %v9963
  %v9965 = vcombine.low %v9957, %v9964
  %v9966 = vcombine.low %v9095, %v9094
  %v9967 = vcombine.low %v9096, %v9104
  %v9969 = vunpack.c.l.s4 1983009808
  %v9970 = vunpack.c.0.s8 %v9969
  %v9971 = vlaneseq
  %v9972 = vshrl.u32 %v9971, 7
  %v9973 = vsub.s32 %v9970, %v9972
  %v9974 = vrot.slane %v9966, %v9973
  %v9976 = vunpack.c.l.s4 1983009808
  %v9977 = vunpack.c.0.s8 %v9976
  %v9978 = vlaneseq
  %v9979 = vshrl.u32 %v9978, 7
  %v9980 = vsub.s32 %v9977, %v9979
  %v9981 = vrot.slane %v9967, %v9980
  %v9982 = vcombine.low %v9974, %v9981
  %v9983 = vcombine.low %v9112, %v9111
  %v9985 = vunpack.c.l.s4 1983009808
  %v9986 = vunpack.c.0.s8 %v9985
  %v9987 = vlaneseq
  %v9988 = vshrl.u32 %v9987, 7
  %v9989 = vsub.s32 %v9986, %v9988
  %v9990 = vrot.slane %v9983, %v9989
  %v9992 = vunpack.c.l.s4 1983009808
  %v9993 = vunpack.c.0.s8 %v9992
  %v9994 = vlaneseq
  %v9995 = vshrl.u32 %v9994, 7
  %v9996 = vsub.s32 %v9993, %v9995
  %v9997 = vrot.slane %v9113, %v9996
  %v9998 = vcombine.low %v9990, %v9997
  %v9999 = vcombine.low %v9121, %v9129
  %v10000 = vcombine.low %v9128, %v9130
  %v10002 = vunpack.c.l.s4 1983009808
  %v10003 = vunpack.c.0.s8 %v10002
  %v10004 = vlaneseq
  %v10005 = vshrl.u32 %v10004, 7
  %v10006 = vsub.s32 %v10003, %v10005
  %v10007 = vrot.slane %v9999, %v10006
  %v10009 = vunpack.c.l.s4 1983009808
  %v10010 = vunpack.c.0.s8 %v10009
  %v10011 = vlaneseq
  %v10012 = vshrl.u32 %v10011, 7
  %v10013 = vsub.s32 %v10010, %v10012
  %v10014 = vrot.slane %v10000, %v10013
  %v10015 = vcombine.low %v10007, %v10014
  %v10016 = vcombine.low %v9138, %v9146
  %v10018 = vunpack.c.l.s4 1983009808
  %v10019 = vunpack.c.0.s8 %v10018
  %v10020 = vlaneseq
  %v10021 = vshrl.u32 %v10020, 7
  %v10022 = vsub.s32 %v10019, %v10021
  %v10023 = vrot.slane %v10016, %v10022
  %v10025 = vunpack.c.l.s4 1983009808
  %v10026 = vunpack.c.0.s8 %v10025
  %v10027 = vlaneseq
  %v10028 = vshrl.u32 %v10027, 7
  %v10029 = vsub.s32 %v10026, %v10028
  %v10030 = vrot.slane %v9145, %v10029
  %v10031 = vcombine.low %v10023, %v10030
  %v10032 = vcombine.low %v9147, %v9155
  %v10033 = vcombine.low %v9163, %v9162
  %v10035 = vunpack.c.l.s4 1983009808
  %v10036 = vunpack.c.0.s8 %v10035
  %v10037 = vlaneseq
  %v10038 = vshrl.u32 %v10037, 7
  %v10039 = vsub.s32 %v10036, %v10038
  %v10040 = vrot.slane %v10032, %v10039
  %v10042 = vunpack.c.l.s4 1983009808
  %v10043 = vunpack.c.0.s8 %v10042
  %v10044 = vlaneseq
  %v10045 = vshrl.u32 %v10044, 7
  %v10046 = vsub.s32 %v10043, %v10045
  %v10047 = vrot.slane %v10033, %v10046
  %v10048 = vcombine.low %v10040, %v10047
  %v10049 = vcombine.low %v9164, %v9172
  %v10051 = vunpack.c.l.s4 1983009808
  %v10052 = vunpack.c.0.s8 %v10051
  %v10053 = vlaneseq
  %v10054 = vshrl.u32 %v10053, 7
  %v10055 = vsub.s32 %v10052, %v10054
  %v10056 = vrot.slane %v10049, %v10055
  %v10058 = vunpack.c.l.s4 1983009808
  %v10059 = vunpack.c.0.s8 %v10058
  %v10060 = vlaneseq
  %v10061 = vshrl.u32 %v10060, 7
  %v10062 = vsub.s32 %v10059, %v10061
  %v10063 = vrot.slane %v9180, %v10062
  %v10064 = vcombine.low %v10056, %v10063
  %v10065 = vcombine.low %v9179, %v9181
  %v10066 = vcombine.low %v9189, %v9197
  %v10068 = vunpack.c.l.s4 1983009808
  %v10069 = vunpack.c.0.s8 %v10068
  %v10070 = vlaneseq
  %v10071 = vshrl.u32 %v10070, 7
  %v10072 = vsub.s32 %v10069, %v10071
  %v10073 = vrot.slane %v10065, %v10072
  %v10075 = vunpack.c.l.s4 1983009808
  %v10076 = vunpack.c.0.s8 %v10075
  %v10077 = vlaneseq
  %v10078 = vshrl.u32 %v10077, 7
  %v10079 = vsub.s32 %v10076, %v10078
  %v10080 = vrot.slane %v10066, %v10079
  %v10081 = vcombine.low %v10073, %v10080
  %v10082 = vcombine.low %v9196, %v9198
  %v10084 = vunpack.c.l.s4 1983009808
  %v10085 = vunpack.c.0.s8 %v10084
  %v10086 = vlaneseq
  %v10087 = vshrl.u32 %v10086, 7
  %v10088 = vsub.s32 %v10085, %v10087
  %v10089 = vrot.slane %v10082, %v10088
  %v10091 = vunpack.c.l.s4 1983009808
  %v10092 = vunpack.c.0.s8 %v10091
  %v10093 = vlaneseq
  %v10094 = vshrl.u32 %v10093, 7
  %v10095 = vsub.s32 %v10092, %v10094
  %v10096 = vrot.slane %v9206, %v10095
  %v10097 = vcombine.low %v10089, %v10096
  %v10098 = vcombine.low %v9214, %v9213
  %v10099 = vcombine.low %v9215, %v9223
  %v10101 = vunpack.c.l.s4 1983009808
  %v10102 = vunpack.c.0.s8 %v10101
  %v10103 = vlaneseq
  %v10104 = vshrl.u32 %v10103, 7
  %v10105 = vsub.s32 %v10102, %v10104
  %v10106 = vrot.slane %v10098, %v10105
  %v10108 = vunpack.c.l.s4 1983009808
  %v10109 = vunpack.c.0.s8 %v10108
  %v10110 = vlaneseq
  %v10111 = vshrl.u32 %v10110, 7
  %v10112 = vsub.s32 %v10109, %v10111
  %v10113 = vrot.slane %v10099, %v10112
  %v10114 = vcombine.low %v10106, %v10113
  %v10115 = vcombine.low %v9231, %v9230
  %v10117 = vunpack.c.l.s4 1983009808
  %v10118 = vunpack.c.0.s8 %v10117
  %v10119 = vlaneseq
  %v10120 = vshrl.u32 %v10119, 7
  %v10121 = vsub.s32 %v10118, %v10120
  %v10122 = vrot.slane %v10115, %v10121
  %v10124 = vunpack.c.l.s4 1983009808
  %v10125 = vunpack.c.0.s8 %v10124
  %v10126 = vlaneseq
  %v10127 = vshrl.u32 %v10126, 7
  %v10128 = vsub.s32 %v10125, %v10127
  %v10129 = vrot.slane %v9232, %v10128
  %v10130 = vcombine.low %v10122, %v10129
  %v10131 = vcombine.low %v9240, %v9248
  %v10132 = vcombine.low %v9247, %v9249
  %v10134 = vunpack.c.l.s4 1983009808
  %v10135 = vunpack.c.0.s8 %v10134
  %v10136 = vlaneseq
  %v10137 = vshrl.u32 %v10136, 7
  %v10138 = vsub.s32 %v10135, %v10137
  %v10139 = vrot.slane %v10131, %v10138
  %v10141 = vunpack.c.l.s4 1983009808
  %v10142 = vunpack.c.0.s8 %v10141
  %v10143 = vlaneseq
  %v10144 = vshrl.u32 %v10143, 7
  %v10145 = vsub.s32 %v10142, %v10144
  %v10146 = vrot.slane %v10132, %v10145
  %v10147 = vcombine.low %v10139, %v10146
  %v10148 = vcombine.low %v9257, %v9265
  %v10150 = vunpack.c.l.s4 1983009808
  %v10151 = vunpack.c.0.s8 %v10150
  %v10152 = vlaneseq
  %v10153 = vshrl.u32 %v10152, 7
  %v10154 = vsub.s32 %v10151, %v10153
  %v10155 = vrot.slane %v10148, %v10154
  %v10157 = vunpack.c.l.s4 1983009808
  %v10158 = vunpack.c.0.s8 %v10157
  %v10159 = vlaneseq
  %v10160 = vshrl.u32 %v10159, 7
  %v10161 = vsub.s32 %v10158, %v10160
  %v10162 = vrot.slane %v9264, %v10161
  %v10163 = vcombine.low %v10155, %v10162
  %v10164 = vcombine.low %v9266, %v9274
  %v10165 = vcombine.low %v9282, %v9281
  %v10167 = vunpack.c.l.s4 1983009808
  %v10168 = vunpack.c.0.s8 %v10167
  %v10169 = vlaneseq
  %v10170 = vshrl.u32 %v10169, 7
  %v10171 = vsub.s32 %v10168, %v10170
  %v10172 = vrot.slane %v10164, %v10171
  %v10174 = vunpack.c.l.s4 1983009808
  %v10175 = vunpack.c.0.s8 %v10174
  %v10176 = vlaneseq
  %v10177 = vshrl.u32 %v10176, 7
  %v10178 = vsub.s32 %v10175, %v10177
  %v10179 = vrot.slane %v10165, %v10178
  %v10180 = vcombine.low %v10172, %v10179
  %v10181 = vcombine.low %v9283, %v9291
  %v10183 = vunpack.c.l.s4 1983009808
  %v10184 = vunpack.c.0.s8 %v10183
  %v10185 = vlaneseq
  %v10186 = vshrl.u32 %v10185, 7
  %v10187 = vsub.s32 %v10184, %v10186
  %v10188 = vrot.slane %v10181, %v10187
  %v10190 = vunpack.c.l.s4 1983009808
  %v10191 = vunpack.c.0.s8 %v10190
  %v10192 = vlaneseq
  %v10193 = vshrl.u32 %v10192, 7
  %v10194 = vsub.s32 %v10191, %v10193
  %v10195 = vrot.slane %v9299, %v10194
  %v10196 = vcombine.low %v10188, %v10195
  %v10197 = vcombine.low %v9298, %v9300
  %v10198 = vcombine.low %v9308, %v9316
  %v10200 = vunpack.c.l.s4 1983009808
  %v10201 = vunpack.c.0.s8 %v10200
  %v10202 = vlaneseq
  %v10203 = vshrl.u32 %v10202, 7
  %v10204 = vsub.s32 %v10201, %v10203
  %v10205 = vrot.slane %v10197, %v10204
  %v10207 = vunpack.c.l.s4 1983009808
  %v10208 = vunpack.c.0.s8 %v10207
  %v10209 = vlaneseq
  %v10210 = vshrl.u32 %v10209, 7
  %v10211 = vsub.s32 %v10208, %v10210
  %v10212 = vrot.slane %v10198, %v10211
  %v10213 = vcombine.low %v10205, %v10212
  %v10214 = vcombine.low %v9315, %v9317
  %v10216 = vunpack.c.l.s4 1983009808
  %v10217 = vunpack.c.0.s8 %v10216
  %v10218 = vlaneseq
  %v10219 = vshrl.u32 %v10218, 7
  %v10220 = vsub.s32 %v10217, %v10219
  %v10221 = vrot.slane %v10214, %v10220
  %v10223 = vunpack.c.l.s4 1983009808
  %v10224 = vunpack.c.0.s8 %v10223
  %v10225 = vlaneseq
  %v10226 = vshrl.u32 %v10225, 7
  %v10227 = vsub.s32 %v10224, %v10226
  %v10228 = vrot.slane %v9325, %v10227
  %v10229 = vcombine.low %v10221, %v10228
  %v10230 = vcombine.low %v9333, %v9332
  %v10231 = vcombine.low %v9334, %v9342
  %v10233 = vunpack.c.l.s4 1983009808
  %v10234 = vunpack.c.0.s8 %v10233
  %v10235 = vlaneseq
  %v10236 = vshrl.u32 %v10235, 7
  %v10237 = vsub.s32 %v10234, %v10236
  %v10238 = vrot.slane %v10230, %v10237
  %v10240 = vunpack.c.l.s4 1983009808
  %v10241 = vunpack.c.0.s8 %v10240
  %v10242 = vlaneseq
  %v10243 = vshrl.u32 %v10242, 7
  %v10244 = vsub.s32 %v10241, %v10243
  %v10245 = vrot.slane %v10231, %v10244
  %v10246 = vcombine.low %v10238, %v10245
  %v10247 = vcombine.low %v9350, %v9349
  %v10249 = vunpack.c.l.s4 1983009808
  %v10250 = vunpack.c.0.s8 %v10249
  %v10251 = vlaneseq
  %v10252 = vshrl.u32 %v10251, 7
  %v10253 = vsub.s32 %v10250, %v10252
  %v10254 = vrot.slane %v10247, %v10253
  %v10256 = vunpack.c.l.s4 1983009808
  %v10257 = vunpack.c.0.s8 %v10256
  %v10258 = vlaneseq
  %v10259 = vshrl.u32 %v10258, 7
  %v10260 = vsub.s32 %v10257, %v10259
  %v10261 = vrot.slane %v9351, %v10260
  %v10262 = vcombine.low %v10254, %v10261
  %v10263 = vcombine.low %v9359, %v9367
  %v10264 = vcombine.low %v9366, %v9368
  %v10266 = vunpack.c.l.s4 1983009808
  %v10267 = vunpack.c.0.s8 %v10266
  %v10268 = vlaneseq
  %v10269 = vshrl.u32 %v10268, 7
  %v10270 = vsub.s32 %v10267, %v10269
  %v10271 = vrot.slane %v10263, %v10270
  %v10273 = vunpack.c.l.s4 1983009808
  %v10274 = vunpack.c.0.s8 %v10273
  %v10275 = vlaneseq
  %v10276 = vshrl.u32 %v10275, 7
  %v10277 = vsub.s32 %v10274, %v10276
  %v10278 = vrot.slane %v10264, %v10277
  %v10279 = vcombine.low %v10271, %v10278
  %v10280 = vcombine.low %v9376, %v9384
  %v10282 = vunpack.c.l.s4 1983009808
  %v10283 = vunpack.c.0.s8 %v10282
  %v10284 = vlaneseq
  %v10285 = vshrl.u32 %v10284, 7
  %v10286 = vsub.s32 %v10283, %v10285
  %v10287 = vrot.slane %v10280, %v10286
  %v10289 = vunpack.c.l.s4 1983009808
  %v10290 = vunpack.c.0.s8 %v10289
  %v10291 = vlaneseq
  %v10292 = vshrl.u32 %v10291, 7
  %v10293 = vsub.s32 %v10290, %v10292
  %v10294 = vrot.slane %v9383, %v10293
  %v10295 = vcombine.low %v10287, %v10294
  %v10296 = vcombine.low %v9385, %v9393
  %v10297 = vcombine.low %v9401, %v9400
  %v10299 = vunpack.c.l.s4 1983009808
  %v10300 = vunpack.c.0.s8 %v10299
  %v10301 = vlaneseq
  %v10302 = vshrl.u32 %v10301, 7
  %v10303 = vsub.s32 %v10300, %v10302
  %v10304 = vrot.slane %v10296, %v10303
  %v10306 = vunpack.c.l.s4 1983009808
  %v10307 = vunpack.c.0.s8 %v10306
  %v10308 = vlaneseq
  %v10309 = vshrl.u32 %v10308, 7
  %v10310 = vsub.s32 %v10307, %v10309
  %v10311 = vrot.slane %v10297, %v10310
  %v10312 = vcombine.low %v10304, %v10311
  %v10313 = vcombine.low %v9402, %v9410
  %v10315 = vunpack.c.l.s4 1983009808
  %v10316 = vunpack.c.0.s8 %v10315
  %v10317 = vlaneseq
  %v10318 = vshrl.u32 %v10317, 7
  %v10319 = vsub.s32 %v10316, %v10318
  %v10320 = vrot.slane %v10313, %v10319
  %v10322 = vunpack.c.l.s4 1983009808
  %v10323 = vunpack.c.0.s8 %v10322
  %v10324 = vlaneseq
  %v10325 = vshrl.u32 %v10324, 7
  %v10326 = vsub.s32 %v10323, %v10325
  %v10327 = vrot.slane %v9418, %v10326
  %v10328 = vcombine.low %v10320, %v10327
  %v10329 = vcombine.low %v9417, %v9419
  %v10330 = vcombine.low %v9427, %v9435
  %v10332 = vunpack.c.l.s4 1983009808
  %v10333 = vunpack.c.0.s8 %v10332
  %v10334 = vlaneseq
  %v10335 = vshrl.u32 %v10334, 7
  %v10336 = vsub.s32 %v10333, %v10335
  %v10337 = vrot.slane %v10329, %v10336
  %v10339 = vunpack.c.l.s4 1983009808
  %v10340 = vunpack.c.0.s8 %v10339
  %v10341 = vlaneseq
  %v10342 = vshrl.u32 %v10341, 7
  %v10343 = vsub.s32 %v10340, %v10342
  %v10344 = vrot.slane %v10330, %v10343
  %v10345 = vcombine.low %v10337, %v10344
  %v10346 = vcombine.low %v9434, %v9436
  %v10348 = vunpack.c.l.s4 1983009808
  %v10349 = vunpack.c.0.s8 %v10348
  %v10350 = vlaneseq
  %v10351 = vshrl.u32 %v10350, 7
  %v10352 = vsub.s32 %v10349, %v10351
  %v10353 = vrot.slane %v10346, %v10352
  %v10355 = vunpack.c.l.s4 1983009808
  %v10356 = vunpack.c.0.s8 %v10355
  %v10357 = vlaneseq
  %v10358 = vshrl.u32 %v10357, 7
  %v10359 = vsub.s32 %v10356, %v10358
  %v10360 = vrot.slane %v9444, %v10359
  %v10361 = vcombine.low %v10353, %v10360
  %v10362 = vcombine.low %v9452, %v9451
  %v10363 = vcombine.low %v9453, %v9461
  %v10365 = vunpack.c.l.s4 1983009808
  %v10366 = vunpack.c.0.s8 %v10365
  %v10367 = vlaneseq
  %v10368 = vshrl.u32 %v10367, 7
  %v10369 = vsub.s32 %v10366, %v10368
  %v10370 = vrot.slane %v10362, %v10369
  %v10372 = vunpack.c.l.s4 1983009808
  %v10373 = vunpack.c.0.s8 %v10372
  %v10374 = vlaneseq
  %v10375 = vshrl.u32 %v10374, 7
  %v10376 = vsub.s32 %v10373, %v10375
  %v10377 = vrot.slane %v10363, %v10376
  %v10378 = vcombine.low %v10370, %v10377
  %v10379 = vcombine.low %v9469, %v9468
  %v10381 = vunpack.c.l.s4 1983009808
  %v10382 = vunpack.c.0.s8 %v10381
  %v10383 = vlaneseq
  %v10384 = vshrl.u32 %v10383, 7
  %v10385 = vsub.s32 %v10382, %v10384
  %v10386 = vrot.slane %v10379, %v10385
  %v10388 = vunpack.c.l.s4 1983009808
  %v10389 = vunpack.c.0.s8 %v10388
  %v10390 = vlaneseq
  %v10391 = vshrl.u32 %v10390, 7
  %v10392 = vsub.s32 %v10389, %v10391
  %v10393 = vrot.slane %v9470, %v10392
  %v10394 = vcombine.low %v10386, %v10393
  %v10451 = vpack.c.bf16 %v9503, %v9487
  %v10452 = vpack.c.bf16 %v9536, %v9520
  %v10453 = vpack.c.bf16 %v9569, %v9553
  %v10454 = vpack.c.bf16 %v9602, %v9586
  %v10455 = vpack.c.bf16 %v9635, %v9619
  %v10456 = vpack.c.bf16 %v9668, %v9652
  %v10457 = vpack.c.bf16 %v9701, %v9685
  %v10458 = vpack.c.bf16 %v9734, %v9718
  %v10459 = vpack.c.bf16 %v9767, %v9751
  %v10460 = vpack.c.bf16 %v9800, %v9784
  %v10461 = vpack.c.bf16 %v9833, %v9817
  %v10462 = vpack.c.bf16 %v9866, %v9850
  %v10463 = vpack.c.bf16 %v9899, %v9883
  %v10464 = vpack.c.bf16 %v9932, %v9916
  %v10465 = vpack.c.bf16 %v9965, %v9949
  %v10466 = vpack.c.bf16 %v9998, %v9982
  %v10467 = vpack.c.bf16 %v10031, %v10015
  %v10468 = vpack.c.bf16 %v10064, %v10048
  %v10469 = vpack.c.bf16 %v10097, %v10081
  %v10470 = vpack.c.bf16 %v10130, %v10114
  %v10471 = vpack.c.bf16 %v10163, %v10147
  %v10472 = vpack.c.bf16 %v10196, %v10180
  %v10473 = vpack.c.bf16 %v10229, %v10213
  %v10474 = vpack.c.bf16 %v10262, %v10246
  %v10475 = vpack.c.bf16 %v10295, %v10279
  %v10476 = vpack.c.bf16 %v10328, %v10312
  %v10477 = vpack.c.bf16 %v10361, %v10345
  %v10478 = vpack.c.bf16 %v10394, %v10378
  %v10480 = vshrl.u32 %v10451, 16
  %v10482 = vshll.u32 %v10451, 16
  %v10484 = vrot.slane %v10482, 1
  %v10485 = vor.u32 %v10480, %v10484
  %v10487 = vshrl.u32 %v10452, 16
  %v10489 = vshll.u32 %v10452, 16
  %v10491 = vrot.slane %v10489, 1
  %v10492 = vor.u32 %v10487, %v10491
  %v10494 = vshrl.u32 %v10453, 16
  %v10496 = vshll.u32 %v10453, 16
  %v10498 = vrot.slane %v10496, 1
  %v10499 = vor.u32 %v10494, %v10498
  %v10501 = vshrl.u32 %v10454, 16
  %v10503 = vshll.u32 %v10454, 16
  %v10505 = vrot.slane %v10503, 1
  %v10506 = vor.u32 %v10501, %v10505
  %v10508 = vshrl.u32 %v10455, 16
  %v10510 = vshll.u32 %v10455, 16
  %v10512 = vrot.slane %v10510, 1
  %v10513 = vor.u32 %v10508, %v10512
  %v10515 = vshrl.u32 %v10456, 16
  %v10517 = vshll.u32 %v10456, 16
  %v10519 = vrot.slane %v10517, 1
  %v10520 = vor.u32 %v10515, %v10519
  %v10522 = vshrl.u32 %v10457, 16
  %v10524 = vshll.u32 %v10457, 16
  %v10526 = vrot.slane %v10524, 1
  %v10527 = vor.u32 %v10522, %v10526
  %v10529 = vshrl.u32 %v10458, 16
  %v10531 = vshll.u32 %v10458, 16
  %v10533 = vrot.slane %v10531, 1
  %v10534 = vor.u32 %v10529, %v10533
  %v10536 = vshrl.u32 %v10459, 16
  %v10538 = vshll.u32 %v10459, 16
  %v10540 = vrot.slane %v10538, 1
  %v10541 = vor.u32 %v10536, %v10540
  %v10543 = vshrl.u32 %v10460, 16
  %v10545 = vshll.u32 %v10460, 16
  %v10547 = vrot.slane %v10545, 1
  %v10548 = vor.u32 %v10543, %v10547
  %v10550 = vshrl.u32 %v10461, 16
  %v10552 = vshll.u32 %v10461, 16
  %v10554 = vrot.slane %v10552, 1
  %v10555 = vor.u32 %v10550, %v10554
  %v10557 = vshrl.u32 %v10462, 16
  %v10559 = vshll.u32 %v10462, 16
  %v10561 = vrot.slane %v10559, 1
  %v10562 = vor.u32 %v10557, %v10561
  %v10564 = vshrl.u32 %v10463, 16
  %v10566 = vshll.u32 %v10463, 16
  %v10568 = vrot.slane %v10566, 1
  %v10569 = vor.u32 %v10564, %v10568
  %v10571 = vshrl.u32 %v10464, 16
  %v10573 = vshll.u32 %v10464, 16
  %v10575 = vrot.slane %v10573, 1
  %v10576 = vor.u32 %v10571, %v10575
  %v10578 = vshrl.u32 %v10465, 16
  %v10580 = vshll.u32 %v10465, 16
  %v10582 = vrot.slane %v10580, 1
  %v10583 = vor.u32 %v10578, %v10582
  %v10585 = vshrl.u32 %v10466, 16
  %v10587 = vshll.u32 %v10466, 16
  %v10589 = vrot.slane %v10587, 1
  %v10590 = vor.u32 %v10585, %v10589
  %v10592 = vshrl.u32 %v10467, 16
  %v10594 = vshll.u32 %v10467, 16
  %v10596 = vrot.slane %v10594, 1
  %v10597 = vor.u32 %v10592, %v10596
  %v10599 = vshrl.u32 %v10468, 16
  %v10601 = vshll.u32 %v10468, 16
  %v10603 = vrot.slane %v10601, 1
  %v10604 = vor.u32 %v10599, %v10603
  %v10606 = vshrl.u32 %v10469, 16
  %v10608 = vshll.u32 %v10469, 16
  %v10610 = vrot.slane %v10608, 1
  %v10611 = vor.u32 %v10606, %v10610
  %v10613 = vshrl.u32 %v10470, 16
  %v10615 = vshll.u32 %v10470, 16
  %v10617 = vrot.slane %v10615, 1
  %v10618 = vor.u32 %v10613, %v10617
  %v10620 = vshrl.u32 %v10471, 16
  %v10622 = vshll.u32 %v10471, 16
  %v10624 = vrot.slane %v10622, 1
  %v10625 = vor.u32 %v10620, %v10624
  %v10627 = vshrl.u32 %v10472, 16
  %v10629 = vshll.u32 %v10472, 16
  %v10631 = vrot.slane %v10629, 1
  %v10632 = vor.u32 %v10627, %v10631
  %v10634 = vshrl.u32 %v10473, 16
  %v10636 = vshll.u32 %v10473, 16
  %v10638 = vrot.slane %v10636, 1
  %v10639 = vor.u32 %v10634, %v10638
  %v10641 = vshrl.u32 %v10474, 16
  %v10643 = vshll.u32 %v10474, 16
  %v10645 = vrot.slane %v10643, 1
  %v10646 = vor.u32 %v10641, %v10645
  %v10648 = vshrl.u32 %v10475, 16
  %v10650 = vshll.u32 %v10475, 16
  %v10652 = vrot.slane %v10650, 1
  %v10653 = vor.u32 %v10648, %v10652
  %v10655 = vshrl.u32 %v10476, 16
  %v10657 = vshll.u32 %v10476, 16
  %v10659 = vrot.slane %v10657, 1
  %v10660 = vor.u32 %v10655, %v10659
  %v10662 = vshrl.u32 %v10477, 16
  %v10664 = vshll.u32 %v10477, 16
  %v10666 = vrot.slane %v10664, 1
  %v10667 = vor.u32 %v10662, %v10666
  %v10669 = vshrl.u32 %v10478, 16
  %v10671 = vshll.u32 %v10478, 16
  %v10673 = vrot.slane %v10671, 1
  %v10674 = vor.u32 %v10669, %v10673
  %10675 = vrot.lane.b32.xlu0 %v10485, 4
  %v10676 = vpop.permute.xlu0 %10675
  %10677 = vrot.lane.b32.xlu0 %v10492, 4
  %v10678 = vpop.permute.xlu0 %10677
  %10679 = vrot.lane.b32.xlu0 %v10499, 4
  %v10680 = vpop.permute.xlu0 %10679
  %10681 = vrot.lane.b32.xlu0 %v10506, 4
  %v10682 = vpop.permute.xlu0 %10681
  %10683 = vrot.lane.b32.xlu0 %v10513, 4
  %v10684 = vpop.permute.xlu0 %10683
  %10685 = vrot.lane.b32.xlu0 %v10520, 4
  %v10686 = vpop.permute.xlu0 %10685
  %10687 = vrot.lane.b32.xlu0 %v10527, 4
  %v10688 = vpop.permute.xlu0 %10687
  %10689 = vrot.lane.b32.xlu0 %v10534, 4
  %v10690 = vpop.permute.xlu0 %10689
  %10691 = vrot.lane.b32.xlu0 %v10541, 4
  %v10692 = vpop.permute.xlu0 %10691
  %10693 = vrot.lane.b32.xlu0 %v10548, 4
  %v10694 = vpop.permute.xlu0 %10693
  %10695 = vrot.lane.b32.xlu0 %v10555, 4
  %v10696 = vpop.permute.xlu0 %10695
  %10697 = vrot.lane.b32.xlu0 %v10562, 4
  %v10698 = vpop.permute.xlu0 %10697
  %10699 = vrot.lane.b32.xlu0 %v10569, 4
  %v10700 = vpop.permute.xlu0 %10699
  %10701 = vrot.lane.b32.xlu0 %v10576, 4
  %v10702 = vpop.permute.xlu0 %10701
  %10703 = vrot.lane.b32.xlu0 %v10583, 4
  %v10704 = vpop.permute.xlu0 %10703
  %10705 = vrot.lane.b32.xlu0 %v10590, 4
  %v10706 = vpop.permute.xlu0 %10705
  %10707 = vrot.lane.b32.xlu0 %v10597, 4
  %v10708 = vpop.permute.xlu0 %10707
  %10709 = vrot.lane.b32.xlu0 %v10604, 4
  %v10710 = vpop.permute.xlu0 %10709
  %10711 = vrot.lane.b32.xlu0 %v10611, 4
  %v10712 = vpop.permute.xlu0 %10711
  %10713 = vrot.lane.b32.xlu0 %v10618, 4
  %v10714 = vpop.permute.xlu0 %10713
  %10715 = vrot.lane.b32.xlu0 %v10625, 4
  %v10716 = vpop.permute.xlu0 %10715
  %10717 = vrot.lane.b32.xlu0 %v10632, 4
  %v10718 = vpop.permute.xlu0 %10717
  %10719 = vrot.lane.b32.xlu0 %v10639, 4
  %v10720 = vpop.permute.xlu0 %10719
  %10721 = vrot.lane.b32.xlu0 %v10646, 4
  %v10722 = vpop.permute.xlu0 %10721
  %10723 = vrot.lane.b32.xlu0 %v10653, 4
  %v10724 = vpop.permute.xlu0 %10723
  %10725 = vrot.lane.b32.xlu0 %v10660, 4
  %v10726 = vpop.permute.xlu0 %10725
  %10727 = vrot.lane.b32.xlu0 %v10667, 4
  %v10728 = vpop.permute.xlu0 %10727
  %10729 = vrot.lane.b32.xlu0 %v10674, 4
  %v10730 = vpop.permute.xlu0 %10729
  %v10759 = vrot.slane %v10451, 1
  %v10760 = vrot.slane %v10452, 1
  %v10761 = vrot.slane %v10453, 1
  %v10762 = vrot.slane %v10454, 1
  %v10763 = vrot.slane %v10455, 1
  %v10764 = vrot.slane %v10456, 1
  %v10765 = vrot.slane %v10457, 1
  %v10766 = vrot.slane %v10458, 1
  %v10767 = vrot.slane %v10459, 1
  %v10768 = vrot.slane %v10460, 1
  %v10769 = vrot.slane %v10461, 1
  %v10770 = vrot.slane %v10462, 1
  %v10771 = vrot.slane %v10463, 1
  %v10772 = vrot.slane %v10464, 1
  %v10773 = vrot.slane %v10465, 1
  %v10774 = vrot.slane %v10466, 1
  %v10775 = vrot.slane %v10467, 1
  %v10776 = vrot.slane %v10468, 1
  %v10777 = vrot.slane %v10469, 1
  %v10778 = vrot.slane %v10470, 1
  %v10779 = vrot.slane %v10471, 1
  %v10780 = vrot.slane %v10472, 1
  %v10781 = vrot.slane %v10473, 1
  %v10782 = vrot.slane %v10474, 1
  %v10783 = vrot.slane %v10475, 1
  %v10784 = vrot.slane %v10476, 1
  %v10785 = vrot.slane %v10477, 1
  %v10786 = vrot.slane %v10478, 1
  %10787 = vrot.lane.b32.xlu0 %v10759, 8
  %v10788 = vpop.permute.xlu0 %10787
  %10789 = vrot.lane.b32.xlu0 %v10760, 8
  %v10790 = vpop.permute.xlu0 %10789
  %10791 = vrot.lane.b32.xlu0 %v10761, 8
  %v10792 = vpop.permute.xlu0 %10791
  %10793 = vrot.lane.b32.xlu0 %v10762, 8
  %v10794 = vpop.permute.xlu0 %10793
  %10795 = vrot.lane.b32.xlu0 %v10763, 8
  %v10796 = vpop.permute.xlu0 %10795
  %10797 = vrot.lane.b32.xlu0 %v10764, 8
  %v10798 = vpop.permute.xlu0 %10797
  %10799 = vrot.lane.b32.xlu0 %v10765, 8
  %v10800 = vpop.permute.xlu0 %10799
  %10801 = vrot.lane.b32.xlu0 %v10766, 8
  %v10802 = vpop.permute.xlu0 %10801
  %10803 = vrot.lane.b32.xlu0 %v10767, 8
  %v10804 = vpop.permute.xlu0 %10803
  %10805 = vrot.lane.b32.xlu0 %v10768, 8
  %v10806 = vpop.permute.xlu0 %10805
  %10807 = vrot.lane.b32.xlu0 %v10769, 8
  %v10808 = vpop.permute.xlu0 %10807
  %10809 = vrot.lane.b32.xlu0 %v10770, 8
  %v10810 = vpop.permute.xlu0 %10809
  %10811 = vrot.lane.b32.xlu0 %v10771, 8
  %v10812 = vpop.permute.xlu0 %10811
  %10813 = vrot.lane.b32.xlu0 %v10772, 8
  %v10814 = vpop.permute.xlu0 %10813
  %10815 = vrot.lane.b32.xlu0 %v10773, 8
  %v10816 = vpop.permute.xlu0 %10815
  %10817 = vrot.lane.b32.xlu0 %v10774, 8
  %v10818 = vpop.permute.xlu0 %10817
  %10819 = vrot.lane.b32.xlu0 %v10775, 8
  %v10820 = vpop.permute.xlu0 %10819
  %10821 = vrot.lane.b32.xlu0 %v10776, 8
  %v10822 = vpop.permute.xlu0 %10821
  %10823 = vrot.lane.b32.xlu0 %v10777, 8
  %v10824 = vpop.permute.xlu0 %10823
  %10825 = vrot.lane.b32.xlu0 %v10778, 8
  %v10826 = vpop.permute.xlu0 %10825
  %10827 = vrot.lane.b32.xlu0 %v10779, 8
  %v10828 = vpop.permute.xlu0 %10827
  %10829 = vrot.lane.b32.xlu0 %v10780, 8
  %v10830 = vpop.permute.xlu0 %10829
  %10831 = vrot.lane.b32.xlu0 %v10781, 8
  %v10832 = vpop.permute.xlu0 %10831
  %10833 = vrot.lane.b32.xlu0 %v10782, 8
  %v10834 = vpop.permute.xlu0 %10833
  %10835 = vrot.lane.b32.xlu0 %v10783, 8
  %v10836 = vpop.permute.xlu0 %10835
  %10837 = vrot.lane.b32.xlu0 %v10784, 8
  %v10838 = vpop.permute.xlu0 %10837
  %10839 = vrot.lane.b32.xlu0 %v10785, 8
  %v10840 = vpop.permute.xlu0 %10839
  %10841 = vrot.lane.b32.xlu0 %v10786, 8
  %v10842 = vpop.permute.xlu0 %10841
  %v10844 = vsel %vm4285, %v10451, %v10676
  %v10846 = vsel %vm4285, %v10452, %v10678
  %v10848 = vsel %vm4285, %v10453, %v10680
  %v10850 = vsel %vm4285, %v10454, %v10682
  %v10852 = vsel %vm4285, %v10455, %v10684
  %v10854 = vsel %vm4285, %v10456, %v10686
  %v10856 = vsel %vm4285, %v10457, %v10688
  %v10858 = vsel %vm4285, %v10458, %v10690
  %v10860 = vsel %vm4285, %v10459, %v10692
  %v10862 = vsel %vm4285, %v10460, %v10694
  %v10864 = vsel %vm4285, %v10461, %v10696
  %v10866 = vsel %vm4285, %v10462, %v10698
  %v10868 = vsel %vm4285, %v10463, %v10700
  %v10870 = vsel %vm4285, %v10464, %v10702
  %v10872 = vsel %vm4285, %v10465, %v10704
  %v10874 = vsel %vm4285, %v10466, %v10706
  %v10876 = vsel %vm4285, %v10467, %v10708
  %v10878 = vsel %vm4285, %v10468, %v10710
  %v10880 = vsel %vm4285, %v10469, %v10712
  %v10882 = vsel %vm4285, %v10470, %v10714
  %v10884 = vsel %vm4285, %v10471, %v10716
  %v10886 = vsel %vm4285, %v10472, %v10718
  %v10888 = vsel %vm4285, %v10473, %v10720
  %v10890 = vsel %vm4285, %v10474, %v10722
  %v10892 = vsel %vm4285, %v10475, %v10724
  %v10894 = vsel %vm4285, %v10476, %v10726
  %v10896 = vsel %vm4285, %v10477, %v10728
  %v10898 = vsel %vm4285, %v10478, %v10730
  %v10900 = vsel %vm100, %v10844, %v10788
  %v10902 = vsel %vm100, %v10846, %v10790
  %v10904 = vsel %vm100, %v10848, %v10792
  %v10906 = vsel %vm100, %v10850, %v10794
  %v10908 = vsel %vm100, %v10852, %v10796
  %v10910 = vsel %vm100, %v10854, %v10798
  %v10912 = vsel %vm100, %v10856, %v10800
  %v10914 = vsel %vm100, %v10858, %v10802
  %v10916 = vsel %vm100, %v10860, %v10804
  %v10918 = vsel %vm100, %v10862, %v10806
  %v10920 = vsel %vm100, %v10864, %v10808
  %v10922 = vsel %vm100, %v10866, %v10810
  %v10924 = vsel %vm100, %v10868, %v10812
  %v10926 = vsel %vm100, %v10870, %v10814
  %v10928 = vsel %vm100, %v10872, %v10816
  %v10930 = vsel %vm100, %v10874, %v10818
  %v10932 = vsel %vm100, %v10876, %v10820
  %v10934 = vsel %vm100, %v10878, %v10822
  %v10936 = vsel %vm100, %v10880, %v10824
  %v10938 = vsel %vm100, %v10882, %v10826
  %v10940 = vsel %vm100, %v10884, %v10828
  %v10942 = vsel %vm100, %v10886, %v10830
  %v10944 = vsel %vm100, %v10888, %v10832
  %v10946 = vsel %vm100, %v10890, %v10834
  %v10948 = vsel %vm100, %v10892, %v10836
  %v10950 = vsel %vm100, %v10894, %v10838
  %v10952 = vsel %vm100, %v10896, %v10840
  %v10954 = vsel %vm100, %v10898, %v10842
  %10979 = vrot.lane.b32.xlu0 %v10902, 12
  %v10980 = vpop.permute.xlu0 %10979
  %10981 = vrot.lane.b32.xlu0 %v10904, 12
  %v10982 = vpop.permute.xlu0 %10981
  %10983 = vrot.lane.b32.xlu0 %v10906, 12
  %v10984 = vpop.permute.xlu0 %10983
  %10985 = vrot.lane.b32.xlu0 %v10908, 12
  %v10986 = vpop.permute.xlu0 %10985
  %10987 = vrot.lane.b32.xlu0 %v10910, 12
  %v10988 = vpop.permute.xlu0 %10987
  %10989 = vrot.lane.b32.xlu0 %v10912, 12
  %v10990 = vpop.permute.xlu0 %10989
  %10991 = vrot.lane.b32.xlu0 %v10914, 12
  %v10992 = vpop.permute.xlu0 %10991
  %10993 = vrot.lane.b32.xlu0 %v10916, 12
  %v10994 = vpop.permute.xlu0 %10993
  %10995 = vrot.lane.b32.xlu0 %v10918, 12
  %v10996 = vpop.permute.xlu0 %10995
  %10997 = vrot.lane.b32.xlu0 %v10920, 12
  %v10998 = vpop.permute.xlu0 %10997
  %10999 = vrot.lane.b32.xlu0 %v10922, 12
  %v11000 = vpop.permute.xlu0 %10999
  %11001 = vrot.lane.b32.xlu0 %v10924, 12
  %v11002 = vpop.permute.xlu0 %11001
  %11003 = vrot.lane.b32.xlu0 %v10930, 12
  %v11004 = vpop.permute.xlu0 %11003
  %11005 = vrot.lane.b32.xlu0 %v10932, 12
  %v11006 = vpop.permute.xlu0 %11005
  %11007 = vrot.lane.b32.xlu0 %v10934, 12
  %v11008 = vpop.permute.xlu0 %11007
  %11009 = vrot.lane.b32.xlu0 %v10936, 12
  %v11010 = vpop.permute.xlu0 %11009
  %11011 = vrot.lane.b32.xlu0 %v10938, 12
  %v11012 = vpop.permute.xlu0 %11011
  %11013 = vrot.lane.b32.xlu0 %v10940, 12
  %v11014 = vpop.permute.xlu0 %11013
  %11015 = vrot.lane.b32.xlu0 %v10942, 12
  %v11016 = vpop.permute.xlu0 %11015
  %11017 = vrot.lane.b32.xlu0 %v10944, 12
  %v11018 = vpop.permute.xlu0 %11017
  %11019 = vrot.lane.b32.xlu0 %v10946, 12
  %v11020 = vpop.permute.xlu0 %11019
  %11021 = vrot.lane.b32.xlu0 %v10948, 12
  %v11022 = vpop.permute.xlu0 %11021
  %11023 = vrot.lane.b32.xlu0 %v10950, 12
  %v11024 = vpop.permute.xlu0 %11023
  %11025 = vrot.lane.b32.xlu0 %v10952, 12
  %v11026 = vpop.permute.xlu0 %11025
  %11029 = vrot.lane.b32.xlu0 %v10904, 24
  %v11030 = vpop.permute.xlu0 %11029
  %11031 = vrot.lane.b32.xlu0 %v10906, 24
  %v11032 = vpop.permute.xlu0 %11031
  %11033 = vrot.lane.b32.xlu0 %v10908, 24
  %v11034 = vpop.permute.xlu0 %11033
  %11035 = vrot.lane.b32.xlu0 %v10910, 24
  %v11036 = vpop.permute.xlu0 %11035
  %11037 = vrot.lane.b32.xlu0 %v10912, 24
  %v11038 = vpop.permute.xlu0 %11037
  %11039 = vrot.lane.b32.xlu0 %v10914, 24
  %v11040 = vpop.permute.xlu0 %11039
  %11041 = vrot.lane.b32.xlu0 %v10916, 24
  %v11042 = vpop.permute.xlu0 %11041
  %11043 = vrot.lane.b32.xlu0 %v10918, 24
  %v11044 = vpop.permute.xlu0 %11043
  %11045 = vrot.lane.b32.xlu0 %v10920, 24
  %v11046 = vpop.permute.xlu0 %11045
  %11047 = vrot.lane.b32.xlu0 %v10922, 24
  %v11048 = vpop.permute.xlu0 %11047
  %11049 = vrot.lane.b32.xlu0 %v10924, 24
  %v11050 = vpop.permute.xlu0 %11049
  %11051 = vrot.lane.b32.xlu0 %v10926, 24
  %v11052 = vpop.permute.xlu0 %11051
  %11053 = vrot.lane.b32.xlu0 %v10932, 24
  %v11054 = vpop.permute.xlu0 %11053
  %11055 = vrot.lane.b32.xlu0 %v10934, 24
  %v11056 = vpop.permute.xlu0 %11055
  %11057 = vrot.lane.b32.xlu0 %v10936, 24
  %v11058 = vpop.permute.xlu0 %11057
  %11059 = vrot.lane.b32.xlu0 %v10938, 24
  %v11060 = vpop.permute.xlu0 %11059
  %11061 = vrot.lane.b32.xlu0 %v10940, 24
  %v11062 = vpop.permute.xlu0 %11061
  %11063 = vrot.lane.b32.xlu0 %v10942, 24
  %v11064 = vpop.permute.xlu0 %11063
  %11065 = vrot.lane.b32.xlu0 %v10944, 24
  %v11066 = vpop.permute.xlu0 %11065
  %11067 = vrot.lane.b32.xlu0 %v10946, 24
  %v11068 = vpop.permute.xlu0 %11067
  %11069 = vrot.lane.b32.xlu0 %v10948, 24
  %v11070 = vpop.permute.xlu0 %11069
  %11071 = vrot.lane.b32.xlu0 %v10950, 24
  %v11072 = vpop.permute.xlu0 %11071
  %11073 = vrot.lane.b32.xlu0 %v10952, 24
  %v11074 = vpop.permute.xlu0 %11073
  %11075 = vrot.lane.b32.xlu0 %v10954, 24
  %v11076 = vpop.permute.xlu0 %11075
  %vm11077 = vcmask 97280
  %v11079 = vsel %vm11077, %v10900, %v10980
  %v11081 = vsel %vm11077, %v10902, %v10982
  %v11083 = vsel %vm11077, %v10904, %v10984
  %v11085 = vsel %vm11077, %v10906, %v10986
  %v11087 = vsel %vm11077, %v10908, %v10988
  %v11089 = vsel %vm11077, %v10910, %v10990
  %v11091 = vsel %vm11077, %v10912, %v10992
  %v11093 = vsel %vm11077, %v10914, %v10994
  %v11095 = vsel %vm11077, %v10916, %v10996
  %v11097 = vsel %vm11077, %v10918, %v10998
  %v11099 = vsel %vm11077, %v10920, %v11000
  %v11101 = vsel %vm11077, %v10922, %v11002
  %v11103 = vsel %vm11077, %v10928, %v11004
  %v11105 = vsel %vm11077, %v10930, %v11006
  %v11107 = vsel %vm11077, %v10932, %v11008
  %v11109 = vsel %vm11077, %v10934, %v11010
  %v11111 = vsel %vm11077, %v10936, %v11012
  %v11113 = vsel %vm11077, %v10938, %v11014
  %v11115 = vsel %vm11077, %v10940, %v11016
  %v11117 = vsel %vm11077, %v10942, %v11018
  %v11119 = vsel %vm11077, %v10944, %v11020
  %v11121 = vsel %vm11077, %v10946, %v11022
  %v11123 = vsel %vm11077, %v10948, %v11024
  %v11125 = vsel %vm11077, %v10950, %v11026
  %v11127 = vsel %vm5037, %v11079, %v11030
  %v11129 = vsel %vm5037, %v11081, %v11032
  %v11131 = vsel %vm5037, %v11083, %v11034
  %v11133 = vsel %vm5037, %v11085, %v11036
  %v11135 = vsel %vm5037, %v11087, %v11038
  %v11137 = vsel %vm5037, %v11089, %v11040
  %v11139 = vsel %vm5037, %v11091, %v11042
  %v11141 = vsel %vm5037, %v11093, %v11044
  %v11143 = vsel %vm5037, %v11095, %v11046
  %v11145 = vsel %vm5037, %v11097, %v11048
  %v11147 = vsel %vm5037, %v11099, %v11050
  %v11149 = vsel %vm5037, %v11101, %v11052
  %v11151 = vsel %vm5037, %v11103, %v11054
  %v11153 = vsel %vm5037, %v11105, %v11056
  %v11155 = vsel %vm5037, %v11107, %v11058
  %v11157 = vsel %vm5037, %v11109, %v11060
  %v11159 = vsel %vm5037, %v11111, %v11062
  %v11161 = vsel %vm5037, %v11113, %v11064
  %v11163 = vsel %vm5037, %v11115, %v11066
  %v11165 = vsel %vm5037, %v11117, %v11068
  %v11167 = vsel %vm5037, %v11119, %v11070
  %v11169 = vsel %vm5037, %v11121, %v11072
  %v11171 = vsel %vm5037, %v11123, %v11074
  %v11173 = vsel %vm5037, %v11125, %v11076
  %v11198 = vcombine.high %v11127, %v11127
  %v11200 = vunpack.c.l.s4 1983009808
  %v11201 = vunpack.c.0.s8 %v11200
  %v11202 = vlaneseq
  %v11203 = vshrl.u32 %v11202, 7
  %v11204 = vsub.s32 %v11201, %v11203
  %v11205 = vrot.slane %v11127, %v11204
  %v11207 = vunpack.c.l.s4 1983009808
  %v11208 = vunpack.c.0.s8 %v11207
  %v11209 = vlaneseq
  %v11210 = vshrl.u32 %v11209, 7
  %v11211 = vsub.s32 %v11208, %v11210
  %v11212 = vrot.slane %v11198, %v11211
  %v11213 = vcombine.high %v11205, %v11205
  %v11214 = vcombine.high %v11129, %v11129
  %v11216 = vunpack.c.l.s4 1983009808
  %v11217 = vunpack.c.0.s8 %v11216
  %v11218 = vlaneseq
  %v11219 = vshrl.u32 %v11218, 7
  %v11220 = vsub.s32 %v11217, %v11219
  %v11221 = vrot.slane %v11129, %v11220
  %v11223 = vunpack.c.l.s4 1983009808
  %v11224 = vunpack.c.0.s8 %v11223
  %v11225 = vlaneseq
  %v11226 = vshrl.u32 %v11225, 7
  %v11227 = vsub.s32 %v11224, %v11226
  %v11228 = vrot.slane %v11214, %v11227
  %v11229 = vcombine.high %v11221, %v11221
  %v11230 = vcombine.high %v11131, %v11131
  %v11232 = vunpack.c.l.s4 1983009808
  %v11233 = vunpack.c.0.s8 %v11232
  %v11234 = vlaneseq
  %v11235 = vshrl.u32 %v11234, 7
  %v11236 = vsub.s32 %v11233, %v11235
  %v11237 = vrot.slane %v11131, %v11236
  %v11239 = vunpack.c.l.s4 1983009808
  %v11240 = vunpack.c.0.s8 %v11239
  %v11241 = vlaneseq
  %v11242 = vshrl.u32 %v11241, 7
  %v11243 = vsub.s32 %v11240, %v11242
  %v11244 = vrot.slane %v11230, %v11243
  %v11245 = vcombine.high %v11237, %v11237
  %v11246 = vcombine.high %v11133, %v11133
  %v11248 = vunpack.c.l.s4 1983009808
  %v11249 = vunpack.c.0.s8 %v11248
  %v11250 = vlaneseq
  %v11251 = vshrl.u32 %v11250, 7
  %v11252 = vsub.s32 %v11249, %v11251
  %v11253 = vrot.slane %v11133, %v11252
  %v11255 = vunpack.c.l.s4 1983009808
  %v11256 = vunpack.c.0.s8 %v11255
  %v11257 = vlaneseq
  %v11258 = vshrl.u32 %v11257, 7
  %v11259 = vsub.s32 %v11256, %v11258
  %v11260 = vrot.slane %v11246, %v11259
  %v11261 = vcombine.high %v11253, %v11253
  %v11262 = vcombine.high %v11135, %v11135
  %v11264 = vunpack.c.l.s4 1983009808
  %v11265 = vunpack.c.0.s8 %v11264
  %v11266 = vlaneseq
  %v11267 = vshrl.u32 %v11266, 7
  %v11268 = vsub.s32 %v11265, %v11267
  %v11269 = vrot.slane %v11135, %v11268
  %v11271 = vunpack.c.l.s4 1983009808
  %v11272 = vunpack.c.0.s8 %v11271
  %v11273 = vlaneseq
  %v11274 = vshrl.u32 %v11273, 7
  %v11275 = vsub.s32 %v11272, %v11274
  %v11276 = vrot.slane %v11262, %v11275
  %v11277 = vcombine.high %v11269, %v11269
  %v11278 = vcombine.high %v11137, %v11137
  %v11280 = vunpack.c.l.s4 1983009808
  %v11281 = vunpack.c.0.s8 %v11280
  %v11282 = vlaneseq
  %v11283 = vshrl.u32 %v11282, 7
  %v11284 = vsub.s32 %v11281, %v11283
  %v11285 = vrot.slane %v11137, %v11284
  %v11287 = vunpack.c.l.s4 1983009808
  %v11288 = vunpack.c.0.s8 %v11287
  %v11289 = vlaneseq
  %v11290 = vshrl.u32 %v11289, 7
  %v11291 = vsub.s32 %v11288, %v11290
  %v11292 = vrot.slane %v11278, %v11291
  %v11293 = vcombine.high %v11285, %v11285
  %v11294 = vcombine.high %v11139, %v11139
  %v11296 = vunpack.c.l.s4 1983009808
  %v11297 = vunpack.c.0.s8 %v11296
  %v11298 = vlaneseq
  %v11299 = vshrl.u32 %v11298, 7
  %v11300 = vsub.s32 %v11297, %v11299
  %v11301 = vrot.slane %v11139, %v11300
  %v11303 = vunpack.c.l.s4 1983009808
  %v11304 = vunpack.c.0.s8 %v11303
  %v11305 = vlaneseq
  %v11306 = vshrl.u32 %v11305, 7
  %v11307 = vsub.s32 %v11304, %v11306
  %v11308 = vrot.slane %v11294, %v11307
  %v11309 = vcombine.high %v11301, %v11301
  %v11310 = vcombine.high %v11141, %v11141
  %v11312 = vunpack.c.l.s4 1983009808
  %v11313 = vunpack.c.0.s8 %v11312
  %v11314 = vlaneseq
  %v11315 = vshrl.u32 %v11314, 7
  %v11316 = vsub.s32 %v11313, %v11315
  %v11317 = vrot.slane %v11141, %v11316
  %v11319 = vunpack.c.l.s4 1983009808
  %v11320 = vunpack.c.0.s8 %v11319
  %v11321 = vlaneseq
  %v11322 = vshrl.u32 %v11321, 7
  %v11323 = vsub.s32 %v11320, %v11322
  %v11324 = vrot.slane %v11310, %v11323
  %v11325 = vcombine.high %v11317, %v11317
  %v11326 = vcombine.high %v11143, %v11143
  %v11328 = vunpack.c.l.s4 1983009808
  %v11329 = vunpack.c.0.s8 %v11328
  %v11330 = vlaneseq
  %v11331 = vshrl.u32 %v11330, 7
  %v11332 = vsub.s32 %v11329, %v11331
  %v11333 = vrot.slane %v11143, %v11332
  %v11335 = vunpack.c.l.s4 1983009808
  %v11336 = vunpack.c.0.s8 %v11335
  %v11337 = vlaneseq
  %v11338 = vshrl.u32 %v11337, 7
  %v11339 = vsub.s32 %v11336, %v11338
  %v11340 = vrot.slane %v11326, %v11339
  %v11341 = vcombine.high %v11333, %v11333
  %v11342 = vcombine.high %v11145, %v11145
  %v11344 = vunpack.c.l.s4 1983009808
  %v11345 = vunpack.c.0.s8 %v11344
  %v11346 = vlaneseq
  %v11347 = vshrl.u32 %v11346, 7
  %v11348 = vsub.s32 %v11345, %v11347
  %v11349 = vrot.slane %v11145, %v11348
  %v11351 = vunpack.c.l.s4 1983009808
  %v11352 = vunpack.c.0.s8 %v11351
  %v11353 = vlaneseq
  %v11354 = vshrl.u32 %v11353, 7
  %v11355 = vsub.s32 %v11352, %v11354
  %v11356 = vrot.slane %v11342, %v11355
  %v11357 = vcombine.high %v11349, %v11349
  %v11358 = vcombine.high %v11147, %v11147
  %v11360 = vunpack.c.l.s4 1983009808
  %v11361 = vunpack.c.0.s8 %v11360
  %v11362 = vlaneseq
  %v11363 = vshrl.u32 %v11362, 7
  %v11364 = vsub.s32 %v11361, %v11363
  %v11365 = vrot.slane %v11147, %v11364
  %v11367 = vunpack.c.l.s4 1983009808
  %v11368 = vunpack.c.0.s8 %v11367
  %v11369 = vlaneseq
  %v11370 = vshrl.u32 %v11369, 7
  %v11371 = vsub.s32 %v11368, %v11370
  %v11372 = vrot.slane %v11358, %v11371
  %v11373 = vcombine.high %v11365, %v11365
  %v11374 = vcombine.high %v11149, %v11149
  %v11376 = vunpack.c.l.s4 1983009808
  %v11377 = vunpack.c.0.s8 %v11376
  %v11378 = vlaneseq
  %v11379 = vshrl.u32 %v11378, 7
  %v11380 = vsub.s32 %v11377, %v11379
  %v11381 = vrot.slane %v11149, %v11380
  %v11383 = vunpack.c.l.s4 1983009808
  %v11384 = vunpack.c.0.s8 %v11383
  %v11385 = vlaneseq
  %v11386 = vshrl.u32 %v11385, 7
  %v11387 = vsub.s32 %v11384, %v11386
  %v11388 = vrot.slane %v11374, %v11387
  %v11389 = vcombine.high %v11381, %v11381
  %v11390 = vcombine.high %v11151, %v11151
  %v11392 = vunpack.c.l.s4 1983009808
  %v11393 = vunpack.c.0.s8 %v11392
  %v11394 = vlaneseq
  %v11395 = vshrl.u32 %v11394, 7
  %v11396 = vsub.s32 %v11393, %v11395
  %v11397 = vrot.slane %v11151, %v11396
  %v11399 = vunpack.c.l.s4 1983009808
  %v11400 = vunpack.c.0.s8 %v11399
  %v11401 = vlaneseq
  %v11402 = vshrl.u32 %v11401, 7
  %v11403 = vsub.s32 %v11400, %v11402
  %v11404 = vrot.slane %v11390, %v11403
  %v11405 = vcombine.high %v11397, %v11397
  %v11406 = vcombine.high %v11153, %v11153
  %v11408 = vunpack.c.l.s4 1983009808
  %v11409 = vunpack.c.0.s8 %v11408
  %v11410 = vlaneseq
  %v11411 = vshrl.u32 %v11410, 7
  %v11412 = vsub.s32 %v11409, %v11411
  %v11413 = vrot.slane %v11153, %v11412
  %v11415 = vunpack.c.l.s4 1983009808
  %v11416 = vunpack.c.0.s8 %v11415
  %v11417 = vlaneseq
  %v11418 = vshrl.u32 %v11417, 7
  %v11419 = vsub.s32 %v11416, %v11418
  %v11420 = vrot.slane %v11406, %v11419
  %v11421 = vcombine.high %v11413, %v11413
  %v11422 = vcombine.high %v11155, %v11155
  %v11424 = vunpack.c.l.s4 1983009808
  %v11425 = vunpack.c.0.s8 %v11424
  %v11426 = vlaneseq
  %v11427 = vshrl.u32 %v11426, 7
  %v11428 = vsub.s32 %v11425, %v11427
  %v11429 = vrot.slane %v11155, %v11428
  %v11431 = vunpack.c.l.s4 1983009808
  %v11432 = vunpack.c.0.s8 %v11431
  %v11433 = vlaneseq
  %v11434 = vshrl.u32 %v11433, 7
  %v11435 = vsub.s32 %v11432, %v11434
  %v11436 = vrot.slane %v11422, %v11435
  %v11437 = vcombine.high %v11429, %v11429
  %v11438 = vcombine.high %v11157, %v11157
  %v11440 = vunpack.c.l.s4 1983009808
  %v11441 = vunpack.c.0.s8 %v11440
  %v11442 = vlaneseq
  %v11443 = vshrl.u32 %v11442, 7
  %v11444 = vsub.s32 %v11441, %v11443
  %v11445 = vrot.slane %v11157, %v11444
  %v11447 = vunpack.c.l.s4 1983009808
  %v11448 = vunpack.c.0.s8 %v11447
  %v11449 = vlaneseq
  %v11450 = vshrl.u32 %v11449, 7
  %v11451 = vsub.s32 %v11448, %v11450
  %v11452 = vrot.slane %v11438, %v11451
  %v11453 = vcombine.high %v11445, %v11445
  %v11454 = vcombine.high %v11159, %v11159
  %v11456 = vunpack.c.l.s4 1983009808
  %v11457 = vunpack.c.0.s8 %v11456
  %v11458 = vlaneseq
  %v11459 = vshrl.u32 %v11458, 7
  %v11460 = vsub.s32 %v11457, %v11459
  %v11461 = vrot.slane %v11159, %v11460
  %v11463 = vunpack.c.l.s4 1983009808
  %v11464 = vunpack.c.0.s8 %v11463
  %v11465 = vlaneseq
  %v11466 = vshrl.u32 %v11465, 7
  %v11467 = vsub.s32 %v11464, %v11466
  %v11468 = vrot.slane %v11454, %v11467
  %v11469 = vcombine.high %v11461, %v11461
  %v11470 = vcombine.high %v11161, %v11161
  %v11472 = vunpack.c.l.s4 1983009808
  %v11473 = vunpack.c.0.s8 %v11472
  %v11474 = vlaneseq
  %v11475 = vshrl.u32 %v11474, 7
  %v11476 = vsub.s32 %v11473, %v11475
  %v11477 = vrot.slane %v11161, %v11476
  %v11479 = vunpack.c.l.s4 1983009808
  %v11480 = vunpack.c.0.s8 %v11479
  %v11481 = vlaneseq
  %v11482 = vshrl.u32 %v11481, 7
  %v11483 = vsub.s32 %v11480, %v11482
  %v11484 = vrot.slane %v11470, %v11483
  %v11485 = vcombine.high %v11477, %v11477
  %v11486 = vcombine.high %v11163, %v11163
  %v11488 = vunpack.c.l.s4 1983009808
  %v11489 = vunpack.c.0.s8 %v11488
  %v11490 = vlaneseq
  %v11491 = vshrl.u32 %v11490, 7
  %v11492 = vsub.s32 %v11489, %v11491
  %v11493 = vrot.slane %v11163, %v11492
  %v11495 = vunpack.c.l.s4 1983009808
  %v11496 = vunpack.c.0.s8 %v11495
  %v11497 = vlaneseq
  %v11498 = vshrl.u32 %v11497, 7
  %v11499 = vsub.s32 %v11496, %v11498
  %v11500 = vrot.slane %v11486, %v11499
  %v11501 = vcombine.high %v11493, %v11493
  %v11502 = vcombine.high %v11165, %v11165
  %v11504 = vunpack.c.l.s4 1983009808
  %v11505 = vunpack.c.0.s8 %v11504
  %v11506 = vlaneseq
  %v11507 = vshrl.u32 %v11506, 7
  %v11508 = vsub.s32 %v11505, %v11507
  %v11509 = vrot.slane %v11165, %v11508
  %v11511 = vunpack.c.l.s4 1983009808
  %v11512 = vunpack.c.0.s8 %v11511
  %v11513 = vlaneseq
  %v11514 = vshrl.u32 %v11513, 7
  %v11515 = vsub.s32 %v11512, %v11514
  %v11516 = vrot.slane %v11502, %v11515
  %v11517 = vcombine.high %v11509, %v11509
  %v11518 = vcombine.high %v11167, %v11167
  %v11520 = vunpack.c.l.s4 1983009808
  %v11521 = vunpack.c.0.s8 %v11520
  %v11522 = vlaneseq
  %v11523 = vshrl.u32 %v11522, 7
  %v11524 = vsub.s32 %v11521, %v11523
  %v11525 = vrot.slane %v11167, %v11524
  %v11527 = vunpack.c.l.s4 1983009808
  %v11528 = vunpack.c.0.s8 %v11527
  %v11529 = vlaneseq
  %v11530 = vshrl.u32 %v11529, 7
  %v11531 = vsub.s32 %v11528, %v11530
  %v11532 = vrot.slane %v11518, %v11531
  %v11533 = vcombine.high %v11525, %v11525
  %v11534 = vcombine.high %v11169, %v11169
  %v11536 = vunpack.c.l.s4 1983009808
  %v11537 = vunpack.c.0.s8 %v11536
  %v11538 = vlaneseq
  %v11539 = vshrl.u32 %v11538, 7
  %v11540 = vsub.s32 %v11537, %v11539
  %v11541 = vrot.slane %v11169, %v11540
  %v11543 = vunpack.c.l.s4 1983009808
  %v11544 = vunpack.c.0.s8 %v11543
  %v11545 = vlaneseq
  %v11546 = vshrl.u32 %v11545, 7
  %v11547 = vsub.s32 %v11544, %v11546
  %v11548 = vrot.slane %v11534, %v11547
  %v11549 = vcombine.high %v11541, %v11541
  %v11550 = vcombine.high %v11171, %v11171
  %v11552 = vunpack.c.l.s4 1983009808
  %v11553 = vunpack.c.0.s8 %v11552
  %v11554 = vlaneseq
  %v11555 = vshrl.u32 %v11554, 7
  %v11556 = vsub.s32 %v11553, %v11555
  %v11557 = vrot.slane %v11171, %v11556
  %v11559 = vunpack.c.l.s4 1983009808
  %v11560 = vunpack.c.0.s8 %v11559
  %v11561 = vlaneseq
  %v11562 = vshrl.u32 %v11561, 7
  %v11563 = vsub.s32 %v11560, %v11562
  %v11564 = vrot.slane %v11550, %v11563
  %v11565 = vcombine.high %v11557, %v11557
  %v11566 = vcombine.high %v11173, %v11173
  %v11568 = vunpack.c.l.s4 1983009808
  %v11569 = vunpack.c.0.s8 %v11568
  %v11570 = vlaneseq
  %v11571 = vshrl.u32 %v11570, 7
  %v11572 = vsub.s32 %v11569, %v11571
  %v11573 = vrot.slane %v11173, %v11572
  %v11575 = vunpack.c.l.s4 1983009808
  %v11576 = vunpack.c.0.s8 %v11575
  %v11577 = vlaneseq
  %v11578 = vshrl.u32 %v11577, 7
  %v11579 = vsub.s32 %v11576, %v11578
  %v11580 = vrot.slane %v11566, %v11579
  %v11581 = vcombine.high %v11573, %v11573
  %v11582 = vld [vmem:[%s7] sm:$0xf]
  %v11583 = vld [vmem:[%s7 + $0x4] sm:$0xf]
  %v11584 = vld [vmem:[%s7 + $0x8] sm:$0xf]
  %v11585 = vld [vmem:[%s7 + $0xc] sm:$0xf]
  %v11586 = vld [vmem:[%s7 + $0x10] sm:$0x3]
  %v11587 = vcombine.low %v11205, %v11213
  %v11588 = vcombine.low %v11212, %v11221
  %v11590 = vunpack.c.l.s4 1983009808
  %v11591 = vunpack.c.0.s8 %v11590
  %v11592 = vlaneseq
  %v11593 = vshrl.u32 %v11592, 7
  %v11594 = vsub.s32 %v11591, %v11593
  %v11595 = vrot.slane %v11587, %v11594
  %v11597 = vunpack.c.l.s4 1983009808
  %v11598 = vunpack.c.0.s8 %v11597
  %v11599 = vlaneseq
  %v11600 = vshrl.u32 %v11599, 7
  %v11601 = vsub.s32 %v11598, %v11600
  %v11602 = vrot.slane %v11588, %v11601
  %v11603 = vcombine.low %v11595, %v11602
  %v11604 = vcombine.low %v11229, %v11228
  %v11605 = vcombine.low %v11237, %v11245
  %v11607 = vunpack.c.l.s4 1983009808
  %v11608 = vunpack.c.0.s8 %v11607
  %v11609 = vlaneseq
  %v11610 = vshrl.u32 %v11609, 7
  %v11611 = vsub.s32 %v11608, %v11610
  %v11612 = vrot.slane %v11604, %v11611
  %v11614 = vunpack.c.l.s4 1983009808
  %v11615 = vunpack.c.0.s8 %v11614
  %v11616 = vlaneseq
  %v11617 = vshrl.u32 %v11616, 7
  %v11618 = vsub.s32 %v11615, %v11617
  %v11619 = vrot.slane %v11605, %v11618
  %v11620 = vcombine.low %v11612, %v11619
  %v11621 = vcombine.low %v11244, %v11253
  %v11622 = vcombine.low %v11261, %v11260
  %v11624 = vunpack.c.l.s4 1983009808
  %v11625 = vunpack.c.0.s8 %v11624
  %v11626 = vlaneseq
  %v11627 = vshrl.u32 %v11626, 7
  %v11628 = vsub.s32 %v11625, %v11627
  %v11629 = vrot.slane %v11621, %v11628
  %v11631 = vunpack.c.l.s4 1983009808
  %v11632 = vunpack.c.0.s8 %v11631
  %v11633 = vlaneseq
  %v11634 = vshrl.u32 %v11633, 7
  %v11635 = vsub.s32 %v11632, %v11634
  %v11636 = vrot.slane %v11622, %v11635
  %v11637 = vcombine.low %v11629, %v11636
  %v11638 = vcombine.low %v11269, %v11277
  %v11639 = vcombine.low %v11276, %v11285
  %v11641 = vunpack.c.l.s4 1983009808
  %v11642 = vunpack.c.0.s8 %v11641
  %v11643 = vlaneseq
  %v11644 = vshrl.u32 %v11643, 7
  %v11645 = vsub.s32 %v11642, %v11644
  %v11646 = vrot.slane %v11638, %v11645
  %v11648 = vunpack.c.l.s4 1983009808
  %v11649 = vunpack.c.0.s8 %v11648
  %v11650 = vlaneseq
  %v11651 = vshrl.u32 %v11650, 7
  %v11652 = vsub.s32 %v11649, %v11651
  %v11653 = vrot.slane %v11639, %v11652
  %v11654 = vcombine.low %v11646, %v11653
  %v11655 = vcombine.low %v11293, %v11292
  %v11656 = vcombine.low %v11301, %v11309
  %v11658 = vunpack.c.l.s4 1983009808
  %v11659 = vunpack.c.0.s8 %v11658
  %v11660 = vlaneseq
  %v11661 = vshrl.u32 %v11660, 7
  %v11662 = vsub.s32 %v11659, %v11661
  %v11663 = vrot.slane %v11655, %v11662
  %v11665 = vunpack.c.l.s4 1983009808
  %v11666 = vunpack.c.0.s8 %v11665
  %v11667 = vlaneseq
  %v11668 = vshrl.u32 %v11667, 7
  %v11669 = vsub.s32 %v11666, %v11668
  %v11670 = vrot.slane %v11656, %v11669
  %v11671 = vcombine.low %v11663, %v11670
  %v11672 = vcombine.low %v11308, %v11317
  %v11673 = vcombine.low %v11325, %v11324
  %v11675 = vunpack.c.l.s4 1983009808
  %v11676 = vunpack.c.0.s8 %v11675
  %v11677 = vlaneseq
  %v11678 = vshrl.u32 %v11677, 7
  %v11679 = vsub.s32 %v11676, %v11678
  %v11680 = vrot.slane %v11672, %v11679
  %v11682 = vunpack.c.l.s4 1983009808
  %v11683 = vunpack.c.0.s8 %v11682
  %v11684 = vlaneseq
  %v11685 = vshrl.u32 %v11684, 7
  %v11686 = vsub.s32 %v11683, %v11685
  %v11687 = vrot.slane %v11673, %v11686
  %v11688 = vcombine.low %v11680, %v11687
  %v11689 = vcombine.low %v11333, %v11341
  %v11690 = vcombine.low %v11340, %v11349
  %v11692 = vunpack.c.l.s4 1983009808
  %v11693 = vunpack.c.0.s8 %v11692
  %v11694 = vlaneseq
  %v11695 = vshrl.u32 %v11694, 7
  %v11696 = vsub.s32 %v11693, %v11695
  %v11697 = vrot.slane %v11689, %v11696
  %v11699 = vunpack.c.l.s4 1983009808
  %v11700 = vunpack.c.0.s8 %v11699
  %v11701 = vlaneseq
  %v11702 = vshrl.u32 %v11701, 7
  %v11703 = vsub.s32 %v11700, %v11702
  %v11704 = vrot.slane %v11690, %v11703
  %v11705 = vcombine.low %v11697, %v11704
  %v11706 = vcombine.low %v11357, %v11356
  %v11707 = vcombine.low %v11365, %v11373
  %v11709 = vunpack.c.l.s4 1983009808
  %v11710 = vunpack.c.0.s8 %v11709
  %v11711 = vlaneseq
  %v11712 = vshrl.u32 %v11711, 7
  %v11713 = vsub.s32 %v11710, %v11712
  %v11714 = vrot.slane %v11706, %v11713
  %v11716 = vunpack.c.l.s4 1983009808
  %v11717 = vunpack.c.0.s8 %v11716
  %v11718 = vlaneseq
  %v11719 = vshrl.u32 %v11718, 7
  %v11720 = vsub.s32 %v11717, %v11719
  %v11721 = vrot.slane %v11707, %v11720
  %v11722 = vcombine.low %v11714, %v11721
  %v11723 = vcombine.low %v11372, %v11381
  %v11724 = vcombine.low %v11389, %v11388
  %v11726 = vunpack.c.l.s4 1983009808
  %v11727 = vunpack.c.0.s8 %v11726
  %v11728 = vlaneseq
  %v11729 = vshrl.u32 %v11728, 7
  %v11730 = vsub.s32 %v11727, %v11729
  %v11731 = vrot.slane %v11723, %v11730
  %v11733 = vunpack.c.l.s4 1983009808
  %v11734 = vunpack.c.0.s8 %v11733
  %v11735 = vlaneseq
  %v11736 = vshrl.u32 %v11735, 7
  %v11737 = vsub.s32 %v11734, %v11736
  %v11738 = vrot.slane %v11724, %v11737
  %v11739 = vcombine.low %v11731, %v11738
  %v11740 = vcombine.low %v11397, %v11405
  %v11741 = vcombine.low %v11404, %v11413
  %v11743 = vunpack.c.l.s4 1983009808
  %v11744 = vunpack.c.0.s8 %v11743
  %v11745 = vlaneseq
  %v11746 = vshrl.u32 %v11745, 7
  %v11747 = vsub.s32 %v11744, %v11746
  %v11748 = vrot.slane %v11740, %v11747
  %v11750 = vunpack.c.l.s4 1983009808
  %v11751 = vunpack.c.0.s8 %v11750
  %v11752 = vlaneseq
  %v11753 = vshrl.u32 %v11752, 7
  %v11754 = vsub.s32 %v11751, %v11753
  %v11755 = vrot.slane %v11741, %v11754
  %v11756 = vcombine.low %v11748, %v11755
  %v11757 = vcombine.low %v11421, %v11420
  %v11758 = vcombine.low %v11429, %v11437
  %v11760 = vunpack.c.l.s4 1983009808
  %v11761 = vunpack.c.0.s8 %v11760
  %v11762 = vlaneseq
  %v11763 = vshrl.u32 %v11762, 7
  %v11764 = vsub.s32 %v11761, %v11763
  %v11765 = vrot.slane %v11757, %v11764
  %v11767 = vunpack.c.l.s4 1983009808
  %v11768 = vunpack.c.0.s8 %v11767
  %v11769 = vlaneseq
  %v11770 = vshrl.u32 %v11769, 7
  %v11771 = vsub.s32 %v11768, %v11770
  %v11772 = vrot.slane %v11758, %v11771
  %v11773 = vcombine.low %v11765, %v11772
  %v11774 = vcombine.low %v11436, %v11445
  %v11775 = vcombine.low %v11453, %v11452
  %v11777 = vunpack.c.l.s4 1983009808
  %v11778 = vunpack.c.0.s8 %v11777
  %v11779 = vlaneseq
  %v11780 = vshrl.u32 %v11779, 7
  %v11781 = vsub.s32 %v11778, %v11780
  %v11782 = vrot.slane %v11774, %v11781
  %v11784 = vunpack.c.l.s4 1983009808
  %v11785 = vunpack.c.0.s8 %v11784
  %v11786 = vlaneseq
  %v11787 = vshrl.u32 %v11786, 7
  %v11788 = vsub.s32 %v11785, %v11787
  %v11789 = vrot.slane %v11775, %v11788
  %v11790 = vcombine.low %v11782, %v11789
  %v11791 = vcombine.low %v11461, %v11469
  %v11792 = vcombine.low %v11468, %v11477
  %v11794 = vunpack.c.l.s4 1983009808
  %v11795 = vunpack.c.0.s8 %v11794
  %v11796 = vlaneseq
  %v11797 = vshrl.u32 %v11796, 7
  %v11798 = vsub.s32 %v11795, %v11797
  %v11799 = vrot.slane %v11791, %v11798
  %v11801 = vunpack.c.l.s4 1983009808
  %v11802 = vunpack.c.0.s8 %v11801
  %v11803 = vlaneseq
  %v11804 = vshrl.u32 %v11803, 7
  %v11805 = vsub.s32 %v11802, %v11804
  %v11806 = vrot.slane %v11792, %v11805
  %v11807 = vcombine.low %v11799, %v11806
  %v11808 = vcombine.low %v11485, %v11484
  %v11809 = vcombine.low %v11493, %v11501
  %v11811 = vunpack.c.l.s4 1983009808
  %v11812 = vunpack.c.0.s8 %v11811
  %v11813 = vlaneseq
  %v11814 = vshrl.u32 %v11813, 7
  %v11815 = vsub.s32 %v11812, %v11814
  %v11816 = vrot.slane %v11808, %v11815
  %v11818 = vunpack.c.l.s4 1983009808
  %v11819 = vunpack.c.0.s8 %v11818
  %v11820 = vlaneseq
  %v11821 = vshrl.u32 %v11820, 7
  %v11822 = vsub.s32 %v11819, %v11821
  %v11823 = vrot.slane %v11809, %v11822
  %v11824 = vcombine.low %v11816, %v11823
  %v11825 = vcombine.low %v11500, %v11509
  %v11826 = vcombine.low %v11517, %v11516
  %v11828 = vunpack.c.l.s4 1983009808
  %v11829 = vunpack.c.0.s8 %v11828
  %v11830 = vlaneseq
  %v11831 = vshrl.u32 %v11830, 7
  %v11832 = vsub.s32 %v11829, %v11831
  %v11833 = vrot.slane %v11825, %v11832
  %v11835 = vunpack.c.l.s4 1983009808
  %v11836 = vunpack.c.0.s8 %v11835
  %v11837 = vlaneseq
  %v11838 = vshrl.u32 %v11837, 7
  %v11839 = vsub.s32 %v11836, %v11838
  %v11840 = vrot.slane %v11826, %v11839
  %v11841 = vcombine.low %v11833, %v11840
  %v11842 = vcombine.low %v11525, %v11533
  %v11843 = vcombine.low %v11532, %v11541
  %v11845 = vunpack.c.l.s4 1983009808
  %v11846 = vunpack.c.0.s8 %v11845
  %v11847 = vlaneseq
  %v11848 = vshrl.u32 %v11847, 7
  %v11849 = vsub.s32 %v11846, %v11848
  %v11850 = vrot.slane %v11842, %v11849
  %v11852 = vunpack.c.l.s4 1983009808
  %v11853 = vunpack.c.0.s8 %v11852
  %v11854 = vlaneseq
  %v11855 = vshrl.u32 %v11854, 7
  %v11856 = vsub.s32 %v11853, %v11855
  %v11857 = vrot.slane %v11843, %v11856
  %v11858 = vcombine.low %v11850, %v11857
  %v11859 = vcombine.low %v11549, %v11548
  %v11860 = vcombine.low %v11557, %v11565
  %v11862 = vunpack.c.l.s4 1983009808
  %v11863 = vunpack.c.0.s8 %v11862
  %v11864 = vlaneseq
  %v11865 = vshrl.u32 %v11864, 7
  %v11866 = vsub.s32 %v11863, %v11865
  %v11867 = vrot.slane %v11859, %v11866
  %v11869 = vunpack.c.l.s4 1983009808
  %v11870 = vunpack.c.0.s8 %v11869
  %v11871 = vlaneseq
  %v11872 = vshrl.u32 %v11871, 7
  %v11873 = vsub.s32 %v11870, %v11872
  %v11874 = vrot.slane %v11860, %v11873
  %v11875 = vcombine.low %v11867, %v11874
  %v11876 = vcombine.low %v11564, %v11573
  %v11877 = vcombine.low %v11581, %v11580
  %v11879 = vunpack.c.l.s4 1983009808
  %v11880 = vunpack.c.0.s8 %v11879
  %v11881 = vlaneseq
  %v11882 = vshrl.u32 %v11881, 7
  %v11883 = vsub.s32 %v11880, %v11882
  %v11884 = vrot.slane %v11876, %v11883
  %v11886 = vunpack.c.l.s4 1983009808
  %v11887 = vunpack.c.0.s8 %v11886
  %v11888 = vlaneseq
  %v11889 = vshrl.u32 %v11888, 7
  %v11890 = vsub.s32 %v11887, %v11889
  %v11891 = vrot.slane %v11877, %v11890
  %v11892 = vcombine.low %v11884, %v11891
  %v11898 = vunpack.c.l.b16 %v11582
  %v11899 = vunpack.c.l.b16 %v11583
  %v11900 = vunpack.c.l.b16 %v11584
  %v11901 = vunpack.c.l.b16 %v11585
  %v11902 = vunpack.c.l.b16 %v11586
  %v11903 = vpack.c.b16 %v11899, %v11898
  %v11904 = vpack.c.b16 %v11901, %v11900
  %v11905 = vpack.c.b16 %v11902, %v11902
  %vm11908 = vcmask 293888
  %v11910 = vsel %vm11908, %v11603, 0
  %v11913 = vsel %vm11908, %v11620, 0
  %v11916 = vsel %vm11908, %v11637, 0
  %v11919 = vsel %vm11908, %v11654, 0
  %v11922 = vsel %vm11908, %v11671, 0
  %v11925 = vsel %vm11908, %v11688, 0
  %v11928 = vsel %vm11908, %v11705, 0
  %v11931 = vsel %vm11908, %v11722, 0
  %v11934 = vsel %vm11908, %v11739, 0
  %v11937 = vsel %vm11908, %v11756, 0
  %v11940 = vsel %vm11908, %v11773, 0
  %v11943 = vsel %vm11908, %v11790, 0
  %v11946 = vsel %vm11908, %v11807, 0
  %v11949 = vsel %vm11908, %v11824, 0
  %v11952 = vsel %vm11908, %v11841, 0
  %v11955 = vsel %vm11908, %v11858, 0
  %v11958 = vsel %vm11908, %v11875, 0
  %v11961 = vsel %vm11908, %v11892, 0
  %vm11963 = vcmask 1041408
  %v11965 = vsel %vm11963, %v11905, 0
  %11967 = vmatprep.subr.bf16.mxu0 0
  %11968 = vmatpush1.bf16.msra.mxu0 %v11903
  %11969 = vmatprep.subr.bf16.mxu0 0
  %11970 = vmatpush1.bf16.msra.mxu0 %v11904
  %11971 = vmatprep.subr.bf16.mxu0 0
  %11972 = vmatpush1.bf16.msra.mxu0 %v11965
  %11973 = vmatprep.subr.bf16.mxu0 0
  %11974 = vmatpush1.bf16.msra.mxu0 0
  %11975 = vmatprep.subr.bf16.mxu0 0
  %11976 = vmatpush1.bf16.msra.mxu0 0
  %11977 = vmatprep.subr.bf16.mxu0 0
  %11978 = vmatpush1.bf16.msra.mxu0 0
  %11979 = vmatprep.subr.bf16.mxu0 0
  %11980 = vmatpush1.bf16.msra.mxu0 0
  %11981 = vmatprep.subr.bf16.mxu0 0
  %11982 = vmatpush1.bf16.msra.mxu0 0
  %11983 = vmatprep.subr.bf16.mxu0 0
  %11984 = vmatpush1.bf16.msra.mxu0 0
  %11985 = vmatprep.subr.bf16.mxu0 0
  %11986 = vmatpush1.bf16.msra.mxu0 0
  %11987 = vmatprep.subr.bf16.mxu0 0
  %11988 = vmatpush1.bf16.msra.mxu0 0
  %11989 = vmatprep.subr.bf16.mxu0 0
  %11990 = vmatpush1.bf16.msra.mxu0 0
  %11991 = vmatprep.subr.bf16.mxu0 0
  %11992 = vmatpush1.bf16.msra.mxu0 0
  %11993 = vmatprep.subr.bf16.mxu0 0
  %11994 = vmatpush1.bf16.msra.mxu0 0
  %11995 = vmatprep.subr.bf16.mxu0 0
  %11996 = vmatpush1.bf16.msra.mxu0 0
  %11997 = vmatprep.subr.bf16.mxu0 0
  %11998 = vmatpush1.bf16.msra.mxu0 0
  %11999 = vmatprep.mubr.bf16.mxu0 0
  %12000 = vmatmul.mubr.bf16.gmra.mrb[0].mxu0 %v11910
  %v12001 = vpop.f32.mrb[0].mxu0
  %v12002 = vadd.f32 0.0, %v12001
  %v12003 = vpop.f32.mrb[0].mxu0
  %v12004 = vpop.f32.mrb[0].mxu0
  %v12005 = vadd.f32 0.0, %v12004
  %v12006 = vpop.f32.mrb[0].mxu0
  %12007 = vmatprep.mubr.bf16.mxu0 0
  %12008 = vmatmul.mubr.bf16.gmra.mrb[0].mxu0 %v11913
  %v12009 = vpop.f32.mrb[0].mxu0
  %v12010 = vadd.f32 0.0, %v12009
  %v12011 = vpop.f32.mrb[0].mxu0
  %v12012 = vpop.f32.mrb[0].mxu0
  %v12013 = vadd.f32 0.0, %v12012
  %v12014 = vpop.f32.mrb[0].mxu0
  %12015 = vmatprep.mubr.bf16.mxu0 0
  %12016 = vmatmul.mubr.bf16.gmra.mrb[0].mxu0 %v11916
  %v12017 = vpop.f32.mrb[0].mxu0
  %v12018 = vadd.f32 0.0, %v12017
  %v12019 = vpop.f32.mrb[0].mxu0
  %v12020 = vpop.f32.mrb[0].mxu0
  %v12021 = vadd.f32 0.0, %v12020
  %v12022 = vpop.f32.mrb[0].mxu0
  %12023 = vmatprep.mubr.bf16.mxu0 0
  %12024 = vmatmul.mubr.bf16.gmra.mrb[0].mxu0 %v11919
  %v12025 = vpop.f32.mrb[0].mxu0
  %v12026 = vadd.f32 0.0, %v12025
  %v12027 = vpop.f32.mrb[0].mxu0
  %v12028 = vpop.f32.mrb[0].mxu0
  %v12029 = vadd.f32 0.0, %v12028
  %v12030 = vpop.f32.mrb[0].mxu0
  %12031 = vmatprep.mubr.bf16.mxu0 0
  %12032 = vmatmul.mubr.bf16.gmra.mrb[0].mxu0 %v11922
  %v12033 = vpop.f32.mrb[0].mxu0
  %v12034 = vadd.f32 0.0, %v12033
  %v12035 = vpop.f32.mrb[0].mxu0
  %v12036 = vpop.f32.mrb[0].mxu0
  %v12037 = vadd.f32 0.0, %v12036
  %v12038 = vpop.f32.mrb[0].mxu0
  %12039 = vmatprep.mubr.bf16.mxu0 0
  %12040 = vmatmul.mubr.bf16.gmra.mrb[0].mxu0 %v11925
  %v12041 = vpop.f32.mrb[0].mxu0
  %v12042 = vadd.f32 0.0, %v12041
  %v12043 = vpop.f32.mrb[0].mxu0
  %v12044 = vpop.f32.mrb[0].mxu0
  %v12045 = vadd.f32 0.0, %v12044
  %v12046 = vpop.f32.mrb[0].mxu0
  %12047 = vmatprep.mubr.bf16.mxu0 0
  %12048 = vmatmul.mubr.bf16.gmra.mrb[0].mxu0 %v11928
  %v12049 = vpop.f32.mrb[0].mxu0
  %v12050 = vadd.f32 0.0, %v12049
  %v12051 = vpop.f32.mrb[0].mxu0
  %v12052 = vpop.f32.mrb[0].mxu0
  %v12053 = vadd.f32 0.0, %v12052
  %v12054 = vpop.f32.mrb[0].mxu0
  %12055 = vmatprep.mubr.bf16.mxu0 0
  %12056 = vmatmul.mubr.bf16.gmra.mrb[0].mxu0 %v11931
  %v12057 = vpop.f32.mrb[0].mxu0
  %v12058 = vadd.f32 0.0, %v12057
  %v12059 = vpop.f32.mrb[0].mxu0
  %v12060 = vpop.f32.mrb[0].mxu0
  %v12061 = vadd.f32 0.0, %v12060
  %v12062 = vpop.f32.mrb[0].mxu0
  %12063 = vmatprep.mubr.bf16.mxu0 0
  %12064 = vmatmul.mubr.bf16.gmra.mrb[0].mxu0 %v11934
  %v12065 = vpop.f32.mrb[0].mxu0
  %v12066 = vadd.f32 0.0, %v12065
  %v12067 = vpop.f32.mrb[0].mxu0
  %v12068 = vpop.f32.mrb[0].mxu0
  %v12069 = vadd.f32 0.0, %v12068
  %v12070 = vpop.f32.mrb[0].mxu0
  %12071 = vmatprep.mubr.bf16.mxu0 0
  %12072 = vmatmul.mubr.bf16.gmra.mrb[0].mxu0 %v11937
  %v12073 = vpop.f32.mrb[0].mxu0
  %v12074 = vadd.f32 0.0, %v12073
  %v12075 = vpop.f32.mrb[0].mxu0
  %v12076 = vpop.f32.mrb[0].mxu0
  %v12077 = vadd.f32 0.0, %v12076
  %v12078 = vpop.f32.mrb[0].mxu0
  %12079 = vmatprep.mubr.bf16.mxu0 0
  %12080 = vmatmul.mubr.bf16.gmra.mrb[0].mxu0 %v11940
  %v12081 = vpop.f32.mrb[0].mxu0
  %v12082 = vadd.f32 0.0, %v12081
  %v12083 = vpop.f32.mrb[0].mxu0
  %v12084 = vpop.f32.mrb[0].mxu0
  %v12085 = vadd.f32 0.0, %v12084
  %v12086 = vpop.f32.mrb[0].mxu0
  %12087 = vmatprep.mubr.bf16.mxu0 0
  %12088 = vmatmul.mubr.bf16.gmra.mrb[0].mxu0 %v11943
  %v12089 = vpop.f32.mrb[0].mxu0
  %v12090 = vadd.f32 0.0, %v12089
  %v12091 = vpop.f32.mrb[0].mxu0
  %v12092 = vpop.f32.mrb[0].mxu0
  %v12093 = vadd.f32 0.0, %v12092
  %v12094 = vpop.f32.mrb[0].mxu0
  %12095 = vmatprep.mubr.bf16.mxu0 0
  %12096 = vmatmul.mubr.bf16.gmra.mrb[0].mxu0 %v11946
  %v12097 = vpop.f32.mrb[0].mxu0
  %v12098 = vadd.f32 0.0, %v12097
  %v12099 = vpop.f32.mrb[0].mxu0
  %v12100 = vpop.f32.mrb[0].mxu0
  %v12101 = vadd.f32 0.0, %v12100
  %v12102 = vpop.f32.mrb[0].mxu0
  %12103 = vmatprep.mubr.bf16.mxu0 0
  %12104 = vmatmul.mubr.bf16.gmra.mrb[0].mxu0 %v11949
  %v12105 = vpop.f32.mrb[0].mxu0
  %v12106 = vadd.f32 0.0, %v12105
  %v12107 = vpop.f32.mrb[0].mxu0
  %v12108 = vpop.f32.mrb[0].mxu0
  %v12109 = vadd.f32 0.0, %v12108
  %v12110 = vpop.f32.mrb[0].mxu0
  %12111 = vmatprep.mubr.bf16.mxu0 0
  %12112 = vmatmul.mubr.bf16.gmra.mrb[0].mxu0 %v11952
  %v12113 = vpop.f32.mrb[0].mxu0
  %v12114 = vadd.f32 0.0, %v12113
  %v12115 = vpop.f32.mrb[0].mxu0
  %v12116 = vpop.f32.mrb[0].mxu0
  %v12117 = vadd.f32 0.0, %v12116
  %v12118 = vpop.f32.mrb[0].mxu0
  %12119 = vmatprep.mubr.bf16.mxu0 0
  %12120 = vmatmul.mubr.bf16.gmra.mrb[0].mxu0 %v11955
  %v12121 = vpop.f32.mrb[0].mxu0
  %v12122 = vadd.f32 0.0, %v12121
  %v12123 = vpop.f32.mrb[0].mxu0
  %v12124 = vpop.f32.mrb[0].mxu0
  %v12125 = vadd.f32 0.0, %v12124
  %v12126 = vpop.f32.mrb[0].mxu0
  %12127 = vmatprep.mubr.bf16.mxu0 0
  %12128 = vmatmul.mubr.bf16.gmra.mrb[0].mxu0 %v11958
  %v12129 = vpop.f32.mrb[0].mxu0
  %v12130 = vadd.f32 0.0, %v12129
  %v12131 = vpop.f32.mrb[0].mxu0
  %v12132 = vpop.f32.mrb[0].mxu0
  %v12133 = vadd.f32 0.0, %v12132
  %v12134 = vpop.f32.mrb[0].mxu0
  %12135 = vmatprep.mubr.bf16.mxu0 0
  %12136 = vmatmul.mubr.bf16.gmra.mrb[0].mxu0 %v11961
  %v12137 = vpop.f32.mrb[0].mxu0
  %v12138 = vadd.f32 0.0, %v12137
  %v12139 = vpop.f32.mrb[0].mxu0
  %v12140 = vpop.f32.mrb[0].mxu0
  %v12141 = vadd.f32 0.0, %v12140
  %v12142 = vpop.f32.mrb[0].mxu0
  %12143 = vdwg.mxu0
  %v12144 = vld [vmem:[%s8] sm:$0x1]
  %v12145 = vld [vmem:[%s9] sm:$0x1]
  %v12146 = vsel %vm4285, %v12002, 0.0
  %v12147 = vsel %vm4285, %v12005, 0.0
  %v12148 = vadd.f32 %v12146, %v12147
  %v12149 = vsel %vm4285, %v12010, 0.0
  %v12150 = vadd.f32 %v12148, %v12149
  %v12151 = vsel %vm4285, %v12013, 0.0
  %v12152 = vadd.f32 %v12150, %v12151
  %v12153 = vsel %vm4285, %v12018, 0.0
  %v12154 = vadd.f32 %v12152, %v12153
  %v12155 = vsel %vm4285, %v12021, 0.0
  %v12156 = vadd.f32 %v12154, %v12155
  %v12157 = vsel %vm4285, %v12026, 0.0
  %v12158 = vadd.f32 %v12156, %v12157
  %v12159 = vsel %vm4285, %v12029, 0.0
  %v12160 = vadd.f32 %v12158, %v12159
  %v12161 = vsel %vm4285, %v12034, 0.0
  %v12162 = vadd.f32 %v12160, %v12161
  %v12163 = vsel %vm4285, %v12037, 0.0
  %v12164 = vadd.f32 %v12162, %v12163
  %v12165 = vsel %vm4285, %v12042, 0.0
  %v12166 = vadd.f32 %v12164, %v12165
  %v12167 = vsel %vm4285, %v12045, 0.0
  %v12168 = vadd.f32 %v12166, %v12167
  %v12169 = vsel %vm4285, %v12050, 0.0
  %v12170 = vadd.f32 %v12168, %v12169
  %v12171 = vsel %vm4285, %v12053, 0.0
  %v12172 = vadd.f32 %v12170, %v12171
  %v12173 = vsel %vm4285, %v12058, 0.0
  %v12174 = vadd.f32 %v12172, %v12173
  %v12175 = vsel %vm4285, %v12061, 0.0
  %v12176 = vadd.f32 %v12174, %v12175
  %v12177 = vsel %vm4285, %v12066, 0.0
  %v12178 = vadd.f32 %v12176, %v12177
  %v12179 = vsel %vm4285, %v12069, 0.0
  %v12180 = vadd.f32 %v12178, %v12179
  %v12181 = vsel %vm4285, %v12074, 0.0
  %v12182 = vadd.f32 %v12180, %v12181
  %v12183 = vsel %vm4285, %v12077, 0.0
  %v12184 = vadd.f32 %v12182, %v12183
  %v12185 = vsel %vm4285, %v12082, 0.0
  %v12186 = vadd.f32 %v12184, %v12185
  %v12187 = vsel %vm4285, %v12085, 0.0
  %v12188 = vadd.f32 %v12186, %v12187
  %v12189 = vsel %vm4285, %v12090, 0.0
  %v12190 = vadd.f32 %v12188, %v12189
  %v12191 = vsel %vm4285, %v12093, 0.0
  %v12192 = vadd.f32 %v12190, %v12191
  %v12193 = vsel %vm4285, %v12098, 0.0
  %v12194 = vadd.f32 %v12192, %v12193
  %v12195 = vsel %vm4285, %v12101, 0.0
  %v12196 = vadd.f32 %v12194, %v12195
  %v12197 = vsel %vm4285, %v12106, 0.0
  %v12198 = vadd.f32 %v12196, %v12197
  %v12199 = vsel %vm4285, %v12109, 0.0
  %v12200 = vadd.f32 %v12198, %v12199
  %v12201 = vsel %vm4285, %v12114, 0.0
  %v12202 = vadd.f32 %v12200, %v12201
  %v12203 = vsel %vm4285, %v12117, 0.0
  %v12204 = vadd.f32 %v12202, %v12203
  %v12205 = vsel %vm4285, %v12122, 0.0
  %v12206 = vadd.f32 %v12204, %v12205
  %v12207 = vsel %vm4285, %v12125, 0.0
  %v12208 = vadd.f32 %v12206, %v12207
  %v12209 = vsel %vm4285, %v12130, 0.0
  %v12210 = vadd.f32 %v12208, %v12209
  %v12211 = vsel %vm4285, %v12133, 0.0
  %v12212 = vadd.f32 %v12210, %v12211
  %v12213 = vsel %vm4285, %v12138, 0.0
  %v12214 = vadd.f32 %v12212, %v12213
  %v12215 = vsel %vm4285, %v12141, 0.0
  %v12216 = vadd.f32 %v12214, %v12215
  %v12217 = vrot.slane %v12216, 4
  %v12218 = vadd.f32 %v12216, %v12217
  %v12219 = vrot.slane %v12218, 2
  %v12220 = vadd.f32 %v12218, %v12219
  %v12221 = vrot.slane %v12220, 1
  %v12222 = vadd.f32 %v12220, %v12221
  %v12223 = vrcp.pop 288.0
  %v12224 = vmul.f32 %v12222, %v12223
  %v12225 = vsub.f32 %v12002, %v12224
  %v12226 = vsub.f32 %v12005, %v12224
  %v12227 = vsub.f32 %v12010, %v12224
  %v12228 = vsub.f32 %v12013, %v12224
  %v12229 = vsub.f32 %v12018, %v12224
  %v12230 = vsub.f32 %v12021, %v12224
  %v12231 = vsub.f32 %v12026, %v12224
  %v12232 = vsub.f32 %v12029, %v12224
  %v12233 = vsub.f32 %v12034, %v12224
  %v12234 = vsub.f32 %v12037, %v12224
  %v12235 = vsub.f32 %v12042, %v12224
  %v12236 = vsub.f32 %v12045, %v12224
  %v12237 = vsub.f32 %v12050, %v12224
  %v12238 = vsub.f32 %v12053, %v12224
  %v12239 = vsub.f32 %v12058, %v12224
  %v12240 = vsub.f32 %v12061, %v12224
  %v12241 = vsub.f32 %v12066, %v12224
  %v12242 = vsub.f32 %v12069, %v12224
  %v12243 = vsub.f32 %v12074, %v12224
  %v12244 = vsub.f32 %v12077, %v12224
  %v12245 = vsub.f32 %v12082, %v12224
  %v12246 = vsub.f32 %v12085, %v12224
  %v12247 = vsub.f32 %v12090, %v12224
  %v12248 = vsub.f32 %v12093, %v12224
  %v12249 = vsub.f32 %v12098, %v12224
  %v12250 = vsub.f32 %v12101, %v12224
  %v12251 = vsub.f32 %v12106, %v12224
  %v12252 = vsub.f32 %v12109, %v12224
  %v12253 = vsub.f32 %v12114, %v12224
  %v12254 = vsub.f32 %v12117, %v12224
  %v12255 = vsub.f32 %v12122, %v12224
  %v12256 = vsub.f32 %v12125, %v12224
  %v12257 = vsub.f32 %v12130, %v12224
  %v12258 = vsub.f32 %v12133, %v12224
  %v12259 = vsub.f32 %v12138, %v12224
  %v12260 = vsub.f32 %v12141, %v12224
  %v12261 = vmul.f32 %v12225, %v12225
  %v12262 = vmul.f32 %v12226, %v12226
  %v12263 = vmul.f32 %v12227, %v12227
  %v12264 = vmul.f32 %v12228, %v12228
  %v12265 = vmul.f32 %v12229, %v12229
  %v12266 = vmul.f32 %v12230, %v12230
  %v12267 = vmul.f32 %v12231, %v12231
  %v12268 = vmul.f32 %v12232, %v12232
  %v12269 = vmul.f32 %v12233, %v12233
  %v12270 = vmul.f32 %v12234, %v12234
  %v12271 = vmul.f32 %v12235, %v12235
  %v12272 = vmul.f32 %v12236, %v12236
  %v12273 = vmul.f32 %v12237, %v12237
  %v12274 = vmul.f32 %v12238, %v12238
  %v12275 = vmul.f32 %v12239, %v12239
  %v12276 = vmul.f32 %v12240, %v12240
  %v12277 = vmul.f32 %v12241, %v12241
  %v12278 = vmul.f32 %v12242, %v12242
  %v12279 = vmul.f32 %v12243, %v12243
  %v12280 = vmul.f32 %v12244, %v12244
  %v12281 = vmul.f32 %v12245, %v12245
  %v12282 = vmul.f32 %v12246, %v12246
  %v12283 = vmul.f32 %v12247, %v12247
  %v12284 = vmul.f32 %v12248, %v12248
  %v12285 = vmul.f32 %v12249, %v12249
  %v12286 = vmul.f32 %v12250, %v12250
  %v12287 = vmul.f32 %v12251, %v12251
  %v12288 = vmul.f32 %v12252, %v12252
  %v12289 = vmul.f32 %v12253, %v12253
  %v12290 = vmul.f32 %v12254, %v12254
  %v12291 = vmul.f32 %v12255, %v12255
  %v12292 = vmul.f32 %v12256, %v12256
  %v12293 = vmul.f32 %v12257, %v12257
  %v12294 = vmul.f32 %v12258, %v12258
  %v12295 = vmul.f32 %v12259, %v12259
  %v12296 = vmul.f32 %v12260, %v12260
  %v12297 = vsel %vm4285, %v12261, 0.0
  %v12298 = vsel %vm4285, %v12262, 0.0
  %v12299 = vadd.f32 %v12297, %v12298
  %v12300 = vsel %vm4285, %v12263, 0.0
  %v12301 = vadd.f32 %v12299, %v12300
  %v12302 = vsel %vm4285, %v12264, 0.0
  %v12303 = vadd.f32 %v12301, %v12302
  %v12304 = vsel %vm4285, %v12265, 0.0
  %v12305 = vadd.f32 %v12303, %v12304
  %v12306 = vsel %vm4285, %v12266, 0.0
  %v12307 = vadd.f32 %v12305, %v12306
  %v12308 = vsel %vm4285, %v12267, 0.0
  %v12309 = vadd.f32 %v12307, %v12308
  %v12310 = vsel %vm4285, %v12268, 0.0
  %v12311 = vadd.f32 %v12309, %v12310
  %v12312 = vsel %vm4285, %v12269, 0.0
  %v12313 = vadd.f32 %v12311, %v12312
  %v12314 = vsel %vm4285, %v12270, 0.0
  %v12315 = vadd.f32 %v12313, %v12314
  %v12316 = vsel %vm4285, %v12271, 0.0
  %v12317 = vadd.f32 %v12315, %v12316
  %v12318 = vsel %vm4285, %v12272, 0.0
  %v12319 = vadd.f32 %v12317, %v12318
  %v12320 = vsel %vm4285, %v12273, 0.0
  %v12321 = vadd.f32 %v12319, %v12320
  %v12322 = vsel %vm4285, %v12274, 0.0
  %v12323 = vadd.f32 %v12321, %v12322
  %v12324 = vsel %vm4285, %v12275, 0.0
  %v12325 = vadd.f32 %v12323, %v12324
  %v12326 = vsel %vm4285, %v12276, 0.0
  %v12327 = vadd.f32 %v12325, %v12326
  %v12328 = vsel %vm4285, %v12277, 0.0
  %v12329 = vadd.f32 %v12327, %v12328
  %v12330 = vsel %vm4285, %v12278, 0.0
  %v12331 = vadd.f32 %v12329, %v12330
  %v12332 = vsel %vm4285, %v12279, 0.0
  %v12333 = vadd.f32 %v12331, %v12332
  %v12334 = vsel %vm4285, %v12280, 0.0
  %v12335 = vadd.f32 %v12333, %v12334
  %v12336 = vsel %vm4285, %v12281, 0.0
  %v12337 = vadd.f32 %v12335, %v12336
  %v12338 = vsel %vm4285, %v12282, 0.0
  %v12339 = vadd.f32 %v12337, %v12338
  %v12340 = vsel %vm4285, %v12283, 0.0
  %v12341 = vadd.f32 %v12339, %v12340
  %v12342 = vsel %vm4285, %v12284, 0.0
  %v12343 = vadd.f32 %v12341, %v12342
  %v12344 = vsel %vm4285, %v12285, 0.0
  %v12345 = vadd.f32 %v12343, %v12344
  %v12346 = vsel %vm4285, %v12286, 0.0
  %v12347 = vadd.f32 %v12345, %v12346
  %v12348 = vsel %vm4285, %v12287, 0.0
  %v12349 = vadd.f32 %v12347, %v12348
  %v12350 = vsel %vm4285, %v12288, 0.0
  %v12351 = vadd.f32 %v12349, %v12350
  %v12352 = vsel %vm4285, %v12289, 0.0
  %v12353 = vadd.f32 %v12351, %v12352
  %v12354 = vsel %vm4285, %v12290, 0.0
  %v12355 = vadd.f32 %v12353, %v12354
  %v12356 = vsel %vm4285, %v12291, 0.0
  %v12357 = vadd.f32 %v12355, %v12356
  %v12358 = vsel %vm4285, %v12292, 0.0
  %v12359 = vadd.f32 %v12357, %v12358
  %v12360 = vsel %vm4285, %v12293, 0.0
  %v12361 = vadd.f32 %v12359, %v12360
  %v12362 = vsel %vm4285, %v12294, 0.0
  %v12363 = vadd.f32 %v12361, %v12362
  %v12364 = vsel %vm4285, %v12295, 0.0
  %v12365 = vadd.f32 %v12363, %v12364
  %v12366 = vsel %vm4285, %v12296, 0.0
  %v12367 = vadd.f32 %v12365, %v12366
  %v12368 = vrot.slane %v12367, 4
  %v12369 = vadd.f32 %v12367, %v12368
  %v12370 = vrot.slane %v12369, 2
  %v12371 = vadd.f32 %v12369, %v12370
  %v12372 = vrot.slane %v12371, 1
  %v12373 = vadd.f32 %v12371, %v12372
  %v12374 = vmul.f32 %v12373, %v12223
  %v12375 = vadd.f32 %v12374, 1e-05
  %v12376 = vrsqrt.pop %v12375
  %v12377 = vmul.f32 %v12225, %v12376
  %v12378 = vmul.f32 %v12226, %v12376
  %v12379 = vmul.f32 %v12227, %v12376
  %v12380 = vmul.f32 %v12228, %v12376
  %v12381 = vmul.f32 %v12229, %v12376
  %v12382 = vmul.f32 %v12230, %v12376
  %v12383 = vmul.f32 %v12231, %v12376
  %v12384 = vmul.f32 %v12232, %v12376
  %v12385 = vmul.f32 %v12233, %v12376
  %v12386 = vmul.f32 %v12234, %v12376
  %v12387 = vmul.f32 %v12235, %v12376
  %v12388 = vmul.f32 %v12236, %v12376
  %v12389 = vmul.f32 %v12237, %v12376
  %v12390 = vmul.f32 %v12238, %v12376
  %v12391 = vmul.f32 %v12239, %v12376
  %v12392 = vmul.f32 %v12240, %v12376
  %v12393 = vmul.f32 %v12241, %v12376
  %v12394 = vmul.f32 %v12242, %v12376
  %v12395 = vmul.f32 %v12243, %v12376
  %v12396 = vmul.f32 %v12244, %v12376
  %v12397 = vmul.f32 %v12245, %v12376
  %v12398 = vmul.f32 %v12246, %v12376
  %v12399 = vmul.f32 %v12247, %v12376
  %v12400 = vmul.f32 %v12248, %v12376
  %v12401 = vmul.f32 %v12249, %v12376
  %v12402 = vmul.f32 %v12250, %v12376
  %v12403 = vmul.f32 %v12251, %v12376
  %v12404 = vmul.f32 %v12252, %v12376
  %v12405 = vmul.f32 %v12253, %v12376
  %v12406 = vmul.f32 %v12254, %v12376
  %v12407 = vmul.f32 %v12255, %v12376
  %v12408 = vmul.f32 %v12256, %v12376
  %v12409 = vmul.f32 %v12257, %v12376
  %v12410 = vmul.f32 %v12258, %v12376
  %v12411 = vmul.f32 %v12259, %v12376
  %v12412 = vmul.f32 %v12260, %v12376
  %v12414 = vlaneseq
  %v12415 = vshrl.u32 %v12414, 7
  %v12416 = vsub.s32 0, %v12415
  %v12417 = vrot.slane %v12144, %v12416
  %v12419 = vmul.f32 %v12377, %v12417
  %v12420 = vmul.f32 %v12378, %v12417
  %v12421 = vmul.f32 %v12379, %v12417
  %v12422 = vmul.f32 %v12380, %v12417
  %v12423 = vmul.f32 %v12381, %v12417
  %v12424 = vmul.f32 %v12382, %v12417
  %v12425 = vmul.f32 %v12383, %v12417
  %v12426 = vmul.f32 %v12384, %v12417
  %v12427 = vmul.f32 %v12385, %v12417
  %v12428 = vmul.f32 %v12386, %v12417
  %v12429 = vmul.f32 %v12387, %v12417
  %v12430 = vmul.f32 %v12388, %v12417
  %v12431 = vmul.f32 %v12389, %v12417
  %v12432 = vmul.f32 %v12390, %v12417
  %v12433 = vmul.f32 %v12391, %v12417
  %v12434 = vmul.f32 %v12392, %v12417
  %v12435 = vmul.f32 %v12393, %v12417
  %v12436 = vmul.f32 %v12394, %v12417
  %v12437 = vmul.f32 %v12395, %v12417
  %v12438 = vmul.f32 %v12396, %v12417
  %v12439 = vmul.f32 %v12397, %v12417
  %v12440 = vmul.f32 %v12398, %v12417
  %v12441 = vmul.f32 %v12399, %v12417
  %v12442 = vmul.f32 %v12400, %v12417
  %v12443 = vmul.f32 %v12401, %v12417
  %v12444 = vmul.f32 %v12402, %v12417
  %v12445 = vmul.f32 %v12403, %v12417
  %v12446 = vmul.f32 %v12404, %v12417
  %v12447 = vmul.f32 %v12405, %v12417
  %v12448 = vmul.f32 %v12406, %v12417
  %v12449 = vmul.f32 %v12407, %v12417
  %v12450 = vmul.f32 %v12408, %v12417
  %v12451 = vmul.f32 %v12409, %v12417
  %v12452 = vmul.f32 %v12410, %v12417
  %v12453 = vmul.f32 %v12411, %v12417
  %v12454 = vmul.f32 %v12412, %v12417
  %v12456 = vlaneseq
  %v12457 = vshrl.u32 %v12456, 7
  %v12458 = vsub.s32 0, %v12457
  %v12459 = vrot.slane %v12145, %v12458
  %v12461 = vadd.f32 %v12419, %v12459
  %v12462 = vadd.f32 %v12420, %v12459
  %v12463 = vadd.f32 %v12421, %v12459
  %v12464 = vadd.f32 %v12422, %v12459
  %v12465 = vadd.f32 %v12423, %v12459
  %v12466 = vadd.f32 %v12424, %v12459
  %v12467 = vadd.f32 %v12425, %v12459
  %v12468 = vadd.f32 %v12426, %v12459
  %v12469 = vadd.f32 %v12427, %v12459
  %v12470 = vadd.f32 %v12428, %v12459
  %v12471 = vadd.f32 %v12429, %v12459
  %v12472 = vadd.f32 %v12430, %v12459
  %v12473 = vadd.f32 %v12431, %v12459
  %v12474 = vadd.f32 %v12432, %v12459
  %v12475 = vadd.f32 %v12433, %v12459
  %v12476 = vadd.f32 %v12434, %v12459
  %v12477 = vadd.f32 %v12435, %v12459
  %v12478 = vadd.f32 %v12436, %v12459
  %v12479 = vadd.f32 %v12437, %v12459
  %v12480 = vadd.f32 %v12438, %v12459
  %v12481 = vadd.f32 %v12439, %v12459
  %v12482 = vadd.f32 %v12440, %v12459
  %v12483 = vadd.f32 %v12441, %v12459
  %v12484 = vadd.f32 %v12442, %v12459
  %v12485 = vadd.f32 %v12443, %v12459
  %v12486 = vadd.f32 %v12444, %v12459
  %v12487 = vadd.f32 %v12445, %v12459
  %v12488 = vadd.f32 %v12446, %v12459
  %v12489 = vadd.f32 %v12447, %v12459
  %v12490 = vadd.f32 %v12448, %v12459
  %v12491 = vadd.f32 %v12449, %v12459
  %v12492 = vadd.f32 %v12450, %v12459
  %v12493 = vadd.f32 %v12451, %v12459
  %v12494 = vadd.f32 %v12452, %v12459
  %v12495 = vadd.f32 %v12453, %v12459
  %v12496 = vadd.f32 %v12454, %v12459
  %v12497 = vmax.f32 %v12461, 0.0
  %v12498 = vmax.f32 %v12462, 0.0
  %v12499 = vmax.f32 %v12463, 0.0
  %v12500 = vmax.f32 %v12464, 0.0
  %v12501 = vmax.f32 %v12465, 0.0
  %v12502 = vmax.f32 %v12466, 0.0
  %v12503 = vmax.f32 %v12467, 0.0
  %v12504 = vmax.f32 %v12468, 0.0
  %v12505 = vmax.f32 %v12469, 0.0
  %v12506 = vmax.f32 %v12470, 0.0
  %v12507 = vmax.f32 %v12471, 0.0
  %v12508 = vmax.f32 %v12472, 0.0
  %v12509 = vmax.f32 %v12473, 0.0
  %v12510 = vmax.f32 %v12474, 0.0
  %v12511 = vmax.f32 %v12475, 0.0
  %v12512 = vmax.f32 %v12476, 0.0
  %v12513 = vmax.f32 %v12477, 0.0
  %v12514 = vmax.f32 %v12478, 0.0
  %v12515 = vmax.f32 %v12479, 0.0
  %v12516 = vmax.f32 %v12480, 0.0
  %v12517 = vmax.f32 %v12481, 0.0
  %v12518 = vmax.f32 %v12482, 0.0
  %v12519 = vmax.f32 %v12483, 0.0
  %v12520 = vmax.f32 %v12484, 0.0
  %v12521 = vmax.f32 %v12485, 0.0
  %v12522 = vmax.f32 %v12486, 0.0
  %v12523 = vmax.f32 %v12487, 0.0
  %v12524 = vmax.f32 %v12488, 0.0
  %v12525 = vmax.f32 %v12489, 0.0
  %v12526 = vmax.f32 %v12490, 0.0
  %v12527 = vmax.f32 %v12491, 0.0
  %v12528 = vmax.f32 %v12492, 0.0
  %v12529 = vmax.f32 %v12493, 0.0
  %v12530 = vmax.f32 %v12494, 0.0
  %v12531 = vmax.f32 %v12495, 0.0
  %v12532 = vmax.f32 %v12496, 0.0
  %v12569 = vcombine.high %v12497, %v12497
  %v12570 = vcombine.high %v12498, %v12498
  %v12571 = vcombine.high %v12499, %v12499
  %v12572 = vcombine.high %v12500, %v12500
  %v12573 = vcombine.high %v12501, %v12501
  %v12574 = vcombine.high %v12502, %v12502
  %v12575 = vcombine.high %v12503, %v12503
  %v12576 = vcombine.high %v12504, %v12504
  %v12577 = vcombine.high %v12505, %v12505
  %v12578 = vcombine.high %v12506, %v12506
  %v12579 = vcombine.high %v12507, %v12507
  %v12580 = vcombine.high %v12508, %v12508
  %v12581 = vcombine.high %v12509, %v12509
  %v12582 = vcombine.high %v12510, %v12510
  %v12583 = vcombine.high %v12511, %v12511
  %v12584 = vcombine.high %v12512, %v12512
  %v12585 = vcombine.high %v12513, %v12513
  %v12586 = vcombine.high %v12514, %v12514
  %v12587 = vcombine.high %v12515, %v12515
  %v12588 = vcombine.high %v12516, %v12516
  %v12589 = vcombine.high %v12517, %v12517
  %v12590 = vcombine.high %v12518, %v12518
  %v12591 = vcombine.high %v12519, %v12519
  %v12592 = vcombine.high %v12520, %v12520
  %v12593 = vcombine.high %v12521, %v12521
  %v12594 = vcombine.high %v12522, %v12522
  %v12595 = vcombine.high %v12523, %v12523
  %v12596 = vcombine.high %v12524, %v12524
  %v12597 = vcombine.high %v12525, %v12525
  %v12598 = vcombine.high %v12526, %v12526
  %v12599 = vcombine.high %v12527, %v12527
  %v12600 = vcombine.high %v12528, %v12528
  %v12601 = vcombine.high %v12529, %v12529
  %v12602 = vcombine.high %v12530, %v12530
  %v12603 = vcombine.high %v12531, %v12531
  %v12604 = vcombine.high %v12532, %v12532
  %v12617 = vcombine.low %v12497, %v12569
  %v12618 = vcombine.low %v12570, %v12499
  %v12619 = vcombine.low %v12500, %v12572
  %v12620 = vcombine.low %v12573, %v12502
  %v12621 = vcombine.low %v12503, %v12575
  %v12622 = vcombine.low %v12576, %v12505
  %v12623 = vcombine.low %v12506, %v12578
  %v12624 = vcombine.low %v12579, %v12508
  %v12625 = vcombine.low %v12509, %v12581
  %v12626 = vcombine.low %v12582, %v12511
  %v12627 = vcombine.low %v12512, %v12584
  %v12628 = vcombine.low %v12585, %v12514
  %v12629 = vcombine.low %v12515, %v12587
  %v12630 = vcombine.low %v12588, %v12517
  %v12631 = vcombine.low %v12518, %v12590
  %v12632 = vcombine.low %v12591, %v12520
  %v12633 = vcombine.low %v12521, %v12593
  %v12634 = vcombine.low %v12594, %v12523
  %v12635 = vcombine.low %v12524, %v12596
  %v12636 = vcombine.low %v12597, %v12526
  %v12637 = vcombine.low %v12527, %v12599
  %v12638 = vcombine.low %v12600, %v12529
  %v12639 = vcombine.low %v12530, %v12602
  %v12640 = vcombine.low %v12603, %v12532
  %12665 = vst.msk [vmem:[%s10] sm:$0xff] %vm4285, %v12617
  %vm12666 = vcmask 27648
  %12667 = vst.msk [vmem:[%s10 + $0x8] sm:$0xf] %vm12666, %v12498
  %12668 = vst.msk [vmem:[%s10 + $0x10] sm:$0xff] %vm4285, %v12618
  %12669 = vst.msk [vmem:[%s10 + $0x18] sm:$0xf] %vm12666, %v12571
  %12670 = vst.msk [vmem:[%s10 + $0x20] sm:$0xff] %vm4285, %v12619
  %12671 = vst.msk [vmem:[%s10 + $0x28] sm:$0xf] %vm12666, %v12501
  %12672 = vst.msk [vmem:[%s10 + $0x30] sm:$0xff] %vm4285, %v12620
  %12673 = vst.msk [vmem:[%s10 + $0x38] sm:$0xf] %vm12666, %v12574
  %12674 = vst.msk [vmem:[%s10 + $0x40] sm:$0xff] %vm4285, %v12621
  %12675 = vst.msk [vmem:[%s10 + $0x48] sm:$0xf] %vm12666, %v12504
  %12676 = vst.msk [vmem:[%s10 + $0x50] sm:$0xff] %vm4285, %v12622
  %12677 = vst.msk [vmem:[%s10 + $0x58] sm:$0xf] %vm12666, %v12577
  %12678 = vst.msk [vmem:[%s10 + $0x60] sm:$0xff] %vm4285, %v12623
  %12679 = vst.msk [vmem:[%s10 + $0x68] sm:$0xf] %vm12666, %v12507
  %12680 = vst.msk [vmem:[%s10 + $0x70] sm:$0xff] %vm4285, %v12624
  %12681 = vst.msk [vmem:[%s10 + $0x78] sm:$0xf] %vm12666, %v12580
  %12682 = vst.msk [vmem:[%s10 + $0x80] sm:$0xff] %vm4285, %v12625
  %12683 = vst.msk [vmem:[%s10 + $0x88] sm:$0xf] %vm12666, %v12510
  %12684 = vst.msk [vmem:[%s10 + $0x90] sm:$0xff] %vm4285, %v12626
  %12685 = vst.msk [vmem:[%s10 + $0x98] sm:$0xf] %vm12666, %v12583
  %12686 = vst.msk [vmem:[%s10 + $0xa0] sm:$0xff] %vm4285, %v12627
  %12687 = vst.msk [vmem:[%s10 + $0xa8] sm:$0xf] %vm12666, %v12513
  %12688 = vst.msk [vmem:[%s10 + $0xb0] sm:$0xff] %vm4285, %v12628
  %12689 = vst.msk [vmem:[%s10 + $0xb8] sm:$0xf] %vm12666, %v12586
  %12690 = vst.msk [vmem:[%s10 + $0xc0] sm:$0xff] %vm4285, %v12629
  %12691 = vst.msk [vmem:[%s10 + $0xc8] sm:$0xf] %vm12666, %v12516
  %12692 = vst.msk [vmem:[%s10 + $0xd0] sm:$0xff] %vm4285, %v12630
  %12693 = vst.msk [vmem:[%s10 + $0xd8] sm:$0xf] %vm12666, %v12589
  %12694 = vst.msk [vmem:[%s10 + $0xe0] sm:$0xff] %vm4285, %v12631
  %12695 = vst.msk [vmem:[%s10 + $0xe8] sm:$0xf] %vm12666, %v12519
  %12696 = vst.msk [vmem:[%s10 + $0xf0] sm:$0xff] %vm4285, %v12632
  %12697 = vst.msk [vmem:[%s10 + $0xf8] sm:$0xf] %vm12666, %v12592
  %12698 = vst.msk [vmem:[%s10 + $0x100] sm:$0xff] %vm4285, %v12633
  %12699 = vst.msk [vmem:[%s10 + $0x108] sm:$0xf] %vm12666, %v12522
  %12700 = vst.msk [vmem:[%s10 + $0x110] sm:$0xff] %vm4285, %v12634
  %12701 = vst.msk [vmem:[%s10 + $0x118] sm:$0xf] %vm12666, %v12595
  %12702 = vst.msk [vmem:[%s10 + $0x120] sm:$0xff] %vm4285, %v12635
  %12703 = vst.msk [vmem:[%s10 + $0x128] sm:$0xf] %vm12666, %v12525
  %12704 = vst.msk [vmem:[%s10 + $0x130] sm:$0xff] %vm4285, %v12636
  %12705 = vst.msk [vmem:[%s10 + $0x138] sm:$0xf] %vm12666, %v12598
  %12706 = vst.msk [vmem:[%s10 + $0x140] sm:$0xff] %vm4285, %v12637
  %12707 = vst.msk [vmem:[%s10 + $0x148] sm:$0xf] %vm12666, %v12528
  %12708 = vst.msk [vmem:[%s10 + $0x150] sm:$0xff] %vm4285, %v12638
  %12709 = vst.msk [vmem:[%s10 + $0x158] sm:$0xf] %vm12666, %v12601
  %12710 = vst.msk [vmem:[%s10 + $0x160] sm:$0xff] %vm4285, %v12639
  %12711 = vst.msk [vmem:[%s10 + $0x168] sm:$0xf] %vm12666, %v12531
  %12712 = vst.msk [vmem:[%s10 + $0x170] sm:$0xff] %vm4285, %v12640
  %12713 = vst.msk [vmem:[%s10 + $0x178] sm:$0xf] %vm12666, %v12604
  // Predicated region
  $region42: #{upstep_forward.1} parent=0 // pred_check
    _
  $region43: #{upstep_forward.1} parent=0 // pred_check_branch
    %12715 = sbr.rel (0) target = $region45
  $region44: #{upstep_forward.1} parent=0 // pred_region
    _
  $region45: #{upstep_forward.1} parent=0 // pred_fallthru
    _
  // Predicated region
  $region46: #{upstep_forward.1} parent=0 // pred_check
    _
  $region47: #{upstep_forward.1} parent=0 // pred_check_branch
    %12717 = sbr.rel (0) target = $region49
  $region48: #{upstep_forward.1} parent=0 // pred_region
    _
  $region49: #{upstep_forward.1} parent=0 // pred_fallthru
    _

</llo_original>
